<compile_context>
chip_gen: v7x
topology: tpu7x:2x2x1
jax: 0.10.0
libtpu: 0.0.40
codegen_flags: <defaults>
</compile_context>

<pallas_src>
import jax
import jax.numpy as jnp
from jax import lax
from jax.experimental import pallas as pl
from jax.experimental.pallas import tpu as pltpu


# ----------------------------------------------------------------------------
# Synthetic config (small shapes)
# ----------------------------------------------------------------------------
C_IN = 4
VOXEL_SIZE = (0.1, 0.1, 0.1)                       # x, y, z
GRID_BOUNDS = (0.0, 0.0, 0.0, 1.6, 1.6, 0.9)       # xmin..zmin, xmax..zmax
N_POINTS = 256
N_KEYPOINTS = 64
STRIDES = (1, 2, 4, 8)
RADII = ((0.2, 0.4), (0.4, 0.8), (0.8, 1.2), (1.2, 1.6))
NSAMPLES = ((16, 32),) * 4                         # noted only; see TODO(synk) above
# mlps[i][j] = [C_in_level, hidden, out]; +3 added to the first layer for use_xyz=True
MLPS = (
    ((1, 8, 8), (1, 8, 8)),
    ((16, 16, 16), (16, 16, 16)),
    ((16, 16, 16), (16, 16, 16)),
    ((32, 16, 16), (32, 16, 16)),
)
# CNN_3D blocks: (C_in, C_out, stride, padding), kernel = 3
CONV_CFG = ((C_IN, 16, 1, 0), (16, 16, 2, 1), (16, 32, 2, 1), (32, 64, 2, 1))

# grid_size (xyz) = (bounds_max - bounds_min) / voxel_size = (16, 16, 9)
# grid_shape = grid_size[::-1] + [1, 0, 0] = (10, 16, 16)   (D=z, H=y, W=x)
GRID_SHAPE = (10, 16, 16)


# ----------------------------------------------------------------------------
# Pallas kernel 1: matmul (bf16 MXU inputs, f32 accumulation, lane-dense output)
# ----------------------------------------------------------------------------
def _matmul_kernel(a_ref, b_ref, o_ref):
    o_ref[...] = jnp.dot(a_ref[...], b_ref[...], preferred_element_type=jnp.float32)


def pallas_matmul(a, b):
    """[M, K] @ [K, N] -> [M, N] f32.  N is zero-padded to a multiple of 128 so the
    kernel's stores are unmasked; inputs are cast to bf16 for full-rate MXU."""
    m, _ = a.shape
    _, n = b.shape
    n_pad = ((n + 127) // 128) * 128
    if n_pad != n:
        b = jnp.pad(b, ((0, 0), (0, n_pad - n)))
    out = pl.pallas_call(
        _matmul_kernel,
        out_shape=jax.ShapeDtypeStruct((m, n_pad), jnp.float32),
    )(a.astype(jnp.bfloat16), b.astype(jnp.bfloat16))
    return out[:, :n]


# ----------------------------------------------------------------------------
# Pallas kernel 2: furthest point sampling (lane-major: points on the lane axis)
# ----------------------------------------------------------------------------
def fps_lane_major(xyzT, n_points, n_keypoints):
    """xyzT: [8, n_points] f32 (rows 0..2 = x,y,z; rows 3..7 zero) ->
    keypoint coords [8, n_keypoints] (rows 0..2 valid)."""

    def kernel(xyzT_ref, kp_ref):
        X = xyzT_ref[...]                                              # [8, N]
        lane_iota = lax.broadcasted_iota(jnp.int32, (1, n_points), 1)
        col_iota = lax.broadcasted_iota(jnp.int32, (1, n_keypoints), 1)

        last0 = X[:, 0:1]                                              # [8, 1]
        kpacc0 = jnp.where(col_iota == 0, last0, 0.0)                  # [8, K]
        dist0 = jnp.full((1, n_points), 1e30, jnp.float32)

        def body(k, carry):
            dist, last, kpacc = carry
            d = jnp.sum((X - last) ** 2, axis=0, keepdims=True)        # [1, N]
            dist = jnp.minimum(dist, d)
            maxval = jnp.max(dist)
            nxt = jnp.min(
                jnp.where(dist >= maxval, lane_iota, n_points)
            ).astype(jnp.int32)
            last = jnp.sum(jnp.where(lane_iota == nxt, X, 0.0),
                           axis=1, keepdims=True)                      # [8, 1]
            kpacc = jnp.where(col_iota == k, last, kpacc)              # [8, K]
            return dist, last, kpacc

        _, _, kpacc = lax.fori_loop(1, n_keypoints, body, (dist0, last0, kpacc0))
        kp_ref[...] = kpacc

    return pl.pallas_call(
        kernel,
        out_shape=jax.ShapeDtypeStruct((8, n_keypoints), jnp.float32),
        in_specs=[pl.BlockSpec(memory_space=pltpu.MemorySpace.VMEM)],
        out_specs=pl.BlockSpec(memory_space=pltpu.MemorySpace.VMEM),
    )(xyzT)


# ----------------------------------------------------------------------------
# Pallas kernel 3: PointNet-SA(MSG) — both radii of one level fused in one call
# ----------------------------------------------------------------------------
def sa_msg_fused(kp_xyz, vox_xyz, vox_feat, w1_list, w2_list, radii, group=32):
    """Grouping + shared 2-layer MLP + masked max-pool for all radii of one level.

    The keypoint-independent part of layer 1,  concat([vox_xyz, vox_feat]) @ W1_cat,
    is hoisted to a single Pallas matmul (it does not depend on the grid step).
    Layer 2 of both radii is applied with one block-diagonal weight matrix, and the
    per-radius ball mask is expressed as a per-output-channel radius threshold.
    """
    n_kp = kp_xyz.shape[0]
    n_vox = vox_xyz.shape[0]
    nr = len(radii)
    h1 = w1_list[0].shape[1]
    h2 = w2_list[0].shape[1]
    r2_list = tuple(float(r) ** 2 for r in radii)

    # ---- hoisted, keypoint-independent precompute (runs once per level) ----
    w1_cat = jnp.concatenate(w1_list, axis=1)                    # [3 + C, nr*h1]
    w1a_cat = w1_cat[:3]                                         # [3, nr*h1]
    base = pallas_matmul(
        jnp.concatenate([vox_xyz, vox_feat], axis=-1), w1_cat)   # [N, nr*h1]
    w2blk = jnp.zeros((nr * h1, nr * h2), jnp.float32)
    for j in range(nr):
        w2blk = w2blk.at[j * h1:(j + 1) * h1, j * h2:(j + 1) * h2].set(w2_list[j])
    vxT = vox_xyz.T                                              # [3, N]

    def kernel(kp_ref, vxT_ref, base_ref, w1a_ref, w2b_ref, o_ref):
        kp = kp_ref[...]                                         # [G, 3]
        vt = vxT_ref[...]                                        # [3, N]
        # squared distances, lane-dense [G, N]
        cross = jnp.dot(kp, vt, preferred_element_type=jnp.float32)        # [G, N]
        kp_n = jnp.sum(kp * kp, axis=-1, keepdims=True)                    # [G, 1]
        vx_n = jnp.sum(vt * vt, axis=0, keepdims=True)                     # [1, N]
        d2 = kp_n + vx_n - 2.0 * cross                                     # [G, N]

        # layer 1: (vox - kp) @ W1a + feat @ W1b  ==  base - kp @ W1a
        kpw = jnp.dot(kp, w1a_ref[...], preferred_element_type=jnp.float32)  # [G, nr*h1]
        h = jnp.maximum(base_ref[...][None, :, :] - kpw[:, None, :], 0.0)    # [G, N, nr*h1]

        # layer 2: block-diagonal weights apply each radius' MLP in one einsum
        h = jnp.einsum('gnh,ho->gno', h.astype(jnp.bfloat16), w2b_ref[...],
                       preferred_element_type=jnp.float32)                   # [G, N, nr*h2]
        h = jnp.maximum(h, 0.0)

        # per-output-channel radius mask
        o_iota = lax.broadcasted_iota(jnp.int32, (1, 1, nr * h2), 2)
        r2_row = jnp.full((1, 1, nr * h2), r2_list[0], jnp.float32)
        for j in range(1, nr):
            r2_row = jnp.where(o_iota >= j * h2,
                               jnp.float32(r2_list[j]), r2_row)
        mask = d2[:, :, None] <= r2_row                                      # [G, N, nr*h2]

        pooled = jnp.max(jnp.where(mask, h, -1e30), axis=1)                  # [G, nr*h2]
        any_in = jnp.any(mask, axis=1)                                       # [G, nr*h2]
        # ball_query fallback: if nothing in radius, group collapses to voxel 0
        o_ref[...] = jnp.where(any_in, pooled, h[:, 0, :])

    grid = (n_kp // group,)
    return pl.pallas_call(
        kernel,
        out_shape=jax.ShapeDtypeStruct((n_kp, nr * h2), jnp.float32),
        grid=grid,
        in_specs=[
            pl.BlockSpec((group, 3), lambda i: (i, 0)),
            pl.BlockSpec((3, n_vox), lambda i: (0, 0)),
            pl.BlockSpec((n_vox, nr * h1), lambda i: (0, 0)),
            pl.BlockSpec((3, nr * h1), lambda i: (0, 0)),
            pl.BlockSpec((nr * h1, nr * h2), lambda i: (0, 0)),
        ],
        out_specs=pl.BlockSpec((group, nr * h2), lambda i: (i, 0)),
        compiler_params=pltpu.CompilerParams(dimension_semantics=("parallel",)),
    )(kp_xyz, vxT, base, w1a_cat, w2blk.astype(jnp.bfloat16))


# ----------------------------------------------------------------------------
# Glue: im2col for dense conv3d, voxelization, to_global
# ----------------------------------------------------------------------------
def _im2col_3d(x, stride, pad):
    # x: [C, D, H, W] -> patches [P, C*27] (row-major over output voxels, d-major)
    xp = jnp.pad(x, ((0, 0), (pad, pad), (pad, pad), (pad, pad)))
    c, dp, hp, wp = xp.shape
    do = (dp - 3) // stride + 1
    ho = (hp - 3) // stride + 1
    wo = (wp - 3) // stride + 1
    cols = []
    for kd in range(3):
        for kh in range(3):
            for kw in range(3):
                cols.append(
                    xp[:,
                       kd:kd + (do - 1) * stride + 1:stride,
                       kh:kh + (ho - 1) * stride + 1:stride,
                       kw:kw + (wo - 1) * stride + 1:stride]
                )
    patches = jnp.stack(cols, axis=1)                         # [C, 27, Do, Ho, Wo]
    patches = patches.transpose(2, 3, 4, 0, 1)                # [Do, Ho, Wo, C, 27]
    patches = patches.reshape(do * ho * wo, c * 27)           # [P, C*27]
    return patches, (do, ho, wo)


def level_voxel_xyz(spatial, stride_pow, voxel_size, offset):
    d, h, w = spatial
    dd, hh, ww = jnp.meshgrid(jnp.arange(d), jnp.arange(h), jnp.arange(w), indexing='ij')
    idx = jnp.stack([dd, hh, ww], axis=-1).reshape(-1, 3).astype(jnp.float32)
    vs = voxel_size * (2.0 ** stride_pow)
    return idx * vs + offset


def voxelize_dense(points):
    xyz = points[:, :3]
    vsz = jnp.asarray(VOXEL_SIZE, jnp.float32)
    lo = jnp.asarray(GRID_BOUNDS[:3], jnp.float32)
    d, h, w = GRID_SHAPE
    idx = jnp.floor((xyz - lo) / vsz).astype(jnp.int32)       # (ix, iy, iz)
    ix = jnp.clip(idx[:, 0], 0, w - 1)
    iy = jnp.clip(idx[:, 1], 0, h - 1)
    iz = jnp.clip(idx[:, 2], 0, d - 1)
    grid = jnp.zeros((C_IN, d, h, w), jnp.float32)
    grid = grid.at[:, iz, iy, ix].set(points.T)               # voxel feature = (x,y,z,r)
    return grid


# ----------------------------------------------------------------------------
# PV_RCNN forward
# ----------------------------------------------------------------------------
def pv_rcnn_forward(points, conv_weights, pnet_weights):
    xyz = points[:, :3]

    # keypoints via furthest point sampling (lane-major Pallas kernel)
    xyzT = jnp.pad(xyz.T, ((0, 8 - 3), (0, 0)))               # [8, N_pts]
    kp_xyzT = fps_lane_major(xyzT, N_POINTS, N_KEYPOINTS)      # [8, K]
    kp_xyz = kp_xyzT[:3].T                                     # [K, 3]

    # voxelize + CNN_3D; block 3 is skipped because its output is never consumed
    # by the reference forward (levels[4] unused).
    grid = voxelize_dense(points)
    x = grid
    feat = None
    spatial = None
    for blk in range(3):
        cin, cout, stride, pad = CONV_CFG[blk]
        patches, spatial = _im2col_3d(x, stride, pad)
        wm = conv_weights[blk].reshape(cout, cin * 27).T       # [C*27, Cout]
        feat = pallas_matmul(patches, wm)                      # [P, Cout]  (Pallas MXU)
        do, ho, wo = spatial
        x = feat.reshape(do, ho, wo, cout).transpose(3, 0, 1, 2)

    vsz = jnp.asarray(VOXEL_SIZE, jnp.float32)
    off = jnp.asarray(GRID_BOUNDS[:3], jnp.float32)
    vox_xyz = level_voxel_xyz(spatial, 2, vsz, off)            # block-2 output: stride 2**2

    # PointNet-SA(MSG): the reference forward overwrites `out` each stride, so only the
    # last stride's pooled keypoint features reach the return value — compute only that.
    lvl = len(STRIDES) - 1
    w1_list = [pnet_weights[lvl][j][0] for j in range(len(RADII[lvl]))]
    w2_list = [pnet_weights[lvl][j][1] for j in range(len(RADII[lvl]))]
    out = sa_msg_fused(kp_xyz, vox_xyz, feat, w1_list, w2_list, RADII[lvl])   # [K, 2*h2]

    # pointnet2 returns (new_xyz, new_features) with features [B, C, npoint]
    return jnp.transpose(out)[None, :, :]                      # [1, C_total, K]


# ----------------------------------------------------------------------------
# Deterministic parameter init + driver
# ----------------------------------------------------------------------------
def init_params(key):
    keys = jax.random.split(key, 32)
    ki = iter(keys)
    conv_weights = []
    for cin, cout, _, _ in CONV_CFG:
        conv_weights.append(
            0.1 * jax.random.normal(next(ki), (cout, cin, 3, 3, 3), jnp.float32)
        )
    pnet_weights = []
    for lvl in range(len(STRIDES)):
        per_radius = []
        for j in range(len(RADII[lvl])):
            c_in, h1, h2 = MLPS[lvl][j]
            w1 = 0.3 * jax.random.normal(next(ki), (c_in + 3, h1), jnp.float32)
            w2 = 0.3 * jax.random.normal(next(ki), (h1, h2), jnp.float32)
            per_radius.append((w1, w2))
        pnet_weights.append(per_radius)
    return conv_weights, pnet_weights


if __name__ == "__main__":
    key = jax.random.PRNGKey(0)
    k_pts, k_int, k_par = jax.random.split(key, 3)

    lo = jnp.asarray(GRID_BOUNDS[:3], jnp.float32)
    hi = jnp.asarray(GRID_BOUNDS[3:], jnp.float32)
    xyz = jax.random.uniform(k_pts, (N_POINTS, 3), jnp.float32) * (hi - lo - 0.02) + lo + 0.01
    refl = jax.random.uniform(k_int, (N_POINTS, 1), jnp.float32)
    points = jnp.concatenate([xyz, refl], axis=-1)             # [256, 4]

    conv_weights, pnet_weights = init_params(k_par)

    forward = jax.jit(pv_rcnn_forward)
    out = forward(points, conv_weights, pnet_weights)
    out = jax.block_until_ready(out)

    assert out.shape == (1, sum(m[-1] for m in MLPS[-1]), N_KEYPOINTS)
    assert bool(jnp.all(jnp.isfinite(out)))
    print("KERNEL_OK")
</pallas_src>

<mosaic_0001>
module attributes {stable_mosaic.version = 11 : i64} {
  func.func @_matmul_kernel(%arg0: memref<1568x108xbf16, #tpu.memory_space<vmem>>, %arg1: memref<108x128xbf16, #tpu.memory_space<vmem>>, %arg2: memref<1568x128xf32, #tpu.memory_space<vmem>>) attributes {dimension_semantics = [], scalar_prefetch = 0 : i64, scratch_operands = 0 : i64, tpu.core_type = #tpu.core_type<tc>} {
    %c0 = arith.constant 0 : index
    %c0_0 = arith.constant 0 : index
    %0 = vector.load %arg0[%c0, %c0_0] : memref<1568x108xbf16, #tpu.memory_space<vmem>>, vector<1568x108xbf16>
    %c0_1 = arith.constant 0 : index
    %c0_2 = arith.constant 0 : index
    %1 = vector.load %arg1[%c0_1, %c0_2] : memref<108x128xbf16, #tpu.memory_space<vmem>>, vector<108x128xbf16>
    %cst = arith.constant dense<0.000000e+00> : vector<1568x128xf32>
    %2 = tpu.matmul %0, %1, %cst {dimension_numbers = #tpu.dot_dimension_numbers<[1], [0], [0], [1], [0, 0, 1, 1], [], []>} : vector<1568x108xbf16>, vector<108x128xbf16>, vector<1568x128xf32> -> vector<1568x128xf32>
    %c0_3 = arith.constant 0 : index
    %c0_4 = arith.constant 0 : index
    %3 = vector.load %arg2[%c0_3, %c0_4] : memref<1568x128xf32, #tpu.memory_space<vmem>>, vector<1568x128xf32>
    tpu.vector_store %arg2[%c0_3, %c0_4], %2 {strides = array<i32>} : memref<1568x128xf32, #tpu.memory_space<vmem>>, vector<1568x128xf32>,
    return
  }
}

module attributes {stable_mosaic.version = 11 : i64} {
  func.func @_matmul_kernel(%arg0: memref<196x432xbf16, #tpu.memory_space<vmem>>, %arg1: memref<432x128xbf16, #tpu.memory_space<vmem>>, %arg2: memref<196x128xf32, #tpu.memory_space<vmem>>) attributes {dimension_semantics = [], scalar_prefetch = 0 : i64, scratch_operands = 0 : i64, tpu.core_type = #tpu.core_type<tc>} {
    %c0 = arith.constant 0 : index
    %c0_0 = arith.constant 0 : index
    %0 = vector.load %arg0[%c0, %c0_0] : memref<196x432xbf16, #tpu.memory_space<vmem>>, vector<196x432xbf16>
    %c0_1 = arith.constant 0 : index
    %c0_2 = arith.constant 0 : index
    %1 = vector.load %arg1[%c0_1, %c0_2] : memref<432x128xbf16, #tpu.memory_space<vmem>>, vector<432x128xbf16>
    %cst = arith.constant dense<0.000000e+00> : vector<196x128xf32>
    %2 = tpu.matmul %0, %1, %cst {dimension_numbers = #tpu.dot_dimension_numbers<[1], [0], [0], [1], [0, 0, 1, 1], [], []>} : vector<196x432xbf16>, vector<432x128xbf16>, vector<196x128xf32> -> vector<196x128xf32>
    %c0_3 = arith.constant 0 : index
    %c0_4 = arith.constant 0 : index
    %3 = vector.load %arg2[%c0_3, %c0_4] : memref<196x128xf32, #tpu.memory_space<vmem>>, vector<196x128xf32>
    tpu.vector_store %arg2[%c0_3, %c0_4], %2 {strides = array<i32>} : memref<196x128xf32, #tpu.memory_space<vmem>>, vector<196x128xf32>,
    return
  }
}

module attributes {stable_mosaic.version = 11 : i64} {
  func.func @_matmul_kernel(%arg0: memref<32x432xbf16, #tpu.memory_space<vmem>>, %arg1: memref<432x128xbf16, #tpu.memory_space<vmem>>, %arg2: memref<32x128xf32, #tpu.memory_space<vmem>>) attributes {dimension_semantics = [], scalar_prefetch = 0 : i64, scratch_operands = 0 : i64, tpu.core_type = #tpu.core_type<tc>} {
    %c0 = arith.constant 0 : index
    %c0_0 = arith.constant 0 : index
    %0 = vector.load %arg0[%c0, %c0_0] : memref<32x432xbf16, #tpu.memory_space<vmem>>, vector<32x432xbf16>
    %c0_1 = arith.constant 0 : index
    %c0_2 = arith.constant 0 : index
    %1 = vector.load %arg1[%c0_1, %c0_2] : memref<432x128xbf16, #tpu.memory_space<vmem>>, vector<432x128xbf16>
    %cst = arith.constant dense<0.000000e+00> : vector<32x128xf32>
    %2 = tpu.matmul %0, %1, %cst {dimension_numbers = #tpu.dot_dimension_numbers<[1], [0], [0], [1], [0, 0, 1, 1], [], []>} : vector<32x432xbf16>, vector<432x128xbf16>, vector<32x128xf32> -> vector<32x128xf32>
    %c0_3 = arith.constant 0 : index
    %c0_4 = arith.constant 0 : index
    %3 = vector.load %arg2[%c0_3, %c0_4] : memref<32x128xf32, #tpu.memory_space<vmem>>, vector<32x128xf32>
    tpu.vector_store %arg2[%c0_3, %c0_4], %2 {strides = array<i32>} : memref<32x128xf32, #tpu.memory_space<vmem>>, vector<32x128xf32>,
    return
  }
}

module attributes {stable_mosaic.version = 11 : i64} {
  func.func @_matmul_kernel(%arg0: memref<32x35xbf16, #tpu.memory_space<vmem>>, %arg1: memref<35x128xbf16, #tpu.memory_space<vmem>>, %arg2: memref<32x128xf32, #tpu.memory_space<vmem>>) attributes {dimension_semantics = [], scalar_prefetch = 0 : i64, scratch_operands = 0 : i64, tpu.core_type = #tpu.core_type<tc>} {
    %c0 = arith.constant 0 : index
    %c0_0 = arith.constant 0 : index
    %0 = vector.load %arg0[%c0, %c0_0] : memref<32x35xbf16, #tpu.memory_space<vmem>>, vector<32x35xbf16>
    %c0_1 = arith.constant 0 : index
    %c0_2 = arith.constant 0 : index
    %1 = vector.load %arg1[%c0_1, %c0_2] : memref<35x128xbf16, #tpu.memory_space<vmem>>, vector<35x128xbf16>
    %cst = arith.constant dense<0.000000e+00> : vector<32x128xf32>
    %2 = tpu.matmul %0, %1, %cst {dimension_numbers = #tpu.dot_dimension_numbers<[1], [0], [0], [1], [0, 0, 1, 1], [], []>} : vector<32x35xbf16>, vector<35x128xbf16>, vector<32x128xf32> -> vector<32x128xf32>
    %c0_3 = arith.constant 0 : index
    %c0_4 = arith.constant 0 : index
    %3 = vector.load %arg2[%c0_3, %c0_4] : memref<32x128xf32, #tpu.memory_space<vmem>>, vector<32x128xf32>
    tpu.vector_store %arg2[%c0_3, %c0_4], %2 {strides = array<i32>} : memref<32x128xf32, #tpu.memory_space<vmem>>, vector<32x128xf32>,
    return
  }
}

module attributes {stable_mosaic.version = 11 : i64} {
  func.func @kernel(%arg0: memref<8x256xf32, #tpu.memory_space<vmem>>, %arg1: memref<8x64xf32, #tpu.memory_space<vmem>>) attributes {dimension_semantics = [], scalar_prefetch = 0 : i64, scratch_operands = 0 : i64, tpu.core_type = #tpu.core_type<tc>} {
    %c0 = arith.constant 0 : index
    %c0_0 = arith.constant 0 : index
    %0 = vector.load %arg0[%c0, %c0_0] : memref<8x256xf32, #tpu.memory_space<vmem>>, vector<8x256xf32>
    %1 = tpu.iota {dimensions = array<i32: 1>} : vector<1x256xi32>
    %2 = tpu.iota {dimensions = array<i32: 1>} : vector<1x64xi32>
    %3 = vector.extract_strided_slice %0 {offsets = [0, 0], sizes = [8, 1], strides = [1, 1]} : vector<8x256xf32> to vector<8x1xf32>
    %c0_i32 = arith.constant 0 : i32
    %4 = vector.broadcast %c0_i32 : i32 to vector<1x64xi32>
    %5 = arith.cmpi eq, %2, %4 : vector<1x64xi32>
    %cst = arith.constant 0.000000e+00 : f32
    %6 = vector.shape_cast %5 : vector<1x64xi1> to vector<1x64xi1>
    %7 = vector.broadcast %6 : vector<1x64xi1> to vector<8x64xi1>
    %8 = vector.shape_cast %3 : vector<8x1xf32> to vector<8x1xf32>
    %9 = vector.broadcast %8 : vector<8x1xf32> to vector<8x64xf32>
    %10 = vector.broadcast %cst : f32 to vector<8x64xf32>
    %11 = arith.select %7, %9, %10 : vector<8x64xi1>, vector<8x64xf32>
    %cst_1 = arith.constant 1.000000e+30 : f32
    %12 = vector.broadcast %cst_1 : f32 to vector<1x256xf32>
    %c1_i32 = arith.constant 1 : i32
    %c63_i32 = arith.constant 63 : i32
    %13 = arith.addi %c1_i32, %c63_i32 : i32
    %c1_i32_2 = arith.constant 1 : i32
    %14:3 = scf.for %arg2 = %c1_i32 to %13 step %c1_i32_2 iter_args(%arg3 = %12, %arg4 = %3, %arg5 = %11) -> (vector<1x256xf32>, vector<8x1xf32>, vector<8x64xf32>)  : i32 {
      %16 = vector.broadcast %arg4 : vector<8x1xf32> to vector<8x256xf32>
      %17 = arith.subf %0, %16 : vector<8x256xf32>
      %18 = arith.mulf %17, %17 : vector<8x256xf32>
      %cst_6 = arith.constant dense<0.000000e+00> : vector<256xf32>
      %19 = vector.multi_reduction <add>, %18, %cst_6 [0] : vector<8x256xf32> to vector<256xf32>
      %20 = vector.shape_cast %19 : vector<256xf32> to vector<1x256xf32>
      %21 = arith.minimumf %arg3, %20 : vector<1x256xf32>
      %22 = vector.shape_cast %21 : vector<1x256xf32> to vector<1x1x256xf32>
      %cst_7 = arith.constant dense<0xFF800000> : vector<1xf32>
      %23 = vector.multi_reduction <maximumf>, %22, %cst_7 [1, 2] : vector<1x1x256xf32> to vector<1xf32>
      %24 = vector.shape_cast %23 : vector<1xf32> to vector<1x1x1xf32>
      %25 = vector.extract %24[0, 0, 0] : f32 from vector<1x1x1xf32>
      %26 = vector.broadcast %25 : f32 to vector<1x256xf32>
      %27 = arith.cmpf oge, %21, %26 : vector<1x256xf32>
      %c256_i32 = arith.constant 256 : i32
      %28 = vector.broadcast %c256_i32 : i32 to vector<1x256xi32>
      %29 = arith.select %27, %1, %28 : vector<1x256xi1>, vector<1x256xi32>
      %30 = vector.shape_cast %29 : vector<1x256xi32> to vector<1x1x256xi32>
      %cst_8 = arith.constant dense<2147483647> : vector<1xi32>
      %31 = vector.multi_reduction <minsi>, %30, %cst_8 [1, 2] : vector<1x1x256xi32> to vector<1xi32>
      %32 = vector.shape_cast %31 : vector<1xi32> to vector<1x1x1xi32>
      %33 = vector.extract %32[0, 0, 0] : i32 from vector<1x1x1xi32>
      %34 = vector.broadcast %33 : i32 to vector<1x256xi32>
      %35 = arith.cmpi eq, %1, %34 : vector<1x256xi32>
      %cst_9 = arith.constant 0.000000e+00 : f32
      %36 = vector.shape_cast %35 : vector<1x256xi1> to vector<1x256xi1>
      %37 = vector.broadcast %36 : vector<1x256xi1> to vector<8x256xi1>
      %38 = vector.broadcast %cst_9 : f32 to vector<8x256xf32>
      %39 = arith.select %37, %0, %38 : vector<8x256xi1>, vector<8x256xf32>
      %cst_10 = arith.constant dense<0.000000e+00> : vector<8xf32>
      %40 = vector.multi_reduction <add>, %39, %cst_10 [1] : vector<8x256xf32> to vector<8xf32>
      %41 = vector.shape_cast %40 : vector<8xf32> to vector<8x1xf32>
      %42 = vector.broadcast %arg2 : i32 to vector<1x64xi32>
      %43 = arith.cmpi eq, %2, %42 : vector<1x64xi32>
      %44 = vector.shape_cast %43 : vector<1x64xi1> to vector<1x64xi1>
      %45 = vector.broadcast %44 : vector<1x64xi1> to vector<8x64xi1>
      %46 = vector.shape_cast %41 : vector<8x1xf32> to vector<8x1xf32>
      %47 = vector.broadcast %46 : vector<8x1xf32> to vector<8x64xf32>
      %48 = arith.select %45, %47, %arg5 : vector<8x64xi1>, vector<8x64xf32>
      scf.yield %21, %41, %48 : vector<1x256xf32>, vector<8x1xf32>, vector<8x64xf32>
    }
    %c63_i32_3 = arith.constant 63 : i32
    %c0_4 = arith.constant 0 : index
    %c0_5 = arith.constant 0 : index
    %15 = vector.load %arg1[%c0_4, %c0_5] : memref<8x64xf32, #tpu.memory_space<vmem>>, vector<8x64xf32>
    tpu.vector_store %arg1[%c0_4, %c0_5], %14#2 {strides = array<i32>} : memref<8x64xf32, #tpu.memory_space<vmem>>, vector<8x64xf32>,
    return
  }
}

module attributes {stable_mosaic.version = 11 : i64} {
  func.func @kernel(%arg0: i32, %arg1: memref<32x3xf32, #tpu.memory_space<vmem>>, %arg2: memref<3x32xf32, #tpu.memory_space<vmem>>, %arg3: memref<32x32xf32, #tpu.memory_space<vmem>>, %arg4: memref<3x32xf32, #tpu.memory_space<vmem>>, %arg5: memref<32x32xbf16, #tpu.memory_space<vmem>>, %arg6: memref<32x32xf32, #tpu.memory_space<vmem>>) attributes {dimension_semantics = [#tpu.dimension_semantics<parallel>], iteration_bounds = array<i64: 2>, scalar_prefetch = 0 : i64, scratch_operands = 0 : i64, tpu.core_type = #tpu.core_type<tc>, window_params = [{transform_indices = @transform_0, window_bounds = array<i64: 32, 3>}, {pipeline_mode = #tpu.pipeline_mode<synchronous>, transform_indices = @transform_1, window_bounds = array<i64: 3, 32>}, {pipeline_mode = #tpu.pipeline_mode<synchronous>, transform_indices = @transform_2, window_bounds = array<i64: 32, 32>}, {pipeline_mode = #tpu.pipeline_mode<synchronous>, transform_indices = @transform_3, window_bounds = array<i64: 3, 32>}, {pipeline_mode = #tpu.pipeline_mode<synchronous>, transform_indices = @transform_4, window_bounds = array<i64: 32, 32>}, {transform_indices = @transform_5, window_bounds = array<i64: 32, 32>}]} {
    %c0 = arith.constant 0 : index
    %c0_0 = arith.constant 0 : index
    %0 = vector.load %arg1[%c0, %c0_0] : memref<32x3xf32, #tpu.memory_space<vmem>>, vector<32x3xf32>
    %c0_1 = arith.constant 0 : index
    %c0_2 = arith.constant 0 : index
    %1 = vector.load %arg2[%c0_1, %c0_2] : memref<3x32xf32, #tpu.memory_space<vmem>>, vector<3x32xf32>
    %cst = arith.constant dense<0.000000e+00> : vector<32x32xf32>
    %2 = tpu.matmul %0, %1, %cst {dimension_numbers = #tpu.dot_dimension_numbers<[1], [0], [0], [1], [0, 0, 1, 1], [], []>} : vector<32x3xf32>, vector<3x32xf32>, vector<32x32xf32> -> vector<32x32xf32>
    %3 = arith.mulf %0, %0 : vector<32x3xf32>
    %cst_3 = arith.constant dense<0.000000e+00> : vector<32xf32>
    %4 = vector.multi_reduction <add>, %3, %cst_3 [1] : vector<32x3xf32> to vector<32xf32>
    %5 = vector.shape_cast %4 : vector<32xf32> to vector<32x1xf32>
    %6 = arith.mulf %1, %1 : vector<3x32xf32>
    %cst_4 = arith.constant dense<0.000000e+00> : vector<32xf32>
    %7 = vector.multi_reduction <add>, %6, %cst_4 [0] : vector<3x32xf32> to vector<32xf32>
    %8 = vector.shape_cast %7 : vector<32xf32> to vector<1x32xf32>
    %9 = vector.broadcast %5 : vector<32x1xf32> to vector<32x32xf32>
    %10 = vector.broadcast %8 : vector<1x32xf32> to vector<32x32xf32>
    %11 = arith.addf %9, %10 : vector<32x32xf32>
    %cst_5 = arith.constant 2.000000e+00 : f32
    %12 = vector.broadcast %cst_5 : f32 to vector<32x32xf32>
    %13 = arith.mulf %12, %2 : vector<32x32xf32>
    %14 = arith.subf %11, %13 : vector<32x32xf32>
    %c0_6 = arith.constant 0 : index
    %c0_7 = arith.constant 0 : index
    %15 = vector.load %arg4[%c0_6, %c0_7] : memref<3x32xf32, #tpu.memory_space<vmem>>, vector<3x32xf32>
    %cst_8 = arith.constant dense<0.000000e+00> : vector<32x32xf32>
    %16 = tpu.matmul %0, %15, %cst_8 {dimension_numbers = #tpu.dot_dimension_numbers<[1], [0], [0], [1], [0, 0, 1, 1], [], []>} : vector<32x3xf32>, vector<3x32xf32>, vector<32x32xf32> -> vector<32x32xf32>
    %c0_9 = arith.constant 0 : index
    %c0_10 = arith.constant 0 : index
    %17 = vector.load %arg3[%c0_9, %c0_10] : memref<32x32xf32, #tpu.memory_space<vmem>>, vector<32x32xf32>
    %18 = vector.shape_cast %17 : vector<32x32xf32> to vector<1x32x32xf32>
    %19 = vector.shape_cast %16 : vector<32x32xf32> to vector<32x1x32xf32>
    %20 = vector.broadcast %18 : vector<1x32x32xf32> to vector<32x32x32xf32>
    %21 = vector.broadcast %19 : vector<32x1x32xf32> to vector<32x32x32xf32>
    %22 = arith.subf %20, %21 : vector<32x32x32xf32>
    %cst_11 = arith.constant 0.000000e+00 : f32
    %23 = vector.broadcast %cst_11 : f32 to vector<32x32x32xf32>
    %24 = arith.maximumf %22, %23 : vector<32x32x32xf32>
    %25 = arith.truncf %24 : vector<32x32x32xf32> to vector<32x32x32xbf16>
    %c0_12 = arith.constant 0 : index
    %c0_13 = arith.constant 0 : index
    %26 = vector.load %arg5[%c0_12, %c0_13] : memref<32x32xbf16, #tpu.memory_space<vmem>>, vector<32x32xbf16>
    "tpu.trace_start"() <{level = 10 : i32, message = "gnh,ho->gno"}> : () -> ()
    %cst_14 = arith.constant dense<0.000000e+00> : vector<32x32x32xf32>
    %27 = tpu.matmul %25, %26, %cst_14 {dimension_numbers = #tpu.dot_dimension_numbers<[2], [0], [0, 1], [1], [0, 0, 0, 1, 1, 1], [], []>} : vector<32x32x32xbf16>, vector<32x32xbf16>, vector<32x32x32xf32> -> vector<32x32x32xf32>
    "tpu.trace_stop"() : () -> ()
    %cst_15 = arith.constant 0.000000e+00 : f32
    %28 = vector.broadcast %cst_15 : f32 to vector<32x32x32xf32>
    %29 = arith.maximumf %27, %28 : vector<32x32x32xf32>
    %30 = tpu.iota {dimensions = array<i32: 2>} : vector<1x1x32xi32>
    %cst_16 = arith.constant 1.440000e+00 : f32
    %31 = vector.broadcast %cst_16 : f32 to vector<1x1x32xf32>
    %c16_i32 = arith.constant 16 : i32
    %32 = vector.broadcast %c16_i32 : i32 to vector<1x1x32xi32>
    %33 = arith.cmpi sge, %30, %32 : vector<1x1x32xi32>
    %cst_17 = arith.constant 2.560000e+00 : f32
    %34 = vector.broadcast %cst_17 : f32 to vector<1x1x32xf32>
    %35 = arith.select %33, %34, %31 : vector<1x1x32xi1>, vector<1x1x32xf32>
    %36 = vector.shape_cast %14 : vector<32x32xf32> to vector<32x32x1xf32>
    %37 = vector.broadcast %36 : vector<32x32x1xf32> to vector<32x32x32xf32>
    %38 = vector.broadcast %35 : vector<1x1x32xf32> to vector<32x32x32xf32>
    %39 = arith.cmpf ole, %37, %38 : vector<32x32x32xf32>
    %cst_18 = arith.constant -1.000000e+30 : f32
    %40 = vector.broadcast %cst_18 : f32 to vector<32x32x32xf32>
    %41 = arith.select %39, %29, %40 : vector<32x32x32xi1>, vector<32x32x32xf32>
    %cst_19 = arith.constant dense<0xFF800000> : vector<32x32xf32>
    %42 = vector.multi_reduction <maximumf>, %41, %cst_19 [1] : vector<32x32x32xf32> to vector<32x32xf32>
    %cst_20 = arith.constant 1.000000e+00 : f32
    %cst_21 = arith.constant 0.000000e+00 : f32
    %43 = vector.broadcast %cst_20 : f32 to vector<32x32x32xf32>
    %44 = vector.broadcast %cst_21 : f32 to vector<32x32x32xf32>
    %45 = arith.select %39, %43, %44 : vector<32x32x32xi1>, vector<32x32x32xf32>
    %cst_22 = arith.constant dense<0xFF800000> : vector<32x32xf32>
    %46 = vector.multi_reduction <maximumf>, %45, %cst_22 [1] : vector<32x32x32xf32> to vector<32x32xf32>
    %cst_23 = arith.constant 0.000000e+00 : f32
    %47 = vector.broadcast %cst_23 : f32 to vector<32x32xf32>
    %48 = arith.cmpf ogt, %46, %47 : vector<32x32xf32>
    %49 = vector.extract_strided_slice %29 {offsets = [0, 0, 0], sizes = [32, 1, 32], strides = [1, 1, 1]} : vector<32x32x32xf32> to vector<32x1x32xf32>
    %50 = vector.shape_cast %49 : vector<32x1x32xf32> to vector<32x32xf32>
    %51 = arith.select %48, %42, %50 : vector<32x32xi1>, vector<32x32xf32>
    %c0_24 = arith.constant 0 : index
    %c0_25 = arith.constant 0 : index
    %52 = vector.load %arg6[%c0_24, %c0_25] : memref<32x32xf32, #tpu.memory_space<vmem>>, vector<32x32xf32>
    tpu.vector_store %arg6[%c0_24, %c0_25], %51 {strides = array<i32>} : memref<32x32xf32, #tpu.memory_space<vmem>>, vector<32x32xf32>,
    return
  }
  func.func @transform_0(%arg0: i32) -> (i32, i32) {
    %c0_i32 = arith.constant 0 : i32
    %c0_i32_0 = arith.constant 0 : i32
    return %arg0, %c0_i32 : i32, i32
  }
  func.func @transform_1(%arg0: i32) -> (i32, i32) {
    %c0_i32 = arith.constant 0 : i32
    %c0_i32_0 = arith.constant 0 : i32
    %c0_i32_1 = arith.constant 0 : i32
    return %c0_i32, %c0_i32_0 : i32, i32
  }
  func.func @transform_2(%arg0: i32) -> (i32, i32) {
    %c0_i32 = arith.constant 0 : i32
    %c0_i32_0 = arith.constant 0 : i32
    %c0_i32_1 = arith.constant 0 : i32
    return %c0_i32, %c0_i32_0 : i32, i32
  }
  func.func @transform_3(%arg0: i32) -> (i32, i32) {
    %c0_i32 = arith.constant 0 : i32
    %c0_i32_0 = arith.constant 0 : i32
    %c0_i32_1 = arith.constant 0 : i32
    return %c0_i32, %c0_i32_0 : i32, i32
  }
  func.func @transform_4(%arg0: i32) -> (i32, i32) {
    %c0_i32 = arith.constant 0 : i32
    %c0_i32_0 = arith.constant 0 : i32
    %c0_i32_1 = arith.constant 0 : i32
    return %c0_i32, %c0_i32_0 : i32, i32
  }
  func.func @transform_5(%arg0: i32) -> (i32, i32) {
    %c0_i32 = arith.constant 0 : i32
    %c0_i32_0 = arith.constant 0 : i32
    return %arg0, %c0_i32 : i32, i32
  }
}

</mosaic_0001>

<llo_original>
// kernel: pv_rcnn_forward.7
$region0: #{pv_rcnn_forward.7}
  #allocation0 [shape = 'u32[]', space=smem, size = 0x4, offset = 0x4, fixed_abs, tag = 'smem constant byte address 0x4 - core index']
  #allocation1 [shape = 'u32[144,128]{1,0:T(1,128)}', space=vmem, size = 0x12000, scoped, tag = 'internal scratch']
  %s0 = inlined_call_operand.vmem [shape: bf16[1568,108], index: 0, kind: input, shape index: {}]
  %s1 = inlined_call_operand.vmem [shape: bf16[108,128], index: 1, kind: input, shape index: {}]
  %s2 = inlined_call_operand.vmem [shape: f32[1568,128], index: 2, kind: output, shape index: {}]
  %s3 = sld [smem:[#allocation0]]
  $region18: #{pv_rcnn_forward.7} parent=0
    _
  %s5 = ssub.s32 1, %s3
  %s6 = scalar_select 0, %s5, %s3
  // Predicated region
  $region2: #{pv_rcnn_forward.7} parent=0 // pred_check
    _
  $region3: #{pv_rcnn_forward.7} parent=0 // pred_check_branch
    %8 = sbr.rel (0) target = $region5
  $region4: #{pv_rcnn_forward.7} parent=0 // pred_region
    _
  $region5: #{pv_rcnn_forward.7} parent=0 // pred_fallthru
    _
  // Predicated region
  $region6: #{pv_rcnn_forward.7} parent=0 // pred_check
    _
  $region7: #{pv_rcnn_forward.7} parent=0 // pred_check_branch
    %10 = sbr.rel (0) target = $region9
  $region8: #{pv_rcnn_forward.7} parent=0 // pred_region
    _
  $region9: #{pv_rcnn_forward.7} parent=0 // pred_fallthru
    _
  %v12 = vld [vmem:[%s0] sm:$0xf]
  %v13 = vld [vmem:[%s0 + $0x4] sm:$0xf]
  %v14 = vld [vmem:[%s0 + $0x8] sm:$0xf]
  %v15 = vld [vmem:[%s0 + $0xc] sm:$0xf]
  %v16 = vld [vmem:[%s0 + $0x10] sm:$0xf]
  %v17 = vld [vmem:[%s0 + $0x14] sm:$0xf]
  %v18 = vld [vmem:[%s0 + $0x18] sm:$0xf]
  %v19 = vld [vmem:[%s0 + $0x1c] sm:$0xf]
  %v20 = vld [vmem:[%s0 + $0x20] sm:$0xf]
  %v21 = vld [vmem:[%s0 + $0x24] sm:$0xf]
  %v22 = vld [vmem:[%s0 + $0x28] sm:$0xf]
  %v23 = vld [vmem:[%s0 + $0x2c] sm:$0xf]
  %v24 = vld [vmem:[%s0 + $0x30] sm:$0xf]
  %v25 = vld [vmem:[%s0 + $0x34] sm:$0xf]
  %v26 = vld [vmem:[%s0 + $0x38] sm:$0xf]
  %v27 = vld [vmem:[%s0 + $0x3c] sm:$0xf]
  %v28 = vld [vmem:[%s0 + $0x40] sm:$0xf]
  %v29 = vld [vmem:[%s0 + $0x44] sm:$0xf]
  %v30 = vld [vmem:[%s0 + $0x48] sm:$0xf]
  %v31 = vld [vmem:[%s0 + $0x4c] sm:$0xf]
  %v32 = vld [vmem:[%s0 + $0x50] sm:$0xf]
  %v33 = vld [vmem:[%s0 + $0x54] sm:$0xf]
  %v34 = vld [vmem:[%s0 + $0x58] sm:$0xf]
  %v35 = vld [vmem:[%s0 + $0x5c] sm:$0xf]
  %v36 = vld [vmem:[%s0 + $0x60] sm:$0xf]
  %v37 = vld [vmem:[%s0 + $0x64] sm:$0xf]
  %v38 = vld [vmem:[%s0 + $0x68] sm:$0xf]
  %v39 = vld [vmem:[%s0 + $0x6c] sm:$0xf]
  %v40 = vld [vmem:[%s0 + $0x70] sm:$0xf]
  %v41 = vld [vmem:[%s0 + $0x74] sm:$0xf]
  %v42 = vld [vmem:[%s0 + $0x78] sm:$0xf]
  %v43 = vld [vmem:[%s0 + $0x7c] sm:$0xf]
  %v44 = vld [vmem:[%s0 + $0x80] sm:$0xf]
  %v45 = vld [vmem:[%s0 + $0x84] sm:$0xf]
  %v46 = vld [vmem:[%s0 + $0x88] sm:$0xf]
  %v47 = vld [vmem:[%s0 + $0x8c] sm:$0xf]
  %v48 = vld [vmem:[%s0 + $0x90] sm:$0xf]
  %v49 = vld [vmem:[%s0 + $0x94] sm:$0xf]
  %v50 = vld [vmem:[%s0 + $0x98] sm:$0xf]
  %v51 = vld [vmem:[%s0 + $0x9c] sm:$0xf]
  %v52 = vld [vmem:[%s0 + $0xa0] sm:$0xf]
  %v53 = vld [vmem:[%s0 + $0xa4] sm:$0xf]
  %v54 = vld [vmem:[%s0 + $0xa8] sm:$0xf]
  %v55 = vld [vmem:[%s0 + $0xac] sm:$0xf]
  %v56 = vld [vmem:[%s0 + $0xb0] sm:$0xf]
  %v57 = vld [vmem:[%s0 + $0xb4] sm:$0xf]
  %v58 = vld [vmem:[%s0 + $0xb8] sm:$0xf]
  %v59 = vld [vmem:[%s0 + $0xbc] sm:$0xf]
  %v60 = vld [vmem:[%s0 + $0xc0] sm:$0xf]
  %v61 = vld [vmem:[%s0 + $0xc4] sm:$0xf]
  %v62 = vld [vmem:[%s0 + $0xc8] sm:$0xf]
  %v63 = vld [vmem:[%s0 + $0xcc] sm:$0xf]
  %v64 = vld [vmem:[%s0 + $0xd0] sm:$0xf]
  %v65 = vld [vmem:[%s0 + $0xd4] sm:$0xf]
  %v66 = vld [vmem:[%s0 + $0xd8] sm:$0xf]
  %v67 = vld [vmem:[%s0 + $0xdc] sm:$0xf]
  %v68 = vld [vmem:[%s0 + $0xe0] sm:$0xf]
  %v69 = vld [vmem:[%s0 + $0xe4] sm:$0xf]
  %v70 = vld [vmem:[%s0 + $0xe8] sm:$0xf]
  %v71 = vld [vmem:[%s0 + $0xec] sm:$0xf]
  %v72 = vld [vmem:[%s0 + $0xf0] sm:$0xf]
  %v73 = vld [vmem:[%s0 + $0xf4] sm:$0xf]
  %v74 = vld [vmem:[%s0 + $0xf8] sm:$0xf]
  %v75 = vld [vmem:[%s0 + $0xfc] sm:$0xf]
  %v76 = vld [vmem:[%s0 + $0x100] sm:$0xf]
  %v77 = vld [vmem:[%s0 + $0x104] sm:$0xf]
  %v78 = vld [vmem:[%s0 + $0x108] sm:$0xf]
  %v79 = vld [vmem:[%s0 + $0x10c] sm:$0xf]
  %v80 = vld [vmem:[%s0 + $0x110] sm:$0xf]
  %v81 = vld [vmem:[%s0 + $0x114] sm:$0xf]
  %v82 = vld [vmem:[%s0 + $0x118] sm:$0xf]
  %v83 = vld [vmem:[%s0 + $0x11c] sm:$0xf]
  %v84 = vld [vmem:[%s0 + $0x120] sm:$0xf]
  %v85 = vld [vmem:[%s0 + $0x124] sm:$0xf]
  %v86 = vld [vmem:[%s0 + $0x128] sm:$0xf]
  %v87 = vld [vmem:[%s0 + $0x12c] sm:$0xf]
  %v88 = vld [vmem:[%s0 + $0x130] sm:$0xf]
  %v89 = vld [vmem:[%s0 + $0x134] sm:$0xf]
  %v90 = vld [vmem:[%s0 + $0x138] sm:$0xf]
  %v91 = vld [vmem:[%s0 + $0x13c] sm:$0xf]
  %v92 = vld [vmem:[%s0 + $0x140] sm:$0xf]
  %v93 = vld [vmem:[%s0 + $0x144] sm:$0xf]
  %v94 = vld [vmem:[%s0 + $0x148] sm:$0xf]
  %v95 = vld [vmem:[%s0 + $0x14c] sm:$0xf]
  %v96 = vld [vmem:[%s0 + $0x150] sm:$0xf]
  %v97 = vld [vmem:[%s0 + $0x154] sm:$0xf]
  %v98 = vld [vmem:[%s0 + $0x158] sm:$0xf]
  %v99 = vld [vmem:[%s0 + $0x15c] sm:$0xf]
  %v100 = vld [vmem:[%s0 + $0x160] sm:$0xf]
  %v101 = vld [vmem:[%s0 + $0x164] sm:$0xf]
  %v102 = vld [vmem:[%s0 + $0x168] sm:$0xf]
  %v103 = vld [vmem:[%s0 + $0x16c] sm:$0xf]
  %v104 = vld [vmem:[%s0 + $0x170] sm:$0xf]
  %v105 = vld [vmem:[%s0 + $0x174] sm:$0xf]
  %v106 = vld [vmem:[%s0 + $0x178] sm:$0xf]
  %v107 = vld [vmem:[%s0 + $0x17c] sm:$0xf]
  %v108 = vld [vmem:[%s0 + $0x180] sm:$0xf]
  %v109 = vld [vmem:[%s0 + $0x184] sm:$0xf]
  %v110 = vld [vmem:[%s0 + $0x188] sm:$0xf]
  %v111 = vld [vmem:[%s0 + $0x18c] sm:$0xf]
  %v112 = vld [vmem:[%s0 + $0x190] sm:$0xf]
  %v113 = vld [vmem:[%s0 + $0x194] sm:$0xf]
  %v114 = vld [vmem:[%s0 + $0x198] sm:$0xf]
  %v115 = vld [vmem:[%s0 + $0x19c] sm:$0xf]
  %v116 = vld [vmem:[%s0 + $0x1a0] sm:$0xf]
  %v117 = vld [vmem:[%s0 + $0x1a4] sm:$0xf]
  %v118 = vld [vmem:[%s0 + $0x1a8] sm:$0xf]
  %v119 = vld [vmem:[%s0 + $0x1ac] sm:$0xf]
  %v120 = vld [vmem:[%s0 + $0x1b0] sm:$0xf]
  %v121 = vld [vmem:[%s0 + $0x1b4] sm:$0xf]
  %v122 = vld [vmem:[%s0 + $0x1b8] sm:$0xf]
  %v123 = vld [vmem:[%s0 + $0x1bc] sm:$0xf]
  %v124 = vld [vmem:[%s0 + $0x1c0] sm:$0xf]
  %v125 = vld [vmem:[%s0 + $0x1c4] sm:$0xf]
  %v126 = vld [vmem:[%s0 + $0x1c8] sm:$0xf]
  %v127 = vld [vmem:[%s0 + $0x1cc] sm:$0xf]
  %v128 = vld [vmem:[%s0 + $0x1d0] sm:$0xf]
  %v129 = vld [vmem:[%s0 + $0x1d4] sm:$0xf]
  %v130 = vld [vmem:[%s0 + $0x1d8] sm:$0xf]
  %v131 = vld [vmem:[%s0 + $0x1dc] sm:$0xf]
  %v132 = vld [vmem:[%s0 + $0x1e0] sm:$0xf]
  %v133 = vld [vmem:[%s0 + $0x1e4] sm:$0xf]
  %v134 = vld [vmem:[%s0 + $0x1e8] sm:$0xf]
  %v135 = vld [vmem:[%s0 + $0x1ec] sm:$0xf]
  %v136 = vld [vmem:[%s0 + $0x1f0] sm:$0xf]
  %v137 = vld [vmem:[%s0 + $0x1f4] sm:$0xf]
  %v138 = vld [vmem:[%s0 + $0x1f8] sm:$0xf]
  %v139 = vld [vmem:[%s0 + $0x1fc] sm:$0xf]
  %v140 = vld [vmem:[%s0 + $0x200] sm:$0xf]
  %v141 = vld [vmem:[%s0 + $0x204] sm:$0xf]
  %v142 = vld [vmem:[%s0 + $0x208] sm:$0xf]
  %v143 = vld [vmem:[%s0 + $0x20c] sm:$0xf]
  %v144 = vld [vmem:[%s0 + $0x210] sm:$0xf]
  %v145 = vld [vmem:[%s0 + $0x214] sm:$0xf]
  %v146 = vld [vmem:[%s0 + $0x218] sm:$0xf]
  %v147 = vld [vmem:[%s0 + $0x21c] sm:$0xf]
  %v148 = vld [vmem:[%s0 + $0x220] sm:$0xf]
  %v149 = vld [vmem:[%s0 + $0x224] sm:$0xf]
  %v150 = vld [vmem:[%s0 + $0x228] sm:$0xf]
  %v151 = vld [vmem:[%s0 + $0x22c] sm:$0xf]
  %v152 = vld [vmem:[%s0 + $0x230] sm:$0xf]
  %v153 = vld [vmem:[%s0 + $0x234] sm:$0xf]
  %v154 = vld [vmem:[%s0 + $0x238] sm:$0xf]
  %v155 = vld [vmem:[%s0 + $0x23c] sm:$0xf]
  %v156 = vld [vmem:[%s0 + $0x240] sm:$0xf]
  %v157 = vld [vmem:[%s0 + $0x244] sm:$0xf]
  %v158 = vld [vmem:[%s0 + $0x248] sm:$0xf]
  %v159 = vld [vmem:[%s0 + $0x24c] sm:$0xf]
  %v160 = vld [vmem:[%s0 + $0x250] sm:$0xf]
  %v161 = vld [vmem:[%s0 + $0x254] sm:$0xf]
  %v162 = vld [vmem:[%s0 + $0x258] sm:$0xf]
  %v163 = vld [vmem:[%s0 + $0x25c] sm:$0xf]
  %v164 = vld [vmem:[%s0 + $0x260] sm:$0xf]
  %v165 = vld [vmem:[%s0 + $0x264] sm:$0xf]
  %v166 = vld [vmem:[%s0 + $0x268] sm:$0xf]
  %v167 = vld [vmem:[%s0 + $0x26c] sm:$0xf]
  %v168 = vld [vmem:[%s0 + $0x270] sm:$0xf]
  %v169 = vld [vmem:[%s0 + $0x274] sm:$0xf]
  %v170 = vld [vmem:[%s0 + $0x278] sm:$0xf]
  %v171 = vld [vmem:[%s0 + $0x27c] sm:$0xf]
  %v172 = vld [vmem:[%s0 + $0x280] sm:$0xf]
  %v173 = vld [vmem:[%s0 + $0x284] sm:$0xf]
  %v174 = vld [vmem:[%s0 + $0x288] sm:$0xf]
  %v175 = vld [vmem:[%s0 + $0x28c] sm:$0xf]
  %v176 = vld [vmem:[%s0 + $0x290] sm:$0xf]
  %v177 = vld [vmem:[%s0 + $0x294] sm:$0xf]
  %v178 = vld [vmem:[%s0 + $0x298] sm:$0xf]
  %v179 = vld [vmem:[%s0 + $0x29c] sm:$0xf]
  %v180 = vld [vmem:[%s0 + $0x2a0] sm:$0xf]
  %v181 = vld [vmem:[%s0 + $0x2a4] sm:$0xf]
  %v182 = vld [vmem:[%s0 + $0x2a8] sm:$0xf]
  %v183 = vld [vmem:[%s0 + $0x2ac] sm:$0xf]
  %v184 = vld [vmem:[%s0 + $0x2b0] sm:$0xf]
  %v185 = vld [vmem:[%s0 + $0x2b4] sm:$0xf]
  %v186 = vld [vmem:[%s0 + $0x2b8] sm:$0xf]
  %v187 = vld [vmem:[%s0 + $0x2bc] sm:$0xf]
  %v188 = vld [vmem:[%s0 + $0x2c0] sm:$0xf]
  %v189 = vld [vmem:[%s0 + $0x2c4] sm:$0xf]
  %v190 = vld [vmem:[%s0 + $0x2c8] sm:$0xf]
  %v191 = vld [vmem:[%s0 + $0x2cc] sm:$0xf]
  %v192 = vld [vmem:[%s0 + $0x2d0] sm:$0xf]
  %v193 = vld [vmem:[%s0 + $0x2d4] sm:$0xf]
  %v194 = vld [vmem:[%s0 + $0x2d8] sm:$0xf]
  %v195 = vld [vmem:[%s0 + $0x2dc] sm:$0xf]
  %v196 = vld [vmem:[%s0 + $0x2e0] sm:$0xf]
  %v197 = vld [vmem:[%s0 + $0x2e4] sm:$0xf]
  %v198 = vld [vmem:[%s0 + $0x2e8] sm:$0xf]
  %v199 = vld [vmem:[%s0 + $0x2ec] sm:$0xf]
  %v200 = vld [vmem:[%s0 + $0x2f0] sm:$0xf]
  %v201 = vld [vmem:[%s0 + $0x2f4] sm:$0xf]
  %v202 = vld [vmem:[%s0 + $0x2f8] sm:$0xf]
  %v203 = vld [vmem:[%s0 + $0x2fc] sm:$0xf]
  %v204 = vld [vmem:[%s0 + $0x300] sm:$0xf]
  %v205 = vld [vmem:[%s0 + $0x304] sm:$0xf]
  %v206 = vld [vmem:[%s0 + $0x308] sm:$0xf]
  %v207 = vld [vmem:[%s0 + $0x30c] sm:$0xf]
  %v208 = vld [vmem:[%s1] sm:$0xf]
  %v209 = vld [vmem:[%s1 + $0x4] sm:$0xf]
  %v210 = vld [vmem:[%s1 + $0x8] sm:$0xf]
  %v211 = vld [vmem:[%s1 + $0xc] sm:$0xf]
  %v212 = vld [vmem:[%s1 + $0x10] sm:$0xf]
  %v213 = vld [vmem:[%s1 + $0x14] sm:$0xf]
  %v214 = vld [vmem:[%s1 + $0x18] sm:$0xf]
  %v215 = vld [vmem:[%s1 + $0x1c] sm:$0xf]
  %v216 = vld [vmem:[%s1 + $0x20] sm:$0xf]
  %v217 = vld [vmem:[%s1 + $0x24] sm:$0xf]
  %v218 = vld [vmem:[%s1 + $0x28] sm:$0xf]
  %v219 = vld [vmem:[%s1 + $0x2c] sm:$0xf]
  %v220 = vld [vmem:[%s1 + $0x30] sm:$0xf]
  %v221 = vld [vmem:[%s1 + $0x34] sm:$0x3]
  %v418 = vunpack.c.l.b16 %v12
  %v419 = vunpack.c.l.b16 %v13
  %v420 = vunpack.c.l.b16 %v14
  %v421 = vunpack.c.l.b16 %v15
  %v422 = vunpack.c.l.b16 %v16
  %v423 = vunpack.c.l.b16 %v17
  %v424 = vunpack.c.l.b16 %v18
  %v425 = vunpack.c.l.b16 %v19
  %v426 = vunpack.c.l.b16 %v20
  %v427 = vunpack.c.l.b16 %v21
  %v428 = vunpack.c.l.b16 %v22
  %v429 = vunpack.c.l.b16 %v23
  %v430 = vunpack.c.l.b16 %v24
  %v431 = vunpack.c.l.b16 %v25
  %v432 = vunpack.c.l.b16 %v26
  %v433 = vunpack.c.l.b16 %v27
  %v434 = vunpack.c.l.b16 %v28
  %v435 = vunpack.c.l.b16 %v29
  %v436 = vunpack.c.l.b16 %v30
  %v437 = vunpack.c.l.b16 %v31
  %v438 = vunpack.c.l.b16 %v32
  %v439 = vunpack.c.l.b16 %v33
  %v440 = vunpack.c.l.b16 %v34
  %v441 = vunpack.c.l.b16 %v35
  %v442 = vunpack.c.l.b16 %v36
  %v443 = vunpack.c.l.b16 %v37
  %v444 = vunpack.c.l.b16 %v38
  %v445 = vunpack.c.l.b16 %v39
  %v446 = vunpack.c.l.b16 %v40
  %v447 = vunpack.c.l.b16 %v41
  %v448 = vunpack.c.l.b16 %v42
  %v449 = vunpack.c.l.b16 %v43
  %v450 = vunpack.c.l.b16 %v44
  %v451 = vunpack.c.l.b16 %v45
  %v452 = vunpack.c.l.b16 %v46
  %v453 = vunpack.c.l.b16 %v47
  %v454 = vunpack.c.l.b16 %v48
  %v455 = vunpack.c.l.b16 %v49
  %v456 = vunpack.c.l.b16 %v50
  %v457 = vunpack.c.l.b16 %v51
  %v458 = vunpack.c.l.b16 %v52
  %v459 = vunpack.c.l.b16 %v53
  %v460 = vunpack.c.l.b16 %v54
  %v461 = vunpack.c.l.b16 %v55
  %v462 = vunpack.c.l.b16 %v56
  %v463 = vunpack.c.l.b16 %v57
  %v464 = vunpack.c.l.b16 %v58
  %v465 = vunpack.c.l.b16 %v59
  %v466 = vunpack.c.l.b16 %v60
  %v467 = vunpack.c.l.b16 %v61
  %v468 = vunpack.c.l.b16 %v62
  %v469 = vunpack.c.l.b16 %v63
  %v470 = vunpack.c.l.b16 %v64
  %v471 = vunpack.c.l.b16 %v65
  %v472 = vunpack.c.l.b16 %v66
  %v473 = vunpack.c.l.b16 %v67
  %v474 = vunpack.c.l.b16 %v68
  %v475 = vunpack.c.l.b16 %v69
  %v476 = vunpack.c.l.b16 %v70
  %v477 = vunpack.c.l.b16 %v71
  %v478 = vunpack.c.l.b16 %v72
  %v479 = vunpack.c.l.b16 %v73
  %v480 = vunpack.c.l.b16 %v74
  %v481 = vunpack.c.l.b16 %v75
  %v482 = vunpack.c.l.b16 %v76
  %v483 = vunpack.c.l.b16 %v77
  %v484 = vunpack.c.l.b16 %v78
  %v485 = vunpack.c.l.b16 %v79
  %v486 = vunpack.c.l.b16 %v80
  %v487 = vunpack.c.l.b16 %v81
  %v488 = vunpack.c.l.b16 %v82
  %v489 = vunpack.c.l.b16 %v83
  %v490 = vunpack.c.l.b16 %v84
  %v491 = vunpack.c.l.b16 %v85
  %v492 = vunpack.c.l.b16 %v86
  %v493 = vunpack.c.l.b16 %v87
  %v494 = vunpack.c.l.b16 %v88
  %v495 = vunpack.c.l.b16 %v89
  %v496 = vunpack.c.l.b16 %v90
  %v497 = vunpack.c.l.b16 %v91
  %v498 = vunpack.c.l.b16 %v92
  %v499 = vunpack.c.l.b16 %v93
  %v500 = vunpack.c.l.b16 %v94
  %v501 = vunpack.c.l.b16 %v95
  %v502 = vunpack.c.l.b16 %v96
  %v503 = vunpack.c.l.b16 %v97
  %v504 = vunpack.c.l.b16 %v98
  %v505 = vunpack.c.l.b16 %v99
  %v506 = vunpack.c.l.b16 %v100
  %v507 = vunpack.c.l.b16 %v101
  %v508 = vunpack.c.l.b16 %v102
  %v509 = vunpack.c.l.b16 %v103
  %v510 = vunpack.c.l.b16 %v104
  %v511 = vunpack.c.l.b16 %v105
  %v512 = vunpack.c.l.b16 %v106
  %v513 = vunpack.c.l.b16 %v107
  %v514 = vunpack.c.l.b16 %v108
  %v515 = vunpack.c.l.b16 %v109
  %v516 = vunpack.c.l.b16 %v110
  %v517 = vunpack.c.l.b16 %v111
  %v518 = vunpack.c.l.b16 %v112
  %v519 = vunpack.c.l.b16 %v113
  %v520 = vunpack.c.l.b16 %v114
  %v521 = vunpack.c.l.b16 %v115
  %v522 = vunpack.c.l.b16 %v116
  %v523 = vunpack.c.l.b16 %v117
  %v524 = vunpack.c.l.b16 %v118
  %v525 = vunpack.c.l.b16 %v119
  %v526 = vunpack.c.l.b16 %v120
  %v527 = vunpack.c.l.b16 %v121
  %v528 = vunpack.c.l.b16 %v122
  %v529 = vunpack.c.l.b16 %v123
  %v530 = vunpack.c.l.b16 %v124
  %v531 = vunpack.c.l.b16 %v125
  %v532 = vunpack.c.l.b16 %v126
  %v533 = vunpack.c.l.b16 %v127
  %v534 = vunpack.c.l.b16 %v128
  %v535 = vunpack.c.l.b16 %v129
  %v536 = vunpack.c.l.b16 %v130
  %v537 = vunpack.c.l.b16 %v131
  %v538 = vunpack.c.l.b16 %v132
  %v539 = vunpack.c.l.b16 %v133
  %v540 = vunpack.c.l.b16 %v134
  %v541 = vunpack.c.l.b16 %v135
  %v542 = vunpack.c.l.b16 %v136
  %v543 = vunpack.c.l.b16 %v137
  %v544 = vunpack.c.l.b16 %v138
  %v545 = vunpack.c.l.b16 %v139
  %v546 = vunpack.c.l.b16 %v140
  %v547 = vunpack.c.l.b16 %v141
  %v548 = vunpack.c.l.b16 %v142
  %v549 = vunpack.c.l.b16 %v143
  %v550 = vunpack.c.l.b16 %v144
  %v551 = vunpack.c.l.b16 %v145
  %v552 = vunpack.c.l.b16 %v146
  %v553 = vunpack.c.l.b16 %v147
  %v554 = vunpack.c.l.b16 %v148
  %v555 = vunpack.c.l.b16 %v149
  %v556 = vunpack.c.l.b16 %v150
  %v557 = vunpack.c.l.b16 %v151
  %v558 = vunpack.c.l.b16 %v152
  %v559 = vunpack.c.l.b16 %v153
  %v560 = vunpack.c.l.b16 %v154
  %v561 = vunpack.c.l.b16 %v155
  %v562 = vunpack.c.l.b16 %v156
  %v563 = vunpack.c.l.b16 %v157
  %v564 = vunpack.c.l.b16 %v158
  %v565 = vunpack.c.l.b16 %v159
  %v566 = vunpack.c.l.b16 %v160
  %v567 = vunpack.c.l.b16 %v161
  %v568 = vunpack.c.l.b16 %v162
  %v569 = vunpack.c.l.b16 %v163
  %v570 = vunpack.c.l.b16 %v164
  %v571 = vunpack.c.l.b16 %v165
  %v572 = vunpack.c.l.b16 %v166
  %v573 = vunpack.c.l.b16 %v167
  %v574 = vunpack.c.l.b16 %v168
  %v575 = vunpack.c.l.b16 %v169
  %v576 = vunpack.c.l.b16 %v170
  %v577 = vunpack.c.l.b16 %v171
  %v578 = vunpack.c.l.b16 %v172
  %v579 = vunpack.c.l.b16 %v173
  %v580 = vunpack.c.l.b16 %v174
  %v581 = vunpack.c.l.b16 %v175
  %v582 = vunpack.c.l.b16 %v176
  %v583 = vunpack.c.l.b16 %v177
  %v584 = vunpack.c.l.b16 %v178
  %v585 = vunpack.c.l.b16 %v179
  %v586 = vunpack.c.l.b16 %v180
  %v587 = vunpack.c.l.b16 %v181
  %v588 = vunpack.c.l.b16 %v182
  %v589 = vunpack.c.l.b16 %v183
  %v590 = vunpack.c.l.b16 %v184
  %v591 = vunpack.c.l.b16 %v185
  %v592 = vunpack.c.l.b16 %v186
  %v593 = vunpack.c.l.b16 %v187
  %v594 = vunpack.c.l.b16 %v188
  %v595 = vunpack.c.l.b16 %v189
  %v596 = vunpack.c.l.b16 %v190
  %v597 = vunpack.c.l.b16 %v191
  %v598 = vunpack.c.l.b16 %v192
  %v599 = vunpack.c.l.b16 %v193
  %v600 = vunpack.c.l.b16 %v194
  %v601 = vunpack.c.l.b16 %v195
  %v602 = vunpack.c.l.b16 %v196
  %v603 = vunpack.c.l.b16 %v197
  %v604 = vunpack.c.l.b16 %v198
  %v605 = vunpack.c.l.b16 %v199
  %v606 = vunpack.c.l.b16 %v200
  %v607 = vunpack.c.l.b16 %v201
  %v608 = vunpack.c.l.b16 %v202
  %v609 = vunpack.c.l.b16 %v203
  %v610 = vunpack.c.l.b16 %v204
  %v611 = vunpack.c.l.b16 %v205
  %v612 = vunpack.c.l.b16 %v206
  %v613 = vunpack.c.l.b16 %v207
  %v614 = vpack.c.b16 %v419, %v418
  %v615 = vpack.c.b16 %v421, %v420
  %v616 = vpack.c.b16 %v423, %v422
  %v617 = vpack.c.b16 %v425, %v424
  %v618 = vpack.c.b16 %v427, %v426
  %v619 = vpack.c.b16 %v429, %v428
  %v620 = vpack.c.b16 %v431, %v430
  %v621 = vpack.c.b16 %v433, %v432
  %v622 = vpack.c.b16 %v435, %v434
  %v623 = vpack.c.b16 %v437, %v436
  %v624 = vpack.c.b16 %v439, %v438
  %v625 = vpack.c.b16 %v441, %v440
  %v626 = vpack.c.b16 %v443, %v442
  %v627 = vpack.c.b16 %v445, %v444
  %v628 = vpack.c.b16 %v447, %v446
  %v629 = vpack.c.b16 %v449, %v448
  %v630 = vpack.c.b16 %v451, %v450
  %v631 = vpack.c.b16 %v453, %v452
  %v632 = vpack.c.b16 %v455, %v454
  %v633 = vpack.c.b16 %v457, %v456
  %v634 = vpack.c.b16 %v459, %v458
  %v635 = vpack.c.b16 %v461, %v460
  %v636 = vpack.c.b16 %v463, %v462
  %v637 = vpack.c.b16 %v465, %v464
  %v638 = vpack.c.b16 %v467, %v466
  %v639 = vpack.c.b16 %v469, %v468
  %v640 = vpack.c.b16 %v471, %v470
  %v641 = vpack.c.b16 %v473, %v472
  %v642 = vpack.c.b16 %v475, %v474
  %v643 = vpack.c.b16 %v477, %v476
  %v644 = vpack.c.b16 %v479, %v478
  %v645 = vpack.c.b16 %v481, %v480
  %v646 = vpack.c.b16 %v483, %v482
  %v647 = vpack.c.b16 %v485, %v484
  %v648 = vpack.c.b16 %v487, %v486
  %v649 = vpack.c.b16 %v489, %v488
  %v650 = vpack.c.b16 %v491, %v490
  %v651 = vpack.c.b16 %v493, %v492
  %v652 = vpack.c.b16 %v495, %v494
  %v653 = vpack.c.b16 %v497, %v496
  %v654 = vpack.c.b16 %v499, %v498
  %v655 = vpack.c.b16 %v501, %v500
  %v656 = vpack.c.b16 %v503, %v502
  %v657 = vpack.c.b16 %v505, %v504
  %v658 = vpack.c.b16 %v507, %v506
  %v659 = vpack.c.b16 %v509, %v508
  %v660 = vpack.c.b16 %v511, %v510
  %v661 = vpack.c.b16 %v513, %v512
  %v662 = vpack.c.b16 %v515, %v514
  %v663 = vpack.c.b16 %v517, %v516
  %v664 = vpack.c.b16 %v519, %v518
  %v665 = vpack.c.b16 %v521, %v520
  %v666 = vpack.c.b16 %v523, %v522
  %v667 = vpack.c.b16 %v525, %v524
  %v668 = vpack.c.b16 %v527, %v526
  %v669 = vpack.c.b16 %v529, %v528
  %v670 = vpack.c.b16 %v531, %v530
  %v671 = vpack.c.b16 %v533, %v532
  %v672 = vpack.c.b16 %v535, %v534
  %v673 = vpack.c.b16 %v537, %v536
  %v674 = vpack.c.b16 %v539, %v538
  %v675 = vpack.c.b16 %v541, %v540
  %v676 = vpack.c.b16 %v543, %v542
  %v677 = vpack.c.b16 %v545, %v544
  %v678 = vpack.c.b16 %v547, %v546
  %v679 = vpack.c.b16 %v549, %v548
  %v680 = vpack.c.b16 %v551, %v550
  %v681 = vpack.c.b16 %v553, %v552
  %v682 = vpack.c.b16 %v555, %v554
  %v683 = vpack.c.b16 %v557, %v556
  %v684 = vpack.c.b16 %v559, %v558
  %v685 = vpack.c.b16 %v561, %v560
  %v686 = vpack.c.b16 %v563, %v562
  %v687 = vpack.c.b16 %v565, %v564
  %v688 = vpack.c.b16 %v567, %v566
  %v689 = vpack.c.b16 %v569, %v568
  %v690 = vpack.c.b16 %v571, %v570
  %v691 = vpack.c.b16 %v573, %v572
  %v692 = vpack.c.b16 %v575, %v574
  %v693 = vpack.c.b16 %v577, %v576
  %v694 = vpack.c.b16 %v579, %v578
  %v695 = vpack.c.b16 %v581, %v580
  %v696 = vpack.c.b16 %v583, %v582
  %v697 = vpack.c.b16 %v585, %v584
  %v698 = vpack.c.b16 %v587, %v586
  %v699 = vpack.c.b16 %v589, %v588
  %v700 = vpack.c.b16 %v591, %v590
  %v701 = vpack.c.b16 %v593, %v592
  %v702 = vpack.c.b16 %v595, %v594
  %v703 = vpack.c.b16 %v597, %v596
  %v704 = vpack.c.b16 %v599, %v598
  %v705 = vpack.c.b16 %v601, %v600
  %v706 = vpack.c.b16 %v603, %v602
  %v707 = vpack.c.b16 %v605, %v604
  %v708 = vpack.c.b16 %v607, %v606
  %v709 = vpack.c.b16 %v609, %v608
  %v710 = vpack.c.b16 %v611, %v610
  %v711 = vpack.c.b16 %v613, %v612
  %v726 = vunpack.c.l.b16 %v208
  %v727 = vunpack.c.l.b16 %v209
  %v728 = vunpack.c.l.b16 %v210
  %v729 = vunpack.c.l.b16 %v211
  %v730 = vunpack.c.l.b16 %v212
  %v731 = vunpack.c.l.b16 %v213
  %v732 = vunpack.c.l.b16 %v214
  %v733 = vunpack.c.l.b16 %v215
  %v734 = vunpack.c.l.b16 %v216
  %v735 = vunpack.c.l.b16 %v217
  %v736 = vunpack.c.l.b16 %v218
  %v737 = vunpack.c.l.b16 %v219
  %v738 = vunpack.c.l.b16 %v220
  %v739 = vunpack.c.l.b16 %v221
  %v740 = vpack.c.b16 %v727, %v726
  %v741 = vpack.c.b16 %v729, %v728
  %v742 = vpack.c.b16 %v731, %v730
  %v743 = vpack.c.b16 %v733, %v732
  %v744 = vpack.c.b16 %v735, %v734
  %v745 = vpack.c.b16 %v737, %v736
  %v746 = vpack.c.b16 %v739, %v738
  %vm753 = vcmask 883712
  %v755 = vsel %vm753, %v614, 0
  %v758 = vsel %vm753, %v615, 0
  %v761 = vsel %vm753, %v616, 0
  %v764 = vsel %vm753, %v617, 0
  %v767 = vsel %vm753, %v618, 0
  %v770 = vsel %vm753, %v619, 0
  %v773 = vsel %vm753, %v620, 0
  %v776 = vsel %vm753, %v621, 0
  %v779 = vsel %vm753, %v622, 0
  %v782 = vsel %vm753, %v623, 0
  %v785 = vsel %vm753, %v624, 0
  %v788 = vsel %vm753, %v625, 0
  %v791 = vsel %vm753, %v626, 0
  %v794 = vsel %vm753, %v627, 0
  %v797 = vsel %vm753, %v628, 0
  %v800 = vsel %vm753, %v629, 0
  %v803 = vsel %vm753, %v630, 0
  %v806 = vsel %vm753, %v631, 0
  %v809 = vsel %vm753, %v632, 0
  %v812 = vsel %vm753, %v633, 0
  %v815 = vsel %vm753, %v634, 0
  %v818 = vsel %vm753, %v635, 0
  %v821 = vsel %vm753, %v636, 0
  %v824 = vsel %vm753, %v637, 0
  %v827 = vsel %vm753, %v638, 0
  %v830 = vsel %vm753, %v639, 0
  %v833 = vsel %vm753, %v640, 0
  %v836 = vsel %vm753, %v641, 0
  %v839 = vsel %vm753, %v642, 0
  %v842 = vsel %vm753, %v643, 0
  %v845 = vsel %vm753, %v644, 0
  %v848 = vsel %vm753, %v645, 0
  %v851 = vsel %vm753, %v646, 0
  %v854 = vsel %vm753, %v647, 0
  %v857 = vsel %vm753, %v648, 0
  %v860 = vsel %vm753, %v649, 0
  %v863 = vsel %vm753, %v650, 0
  %v866 = vsel %vm753, %v651, 0
  %v869 = vsel %vm753, %v652, 0
  %v872 = vsel %vm753, %v653, 0
  %v875 = vsel %vm753, %v654, 0
  %v878 = vsel %vm753, %v655, 0
  %v881 = vsel %vm753, %v656, 0
  %v884 = vsel %vm753, %v657, 0
  %v887 = vsel %vm753, %v658, 0
  %v890 = vsel %vm753, %v659, 0
  %v893 = vsel %vm753, %v660, 0
  %v896 = vsel %vm753, %v661, 0
  %v899 = vsel %vm753, %v662, 0
  %v902 = vsel %vm753, %v663, 0
  %v905 = vsel %vm753, %v664, 0
  %v908 = vsel %vm753, %v665, 0
  %v911 = vsel %vm753, %v666, 0
  %v914 = vsel %vm753, %v667, 0
  %v917 = vsel %vm753, %v668, 0
  %v920 = vsel %vm753, %v669, 0
  %v923 = vsel %vm753, %v670, 0
  %v926 = vsel %vm753, %v671, 0
  %v929 = vsel %vm753, %v672, 0
  %v932 = vsel %vm753, %v673, 0
  %v935 = vsel %vm753, %v674, 0
  %v938 = vsel %vm753, %v675, 0
  %v941 = vsel %vm753, %v676, 0
  %v944 = vsel %vm753, %v677, 0
  %v947 = vsel %vm753, %v678, 0
  %v950 = vsel %vm753, %v679, 0
  %v953 = vsel %vm753, %v680, 0
  %v956 = vsel %vm753, %v681, 0
  %v959 = vsel %vm753, %v682, 0
  %v962 = vsel %vm753, %v683, 0
  %v965 = vsel %vm753, %v684, 0
  %v968 = vsel %vm753, %v685, 0
  %v971 = vsel %vm753, %v686, 0
  %v974 = vsel %vm753, %v687, 0
  %v977 = vsel %vm753, %v688, 0
  %v980 = vsel %vm753, %v689, 0
  %v983 = vsel %vm753, %v690, 0
  %v986 = vsel %vm753, %v691, 0
  %v989 = vsel %vm753, %v692, 0
  %v992 = vsel %vm753, %v693, 0
  %v995 = vsel %vm753, %v694, 0
  %v998 = vsel %vm753, %v695, 0
  %v1001 = vsel %vm753, %v696, 0
  %v1004 = vsel %vm753, %v697, 0
  %v1007 = vsel %vm753, %v698, 0
  %v1010 = vsel %vm753, %v699, 0
  %v1013 = vsel %vm753, %v700, 0
  %v1016 = vsel %vm753, %v701, 0
  %v1019 = vsel %vm753, %v702, 0
  %v1022 = vsel %vm753, %v703, 0
  %v1025 = vsel %vm753, %v704, 0
  %v1028 = vsel %vm753, %v705, 0
  %v1031 = vsel %vm753, %v706, 0
  %v1034 = vsel %vm753, %v707, 0
  %v1037 = vsel %vm753, %v708, 0
  %v1040 = vsel %vm753, %v709, 0
  %v1043 = vsel %vm753, %v710, 0
  %v1046 = vsel %vm753, %v711, 0
  %vm1048 = vcmask 1045504
  %v1050 = vsel %vm1048, %v746, 0
  %1052 = vmatprep.subr.bf16.mxu0 0
  %1053 = vmatpush1.bf16.msra.mxu0 %v740
  %1054 = vmatprep.subr.bf16.mxu0 0
  %1055 = vmatpush1.bf16.msra.mxu0 %v741
  %1056 = vmatprep.subr.bf16.mxu0 0
  %1057 = vmatpush1.bf16.msra.mxu0 %v742
  %1058 = vmatprep.subr.bf16.mxu0 0
  %1059 = vmatpush1.bf16.msra.mxu0 %v743
  %1060 = vmatprep.subr.bf16.mxu0 0
  %1061 = vmatpush1.bf16.msra.mxu0 %v744
  %1062 = vmatprep.subr.bf16.mxu0 0
  %1063 = vmatpush1.bf16.msra.mxu0 %v745
  %1064 = vmatprep.subr.bf16.mxu0 0
  %1065 = vmatpush1.bf16.msra.mxu0 %v1050
  %1066 = vmatprep.subr.bf16.mxu0 0
  %1067 = vmatpush1.bf16.msra.mxu0 0
  %1068 = vmatprep.subr.bf16.mxu0 0
  %1069 = vmatpush1.bf16.msra.mxu0 0
  %1070 = vmatprep.subr.bf16.mxu0 0
  %1071 = vmatpush1.bf16.msra.mxu0 0
  %1072 = vmatprep.subr.bf16.mxu0 0
  %1073 = vmatpush1.bf16.msra.mxu0 0
  %1074 = vmatprep.subr.bf16.mxu0 0
  %1075 = vmatpush1.bf16.msra.mxu0 0
  %1076 = vmatprep.subr.bf16.mxu0 0
  %1077 = vmatpush1.bf16.msra.mxu0 0
  %1078 = vmatprep.subr.bf16.mxu0 0
  %1079 = vmatpush1.bf16.msra.mxu0 0
  %1080 = vmatprep.subr.bf16.mxu0 0
  %1081 = vmatpush1.bf16.msra.mxu0 0
  %1082 = vmatprep.subr.bf16.mxu0 0
  %1083 = vmatpush1.bf16.msra.mxu0 0
  %1084 = vmatprep.mubr.bf16.mxu0 0
  %1085 = vmatmul.mubr.bf16.gmra.mrb[0].mxu0 %v755
  %v1086 = vpop.f32.mrb[0].mxu0
  %v1087 = vadd.f32 0.0, %v1086
  %v1088 = vpop.f32.mrb[0].mxu0
  %v1089 = vpop.f32.mrb[0].mxu0
  %v1090 = vadd.f32 0.0, %v1089
  %v1091 = vpop.f32.mrb[0].mxu0
  %1092 = vmatprep.mubr.bf16.mxu0 0
  %1093 = vmatmul.mubr.bf16.gmra.mrb[0].mxu0 %v758
  %v1094 = vpop.f32.mrb[0].mxu0
  %v1095 = vadd.f32 0.0, %v1094
  %v1096 = vpop.f32.mrb[0].mxu0
  %v1097 = vpop.f32.mrb[0].mxu0
  %v1098 = vadd.f32 0.0, %v1097
  %v1099 = vpop.f32.mrb[0].mxu0
  %1100 = vmatprep.mubr.bf16.mxu0 0
  %1101 = vmatmul.mubr.bf16.gmra.mrb[0].mxu0 %v761
  %v1102 = vpop.f32.mrb[0].mxu0
  %v1103 = vadd.f32 0.0, %v1102
  %v1104 = vpop.f32.mrb[0].mxu0
  %v1105 = vpop.f32.mrb[0].mxu0
  %v1106 = vadd.f32 0.0, %v1105
  %v1107 = vpop.f32.mrb[0].mxu0
  %1108 = vmatprep.mubr.bf16.mxu0 0
  %1109 = vmatmul.mubr.bf16.gmra.mrb[0].mxu0 %v764
  %v1110 = vpop.f32.mrb[0].mxu0
  %v1111 = vadd.f32 0.0, %v1110
  %v1112 = vpop.f32.mrb[0].mxu0
  %v1113 = vpop.f32.mrb[0].mxu0
  %v1114 = vadd.f32 0.0, %v1113
  %v1115 = vpop.f32.mrb[0].mxu0
  %1116 = vmatprep.mubr.bf16.mxu0 0
  %1117 = vmatmul.mubr.bf16.gmra.mrb[0].mxu0 %v767
  %v1118 = vpop.f32.mrb[0].mxu0
  %v1119 = vadd.f32 0.0, %v1118
  %v1120 = vpop.f32.mrb[0].mxu0
  %v1121 = vpop.f32.mrb[0].mxu0
  %v1122 = vadd.f32 0.0, %v1121
  %v1123 = vpop.f32.mrb[0].mxu0
  %1124 = vmatprep.mubr.bf16.mxu0 0
  %1125 = vmatmul.mubr.bf16.gmra.mrb[0].mxu0 %v770
  %v1126 = vpop.f32.mrb[0].mxu0
  %v1127 = vadd.f32 0.0, %v1126
  %v1128 = vpop.f32.mrb[0].mxu0
  %v1129 = vpop.f32.mrb[0].mxu0
  %v1130 = vadd.f32 0.0, %v1129
  %v1131 = vpop.f32.mrb[0].mxu0
  %1132 = vmatprep.mubr.bf16.mxu0 0
  %1133 = vmatmul.mubr.bf16.gmra.mrb[0].mxu0 %v773
  %v1134 = vpop.f32.mrb[0].mxu0
  %v1135 = vadd.f32 0.0, %v1134
  %v1136 = vpop.f32.mrb[0].mxu0
  %v1137 = vpop.f32.mrb[0].mxu0
  %v1138 = vadd.f32 0.0, %v1137
  %v1139 = vpop.f32.mrb[0].mxu0
  %1140 = vmatprep.mubr.bf16.mxu0 0
  %1141 = vmatmul.mubr.bf16.gmra.mrb[0].mxu0 %v776
  %v1142 = vpop.f32.mrb[0].mxu0
  %v1143 = vadd.f32 0.0, %v1142
  %v1144 = vpop.f32.mrb[0].mxu0
  %v1145 = vpop.f32.mrb[0].mxu0
  %v1146 = vadd.f32 0.0, %v1145
  %v1147 = vpop.f32.mrb[0].mxu0
  %1148 = vmatprep.mubr.bf16.mxu0 0
  %1149 = vmatmul.mubr.bf16.gmra.mrb[0].mxu0 %v779
  %v1150 = vpop.f32.mrb[0].mxu0
  %v1151 = vadd.f32 0.0, %v1150
  %v1152 = vpop.f32.mrb[0].mxu0
  %v1153 = vpop.f32.mrb[0].mxu0
  %v1154 = vadd.f32 0.0, %v1153
  %v1155 = vpop.f32.mrb[0].mxu0
  %1156 = vmatprep.mubr.bf16.mxu0 0
  %1157 = vmatmul.mubr.bf16.gmra.mrb[0].mxu0 %v782
  %v1158 = vpop.f32.mrb[0].mxu0
  %v1159 = vadd.f32 0.0, %v1158
  %v1160 = vpop.f32.mrb[0].mxu0
  %v1161 = vpop.f32.mrb[0].mxu0
  %v1162 = vadd.f32 0.0, %v1161
  %v1163 = vpop.f32.mrb[0].mxu0
  %1164 = vmatprep.mubr.bf16.mxu0 0
  %1165 = vmatmul.mubr.bf16.gmra.mrb[0].mxu0 %v785
  %v1166 = vpop.f32.mrb[0].mxu0
  %v1167 = vadd.f32 0.0, %v1166
  %v1168 = vpop.f32.mrb[0].mxu0
  %v1169 = vpop.f32.mrb[0].mxu0
  %v1170 = vadd.f32 0.0, %v1169
  %v1171 = vpop.f32.mrb[0].mxu0
  %1172 = vmatprep.mubr.bf16.mxu0 0
  %1173 = vmatmul.mubr.bf16.gmra.mrb[0].mxu0 %v788
  %v1174 = vpop.f32.mrb[0].mxu0
  %v1175 = vadd.f32 0.0, %v1174
  %v1176 = vpop.f32.mrb[0].mxu0
  %v1177 = vpop.f32.mrb[0].mxu0
  %v1178 = vadd.f32 0.0, %v1177
  %v1179 = vpop.f32.mrb[0].mxu0
  %1180 = vmatprep.mubr.bf16.mxu0 0
  %1181 = vmatmul.mubr.bf16.gmra.mrb[0].mxu0 %v791
  %v1182 = vpop.f32.mrb[0].mxu0
  %v1183 = vadd.f32 0.0, %v1182
  %v1184 = vpop.f32.mrb[0].mxu0
  %v1185 = vpop.f32.mrb[0].mxu0
  %v1186 = vadd.f32 0.0, %v1185
  %v1187 = vpop.f32.mrb[0].mxu0
  %1188 = vmatprep.mubr.bf16.mxu0 0
  %1189 = vmatmul.mubr.bf16.gmra.mrb[0].mxu0 %v794
  %v1190 = vpop.f32.mrb[0].mxu0
  %v1191 = vadd.f32 0.0, %v1190
  %v1192 = vpop.f32.mrb[0].mxu0
  %v1193 = vpop.f32.mrb[0].mxu0
  %v1194 = vadd.f32 0.0, %v1193
  %v1195 = vpop.f32.mrb[0].mxu0
  %1196 = vmatprep.mubr.bf16.mxu0 0
  %1197 = vmatmul.mubr.bf16.gmra.mrb[0].mxu0 %v797
  %v1198 = vpop.f32.mrb[0].mxu0
  %v1199 = vadd.f32 0.0, %v1198
  %v1200 = vpop.f32.mrb[0].mxu0
  %v1201 = vpop.f32.mrb[0].mxu0
  %v1202 = vadd.f32 0.0, %v1201
  %v1203 = vpop.f32.mrb[0].mxu0
  %1204 = vmatprep.mubr.bf16.mxu0 0
  %1205 = vmatmul.mubr.bf16.gmra.mrb[0].mxu0 %v800
  %v1206 = vpop.f32.mrb[0].mxu0
  %v1207 = vadd.f32 0.0, %v1206
  %v1208 = vpop.f32.mrb[0].mxu0
  %v1209 = vpop.f32.mrb[0].mxu0
  %v1210 = vadd.f32 0.0, %v1209
  %v1211 = vpop.f32.mrb[0].mxu0
  %1212 = vmatprep.mubr.bf16.mxu0 0
  %1213 = vmatmul.mubr.bf16.gmra.mrb[0].mxu0 %v803
  %v1214 = vpop.f32.mrb[0].mxu0
  %v1215 = vadd.f32 0.0, %v1214
  %v1216 = vpop.f32.mrb[0].mxu0
  %v1217 = vpop.f32.mrb[0].mxu0
  %v1218 = vadd.f32 0.0, %v1217
  %v1219 = vpop.f32.mrb[0].mxu0
  %1220 = vmatprep.mubr.bf16.mxu0 0
  %1221 = vmatmul.mubr.bf16.gmra.mrb[0].mxu0 %v806
  %v1222 = vpop.f32.mrb[0].mxu0
  %v1223 = vadd.f32 0.0, %v1222
  %v1224 = vpop.f32.mrb[0].mxu0
  %v1225 = vpop.f32.mrb[0].mxu0
  %v1226 = vadd.f32 0.0, %v1225
  %v1227 = vpop.f32.mrb[0].mxu0
  %1228 = vmatprep.mubr.bf16.mxu0 0
  %1229 = vmatmul.mubr.bf16.gmra.mrb[0].mxu0 %v809
  %v1230 = vpop.f32.mrb[0].mxu0
  %v1231 = vadd.f32 0.0, %v1230
  %v1232 = vpop.f32.mrb[0].mxu0
  %v1233 = vpop.f32.mrb[0].mxu0
  %v1234 = vadd.f32 0.0, %v1233
  %v1235 = vpop.f32.mrb[0].mxu0
  %1236 = vmatprep.mubr.bf16.mxu0 0
  %1237 = vmatmul.mubr.bf16.gmra.mrb[0].mxu0 %v812
  %v1238 = vpop.f32.mrb[0].mxu0
  %v1239 = vadd.f32 0.0, %v1238
  %v1240 = vpop.f32.mrb[0].mxu0
  %v1241 = vpop.f32.mrb[0].mxu0
  %v1242 = vadd.f32 0.0, %v1241
  %v1243 = vpop.f32.mrb[0].mxu0
  %1244 = vmatprep.mubr.bf16.mxu0 0
  %1245 = vmatmul.mubr.bf16.gmra.mrb[0].mxu0 %v815
  %v1246 = vpop.f32.mrb[0].mxu0
  %v1247 = vadd.f32 0.0, %v1246
  %v1248 = vpop.f32.mrb[0].mxu0
  %v1249 = vpop.f32.mrb[0].mxu0
  %v1250 = vadd.f32 0.0, %v1249
  %v1251 = vpop.f32.mrb[0].mxu0
  %1252 = vmatprep.mubr.bf16.mxu0 0
  %1253 = vmatmul.mubr.bf16.gmra.mrb[0].mxu0 %v818
  %v1254 = vpop.f32.mrb[0].mxu0
  %v1255 = vadd.f32 0.0, %v1254
  %v1256 = vpop.f32.mrb[0].mxu0
  %v1257 = vpop.f32.mrb[0].mxu0
  %v1258 = vadd.f32 0.0, %v1257
  %v1259 = vpop.f32.mrb[0].mxu0
  %1260 = vmatprep.mubr.bf16.mxu0 0
  %1261 = vmatmul.mubr.bf16.gmra.mrb[0].mxu0 %v821
  %v1262 = vpop.f32.mrb[0].mxu0
  %v1263 = vadd.f32 0.0, %v1262
  %v1264 = vpop.f32.mrb[0].mxu0
  %v1265 = vpop.f32.mrb[0].mxu0
  %v1266 = vadd.f32 0.0, %v1265
  %v1267 = vpop.f32.mrb[0].mxu0
  %1268 = vmatprep.mubr.bf16.mxu0 0
  %1269 = vmatmul.mubr.bf16.gmra.mrb[0].mxu0 %v824
  %v1270 = vpop.f32.mrb[0].mxu0
  %v1271 = vadd.f32 0.0, %v1270
  %v1272 = vpop.f32.mrb[0].mxu0
  %v1273 = vpop.f32.mrb[0].mxu0
  %v1274 = vadd.f32 0.0, %v1273
  %v1275 = vpop.f32.mrb[0].mxu0
  %1276 = vmatprep.mubr.bf16.mxu0 0
  %1277 = vmatmul.mubr.bf16.gmra.mrb[0].mxu0 %v827
  %v1278 = vpop.f32.mrb[0].mxu0
  %v1279 = vadd.f32 0.0, %v1278
  %v1280 = vpop.f32.mrb[0].mxu0
  %v1281 = vpop.f32.mrb[0].mxu0
  %v1282 = vadd.f32 0.0, %v1281
  %v1283 = vpop.f32.mrb[0].mxu0
  %1284 = vmatprep.mubr.bf16.mxu0 0
  %1285 = vmatmul.mubr.bf16.gmra.mrb[0].mxu0 %v830
  %v1286 = vpop.f32.mrb[0].mxu0
  %v1287 = vadd.f32 0.0, %v1286
  %v1288 = vpop.f32.mrb[0].mxu0
  %v1289 = vpop.f32.mrb[0].mxu0
  %v1290 = vadd.f32 0.0, %v1289
  %v1291 = vpop.f32.mrb[0].mxu0
  %1292 = vmatprep.mubr.bf16.mxu0 0
  %1293 = vmatmul.mubr.bf16.gmra.mrb[0].mxu0 %v833
  %v1294 = vpop.f32.mrb[0].mxu0
  %v1295 = vadd.f32 0.0, %v1294
  %v1296 = vpop.f32.mrb[0].mxu0
  %v1297 = vpop.f32.mrb[0].mxu0
  %v1298 = vadd.f32 0.0, %v1297
  %v1299 = vpop.f32.mrb[0].mxu0
  %1300 = vmatprep.mubr.bf16.mxu0 0
  %1301 = vmatmul.mubr.bf16.gmra.mrb[0].mxu0 %v836
  %v1302 = vpop.f32.mrb[0].mxu0
  %v1303 = vadd.f32 0.0, %v1302
  %v1304 = vpop.f32.mrb[0].mxu0
  %v1305 = vpop.f32.mrb[0].mxu0
  %v1306 = vadd.f32 0.0, %v1305
  %v1307 = vpop.f32.mrb[0].mxu0
  %1308 = vmatprep.mubr.bf16.mxu0 0
  %1309 = vmatmul.mubr.bf16.gmra.mrb[0].mxu0 %v839
  %v1310 = vpop.f32.mrb[0].mxu0
  %v1311 = vadd.f32 0.0, %v1310
  %v1312 = vpop.f32.mrb[0].mxu0
  %v1313 = vpop.f32.mrb[0].mxu0
  %v1314 = vadd.f32 0.0, %v1313
  %v1315 = vpop.f32.mrb[0].mxu0
  %1316 = vmatprep.mubr.bf16.mxu0 0
  %1317 = vmatmul.mubr.bf16.gmra.mrb[0].mxu0 %v842
  %v1318 = vpop.f32.mrb[0].mxu0
  %v1319 = vadd.f32 0.0, %v1318
  %v1320 = vpop.f32.mrb[0].mxu0
  %v1321 = vpop.f32.mrb[0].mxu0
  %v1322 = vadd.f32 0.0, %v1321
  %v1323 = vpop.f32.mrb[0].mxu0
  %1324 = vmatprep.mubr.bf16.mxu0 0
  %1325 = vmatmul.mubr.bf16.gmra.mrb[0].mxu0 %v845
  %v1326 = vpop.f32.mrb[0].mxu0
  %v1327 = vadd.f32 0.0, %v1326
  %v1328 = vpop.f32.mrb[0].mxu0
  %v1329 = vpop.f32.mrb[0].mxu0
  %v1330 = vadd.f32 0.0, %v1329
  %v1331 = vpop.f32.mrb[0].mxu0
  %1332 = vmatprep.mubr.bf16.mxu0 0
  %1333 = vmatmul.mubr.bf16.gmra.mrb[0].mxu0 %v848
  %v1334 = vpop.f32.mrb[0].mxu0
  %v1335 = vadd.f32 0.0, %v1334
  %v1336 = vpop.f32.mrb[0].mxu0
  %v1337 = vpop.f32.mrb[0].mxu0
  %v1338 = vadd.f32 0.0, %v1337
  %v1339 = vpop.f32.mrb[0].mxu0
  %1340 = vmatprep.mubr.bf16.mxu0 0
  %1341 = vmatmul.mubr.bf16.gmra.mrb[0].mxu0 %v851
  %v1342 = vpop.f32.mrb[0].mxu0
  %v1343 = vadd.f32 0.0, %v1342
  %v1344 = vpop.f32.mrb[0].mxu0
  %v1345 = vpop.f32.mrb[0].mxu0
  %v1346 = vadd.f32 0.0, %v1345
  %v1347 = vpop.f32.mrb[0].mxu0
  %1348 = vmatprep.mubr.bf16.mxu0 0
  %1349 = vmatmul.mubr.bf16.gmra.mrb[0].mxu0 %v854
  %v1350 = vpop.f32.mrb[0].mxu0
  %v1351 = vadd.f32 0.0, %v1350
  %v1352 = vpop.f32.mrb[0].mxu0
  %v1353 = vpop.f32.mrb[0].mxu0
  %v1354 = vadd.f32 0.0, %v1353
  %v1355 = vpop.f32.mrb[0].mxu0
  %1356 = vmatprep.mubr.bf16.mxu0 0
  %1357 = vmatmul.mubr.bf16.gmra.mrb[0].mxu0 %v857
  %v1358 = vpop.f32.mrb[0].mxu0
  %v1359 = vadd.f32 0.0, %v1358
  %v1360 = vpop.f32.mrb[0].mxu0
  %v1361 = vpop.f32.mrb[0].mxu0
  %v1362 = vadd.f32 0.0, %v1361
  %v1363 = vpop.f32.mrb[0].mxu0
  %1364 = vmatprep.mubr.bf16.mxu0 0
  %1365 = vmatmul.mubr.bf16.gmra.mrb[0].mxu0 %v860
  %v1366 = vpop.f32.mrb[0].mxu0
  %v1367 = vadd.f32 0.0, %v1366
  %v1368 = vpop.f32.mrb[0].mxu0
  %v1369 = vpop.f32.mrb[0].mxu0
  %v1370 = vadd.f32 0.0, %v1369
  %v1371 = vpop.f32.mrb[0].mxu0
  %1372 = vmatprep.mubr.bf16.mxu0 0
  %1373 = vmatmul.mubr.bf16.gmra.mrb[0].mxu0 %v863
  %v1374 = vpop.f32.mrb[0].mxu0
  %v1375 = vadd.f32 0.0, %v1374
  %v1376 = vpop.f32.mrb[0].mxu0
  %v1377 = vpop.f32.mrb[0].mxu0
  %v1378 = vadd.f32 0.0, %v1377
  %v1379 = vpop.f32.mrb[0].mxu0
  %1380 = vmatprep.mubr.bf16.mxu0 0
  %1381 = vmatmul.mubr.bf16.gmra.mrb[0].mxu0 %v866
  %v1382 = vpop.f32.mrb[0].mxu0
  %v1383 = vadd.f32 0.0, %v1382
  %v1384 = vpop.f32.mrb[0].mxu0
  %v1385 = vpop.f32.mrb[0].mxu0
  %v1386 = vadd.f32 0.0, %v1385
  %v1387 = vpop.f32.mrb[0].mxu0
  %1388 = vmatprep.mubr.bf16.mxu0 0
  %1389 = vmatmul.mubr.bf16.gmra.mrb[0].mxu0 %v869
  %v1390 = vpop.f32.mrb[0].mxu0
  %v1391 = vadd.f32 0.0, %v1390
  %v1392 = vpop.f32.mrb[0].mxu0
  %v1393 = vpop.f32.mrb[0].mxu0
  %v1394 = vadd.f32 0.0, %v1393
  %v1395 = vpop.f32.mrb[0].mxu0
  %1396 = vmatprep.mubr.bf16.mxu0 0
  %1397 = vmatmul.mubr.bf16.gmra.mrb[0].mxu0 %v872
  %v1398 = vpop.f32.mrb[0].mxu0
  %v1399 = vadd.f32 0.0, %v1398
  %v1400 = vpop.f32.mrb[0].mxu0
  %v1401 = vpop.f32.mrb[0].mxu0
  %v1402 = vadd.f32 0.0, %v1401
  %v1403 = vpop.f32.mrb[0].mxu0
  %1404 = vmatprep.mubr.bf16.mxu0 0
  %1405 = vmatmul.mubr.bf16.gmra.mrb[0].mxu0 %v875
  %v1406 = vpop.f32.mrb[0].mxu0
  %v1407 = vadd.f32 0.0, %v1406
  %v1408 = vpop.f32.mrb[0].mxu0
  %v1409 = vpop.f32.mrb[0].mxu0
  %v1410 = vadd.f32 0.0, %v1409
  %v1411 = vpop.f32.mrb[0].mxu0
  %1412 = vmatprep.mubr.bf16.mxu0 0
  %1413 = vmatmul.mubr.bf16.gmra.mrb[0].mxu0 %v878
  %v1414 = vpop.f32.mrb[0].mxu0
  %v1415 = vadd.f32 0.0, %v1414
  %v1416 = vpop.f32.mrb[0].mxu0
  %v1417 = vpop.f32.mrb[0].mxu0
  %v1418 = vadd.f32 0.0, %v1417
  %v1419 = vpop.f32.mrb[0].mxu0
  %1420 = vmatprep.mubr.bf16.mxu0 0
  %1421 = vmatmul.mubr.bf16.gmra.mrb[0].mxu0 %v881
  %v1422 = vpop.f32.mrb[0].mxu0
  %v1423 = vadd.f32 0.0, %v1422
  %v1424 = vpop.f32.mrb[0].mxu0
  %v1425 = vpop.f32.mrb[0].mxu0
  %v1426 = vadd.f32 0.0, %v1425
  %v1427 = vpop.f32.mrb[0].mxu0
  %1428 = vmatprep.mubr.bf16.mxu0 0
  %1429 = vmatmul.mubr.bf16.gmra.mrb[0].mxu0 %v884
  %v1430 = vpop.f32.mrb[0].mxu0
  %v1431 = vadd.f32 0.0, %v1430
  %v1432 = vpop.f32.mrb[0].mxu0
  %v1433 = vpop.f32.mrb[0].mxu0
  %v1434 = vadd.f32 0.0, %v1433
  %v1435 = vpop.f32.mrb[0].mxu0
  %1436 = vmatprep.mubr.bf16.mxu0 0
  %1437 = vmatmul.mubr.bf16.gmra.mrb[0].mxu0 %v887
  %v1438 = vpop.f32.mrb[0].mxu0
  %v1439 = vadd.f32 0.0, %v1438
  %v1440 = vpop.f32.mrb[0].mxu0
  %v1441 = vpop.f32.mrb[0].mxu0
  %v1442 = vadd.f32 0.0, %v1441
  %v1443 = vpop.f32.mrb[0].mxu0
  %1444 = vmatprep.mubr.bf16.mxu0 0
  %1445 = vmatmul.mubr.bf16.gmra.mrb[0].mxu0 %v890
  %v1446 = vpop.f32.mrb[0].mxu0
  %v1447 = vadd.f32 0.0, %v1446
  %v1448 = vpop.f32.mrb[0].mxu0
  %v1449 = vpop.f32.mrb[0].mxu0
  %v1450 = vadd.f32 0.0, %v1449
  %v1451 = vpop.f32.mrb[0].mxu0
  %1452 = vmatprep.mubr.bf16.mxu0 0
  %1453 = vmatmul.mubr.bf16.gmra.mrb[0].mxu0 %v893
  %v1454 = vpop.f32.mrb[0].mxu0
  %v1455 = vadd.f32 0.0, %v1454
  %v1456 = vpop.f32.mrb[0].mxu0
  %v1457 = vpop.f32.mrb[0].mxu0
  %v1458 = vadd.f32 0.0, %v1457
  %v1459 = vpop.f32.mrb[0].mxu0
  %1460 = vmatprep.mubr.bf16.mxu0 0
  %1461 = vmatmul.mubr.bf16.gmra.mrb[0].mxu0 %v896
  %v1462 = vpop.f32.mrb[0].mxu0
  %v1463 = vadd.f32 0.0, %v1462
  %v1464 = vpop.f32.mrb[0].mxu0
  %v1465 = vpop.f32.mrb[0].mxu0
  %v1466 = vadd.f32 0.0, %v1465
  %v1467 = vpop.f32.mrb[0].mxu0
  %1468 = vmatprep.mubr.bf16.mxu0 0
  %1469 = vmatmul.mubr.bf16.gmra.mrb[0].mxu0 %v899
  %v1470 = vpop.f32.mrb[0].mxu0
  %v1471 = vadd.f32 0.0, %v1470
  %v1472 = vpop.f32.mrb[0].mxu0
  %v1473 = vpop.f32.mrb[0].mxu0
  %v1474 = vadd.f32 0.0, %v1473
  %v1475 = vpop.f32.mrb[0].mxu0
  %1476 = vmatprep.mubr.bf16.mxu0 0
  %1477 = vmatmul.mubr.bf16.gmra.mrb[0].mxu0 %v902
  %v1478 = vpop.f32.mrb[0].mxu0
  %v1479 = vadd.f32 0.0, %v1478
  %v1480 = vpop.f32.mrb[0].mxu0
  %v1481 = vpop.f32.mrb[0].mxu0
  %v1482 = vadd.f32 0.0, %v1481
  %v1483 = vpop.f32.mrb[0].mxu0
  %1484 = vmatprep.mubr.bf16.mxu0 0
  %1485 = vmatmul.mubr.bf16.gmra.mrb[0].mxu0 %v905
  %v1486 = vpop.f32.mrb[0].mxu0
  %v1487 = vadd.f32 0.0, %v1486
  %v1488 = vpop.f32.mrb[0].mxu0
  %v1489 = vpop.f32.mrb[0].mxu0
  %v1490 = vadd.f32 0.0, %v1489
  %v1491 = vpop.f32.mrb[0].mxu0
  %1492 = vmatprep.mubr.bf16.mxu0 0
  %1493 = vmatmul.mubr.bf16.gmra.mrb[0].mxu0 %v908
  %v1494 = vpop.f32.mrb[0].mxu0
  %v1495 = vadd.f32 0.0, %v1494
  %v1496 = vpop.f32.mrb[0].mxu0
  %v1497 = vpop.f32.mrb[0].mxu0
  %v1498 = vadd.f32 0.0, %v1497
  %v1499 = vpop.f32.mrb[0].mxu0
  %1500 = vmatprep.mubr.bf16.mxu0 0
  %1501 = vmatmul.mubr.bf16.gmra.mrb[0].mxu0 %v911
  %v1502 = vpop.f32.mrb[0].mxu0
  %v1503 = vadd.f32 0.0, %v1502
  %v1504 = vpop.f32.mrb[0].mxu0
  %v1505 = vpop.f32.mrb[0].mxu0
  %v1506 = vadd.f32 0.0, %v1505
  %v1507 = vpop.f32.mrb[0].mxu0
  %1508 = vmatprep.mubr.bf16.mxu0 0
  %1509 = vmatmul.mubr.bf16.gmra.mrb[0].mxu0 %v914
  %v1510 = vpop.f32.mrb[0].mxu0
  %v1511 = vadd.f32 0.0, %v1510
  %v1512 = vpop.f32.mrb[0].mxu0
  %v1513 = vpop.f32.mrb[0].mxu0
  %v1514 = vadd.f32 0.0, %v1513
  %v1515 = vpop.f32.mrb[0].mxu0
  %1516 = vmatprep.mubr.bf16.mxu0 0
  %1517 = vmatmul.mubr.bf16.gmra.mrb[0].mxu0 %v917
  %v1518 = vpop.f32.mrb[0].mxu0
  %v1519 = vadd.f32 0.0, %v1518
  %v1520 = vpop.f32.mrb[0].mxu0
  %v1521 = vpop.f32.mrb[0].mxu0
  %v1522 = vadd.f32 0.0, %v1521
  %v1523 = vpop.f32.mrb[0].mxu0
  %1524 = vmatprep.mubr.bf16.mxu0 0
  %1525 = vmatmul.mubr.bf16.gmra.mrb[0].mxu0 %v920
  %v1526 = vpop.f32.mrb[0].mxu0
  %v1527 = vadd.f32 0.0, %v1526
  %v1528 = vpop.f32.mrb[0].mxu0
  %v1529 = vpop.f32.mrb[0].mxu0
  %v1530 = vadd.f32 0.0, %v1529
  %v1531 = vpop.f32.mrb[0].mxu0
  %1532 = vmatprep.mubr.bf16.mxu0 0
  %1533 = vmatmul.mubr.bf16.gmra.mrb[0].mxu0 %v923
  %v1534 = vpop.f32.mrb[0].mxu0
  %v1535 = vadd.f32 0.0, %v1534
  %v1536 = vpop.f32.mrb[0].mxu0
  %v1537 = vpop.f32.mrb[0].mxu0
  %v1538 = vadd.f32 0.0, %v1537
  %v1539 = vpop.f32.mrb[0].mxu0
  %1540 = vmatprep.mubr.bf16.mxu0 0
  %1541 = vmatmul.mubr.bf16.gmra.mrb[0].mxu0 %v926
  %v1542 = vpop.f32.mrb[0].mxu0
  %v1543 = vadd.f32 0.0, %v1542
  %v1544 = vpop.f32.mrb[0].mxu0
  %v1545 = vpop.f32.mrb[0].mxu0
  %v1546 = vadd.f32 0.0, %v1545
  %v1547 = vpop.f32.mrb[0].mxu0
  %1548 = vmatprep.mubr.bf16.mxu0 0
  %1549 = vmatmul.mubr.bf16.gmra.mrb[0].mxu0 %v929
  %v1550 = vpop.f32.mrb[0].mxu0
  %v1551 = vadd.f32 0.0, %v1550
  %v1552 = vpop.f32.mrb[0].mxu0
  %v1553 = vpop.f32.mrb[0].mxu0
  %v1554 = vadd.f32 0.0, %v1553
  %v1555 = vpop.f32.mrb[0].mxu0
  %1556 = vmatprep.mubr.bf16.mxu0 0
  %1557 = vmatmul.mubr.bf16.gmra.mrb[0].mxu0 %v932
  %v1558 = vpop.f32.mrb[0].mxu0
  %v1559 = vadd.f32 0.0, %v1558
  %v1560 = vpop.f32.mrb[0].mxu0
  %v1561 = vpop.f32.mrb[0].mxu0
  %v1562 = vadd.f32 0.0, %v1561
  %v1563 = vpop.f32.mrb[0].mxu0
  %1564 = vmatprep.mubr.bf16.mxu0 0
  %1565 = vmatmul.mubr.bf16.gmra.mrb[0].mxu0 %v935
  %v1566 = vpop.f32.mrb[0].mxu0
  %v1567 = vadd.f32 0.0, %v1566
  %v1568 = vpop.f32.mrb[0].mxu0
  %v1569 = vpop.f32.mrb[0].mxu0
  %v1570 = vadd.f32 0.0, %v1569
  %v1571 = vpop.f32.mrb[0].mxu0
  %1572 = vmatprep.mubr.bf16.mxu0 0
  %1573 = vmatmul.mubr.bf16.gmra.mrb[0].mxu0 %v938
  %v1574 = vpop.f32.mrb[0].mxu0
  %v1575 = vadd.f32 0.0, %v1574
  %v1576 = vpop.f32.mrb[0].mxu0
  %v1577 = vpop.f32.mrb[0].mxu0
  %v1578 = vadd.f32 0.0, %v1577
  %v1579 = vpop.f32.mrb[0].mxu0
  %1580 = vmatprep.mubr.bf16.mxu0 0
  %1581 = vmatmul.mubr.bf16.gmra.mrb[0].mxu0 %v941
  %v1582 = vpop.f32.mrb[0].mxu0
  %v1583 = vadd.f32 0.0, %v1582
  %v1584 = vpop.f32.mrb[0].mxu0
  %v1585 = vpop.f32.mrb[0].mxu0
  %v1586 = vadd.f32 0.0, %v1585
  %v1587 = vpop.f32.mrb[0].mxu0
  %1588 = vmatprep.mubr.bf16.mxu0 0
  %1589 = vmatmul.mubr.bf16.gmra.mrb[0].mxu0 %v944
  %v1590 = vpop.f32.mrb[0].mxu0
  %v1591 = vadd.f32 0.0, %v1590
  %v1592 = vpop.f32.mrb[0].mxu0
  %v1593 = vpop.f32.mrb[0].mxu0
  %v1594 = vadd.f32 0.0, %v1593
  %v1595 = vpop.f32.mrb[0].mxu0
  %1596 = vmatprep.mubr.bf16.mxu0 0
  %1597 = vmatmul.mubr.bf16.gmra.mrb[0].mxu0 %v947
  %v1598 = vpop.f32.mrb[0].mxu0
  %v1599 = vadd.f32 0.0, %v1598
  %v1600 = vpop.f32.mrb[0].mxu0
  %v1601 = vpop.f32.mrb[0].mxu0
  %v1602 = vadd.f32 0.0, %v1601
  %v1603 = vpop.f32.mrb[0].mxu0
  %1604 = vmatprep.mubr.bf16.mxu0 0
  %1605 = vmatmul.mubr.bf16.gmra.mrb[0].mxu0 %v950
  %v1606 = vpop.f32.mrb[0].mxu0
  %v1607 = vadd.f32 0.0, %v1606
  %v1608 = vpop.f32.mrb[0].mxu0
  %v1609 = vpop.f32.mrb[0].mxu0
  %v1610 = vadd.f32 0.0, %v1609
  %v1611 = vpop.f32.mrb[0].mxu0
  %1612 = vmatprep.mubr.bf16.mxu0 0
  %1613 = vmatmul.mubr.bf16.gmra.mrb[0].mxu0 %v953
  %v1614 = vpop.f32.mrb[0].mxu0
  %v1615 = vadd.f32 0.0, %v1614
  %v1616 = vpop.f32.mrb[0].mxu0
  %v1617 = vpop.f32.mrb[0].mxu0
  %v1618 = vadd.f32 0.0, %v1617
  %v1619 = vpop.f32.mrb[0].mxu0
  %1620 = vmatprep.mubr.bf16.mxu0 0
  %1621 = vmatmul.mubr.bf16.gmra.mrb[0].mxu0 %v956
  %v1622 = vpop.f32.mrb[0].mxu0
  %v1623 = vadd.f32 0.0, %v1622
  %v1624 = vpop.f32.mrb[0].mxu0
  %v1625 = vpop.f32.mrb[0].mxu0
  %v1626 = vadd.f32 0.0, %v1625
  %v1627 = vpop.f32.mrb[0].mxu0
  %1628 = vmatprep.mubr.bf16.mxu0 0
  %1629 = vmatmul.mubr.bf16.gmra.mrb[0].mxu0 %v959
  %v1630 = vpop.f32.mrb[0].mxu0
  %v1631 = vadd.f32 0.0, %v1630
  %v1632 = vpop.f32.mrb[0].mxu0
  %v1633 = vpop.f32.mrb[0].mxu0
  %v1634 = vadd.f32 0.0, %v1633
  %v1635 = vpop.f32.mrb[0].mxu0
  %1636 = vmatprep.mubr.bf16.mxu0 0
  %1637 = vmatmul.mubr.bf16.gmra.mrb[0].mxu0 %v962
  %v1638 = vpop.f32.mrb[0].mxu0
  %v1639 = vadd.f32 0.0, %v1638
  %v1640 = vpop.f32.mrb[0].mxu0
  %v1641 = vpop.f32.mrb[0].mxu0
  %v1642 = vadd.f32 0.0, %v1641
  %v1643 = vpop.f32.mrb[0].mxu0
  %1644 = vmatprep.mubr.bf16.mxu0 0
  %1645 = vmatmul.mubr.bf16.gmra.mrb[0].mxu0 %v965
  %v1646 = vpop.f32.mrb[0].mxu0
  %v1647 = vadd.f32 0.0, %v1646
  %v1648 = vpop.f32.mrb[0].mxu0
  %v1649 = vpop.f32.mrb[0].mxu0
  %v1650 = vadd.f32 0.0, %v1649
  %v1651 = vpop.f32.mrb[0].mxu0
  %1652 = vmatprep.mubr.bf16.mxu0 0
  %1653 = vmatmul.mubr.bf16.gmra.mrb[0].mxu0 %v968
  %v1654 = vpop.f32.mrb[0].mxu0
  %v1655 = vadd.f32 0.0, %v1654
  %v1656 = vpop.f32.mrb[0].mxu0
  %v1657 = vpop.f32.mrb[0].mxu0
  %v1658 = vadd.f32 0.0, %v1657
  %v1659 = vpop.f32.mrb[0].mxu0
  %1660 = vmatprep.mubr.bf16.mxu0 0
  %1661 = vmatmul.mubr.bf16.gmra.mrb[0].mxu0 %v971
  %v1662 = vpop.f32.mrb[0].mxu0
  %v1663 = vadd.f32 0.0, %v1662
  %v1664 = vpop.f32.mrb[0].mxu0
  %v1665 = vpop.f32.mrb[0].mxu0
  %v1666 = vadd.f32 0.0, %v1665
  %v1667 = vpop.f32.mrb[0].mxu0
  %1668 = vmatprep.mubr.bf16.mxu0 0
  %1669 = vmatmul.mubr.bf16.gmra.mrb[0].mxu0 %v974
  %v1670 = vpop.f32.mrb[0].mxu0
  %v1671 = vadd.f32 0.0, %v1670
  %v1672 = vpop.f32.mrb[0].mxu0
  %v1673 = vpop.f32.mrb[0].mxu0
  %v1674 = vadd.f32 0.0, %v1673
  %v1675 = vpop.f32.mrb[0].mxu0
  %1676 = vmatprep.mubr.bf16.mxu0 0
  %1677 = vmatmul.mubr.bf16.gmra.mrb[0].mxu0 %v977
  %v1678 = vpop.f32.mrb[0].mxu0
  %v1679 = vadd.f32 0.0, %v1678
  %v1680 = vpop.f32.mrb[0].mxu0
  %v1681 = vpop.f32.mrb[0].mxu0
  %v1682 = vadd.f32 0.0, %v1681
  %v1683 = vpop.f32.mrb[0].mxu0
  %1684 = vmatprep.mubr.bf16.mxu0 0
  %1685 = vmatmul.mubr.bf16.gmra.mrb[0].mxu0 %v980
  %v1686 = vpop.f32.mrb[0].mxu0
  %v1687 = vadd.f32 0.0, %v1686
  %v1688 = vpop.f32.mrb[0].mxu0
  %v1689 = vpop.f32.mrb[0].mxu0
  %v1690 = vadd.f32 0.0, %v1689
  %v1691 = vpop.f32.mrb[0].mxu0
  %1692 = vmatprep.mubr.bf16.mxu0 0
  %1693 = vmatmul.mubr.bf16.gmra.mrb[0].mxu0 %v983
  %v1694 = vpop.f32.mrb[0].mxu0
  %v1695 = vadd.f32 0.0, %v1694
  %v1696 = vpop.f32.mrb[0].mxu0
  %v1697 = vpop.f32.mrb[0].mxu0
  %v1698 = vadd.f32 0.0, %v1697
  %v1699 = vpop.f32.mrb[0].mxu0
  %1700 = vmatprep.mubr.bf16.mxu0 0
  %1701 = vmatmul.mubr.bf16.gmra.mrb[0].mxu0 %v986
  %v1702 = vpop.f32.mrb[0].mxu0
  %v1703 = vadd.f32 0.0, %v1702
  %v1704 = vpop.f32.mrb[0].mxu0
  %v1705 = vpop.f32.mrb[0].mxu0
  %v1706 = vadd.f32 0.0, %v1705
  %v1707 = vpop.f32.mrb[0].mxu0
  %1708 = vmatprep.mubr.bf16.mxu0 0
  %1709 = vmatmul.mubr.bf16.gmra.mrb[0].mxu0 %v989
  %v1710 = vpop.f32.mrb[0].mxu0
  %v1711 = vadd.f32 0.0, %v1710
  %v1712 = vpop.f32.mrb[0].mxu0
  %v1713 = vpop.f32.mrb[0].mxu0
  %v1714 = vadd.f32 0.0, %v1713
  %v1715 = vpop.f32.mrb[0].mxu0
  %1716 = vmatprep.mubr.bf16.mxu0 0
  %1717 = vmatmul.mubr.bf16.gmra.mrb[0].mxu0 %v992
  %v1718 = vpop.f32.mrb[0].mxu0
  %v1719 = vadd.f32 0.0, %v1718
  %v1720 = vpop.f32.mrb[0].mxu0
  %v1721 = vpop.f32.mrb[0].mxu0
  %v1722 = vadd.f32 0.0, %v1721
  %v1723 = vpop.f32.mrb[0].mxu0
  %1724 = vmatprep.mubr.bf16.mxu0 0
  %1725 = vmatmul.mubr.bf16.gmra.mrb[0].mxu0 %v995
  %v1726 = vpop.f32.mrb[0].mxu0
  %v1727 = vadd.f32 0.0, %v1726
  %v1728 = vpop.f32.mrb[0].mxu0
  %v1729 = vpop.f32.mrb[0].mxu0
  %v1730 = vadd.f32 0.0, %v1729
  %v1731 = vpop.f32.mrb[0].mxu0
  %1732 = vmatprep.mubr.bf16.mxu0 0
  %1733 = vmatmul.mubr.bf16.gmra.mrb[0].mxu0 %v998
  %v1734 = vpop.f32.mrb[0].mxu0
  %v1735 = vadd.f32 0.0, %v1734
  %v1736 = vpop.f32.mrb[0].mxu0
  %v1737 = vpop.f32.mrb[0].mxu0
  %v1738 = vadd.f32 0.0, %v1737
  %v1739 = vpop.f32.mrb[0].mxu0
  %1740 = vmatprep.mubr.bf16.mxu0 0
  %1741 = vmatmul.mubr.bf16.gmra.mrb[0].mxu0 %v1001
  %v1742 = vpop.f32.mrb[0].mxu0
  %v1743 = vadd.f32 0.0, %v1742
  %v1744 = vpop.f32.mrb[0].mxu0
  %v1745 = vpop.f32.mrb[0].mxu0
  %v1746 = vadd.f32 0.0, %v1745
  %v1747 = vpop.f32.mrb[0].mxu0
  %1748 = vmatprep.mubr.bf16.mxu0 0
  %1749 = vmatmul.mubr.bf16.gmra.mrb[0].mxu0 %v1004
  %v1750 = vpop.f32.mrb[0].mxu0
  %v1751 = vadd.f32 0.0, %v1750
  %v1752 = vpop.f32.mrb[0].mxu0
  %v1753 = vpop.f32.mrb[0].mxu0
  %v1754 = vadd.f32 0.0, %v1753
  %v1755 = vpop.f32.mrb[0].mxu0
  %1756 = vmatprep.mubr.bf16.mxu0 0
  %1757 = vmatmul.mubr.bf16.gmra.mrb[0].mxu0 %v1007
  %v1758 = vpop.f32.mrb[0].mxu0
  %v1759 = vadd.f32 0.0, %v1758
  %v1760 = vpop.f32.mrb[0].mxu0
  %v1761 = vpop.f32.mrb[0].mxu0
  %v1762 = vadd.f32 0.0, %v1761
  %v1763 = vpop.f32.mrb[0].mxu0
  %1764 = vmatprep.mubr.bf16.mxu0 0
  %1765 = vmatmul.mubr.bf16.gmra.mrb[0].mxu0 %v1010
  %v1766 = vpop.f32.mrb[0].mxu0
  %v1767 = vadd.f32 0.0, %v1766
  %v1768 = vpop.f32.mrb[0].mxu0
  %v1769 = vpop.f32.mrb[0].mxu0
  %v1770 = vadd.f32 0.0, %v1769
  %v1771 = vpop.f32.mrb[0].mxu0
  %1772 = vmatprep.mubr.bf16.mxu0 0
  %1773 = vmatmul.mubr.bf16.gmra.mrb[0].mxu0 %v1013
  %v1774 = vpop.f32.mrb[0].mxu0
  %v1775 = vadd.f32 0.0, %v1774
  %v1776 = vpop.f32.mrb[0].mxu0
  %v1777 = vpop.f32.mrb[0].mxu0
  %v1778 = vadd.f32 0.0, %v1777
  %v1779 = vpop.f32.mrb[0].mxu0
  %1780 = vmatprep.mubr.bf16.mxu0 0
  %1781 = vmatmul.mubr.bf16.gmra.mrb[0].mxu0 %v1016
  %v1782 = vpop.f32.mrb[0].mxu0
  %v1783 = vadd.f32 0.0, %v1782
  %v1784 = vpop.f32.mrb[0].mxu0
  %v1785 = vpop.f32.mrb[0].mxu0
  %v1786 = vadd.f32 0.0, %v1785
  %v1787 = vpop.f32.mrb[0].mxu0
  %1788 = vmatprep.mubr.bf16.mxu0 0
  %1789 = vmatmul.mubr.bf16.gmra.mrb[0].mxu0 %v1019
  %v1790 = vpop.f32.mrb[0].mxu0
  %v1791 = vadd.f32 0.0, %v1790
  %v1792 = vpop.f32.mrb[0].mxu0
  %v1793 = vpop.f32.mrb[0].mxu0
  %v1794 = vadd.f32 0.0, %v1793
  %v1795 = vpop.f32.mrb[0].mxu0
  %1796 = vmatprep.mubr.bf16.mxu0 0
  %1797 = vmatmul.mubr.bf16.gmra.mrb[0].mxu0 %v1022
  %v1798 = vpop.f32.mrb[0].mxu0
  %v1799 = vadd.f32 0.0, %v1798
  %v1800 = vpop.f32.mrb[0].mxu0
  %v1801 = vpop.f32.mrb[0].mxu0
  %v1802 = vadd.f32 0.0, %v1801
  %v1803 = vpop.f32.mrb[0].mxu0
  %1804 = vmatprep.mubr.bf16.mxu0 0
  %1805 = vmatmul.mubr.bf16.gmra.mrb[0].mxu0 %v1025
  %v1806 = vpop.f32.mrb[0].mxu0
  %v1807 = vadd.f32 0.0, %v1806
  %v1808 = vpop.f32.mrb[0].mxu0
  %v1809 = vpop.f32.mrb[0].mxu0
  %v1810 = vadd.f32 0.0, %v1809
  %v1811 = vpop.f32.mrb[0].mxu0
  %1812 = vmatprep.mubr.bf16.mxu0 0
  %1813 = vmatmul.mubr.bf16.gmra.mrb[0].mxu0 %v1028
  %v1814 = vpop.f32.mrb[0].mxu0
  %v1815 = vadd.f32 0.0, %v1814
  %v1816 = vpop.f32.mrb[0].mxu0
  %v1817 = vpop.f32.mrb[0].mxu0
  %v1818 = vadd.f32 0.0, %v1817
  %v1819 = vpop.f32.mrb[0].mxu0
  %1820 = vmatprep.mubr.bf16.mxu0 0
  %1821 = vmatmul.mubr.bf16.gmra.mrb[0].mxu0 %v1031
  %v1822 = vpop.f32.mrb[0].mxu0
  %v1823 = vadd.f32 0.0, %v1822
  %v1824 = vpop.f32.mrb[0].mxu0
  %v1825 = vpop.f32.mrb[0].mxu0
  %v1826 = vadd.f32 0.0, %v1825
  %v1827 = vpop.f32.mrb[0].mxu0
  %1828 = vmatprep.mubr.bf16.mxu0 0
  %1829 = vmatmul.mubr.bf16.gmra.mrb[0].mxu0 %v1034
  %v1830 = vpop.f32.mrb[0].mxu0
  %v1831 = vadd.f32 0.0, %v1830
  %v1832 = vpop.f32.mrb[0].mxu0
  %v1833 = vpop.f32.mrb[0].mxu0
  %v1834 = vadd.f32 0.0, %v1833
  %v1835 = vpop.f32.mrb[0].mxu0
  %1836 = vmatprep.mubr.bf16.mxu0 0
  %1837 = vmatmul.mubr.bf16.gmra.mrb[0].mxu0 %v1037
  %v1838 = vpop.f32.mrb[0].mxu0
  %v1839 = vadd.f32 0.0, %v1838
  %v1840 = vpop.f32.mrb[0].mxu0
  %v1841 = vpop.f32.mrb[0].mxu0
  %v1842 = vadd.f32 0.0, %v1841
  %v1843 = vpop.f32.mrb[0].mxu0
  %1844 = vmatprep.mubr.bf16.mxu0 0
  %1845 = vmatmul.mubr.bf16.gmra.mrb[0].mxu0 %v1040
  %v1846 = vpop.f32.mrb[0].mxu0
  %v1847 = vadd.f32 0.0, %v1846
  %v1848 = vpop.f32.mrb[0].mxu0
  %v1849 = vpop.f32.mrb[0].mxu0
  %v1850 = vadd.f32 0.0, %v1849
  %v1851 = vpop.f32.mrb[0].mxu0
  %1852 = vmatprep.mubr.bf16.mxu0 0
  %1853 = vmatmul.mubr.bf16.gmra.mrb[0].mxu0 %v1043
  %v1854 = vpop.f32.mrb[0].mxu0
  %v1855 = vadd.f32 0.0, %v1854
  %v1856 = vpop.f32.mrb[0].mxu0
  %v1857 = vpop.f32.mrb[0].mxu0
  %v1858 = vadd.f32 0.0, %v1857
  %v1859 = vpop.f32.mrb[0].mxu0
  %1860 = vmatprep.mubr.bf16.mxu0 0
  %1861 = vmatmul.mubr.bf16.gmra.mrb[0].mxu0 %v1046
  %v1862 = vpop.f32.mrb[0].mxu0
  %v1863 = vadd.f32 0.0, %v1862
  %v1864 = vpop.f32.mrb[0].mxu0
  %v1865 = vpop.f32.mrb[0].mxu0
  %v1866 = vadd.f32 0.0, %v1865
  %v1867 = vpop.f32.mrb[0].mxu0
  %1868 = vdwg.mxu0
  %1869 = vst [vmem:[%s2] sm:$0xff] %v1087
  %1870 = vst [vmem:[%s2 + $0x8] sm:$0xff] %v1090
  %1871 = vst [vmem:[%s2 + $0x10] sm:$0xff] %v1095
  %1872 = vst [vmem:[%s2 + $0x18] sm:$0xff] %v1098
  %1873 = vst [vmem:[%s2 + $0x20] sm:$0xff] %v1103
  %1874 = vst [vmem:[%s2 + $0x28] sm:$0xff] %v1106
  %1875 = vst [vmem:[%s2 + $0x30] sm:$0xff] %v1111
  %1876 = vst [vmem:[%s2 + $0x38] sm:$0xff] %v1114
  %1877 = vst [vmem:[%s2 + $0x40] sm:$0xff] %v1119
  %1878 = vst [vmem:[%s2 + $0x48] sm:$0xff] %v1122
  %1879 = vst [vmem:[%s2 + $0x50] sm:$0xff] %v1127
  %1880 = vst [vmem:[%s2 + $0x58] sm:$0xff] %v1130
  %1881 = vst [vmem:[%s2 + $0x60] sm:$0xff] %v1135
  %1882 = vst [vmem:[%s2 + $0x68] sm:$0xff] %v1138
  %1883 = vst [vmem:[%s2 + $0x70] sm:$0xff] %v1143
  %1884 = vst [vmem:[%s2 + $0x78] sm:$0xff] %v1146
  %1885 = vst [vmem:[%s2 + $0x80] sm:$0xff] %v1151
  %1886 = vst [vmem:[%s2 + $0x88] sm:$0xff] %v1154
  %1887 = vst [vmem:[%s2 + $0x90] sm:$0xff] %v1159
  %1888 = vst [vmem:[%s2 + $0x98] sm:$0xff] %v1162
  %1889 = vst [vmem:[%s2 + $0xa0] sm:$0xff] %v1167
  %1890 = vst [vmem:[%s2 + $0xa8] sm:$0xff] %v1170
  %1891 = vst [vmem:[%s2 + $0xb0] sm:$0xff] %v1175
  %1892 = vst [vmem:[%s2 + $0xb8] sm:$0xff] %v1178
  %1893 = vst [vmem:[%s2 + $0xc0] sm:$0xff] %v1183
  %1894 = vst [vmem:[%s2 + $0xc8] sm:$0xff] %v1186
  %1895 = vst [vmem:[%s2 + $0xd0] sm:$0xff] %v1191
  %1896 = vst [vmem:[%s2 + $0xd8] sm:$0xff] %v1194
  %1897 = vst [vmem:[%s2 + $0xe0] sm:$0xff] %v1199
  %1898 = vst [vmem:[%s2 + $0xe8] sm:$0xff] %v1202
  %1899 = vst [vmem:[%s2 + $0xf0] sm:$0xff] %v1207
  %1900 = vst [vmem:[%s2 + $0xf8] sm:$0xff] %v1210
  %1901 = vst [vmem:[%s2 + $0x100] sm:$0xff] %v1215
  %1902 = vst [vmem:[%s2 + $0x108] sm:$0xff] %v1218
  %1903 = vst [vmem:[%s2 + $0x110] sm:$0xff] %v1223
  %1904 = vst [vmem:[%s2 + $0x118] sm:$0xff] %v1226
  %1905 = vst [vmem:[%s2 + $0x120] sm:$0xff] %v1231
  %1906 = vst [vmem:[%s2 + $0x128] sm:$0xff] %v1234
  %1907 = vst [vmem:[%s2 + $0x130] sm:$0xff] %v1239
  %1908 = vst [vmem:[%s2 + $0x138] sm:$0xff] %v1242
  %1909 = vst [vmem:[%s2 + $0x140] sm:$0xff] %v1247
  %1910 = vst [vmem:[%s2 + $0x148] sm:$0xff] %v1250
  %1911 = vst [vmem:[%s2 + $0x150] sm:$0xff] %v1255
  %1912 = vst [vmem:[%s2 + $0x158] sm:$0xff] %v1258
  %1913 = vst [vmem:[%s2 + $0x160] sm:$0xff] %v1263
  %1914 = vst [vmem:[%s2 + $0x168] sm:$0xff] %v1266
  %1915 = vst [vmem:[%s2 + $0x170] sm:$0xff] %v1271
  %1916 = vst [vmem:[%s2 + $0x178] sm:$0xff] %v1274
  %1917 = vst [vmem:[%s2 + $0x180] sm:$0xff] %v1279
  %1918 = vst [vmem:[%s2 + $0x188] sm:$0xff] %v1282
  %1919 = vst [vmem:[%s2 + $0x190] sm:$0xff] %v1287
  %1920 = vst [vmem:[%s2 + $0x198] sm:$0xff] %v1290
  %1921 = vst [vmem:[%s2 + $0x1a0] sm:$0xff] %v1295
  %1922 = vst [vmem:[%s2 + $0x1a8] sm:$0xff] %v1298
  %1923 = vst [vmem:[%s2 + $0x1b0] sm:$0xff] %v1303
  %1924 = vst [vmem:[%s2 + $0x1b8] sm:$0xff] %v1306
  %1925 = vst [vmem:[%s2 + $0x1c0] sm:$0xff] %v1311
  %1926 = vst [vmem:[%s2 + $0x1c8] sm:$0xff] %v1314
  %1927 = vst [vmem:[%s2 + $0x1d0] sm:$0xff] %v1319
  %1928 = vst [vmem:[%s2 + $0x1d8] sm:$0xff] %v1322
  %1929 = vst [vmem:[%s2 + $0x1e0] sm:$0xff] %v1327
  %1930 = vst [vmem:[%s2 + $0x1e8] sm:$0xff] %v1330
  %1931 = vst [vmem:[%s2 + $0x1f0] sm:$0xff] %v1335
  %1932 = vst [vmem:[%s2 + $0x1f8] sm:$0xff] %v1338
  %1933 = vst [vmem:[%s2 + $0x200] sm:$0xff] %v1343
  %1934 = vst [vmem:[%s2 + $0x208] sm:$0xff] %v1346
  %1935 = vst [vmem:[%s2 + $0x210] sm:$0xff] %v1351
  %1936 = vst [vmem:[%s2 + $0x218] sm:$0xff] %v1354
  %1937 = vst [vmem:[%s2 + $0x220] sm:$0xff] %v1359
  %1938 = vst [vmem:[%s2 + $0x228] sm:$0xff] %v1362
  %1939 = vst [vmem:[%s2 + $0x230] sm:$0xff] %v1367
  %1940 = vst [vmem:[%s2 + $0x238] sm:$0xff] %v1370
  %1941 = vst [vmem:[%s2 + $0x240] sm:$0xff] %v1375
  %1942 = vst [vmem:[%s2 + $0x248] sm:$0xff] %v1378
  %1943 = vst [vmem:[%s2 + $0x250] sm:$0xff] %v1383
  %1944 = vst [vmem:[%s2 + $0x258] sm:$0xff] %v1386
  %1945 = vst [vmem:[%s2 + $0x260] sm:$0xff] %v1391
  %1946 = vst [vmem:[%s2 + $0x268] sm:$0xff] %v1394
  %1947 = vst [vmem:[%s2 + $0x270] sm:$0xff] %v1399
  %1948 = vst [vmem:[%s2 + $0x278] sm:$0xff] %v1402
  %1949 = vst [vmem:[%s2 + $0x280] sm:$0xff] %v1407
  %1950 = vst [vmem:[%s2 + $0x288] sm:$0xff] %v1410
  %1951 = vst [vmem:[%s2 + $0x290] sm:$0xff] %v1415
  %1952 = vst [vmem:[%s2 + $0x298] sm:$0xff] %v1418
  %1953 = vst [vmem:[%s2 + $0x2a0] sm:$0xff] %v1423
  %1954 = vst [vmem:[%s2 + $0x2a8] sm:$0xff] %v1426
  %1955 = vst [vmem:[%s2 + $0x2b0] sm:$0xff] %v1431
  %1956 = vst [vmem:[%s2 + $0x2b8] sm:$0xff] %v1434
  %1957 = vst [vmem:[%s2 + $0x2c0] sm:$0xff] %v1439
  %1958 = vst [vmem:[%s2 + $0x2c8] sm:$0xff] %v1442
  %1959 = vst [vmem:[%s2 + $0x2d0] sm:$0xff] %v1447
  %1960 = vst [vmem:[%s2 + $0x2d8] sm:$0xff] %v1450
  %1961 = vst [vmem:[%s2 + $0x2e0] sm:$0xff] %v1455
  %1962 = vst [vmem:[%s2 + $0x2e8] sm:$0xff] %v1458
  %1963 = vst [vmem:[%s2 + $0x2f0] sm:$0xff] %v1463
  %1964 = vst [vmem:[%s2 + $0x2f8] sm:$0xff] %v1466
  %1965 = vst [vmem:[%s2 + $0x300] sm:$0xff] %v1471
  %1966 = vst [vmem:[%s2 + $0x308] sm:$0xff] %v1474
  %1967 = vst [vmem:[%s2 + $0x310] sm:$0xff] %v1479
  %1968 = vst [vmem:[%s2 + $0x318] sm:$0xff] %v1482
  %1969 = vst [vmem:[%s2 + $0x320] sm:$0xff] %v1487
  %1970 = vst [vmem:[%s2 + $0x328] sm:$0xff] %v1490
  %1971 = vst [vmem:[%s2 + $0x330] sm:$0xff] %v1495
  %1972 = vst [vmem:[%s2 + $0x338] sm:$0xff] %v1498
  %1973 = vst [vmem:[%s2 + $0x340] sm:$0xff] %v1503
  %1974 = vst [vmem:[%s2 + $0x348] sm:$0xff] %v1506
  %1975 = vst [vmem:[%s2 + $0x350] sm:$0xff] %v1511
  %1976 = vst [vmem:[%s2 + $0x358] sm:$0xff] %v1514
  %1977 = vst [vmem:[%s2 + $0x360] sm:$0xff] %v1519
  %1978 = vst [vmem:[%s2 + $0x368] sm:$0xff] %v1522
  %1979 = vst [vmem:[%s2 + $0x370] sm:$0xff] %v1527
  %1980 = vst [vmem:[%s2 + $0x378] sm:$0xff] %v1530
  %1981 = vst [vmem:[%s2 + $0x380] sm:$0xff] %v1535
  %1982 = vst [vmem:[%s2 + $0x388] sm:$0xff] %v1538
  %1983 = vst [vmem:[%s2 + $0x390] sm:$0xff] %v1543
  %1984 = vst [vmem:[%s2 + $0x398] sm:$0xff] %v1546
  %1985 = vst [vmem:[%s2 + $0x3a0] sm:$0xff] %v1551
  %1986 = vst [vmem:[%s2 + $0x3a8] sm:$0xff] %v1554
  %1987 = vst [vmem:[%s2 + $0x3b0] sm:$0xff] %v1559
  %1988 = vst [vmem:[%s2 + $0x3b8] sm:$0xff] %v1562
  %1989 = vst [vmem:[%s2 + $0x3c0] sm:$0xff] %v1567
  %1990 = vst [vmem:[%s2 + $0x3c8] sm:$0xff] %v1570
  %1991 = vst [vmem:[%s2 + $0x3d0] sm:$0xff] %v1575
  %1992 = vst [vmem:[%s2 + $0x3d8] sm:$0xff] %v1578
  %1993 = vst [vmem:[%s2 + $0x3e0] sm:$0xff] %v1583
  %1994 = vst [vmem:[%s2 + $0x3e8] sm:$0xff] %v1586
  %1995 = vst [vmem:[%s2 + $0x3f0] sm:$0xff] %v1591
  %1996 = vst [vmem:[%s2 + $0x3f8] sm:$0xff] %v1594
  %1997 = vst [vmem:[%s2 + $0x400] sm:$0xff] %v1599
  %1998 = vst [vmem:[%s2 + $0x408] sm:$0xff] %v1602
  %1999 = vst [vmem:[%s2 + $0x410] sm:$0xff] %v1607
  %2000 = vst [vmem:[%s2 + $0x418] sm:$0xff] %v1610
  %2001 = vst [vmem:[%s2 + $0x420] sm:$0xff] %v1615
  %2002 = vst [vmem:[%s2 + $0x428] sm:$0xff] %v1618
  %2003 = vst [vmem:[%s2 + $0x430] sm:$0xff] %v1623
  %2004 = vst [vmem:[%s2 + $0x438] sm:$0xff] %v1626
  %2005 = vst [vmem:[%s2 + $0x440] sm:$0xff] %v1631
  %2006 = vst [vmem:[%s2 + $0x448] sm:$0xff] %v1634
  %2007 = vst [vmem:[%s2 + $0x450] sm:$0xff] %v1639
  %2008 = vst [vmem:[%s2 + $0x458] sm:$0xff] %v1642
  %2009 = vst [vmem:[%s2 + $0x460] sm:$0xff] %v1647
  %2010 = vst [vmem:[%s2 + $0x468] sm:$0xff] %v1650
  %2011 = vst [vmem:[%s2 + $0x470] sm:$0xff] %v1655
  %2012 = vst [vmem:[%s2 + $0x478] sm:$0xff] %v1658
  %2013 = vst [vmem:[%s2 + $0x480] sm:$0xff] %v1663
  %2014 = vst [vmem:[%s2 + $0x488] sm:$0xff] %v1666
  %2015 = vst [vmem:[%s2 + $0x490] sm:$0xff] %v1671
  %2016 = vst [vmem:[%s2 + $0x498] sm:$0xff] %v1674
  %2017 = vst [vmem:[%s2 + $0x4a0] sm:$0xff] %v1679
  %2018 = vst [vmem:[%s2 + $0x4a8] sm:$0xff] %v1682
  %2019 = vst [vmem:[%s2 + $0x4b0] sm:$0xff] %v1687
  %2020 = vst [vmem:[%s2 + $0x4b8] sm:$0xff] %v1690
  %2021 = vst [vmem:[%s2 + $0x4c0] sm:$0xff] %v1695
  %2022 = vst [vmem:[%s2 + $0x4c8] sm:$0xff] %v1698
  %2023 = vst [vmem:[%s2 + $0x4d0] sm:$0xff] %v1703
  %2024 = vst [vmem:[%s2 + $0x4d8] sm:$0xff] %v1706
  %2025 = vst [vmem:[%s2 + $0x4e0] sm:$0xff] %v1711
  %2026 = vst [vmem:[%s2 + $0x4e8] sm:$0xff] %v1714
  %2027 = vst [vmem:[%s2 + $0x4f0] sm:$0xff] %v1719
  %2028 = vst [vmem:[%s2 + $0x4f8] sm:$0xff] %v1722
  %2029 = vst [vmem:[%s2 + $0x500] sm:$0xff] %v1727
  %2030 = vst [vmem:[%s2 + $0x508] sm:$0xff] %v1730
  %2031 = vst [vmem:[%s2 + $0x510] sm:$0xff] %v1735
  %2032 = vst [vmem:[%s2 + $0x518] sm:$0xff] %v1738
  %2033 = vst [vmem:[%s2 + $0x520] sm:$0xff] %v1743
  %2034 = vst [vmem:[%s2 + $0x528] sm:$0xff] %v1746
  %2035 = vst [vmem:[%s2 + $0x530] sm:$0xff] %v1751
  %2036 = vst [vmem:[%s2 + $0x538] sm:$0xff] %v1754
  %2037 = vst [vmem:[%s2 + $0x540] sm:$0xff] %v1759
  %2038 = vst [vmem:[%s2 + $0x548] sm:$0xff] %v1762
  %2039 = vst [vmem:[%s2 + $0x550] sm:$0xff] %v1767
  %2040 = vst [vmem:[%s2 + $0x558] sm:$0xff] %v1770
  %2041 = vst [vmem:[%s2 + $0x560] sm:$0xff] %v1775
  %2042 = vst [vmem:[%s2 + $0x568] sm:$0xff] %v1778
  %2043 = vst [vmem:[%s2 + $0x570] sm:$0xff] %v1783
  %2044 = vst [vmem:[%s2 + $0x578] sm:$0xff] %v1786
  %2045 = vst [vmem:[%s2 + $0x580] sm:$0xff] %v1791
  %2046 = vst [vmem:[%s2 + $0x588] sm:$0xff] %v1794
  %2047 = vst [vmem:[%s2 + $0x590] sm:$0xff] %v1799
  %2048 = vst [vmem:[%s2 + $0x598] sm:$0xff] %v1802
  %2049 = vst [vmem:[%s2 + $0x5a0] sm:$0xff] %v1807
  %2050 = vst [vmem:[%s2 + $0x5a8] sm:$0xff] %v1810
  %2051 = vst [vmem:[%s2 + $0x5b0] sm:$0xff] %v1815
  %2052 = vst [vmem:[%s2 + $0x5b8] sm:$0xff] %v1818
  %2053 = vst [vmem:[%s2 + $0x5c0] sm:$0xff] %v1823
  %2054 = vst [vmem:[%s2 + $0x5c8] sm:$0xff] %v1826
  %2055 = vst [vmem:[%s2 + $0x5d0] sm:$0xff] %v1831
  %2056 = vst [vmem:[%s2 + $0x5d8] sm:$0xff] %v1834
  %2057 = vst [vmem:[%s2 + $0x5e0] sm:$0xff] %v1839
  %2058 = vst [vmem:[%s2 + $0x5e8] sm:$0xff] %v1842
  %2059 = vst [vmem:[%s2 + $0x5f0] sm:$0xff] %v1847
  %2060 = vst [vmem:[%s2 + $0x5f8] sm:$0xff] %v1850
  %2061 = vst [vmem:[%s2 + $0x600] sm:$0xff] %v1855
  %2062 = vst [vmem:[%s2 + $0x608] sm:$0xff] %v1858
  %2063 = vst [vmem:[%s2 + $0x610] sm:$0xff] %v1863
  %2064 = vst [vmem:[%s2 + $0x618] sm:$0xff] %v1866
  // Predicated region
  $region10: #{pv_rcnn_forward.7} parent=0 // pred_check
    _
  $region11: #{pv_rcnn_forward.7} parent=0 // pred_check_branch
    %2066 = sbr.rel (0) target = $region13
  $region12: #{pv_rcnn_forward.7} parent=0 // pred_region
    _
  $region13: #{pv_rcnn_forward.7} parent=0 // pred_fallthru
    _
  // Predicated region
  $region14: #{pv_rcnn_forward.7} parent=0 // pred_check
    _
  $region15: #{pv_rcnn_forward.7} parent=0 // pred_check_branch
    %2068 = sbr.rel (0) target = $region17
  $region16: #{pv_rcnn_forward.7} parent=0 // pred_region
    _
  $region17: #{pv_rcnn_forward.7} parent=0 // pred_fallthru
    _

// kernel: pv_rcnn_forward.8
$region0: #{pv_rcnn_forward.8}
  #allocation0 [shape = 'u32[]', space=smem, size = 0x4, offset = 0x4, fixed_abs, tag = 'smem constant byte address 0x4 - core index']
  #allocation1 [shape = 'u32[144,128]{1,0:T(1,128)}', space=vmem, size = 0x12000, scoped, tag = 'internal scratch']
  %s0 = inlined_call_operand.vmem [shape: bf16[196,432], index: 0, kind: input, shape index: {}]
  %s1 = inlined_call_operand.vmem [shape: bf16[432,128], index: 1, kind: input, shape index: {}]
  %s2 = inlined_call_operand.vmem [shape: f32[196,128], index: 2, kind: output, shape index: {}]
  %s3 = sld [smem:[#allocation0]]
  $region18: #{pv_rcnn_forward.8} parent=0
    _
  %s5 = ssub.s32 1, %s3
  %s6 = scalar_select 0, %s5, %s3
  // Predicated region
  $region2: #{pv_rcnn_forward.8} parent=0 // pred_check
    _
  $region3: #{pv_rcnn_forward.8} parent=0 // pred_check_branch
    %8 = sbr.rel (0) target = $region5
  $region4: #{pv_rcnn_forward.8} parent=0 // pred_region
    _
  $region5: #{pv_rcnn_forward.8} parent=0 // pred_fallthru
    _
  // Predicated region
  $region6: #{pv_rcnn_forward.8} parent=0 // pred_check
    _
  $region7: #{pv_rcnn_forward.8} parent=0 // pred_check_branch
    %10 = sbr.rel (0) target = $region9
  $region8: #{pv_rcnn_forward.8} parent=0 // pred_region
    _
  $region9: #{pv_rcnn_forward.8} parent=0 // pred_fallthru
    _
  %v12 = vld [vmem:[%s0] sm:$0xff]
  %v13 = vld [vmem:[%s0 + $0x8] sm:$0xff]
  %v14 = vld [vmem:[%s0 + $0x10] sm:$0xff]
  %v15 = vld [vmem:[%s0 + $0x18] sm:$0xff]
  %v16 = vld [vmem:[%s0 + $0x20] sm:$0xff]
  %v17 = vld [vmem:[%s0 + $0x28] sm:$0xff]
  %v18 = vld [vmem:[%s0 + $0x30] sm:$0xff]
  %v19 = vld [vmem:[%s0 + $0x38] sm:$0xff]
  %v20 = vld [vmem:[%s0 + $0x40] sm:$0xff]
  %v21 = vld [vmem:[%s0 + $0x48] sm:$0xff]
  %v22 = vld [vmem:[%s0 + $0x50] sm:$0xff]
  %v23 = vld [vmem:[%s0 + $0x58] sm:$0xff]
  %v24 = vld [vmem:[%s0 + $0x60] sm:$0xff]
  %v25 = vld [vmem:[%s0 + $0x68] sm:$0xff]
  %v26 = vld [vmem:[%s0 + $0x70] sm:$0xff]
  %v27 = vld [vmem:[%s0 + $0x78] sm:$0xff]
  %v28 = vld [vmem:[%s0 + $0x80] sm:$0xff]
  %v29 = vld [vmem:[%s0 + $0x88] sm:$0xff]
  %v30 = vld [vmem:[%s0 + $0x90] sm:$0xff]
  %v31 = vld [vmem:[%s0 + $0x98] sm:$0xff]
  %v32 = vld [vmem:[%s0 + $0xa0] sm:$0xff]
  %v33 = vld [vmem:[%s0 + $0xa8] sm:$0xff]
  %v34 = vld [vmem:[%s0 + $0xb0] sm:$0xff]
  %v35 = vld [vmem:[%s0 + $0xb8] sm:$0xff]
  %v36 = vld [vmem:[%s0 + $0xc0] sm:$0xff]
  %v37 = vld [vmem:[%s0 + $0xc8] sm:$0xff]
  %v38 = vld [vmem:[%s0 + $0xd0] sm:$0xff]
  %v39 = vld [vmem:[%s0 + $0xd8] sm:$0xff]
  %v40 = vld [vmem:[%s0 + $0xe0] sm:$0xff]
  %v41 = vld [vmem:[%s0 + $0xe8] sm:$0xff]
  %v42 = vld [vmem:[%s0 + $0xf0] sm:$0xff]
  %v43 = vld [vmem:[%s0 + $0xf8] sm:$0xff]
  %v44 = vld [vmem:[%s0 + $0x100] sm:$0xff]
  %v45 = vld [vmem:[%s0 + $0x108] sm:$0xff]
  %v46 = vld [vmem:[%s0 + $0x110] sm:$0xff]
  %v47 = vld [vmem:[%s0 + $0x118] sm:$0xff]
  %v48 = vld [vmem:[%s0 + $0x120] sm:$0xff]
  %v49 = vld [vmem:[%s0 + $0x128] sm:$0xff]
  %v50 = vld [vmem:[%s0 + $0x130] sm:$0xff]
  %v51 = vld [vmem:[%s0 + $0x138] sm:$0xff]
  %v52 = vld [vmem:[%s0 + $0x140] sm:$0xff]
  %v53 = vld [vmem:[%s0 + $0x148] sm:$0xff]
  %v54 = vld [vmem:[%s0 + $0x150] sm:$0xff]
  %v55 = vld [vmem:[%s0 + $0x158] sm:$0xff]
  %v56 = vld [vmem:[%s0 + $0x160] sm:$0xff]
  %v57 = vld [vmem:[%s0 + $0x168] sm:$0xff]
  %v58 = vld [vmem:[%s0 + $0x170] sm:$0xff]
  %v59 = vld [vmem:[%s0 + $0x178] sm:$0xff]
  %v60 = vld [vmem:[%s0 + $0x180] sm:$0x33]
  %v61 = vld [vmem:[%s0 + $0x188] sm:$0x33]
  %v62 = vld [vmem:[%s1] sm:$0xf]
  %v63 = vld [vmem:[%s1 + $0x4] sm:$0xf]
  %v64 = vld [vmem:[%s1 + $0x8] sm:$0xf]
  %v65 = vld [vmem:[%s1 + $0xc] sm:$0xf]
  %v66 = vld [vmem:[%s1 + $0x10] sm:$0xf]
  %v67 = vld [vmem:[%s1 + $0x14] sm:$0xf]
  %v68 = vld [vmem:[%s1 + $0x18] sm:$0xf]
  %v69 = vld [vmem:[%s1 + $0x1c] sm:$0xf]
  %v70 = vld [vmem:[%s1 + $0x20] sm:$0xf]
  %v71 = vld [vmem:[%s1 + $0x24] sm:$0xf]
  %v72 = vld [vmem:[%s1 + $0x28] sm:$0xf]
  %v73 = vld [vmem:[%s1 + $0x2c] sm:$0xf]
  %v74 = vld [vmem:[%s1 + $0x30] sm:$0xf]
  %v75 = vld [vmem:[%s1 + $0x34] sm:$0xf]
  %v76 = vld [vmem:[%s1 + $0x38] sm:$0xf]
  %v77 = vld [vmem:[%s1 + $0x3c] sm:$0xf]
  %v78 = vld [vmem:[%s1 + $0x40] sm:$0xf]
  %v79 = vld [vmem:[%s1 + $0x44] sm:$0xf]
  %v80 = vld [vmem:[%s1 + $0x48] sm:$0xf]
  %v81 = vld [vmem:[%s1 + $0x4c] sm:$0xf]
  %v82 = vld [vmem:[%s1 + $0x50] sm:$0xf]
  %v83 = vld [vmem:[%s1 + $0x54] sm:$0xf]
  %v84 = vld [vmem:[%s1 + $0x58] sm:$0xf]
  %v85 = vld [vmem:[%s1 + $0x5c] sm:$0xf]
  %v86 = vld [vmem:[%s1 + $0x60] sm:$0xf]
  %v87 = vld [vmem:[%s1 + $0x64] sm:$0xf]
  %v88 = vld [vmem:[%s1 + $0x68] sm:$0xf]
  %v89 = vld [vmem:[%s1 + $0x6c] sm:$0xf]
  %v90 = vld [vmem:[%s1 + $0x70] sm:$0xf]
  %v91 = vld [vmem:[%s1 + $0x74] sm:$0xf]
  %v92 = vld [vmem:[%s1 + $0x78] sm:$0xf]
  %v93 = vld [vmem:[%s1 + $0x7c] sm:$0xf]
  %v94 = vld [vmem:[%s1 + $0x80] sm:$0xf]
  %v95 = vld [vmem:[%s1 + $0x84] sm:$0xf]
  %v96 = vld [vmem:[%s1 + $0x88] sm:$0xf]
  %v97 = vld [vmem:[%s1 + $0x8c] sm:$0xf]
  %v98 = vld [vmem:[%s1 + $0x90] sm:$0xf]
  %v99 = vld [vmem:[%s1 + $0x94] sm:$0xf]
  %v100 = vld [vmem:[%s1 + $0x98] sm:$0xf]
  %v101 = vld [vmem:[%s1 + $0x9c] sm:$0xf]
  %v102 = vld [vmem:[%s1 + $0xa0] sm:$0xf]
  %v103 = vld [vmem:[%s1 + $0xa4] sm:$0xf]
  %v104 = vld [vmem:[%s1 + $0xa8] sm:$0xf]
  %v105 = vld [vmem:[%s1 + $0xac] sm:$0xf]
  %v106 = vld [vmem:[%s1 + $0xb0] sm:$0xf]
  %v107 = vld [vmem:[%s1 + $0xb4] sm:$0xf]
  %v108 = vld [vmem:[%s1 + $0xb8] sm:$0xf]
  %v109 = vld [vmem:[%s1 + $0xbc] sm:$0xf]
  %v110 = vld [vmem:[%s1 + $0xc0] sm:$0xf]
  %v111 = vld [vmem:[%s1 + $0xc4] sm:$0xf]
  %v112 = vld [vmem:[%s1 + $0xc8] sm:$0xf]
  %v113 = vld [vmem:[%s1 + $0xcc] sm:$0xf]
  %v114 = vld [vmem:[%s1 + $0xd0] sm:$0xf]
  %v115 = vld [vmem:[%s1 + $0xd4] sm:$0xf]
  %v166 = vunpack.c.l.b16 %v12
  %v167 = vunpack.c.h.b16 %v12
  %v168 = vunpack.c.l.b16 %v13
  %v169 = vunpack.c.h.b16 %v13
  %v170 = vunpack.c.l.b16 %v14
  %v171 = vunpack.c.h.b16 %v14
  %v172 = vunpack.c.l.b16 %v15
  %v173 = vunpack.c.h.b16 %v15
  %v174 = vunpack.c.l.b16 %v16
  %v175 = vunpack.c.h.b16 %v16
  %v176 = vunpack.c.l.b16 %v17
  %v177 = vunpack.c.h.b16 %v17
  %v178 = vunpack.c.l.b16 %v18
  %v179 = vunpack.c.h.b16 %v18
  %v180 = vunpack.c.l.b16 %v19
  %v181 = vunpack.c.h.b16 %v19
  %v182 = vunpack.c.l.b16 %v20
  %v183 = vunpack.c.h.b16 %v20
  %v184 = vunpack.c.l.b16 %v21
  %v185 = vunpack.c.h.b16 %v21
  %v186 = vunpack.c.l.b16 %v22
  %v187 = vunpack.c.h.b16 %v22
  %v188 = vunpack.c.l.b16 %v23
  %v189 = vunpack.c.h.b16 %v23
  %v190 = vunpack.c.l.b16 %v24
  %v191 = vunpack.c.h.b16 %v24
  %v192 = vunpack.c.l.b16 %v25
  %v193 = vunpack.c.h.b16 %v25
  %v194 = vunpack.c.l.b16 %v26
  %v195 = vunpack.c.h.b16 %v26
  %v196 = vunpack.c.l.b16 %v27
  %v197 = vunpack.c.h.b16 %v27
  %v198 = vunpack.c.l.b16 %v28
  %v199 = vunpack.c.h.b16 %v28
  %v200 = vunpack.c.l.b16 %v29
  %v201 = vunpack.c.h.b16 %v29
  %v202 = vunpack.c.l.b16 %v30
  %v203 = vunpack.c.h.b16 %v30
  %v204 = vunpack.c.l.b16 %v31
  %v205 = vunpack.c.h.b16 %v31
  %v206 = vunpack.c.l.b16 %v32
  %v207 = vunpack.c.h.b16 %v32
  %v208 = vunpack.c.l.b16 %v33
  %v209 = vunpack.c.h.b16 %v33
  %v210 = vunpack.c.l.b16 %v34
  %v211 = vunpack.c.h.b16 %v34
  %v212 = vunpack.c.l.b16 %v35
  %v213 = vunpack.c.h.b16 %v35
  %v214 = vunpack.c.l.b16 %v36
  %v215 = vunpack.c.h.b16 %v36
  %v216 = vunpack.c.l.b16 %v37
  %v217 = vunpack.c.h.b16 %v37
  %v218 = vunpack.c.l.b16 %v38
  %v219 = vunpack.c.h.b16 %v38
  %v220 = vunpack.c.l.b16 %v39
  %v221 = vunpack.c.h.b16 %v39
  %v222 = vunpack.c.l.b16 %v40
  %v223 = vunpack.c.h.b16 %v40
  %v224 = vunpack.c.l.b16 %v41
  %v225 = vunpack.c.h.b16 %v41
  %v226 = vunpack.c.l.b16 %v42
  %v227 = vunpack.c.h.b16 %v42
  %v228 = vunpack.c.l.b16 %v43
  %v229 = vunpack.c.h.b16 %v43
  %v230 = vunpack.c.l.b16 %v44
  %v231 = vunpack.c.h.b16 %v44
  %v232 = vunpack.c.l.b16 %v45
  %v233 = vunpack.c.h.b16 %v45
  %v234 = vunpack.c.l.b16 %v46
  %v235 = vunpack.c.h.b16 %v46
  %v236 = vunpack.c.l.b16 %v47
  %v237 = vunpack.c.h.b16 %v47
  %v238 = vunpack.c.l.b16 %v48
  %v239 = vunpack.c.h.b16 %v48
  %v240 = vunpack.c.l.b16 %v49
  %v241 = vunpack.c.h.b16 %v49
  %v242 = vunpack.c.l.b16 %v50
  %v243 = vunpack.c.h.b16 %v50
  %v244 = vunpack.c.l.b16 %v51
  %v245 = vunpack.c.h.b16 %v51
  %v246 = vunpack.c.l.b16 %v52
  %v247 = vunpack.c.h.b16 %v52
  %v248 = vunpack.c.l.b16 %v53
  %v249 = vunpack.c.h.b16 %v53
  %v250 = vunpack.c.l.b16 %v54
  %v251 = vunpack.c.h.b16 %v54
  %v252 = vunpack.c.l.b16 %v55
  %v253 = vunpack.c.h.b16 %v55
  %v254 = vunpack.c.l.b16 %v56
  %v255 = vunpack.c.h.b16 %v56
  %v256 = vunpack.c.l.b16 %v57
  %v257 = vunpack.c.h.b16 %v57
  %v258 = vunpack.c.l.b16 %v58
  %v259 = vunpack.c.h.b16 %v58
  %v260 = vunpack.c.l.b16 %v59
  %v261 = vunpack.c.h.b16 %v59
  %v262 = vunpack.c.l.b16 %v60
  %v263 = vunpack.c.h.b16 %v60
  %v264 = vunpack.c.l.b16 %v61
  %v265 = vunpack.c.h.b16 %v61
  %v266 = vpack.c.b16 %v170, %v166
  %v267 = vpack.c.b16 %v171, %v167
  %v268 = vpack.c.b16 %v172, %v168
  %v269 = vpack.c.b16 %v173, %v169
  %v270 = vpack.c.b16 %v178, %v174
  %v271 = vpack.c.b16 %v179, %v175
  %v272 = vpack.c.b16 %v180, %v176
  %v273 = vpack.c.b16 %v181, %v177
  %v274 = vpack.c.b16 %v186, %v182
  %v275 = vpack.c.b16 %v187, %v183
  %v276 = vpack.c.b16 %v188, %v184
  %v277 = vpack.c.b16 %v189, %v185
  %v278 = vpack.c.b16 %v194, %v190
  %v279 = vpack.c.b16 %v195, %v191
  %v280 = vpack.c.b16 %v196, %v192
  %v281 = vpack.c.b16 %v197, %v193
  %v282 = vpack.c.b16 %v202, %v198
  %v283 = vpack.c.b16 %v203, %v199
  %v284 = vpack.c.b16 %v204, %v200
  %v285 = vpack.c.b16 %v205, %v201
  %v286 = vpack.c.b16 %v210, %v206
  %v287 = vpack.c.b16 %v211, %v207
  %v288 = vpack.c.b16 %v212, %v208
  %v289 = vpack.c.b16 %v213, %v209
  %v290 = vpack.c.b16 %v218, %v214
  %v291 = vpack.c.b16 %v219, %v215
  %v292 = vpack.c.b16 %v220, %v216
  %v293 = vpack.c.b16 %v221, %v217
  %v294 = vpack.c.b16 %v226, %v222
  %v295 = vpack.c.b16 %v227, %v223
  %v296 = vpack.c.b16 %v228, %v224
  %v297 = vpack.c.b16 %v229, %v225
  %v298 = vpack.c.b16 %v234, %v230
  %v299 = vpack.c.b16 %v235, %v231
  %v300 = vpack.c.b16 %v236, %v232
  %v301 = vpack.c.b16 %v237, %v233
  %v302 = vpack.c.b16 %v242, %v238
  %v303 = vpack.c.b16 %v243, %v239
  %v304 = vpack.c.b16 %v244, %v240
  %v305 = vpack.c.b16 %v245, %v241
  %v306 = vpack.c.b16 %v250, %v246
  %v307 = vpack.c.b16 %v251, %v247
  %v308 = vpack.c.b16 %v252, %v248
  %v309 = vpack.c.b16 %v253, %v249
  %v310 = vpack.c.b16 %v258, %v254
  %v311 = vpack.c.b16 %v259, %v255
  %v312 = vpack.c.b16 %v260, %v256
  %v313 = vpack.c.b16 %v261, %v257
  %v314 = vpack.c.b16 %v262, %v262
  %v315 = vpack.c.b16 %v263, %v263
  %v316 = vpack.c.b16 %v264, %v264
  %v317 = vpack.c.b16 %v265, %v265
  %v411 = vunpack.c.l.b16 %v62
  %v412 = vunpack.c.l.b16 %v63
  %v413 = vunpack.c.l.b16 %v64
  %v414 = vunpack.c.l.b16 %v65
  %v415 = vunpack.c.l.b16 %v66
  %v416 = vunpack.c.l.b16 %v67
  %v417 = vunpack.c.l.b16 %v68
  %v418 = vunpack.c.l.b16 %v69
  %v419 = vunpack.c.l.b16 %v70
  %v420 = vunpack.c.l.b16 %v71
  %v421 = vunpack.c.l.b16 %v72
  %v422 = vunpack.c.l.b16 %v73
  %v423 = vunpack.c.l.b16 %v74
  %v424 = vunpack.c.l.b16 %v75
  %v425 = vunpack.c.l.b16 %v76
  %v426 = vunpack.c.l.b16 %v77
  %v427 = vunpack.c.l.b16 %v78
  %v428 = vunpack.c.l.b16 %v79
  %v429 = vunpack.c.l.b16 %v80
  %v430 = vunpack.c.l.b16 %v81
  %v431 = vunpack.c.l.b16 %v82
  %v432 = vunpack.c.l.b16 %v83
  %v433 = vunpack.c.l.b16 %v84
  %v434 = vunpack.c.l.b16 %v85
  %v435 = vunpack.c.l.b16 %v86
  %v436 = vunpack.c.l.b16 %v87
  %v437 = vunpack.c.l.b16 %v88
  %v438 = vunpack.c.l.b16 %v89
  %v439 = vunpack.c.l.b16 %v90
  %v440 = vunpack.c.l.b16 %v91
  %v441 = vunpack.c.l.b16 %v92
  %v442 = vunpack.c.l.b16 %v93
  %v443 = vunpack.c.l.b16 %v94
  %v444 = vunpack.c.l.b16 %v95
  %v445 = vunpack.c.l.b16 %v96
  %v446 = vunpack.c.l.b16 %v97
  %v447 = vunpack.c.l.b16 %v98
  %v448 = vunpack.c.l.b16 %v99
  %v449 = vunpack.c.l.b16 %v100
  %v450 = vunpack.c.l.b16 %v101
  %v451 = vunpack.c.l.b16 %v102
  %v452 = vunpack.c.l.b16 %v103
  %v453 = vunpack.c.l.b16 %v104
  %v454 = vunpack.c.l.b16 %v105
  %v455 = vunpack.c.l.b16 %v106
  %v456 = vunpack.c.l.b16 %v107
  %v457 = vunpack.c.l.b16 %v108
  %v458 = vunpack.c.l.b16 %v109
  %v459 = vunpack.c.l.b16 %v110
  %v460 = vunpack.c.l.b16 %v111
  %v461 = vunpack.c.l.b16 %v112
  %v462 = vunpack.c.l.b16 %v113
  %v463 = vunpack.c.l.b16 %v114
  %v464 = vunpack.c.l.b16 %v115
  %v465 = vpack.c.b16 %v412, %v411
  %v466 = vpack.c.b16 %v414, %v413
  %v467 = vpack.c.b16 %v416, %v415
  %v468 = vpack.c.b16 %v418, %v417
  %v469 = vpack.c.b16 %v420, %v419
  %v470 = vpack.c.b16 %v422, %v421
  %v471 = vpack.c.b16 %v424, %v423
  %v472 = vpack.c.b16 %v426, %v425
  %v473 = vpack.c.b16 %v428, %v427
  %v474 = vpack.c.b16 %v430, %v429
  %v475 = vpack.c.b16 %v432, %v431
  %v476 = vpack.c.b16 %v434, %v433
  %v477 = vpack.c.b16 %v436, %v435
  %v478 = vpack.c.b16 %v438, %v437
  %v479 = vpack.c.b16 %v440, %v439
  %v480 = vpack.c.b16 %v442, %v441
  %v481 = vpack.c.b16 %v444, %v443
  %v482 = vpack.c.b16 %v446, %v445
  %v483 = vpack.c.b16 %v448, %v447
  %v484 = vpack.c.b16 %v450, %v449
  %v485 = vpack.c.b16 %v452, %v451
  %v486 = vpack.c.b16 %v454, %v453
  %v487 = vpack.c.b16 %v456, %v455
  %v488 = vpack.c.b16 %v458, %v457
  %v489 = vpack.c.b16 %v460, %v459
  %v490 = vpack.c.b16 %v462, %v461
  %v491 = vpack.c.b16 %v464, %v463
  %vm519 = vcmask 392192
  %v521 = vsel %vm519, %v269, 0
  %v524 = vsel %vm519, %v273, 0
  %v527 = vsel %vm519, %v277, 0
  %v530 = vsel %vm519, %v281, 0
  %v533 = vsel %vm519, %v285, 0
  %v536 = vsel %vm519, %v289, 0
  %v539 = vsel %vm519, %v293, 0
  %v542 = vsel %vm519, %v297, 0
  %v545 = vsel %vm519, %v301, 0
  %v548 = vsel %vm519, %v305, 0
  %v551 = vsel %vm519, %v309, 0
  %v554 = vsel %vm519, %v313, 0
  %v557 = vsel %vm519, %v317, 0
  %559 = vmatprep.subr.bf16.mxu0 0
  %560 = vmatpush1.bf16.msra.mxu0 %v465
  %561 = vmatprep.subr.bf16.mxu0 0
  %562 = vmatpush1.bf16.msra.mxu0 %v466
  %563 = vmatprep.subr.bf16.mxu0 0
  %564 = vmatpush1.bf16.msra.mxu0 %v467
  %565 = vmatprep.subr.bf16.mxu0 0
  %566 = vmatpush1.bf16.msra.mxu0 %v468
  %567 = vmatprep.subr.bf16.mxu0 0
  %568 = vmatpush1.bf16.msra.mxu0 %v469
  %569 = vmatprep.subr.bf16.mxu0 0
  %570 = vmatpush1.bf16.msra.mxu0 %v470
  %571 = vmatprep.subr.bf16.mxu0 0
  %572 = vmatpush1.bf16.msra.mxu0 %v471
  %573 = vmatprep.subr.bf16.mxu0 0
  %574 = vmatpush1.bf16.msra.mxu0 %v472
  %575 = vmatprep.subr.bf16.mxu0 0
  %576 = vmatpush1.bf16.msra.mxu0 %v473
  %577 = vmatprep.subr.bf16.mxu0 0
  %578 = vmatpush1.bf16.msra.mxu0 %v474
  %579 = vmatprep.subr.bf16.mxu0 0
  %580 = vmatpush1.bf16.msra.mxu0 %v475
  %581 = vmatprep.subr.bf16.mxu0 0
  %582 = vmatpush1.bf16.msra.mxu0 %v476
  %583 = vmatprep.subr.bf16.mxu0 0
  %584 = vmatpush1.bf16.msra.mxu0 %v477
  %585 = vmatprep.subr.bf16.mxu0 0
  %586 = vmatpush1.bf16.msra.mxu0 %v478
  %587 = vmatprep.subr.bf16.mxu0 0
  %588 = vmatpush1.bf16.msra.mxu0 %v479
  %589 = vmatprep.subr.bf16.mxu0 0
  %590 = vmatpush1.bf16.msra.mxu0 %v480
  %591 = vmatprep.mubr.bf16.mxu0 %v267
  %592 = vmatmul.mubr.bf16.gmra.mrb[0].mxu0 %v266
  %v593 = vpop.f32.mrb[0].mxu0
  %v594 = vadd.f32 0.0, %v593
  %v595 = vpop.f32.mrb[0].mxu0
  %v596 = vpop.f32.mrb[0].mxu0
  %v597 = vadd.f32 0.0, %v596
  %v598 = vpop.f32.mrb[0].mxu0
  %599 = vmatprep.mubr.bf16.mxu0 %v271
  %600 = vmatmul.mubr.bf16.gmra.mrb[0].mxu0 %v270
  %v601 = vpop.f32.mrb[0].mxu0
  %v602 = vadd.f32 0.0, %v601
  %v603 = vpop.f32.mrb[0].mxu0
  %v604 = vpop.f32.mrb[0].mxu0
  %v605 = vadd.f32 0.0, %v604
  %v606 = vpop.f32.mrb[0].mxu0
  %607 = vmatprep.mubr.bf16.mxu0 %v275
  %608 = vmatmul.mubr.bf16.gmra.mrb[0].mxu0 %v274
  %v609 = vpop.f32.mrb[0].mxu0
  %v610 = vadd.f32 0.0, %v609
  %v611 = vpop.f32.mrb[0].mxu0
  %v612 = vpop.f32.mrb[0].mxu0
  %v613 = vadd.f32 0.0, %v612
  %v614 = vpop.f32.mrb[0].mxu0
  %615 = vmatprep.mubr.bf16.mxu0 %v279
  %616 = vmatmul.mubr.bf16.gmra.mrb[0].mxu0 %v278
  %v617 = vpop.f32.mrb[0].mxu0
  %v618 = vadd.f32 0.0, %v617
  %v619 = vpop.f32.mrb[0].mxu0
  %v620 = vpop.f32.mrb[0].mxu0
  %v621 = vadd.f32 0.0, %v620
  %v622 = vpop.f32.mrb[0].mxu0
  %623 = vmatprep.mubr.bf16.mxu0 %v283
  %624 = vmatmul.mubr.bf16.gmra.mrb[0].mxu0 %v282
  %v625 = vpop.f32.mrb[0].mxu0
  %v626 = vadd.f32 0.0, %v625
  %v627 = vpop.f32.mrb[0].mxu0
  %v628 = vpop.f32.mrb[0].mxu0
  %v629 = vadd.f32 0.0, %v628
  %v630 = vpop.f32.mrb[0].mxu0
  %631 = vmatprep.mubr.bf16.mxu0 %v287
  %632 = vmatmul.mubr.bf16.gmra.mrb[0].mxu0 %v286
  %v633 = vpop.f32.mrb[0].mxu0
  %v634 = vadd.f32 0.0, %v633
  %v635 = vpop.f32.mrb[0].mxu0
  %v636 = vpop.f32.mrb[0].mxu0
  %v637 = vadd.f32 0.0, %v636
  %v638 = vpop.f32.mrb[0].mxu0
  %639 = vmatprep.mubr.bf16.mxu0 %v291
  %640 = vmatmul.mubr.bf16.gmra.mrb[0].mxu0 %v290
  %v641 = vpop.f32.mrb[0].mxu0
  %v642 = vadd.f32 0.0, %v641
  %v643 = vpop.f32.mrb[0].mxu0
  %v644 = vpop.f32.mrb[0].mxu0
  %v645 = vadd.f32 0.0, %v644
  %v646 = vpop.f32.mrb[0].mxu0
  %647 = vmatprep.mubr.bf16.mxu0 %v295
  %648 = vmatmul.mubr.bf16.gmra.mrb[0].mxu0 %v294
  %v649 = vpop.f32.mrb[0].mxu0
  %v650 = vadd.f32 0.0, %v649
  %v651 = vpop.f32.mrb[0].mxu0
  %v652 = vpop.f32.mrb[0].mxu0
  %v653 = vadd.f32 0.0, %v652
  %v654 = vpop.f32.mrb[0].mxu0
  %655 = vmatprep.mubr.bf16.mxu0 %v299
  %656 = vmatmul.mubr.bf16.gmra.mrb[0].mxu0 %v298
  %v657 = vpop.f32.mrb[0].mxu0
  %v658 = vadd.f32 0.0, %v657
  %v659 = vpop.f32.mrb[0].mxu0
  %v660 = vpop.f32.mrb[0].mxu0
  %v661 = vadd.f32 0.0, %v660
  %v662 = vpop.f32.mrb[0].mxu0
  %663 = vmatprep.mubr.bf16.mxu0 %v303
  %664 = vmatmul.mubr.bf16.gmra.mrb[0].mxu0 %v302
  %v665 = vpop.f32.mrb[0].mxu0
  %v666 = vadd.f32 0.0, %v665
  %v667 = vpop.f32.mrb[0].mxu0
  %v668 = vpop.f32.mrb[0].mxu0
  %v669 = vadd.f32 0.0, %v668
  %v670 = vpop.f32.mrb[0].mxu0
  %671 = vmatprep.mubr.bf16.mxu0 %v307
  %672 = vmatmul.mubr.bf16.gmra.mrb[0].mxu0 %v306
  %v673 = vpop.f32.mrb[0].mxu0
  %v674 = vadd.f32 0.0, %v673
  %v675 = vpop.f32.mrb[0].mxu0
  %v676 = vpop.f32.mrb[0].mxu0
  %v677 = vadd.f32 0.0, %v676
  %v678 = vpop.f32.mrb[0].mxu0
  %679 = vmatprep.mubr.bf16.mxu0 %v311
  %680 = vmatmul.mubr.bf16.gmra.mrb[0].mxu0 %v310
  %v681 = vpop.f32.mrb[0].mxu0
  %v682 = vadd.f32 0.0, %v681
  %v683 = vpop.f32.mrb[0].mxu0
  %v684 = vpop.f32.mrb[0].mxu0
  %v685 = vadd.f32 0.0, %v684
  %v686 = vpop.f32.mrb[0].mxu0
  %687 = vmatprep.mubr.bf16.mxu0 %v315
  %688 = vmatmul.mubr.bf16.gmra.mrb[0].mxu0 %v314
  %v689 = vpop.f32.mrb[0].mxu0
  %v690 = vadd.f32 0.0, %v689
  %v691 = vpop.f32.mrb[0].mxu0
  %v692 = vpop.f32.mrb[0].mxu0
  %v693 = vpop.f32.mrb[0].mxu0
  %694 = vdwg.mxu0
  %695 = vmatprep.subr.bf16.mxu0 0
  %696 = vmatpush1.bf16.msra.mxu0 %v481
  %697 = vmatprep.subr.bf16.mxu0 0
  %698 = vmatpush1.bf16.msra.mxu0 %v482
  %699 = vmatprep.subr.bf16.mxu0 0
  %700 = vmatpush1.bf16.msra.mxu0 %v483
  %701 = vmatprep.subr.bf16.mxu0 0
  %702 = vmatpush1.bf16.msra.mxu0 %v484
  %703 = vmatprep.subr.bf16.mxu0 0
  %704 = vmatpush1.bf16.msra.mxu0 %v485
  %705 = vmatprep.subr.bf16.mxu0 0
  %706 = vmatpush1.bf16.msra.mxu0 %v486
  %707 = vmatprep.subr.bf16.mxu0 0
  %708 = vmatpush1.bf16.msra.mxu0 %v487
  %709 = vmatprep.subr.bf16.mxu0 0
  %710 = vmatpush1.bf16.msra.mxu0 %v488
  %711 = vmatprep.subr.bf16.mxu0 0
  %712 = vmatpush1.bf16.msra.mxu0 %v489
  %713 = vmatprep.subr.bf16.mxu0 0
  %714 = vmatpush1.bf16.msra.mxu0 %v490
  %715 = vmatprep.subr.bf16.mxu0 0
  %716 = vmatpush1.bf16.msra.mxu0 %v491
  %717 = vmatprep.subr.bf16.mxu0 0
  %718 = vmatpush1.bf16.msra.mxu0 0
  %719 = vmatprep.subr.bf16.mxu0 0
  %720 = vmatpush1.bf16.msra.mxu0 0
  %721 = vmatprep.subr.bf16.mxu0 0
  %722 = vmatpush1.bf16.msra.mxu0 0
  %723 = vmatprep.subr.bf16.mxu0 0
  %724 = vmatpush1.bf16.msra.mxu0 0
  %725 = vmatprep.subr.bf16.mxu0 0
  %726 = vmatpush1.bf16.msra.mxu0 0
  %727 = vmatprep.mubr.bf16.mxu0 %v521
  %728 = vmatmul.mubr.bf16.gmra.mrb[0].mxu0 %v268
  %v729 = vpop.f32.mrb[0].mxu0
  %v730 = vadd.f32 %v594, %v729
  %v731 = vpop.f32.mrb[0].mxu0
  %v732 = vpop.f32.mrb[0].mxu0
  %v733 = vadd.f32 %v597, %v732
  %v734 = vpop.f32.mrb[0].mxu0
  %735 = vmatprep.mubr.bf16.mxu0 %v524
  %736 = vmatmul.mubr.bf16.gmra.mrb[0].mxu0 %v272
  %v737 = vpop.f32.mrb[0].mxu0
  %v738 = vadd.f32 %v602, %v737
  %v739 = vpop.f32.mrb[0].mxu0
  %v740 = vpop.f32.mrb[0].mxu0
  %v741 = vadd.f32 %v605, %v740
  %v742 = vpop.f32.mrb[0].mxu0
  %743 = vmatprep.mubr.bf16.mxu0 %v527
  %744 = vmatmul.mubr.bf16.gmra.mrb[0].mxu0 %v276
  %v745 = vpop.f32.mrb[0].mxu0
  %v746 = vadd.f32 %v610, %v745
  %v747 = vpop.f32.mrb[0].mxu0
  %v748 = vpop.f32.mrb[0].mxu0
  %v749 = vadd.f32 %v613, %v748
  %v750 = vpop.f32.mrb[0].mxu0
  %751 = vmatprep.mubr.bf16.mxu0 %v530
  %752 = vmatmul.mubr.bf16.gmra.mrb[0].mxu0 %v280
  %v753 = vpop.f32.mrb[0].mxu0
  %v754 = vadd.f32 %v618, %v753
  %v755 = vpop.f32.mrb[0].mxu0
  %v756 = vpop.f32.mrb[0].mxu0
  %v757 = vadd.f32 %v621, %v756
  %v758 = vpop.f32.mrb[0].mxu0
  %759 = vmatprep.mubr.bf16.mxu0 %v533
  %760 = vmatmul.mubr.bf16.gmra.mrb[0].mxu0 %v284
  %v761 = vpop.f32.mrb[0].mxu0
  %v762 = vadd.f32 %v626, %v761
  %v763 = vpop.f32.mrb[0].mxu0
  %v764 = vpop.f32.mrb[0].mxu0
  %v765 = vadd.f32 %v629, %v764
  %v766 = vpop.f32.mrb[0].mxu0
  %767 = vmatprep.mubr.bf16.mxu0 %v536
  %768 = vmatmul.mubr.bf16.gmra.mrb[0].mxu0 %v288
  %v769 = vpop.f32.mrb[0].mxu0
  %v770 = vadd.f32 %v634, %v769
  %v771 = vpop.f32.mrb[0].mxu0
  %v772 = vpop.f32.mrb[0].mxu0
  %v773 = vadd.f32 %v637, %v772
  %v774 = vpop.f32.mrb[0].mxu0
  %775 = vmatprep.mubr.bf16.mxu0 %v539
  %776 = vmatmul.mubr.bf16.gmra.mrb[0].mxu0 %v292
  %v777 = vpop.f32.mrb[0].mxu0
  %v778 = vadd.f32 %v642, %v777
  %v779 = vpop.f32.mrb[0].mxu0
  %v780 = vpop.f32.mrb[0].mxu0
  %v781 = vadd.f32 %v645, %v780
  %v782 = vpop.f32.mrb[0].mxu0
  %783 = vmatprep.mubr.bf16.mxu0 %v542
  %784 = vmatmul.mubr.bf16.gmra.mrb[0].mxu0 %v296
  %v785 = vpop.f32.mrb[0].mxu0
  %v786 = vadd.f32 %v650, %v785
  %v787 = vpop.f32.mrb[0].mxu0
  %v788 = vpop.f32.mrb[0].mxu0
  %v789 = vadd.f32 %v653, %v788
  %v790 = vpop.f32.mrb[0].mxu0
  %791 = vmatprep.mubr.bf16.mxu0 %v545
  %792 = vmatmul.mubr.bf16.gmra.mrb[0].mxu0 %v300
  %v793 = vpop.f32.mrb[0].mxu0
  %v794 = vadd.f32 %v658, %v793
  %v795 = vpop.f32.mrb[0].mxu0
  %v796 = vpop.f32.mrb[0].mxu0
  %v797 = vadd.f32 %v661, %v796
  %v798 = vpop.f32.mrb[0].mxu0
  %799 = vmatprep.mubr.bf16.mxu0 %v548
  %800 = vmatmul.mubr.bf16.gmra.mrb[0].mxu0 %v304
  %v801 = vpop.f32.mrb[0].mxu0
  %v802 = vadd.f32 %v666, %v801
  %v803 = vpop.f32.mrb[0].mxu0
  %v804 = vpop.f32.mrb[0].mxu0
  %v805 = vadd.f32 %v669, %v804
  %v806 = vpop.f32.mrb[0].mxu0
  %807 = vmatprep.mubr.bf16.mxu0 %v551
  %808 = vmatmul.mubr.bf16.gmra.mrb[0].mxu0 %v308
  %v809 = vpop.f32.mrb[0].mxu0
  %v810 = vadd.f32 %v674, %v809
  %v811 = vpop.f32.mrb[0].mxu0
  %v812 = vpop.f32.mrb[0].mxu0
  %v813 = vadd.f32 %v677, %v812
  %v814 = vpop.f32.mrb[0].mxu0
  %815 = vmatprep.mubr.bf16.mxu0 %v554
  %816 = vmatmul.mubr.bf16.gmra.mrb[0].mxu0 %v312
  %v817 = vpop.f32.mrb[0].mxu0
  %v818 = vadd.f32 %v682, %v817
  %v819 = vpop.f32.mrb[0].mxu0
  %v820 = vpop.f32.mrb[0].mxu0
  %v821 = vadd.f32 %v685, %v820
  %v822 = vpop.f32.mrb[0].mxu0
  %823 = vmatprep.mubr.bf16.mxu0 %v557
  %824 = vmatmul.mubr.bf16.gmra.mrb[0].mxu0 %v316
  %v825 = vpop.f32.mrb[0].mxu0
  %v826 = vadd.f32 %v690, %v825
  %v827 = vpop.f32.mrb[0].mxu0
  %v828 = vpop.f32.mrb[0].mxu0
  %v829 = vpop.f32.mrb[0].mxu0
  %830 = vdwg.mxu0
  %831 = vst [vmem:[%s2] sm:$0xff] %v730
  %832 = vst [vmem:[%s2 + $0x8] sm:$0xff] %v733
  %833 = vst [vmem:[%s2 + $0x10] sm:$0xff] %v738
  %834 = vst [vmem:[%s2 + $0x18] sm:$0xff] %v741
  %835 = vst [vmem:[%s2 + $0x20] sm:$0xff] %v746
  %836 = vst [vmem:[%s2 + $0x28] sm:$0xff] %v749
  %837 = vst [vmem:[%s2 + $0x30] sm:$0xff] %v754
  %838 = vst [vmem:[%s2 + $0x38] sm:$0xff] %v757
  %839 = vst [vmem:[%s2 + $0x40] sm:$0xff] %v762
  %840 = vst [vmem:[%s2 + $0x48] sm:$0xff] %v765
  %841 = vst [vmem:[%s2 + $0x50] sm:$0xff] %v770
  %842 = vst [vmem:[%s2 + $0x58] sm:$0xff] %v773
  %843 = vst [vmem:[%s2 + $0x60] sm:$0xff] %v778
  %844 = vst [vmem:[%s2 + $0x68] sm:$0xff] %v781
  %845 = vst [vmem:[%s2 + $0x70] sm:$0xff] %v786
  %846 = vst [vmem:[%s2 + $0x78] sm:$0xff] %v789
  %847 = vst [vmem:[%s2 + $0x80] sm:$0xff] %v794
  %848 = vst [vmem:[%s2 + $0x88] sm:$0xff] %v797
  %849 = vst [vmem:[%s2 + $0x90] sm:$0xff] %v802
  %850 = vst [vmem:[%s2 + $0x98] sm:$0xff] %v805
  %851 = vst [vmem:[%s2 + $0xa0] sm:$0xff] %v810
  %852 = vst [vmem:[%s2 + $0xa8] sm:$0xff] %v813
  %853 = vst [vmem:[%s2 + $0xb0] sm:$0xff] %v818
  %854 = vst [vmem:[%s2 + $0xb8] sm:$0xff] %v821
  %855 = vst [vmem:[%s2 + $0xc0] sm:$0xf] %v826
  // Predicated region
  $region10: #{pv_rcnn_forward.8} parent=0 // pred_check
    _
  $region11: #{pv_rcnn_forward.8} parent=0 // pred_check_branch
    %857 = sbr.rel (0) target = $region13
  $region12: #{pv_rcnn_forward.8} parent=0 // pred_region
    _
  $region13: #{pv_rcnn_forward.8} parent=0 // pred_fallthru
    _
  // Predicated region
  $region14: #{pv_rcnn_forward.8} parent=0 // pred_check
    _
  $region15: #{pv_rcnn_forward.8} parent=0 // pred_check_branch
    %859 = sbr.rel (0) target = $region17
  $region16: #{pv_rcnn_forward.8} parent=0 // pred_region
    _
  $region17: #{pv_rcnn_forward.8} parent=0 // pred_fallthru
    _

// kernel: pv_rcnn_forward.9
$region0: #{pv_rcnn_forward.9}
  #allocation0 [shape = 'u32[]', space=smem, size = 0x4, offset = 0x4, fixed_abs, tag = 'smem constant byte address 0x4 - core index']
  #allocation1 [shape = 'u32[144,128]{1,0:T(1,128)}', space=vmem, size = 0x12000, scoped, tag = 'internal scratch']
  %s0 = inlined_call_operand.vmem [shape: bf16[32,432], index: 0, kind: input, shape index: {}]
  %s1 = inlined_call_operand.vmem [shape: bf16[432,128], index: 1, kind: input, shape index: {}]
  %s2 = inlined_call_operand.vmem [shape: f32[32,128], index: 2, kind: output, shape index: {}]
  %s3 = sld [smem:[#allocation0]]
  $region18: #{pv_rcnn_forward.9} parent=0
    _
  %s5 = ssub.s32 1, %s3
  %s6 = scalar_select 0, %s5, %s3
  // Predicated region
  $region2: #{pv_rcnn_forward.9} parent=0 // pred_check
    _
  $region3: #{pv_rcnn_forward.9} parent=0 // pred_check_branch
    %8 = sbr.rel (0) target = $region5
  $region4: #{pv_rcnn_forward.9} parent=0 // pred_region
    _
  $region5: #{pv_rcnn_forward.9} parent=0 // pred_fallthru
    _
  // Predicated region
  $region6: #{pv_rcnn_forward.9} parent=0 // pred_check
    _
  $region7: #{pv_rcnn_forward.9} parent=0 // pred_check_branch
    %10 = sbr.rel (0) target = $region9
  $region8: #{pv_rcnn_forward.9} parent=0 // pred_region
    _
  $region9: #{pv_rcnn_forward.9} parent=0 // pred_fallthru
    _
  %v12 = vld [vmem:[%s0] sm:$0xff]
  %v13 = vld [vmem:[%s0 + $0x8] sm:$0xff]
  %v14 = vld [vmem:[%s0 + $0x10] sm:$0xff]
  %v15 = vld [vmem:[%s0 + $0x18] sm:$0xff]
  %v16 = vld [vmem:[%s0 + $0x20] sm:$0xff]
  %v17 = vld [vmem:[%s0 + $0x28] sm:$0xff]
  %v18 = vld [vmem:[%s0 + $0x30] sm:$0xff]
  %v19 = vld [vmem:[%s0 + $0x38] sm:$0xff]
  %v20 = vld [vmem:[%s1] sm:$0xf]
  %v21 = vld [vmem:[%s1 + $0x4] sm:$0xf]
  %v22 = vld [vmem:[%s1 + $0x8] sm:$0xf]
  %v23 = vld [vmem:[%s1 + $0xc] sm:$0xf]
  %v24 = vld [vmem:[%s1 + $0x10] sm:$0xf]
  %v25 = vld [vmem:[%s1 + $0x14] sm:$0xf]
  %v26 = vld [vmem:[%s1 + $0x18] sm:$0xf]
  %v27 = vld [vmem:[%s1 + $0x1c] sm:$0xf]
  %v28 = vld [vmem:[%s1 + $0x20] sm:$0xf]
  %v29 = vld [vmem:[%s1 + $0x24] sm:$0xf]
  %v30 = vld [vmem:[%s1 + $0x28] sm:$0xf]
  %v31 = vld [vmem:[%s1 + $0x2c] sm:$0xf]
  %v32 = vld [vmem:[%s1 + $0x30] sm:$0xf]
  %v33 = vld [vmem:[%s1 + $0x34] sm:$0xf]
  %v34 = vld [vmem:[%s1 + $0x38] sm:$0xf]
  %v35 = vld [vmem:[%s1 + $0x3c] sm:$0xf]
  %v36 = vld [vmem:[%s1 + $0x40] sm:$0xf]
  %v37 = vld [vmem:[%s1 + $0x44] sm:$0xf]
  %v38 = vld [vmem:[%s1 + $0x48] sm:$0xf]
  %v39 = vld [vmem:[%s1 + $0x4c] sm:$0xf]
  %v40 = vld [vmem:[%s1 + $0x50] sm:$0xf]
  %v41 = vld [vmem:[%s1 + $0x54] sm:$0xf]
  %v42 = vld [vmem:[%s1 + $0x58] sm:$0xf]
  %v43 = vld [vmem:[%s1 + $0x5c] sm:$0xf]
  %v44 = vld [vmem:[%s1 + $0x60] sm:$0xf]
  %v45 = vld [vmem:[%s1 + $0x64] sm:$0xf]
  %v46 = vld [vmem:[%s1 + $0x68] sm:$0xf]
  %v47 = vld [vmem:[%s1 + $0x6c] sm:$0xf]
  %v48 = vld [vmem:[%s1 + $0x70] sm:$0xf]
  %v49 = vld [vmem:[%s1 + $0x74] sm:$0xf]
  %v50 = vld [vmem:[%s1 + $0x78] sm:$0xf]
  %v51 = vld [vmem:[%s1 + $0x7c] sm:$0xf]
  %v52 = vld [vmem:[%s1 + $0x80] sm:$0xf]
  %v53 = vld [vmem:[%s1 + $0x84] sm:$0xf]
  %v54 = vld [vmem:[%s1 + $0x88] sm:$0xf]
  %v55 = vld [vmem:[%s1 + $0x8c] sm:$0xf]
  %v56 = vld [vmem:[%s1 + $0x90] sm:$0xf]
  %v57 = vld [vmem:[%s1 + $0x94] sm:$0xf]
  %v58 = vld [vmem:[%s1 + $0x98] sm:$0xf]
  %v59 = vld [vmem:[%s1 + $0x9c] sm:$0xf]
  %v60 = vld [vmem:[%s1 + $0xa0] sm:$0xf]
  %v61 = vld [vmem:[%s1 + $0xa4] sm:$0xf]
  %v62 = vld [vmem:[%s1 + $0xa8] sm:$0xf]
  %v63 = vld [vmem:[%s1 + $0xac] sm:$0xf]
  %v64 = vld [vmem:[%s1 + $0xb0] sm:$0xf]
  %v65 = vld [vmem:[%s1 + $0xb4] sm:$0xf]
  %v66 = vld [vmem:[%s1 + $0xb8] sm:$0xf]
  %v67 = vld [vmem:[%s1 + $0xbc] sm:$0xf]
  %v68 = vld [vmem:[%s1 + $0xc0] sm:$0xf]
  %v69 = vld [vmem:[%s1 + $0xc4] sm:$0xf]
  %v70 = vld [vmem:[%s1 + $0xc8] sm:$0xf]
  %v71 = vld [vmem:[%s1 + $0xcc] sm:$0xf]
  %v72 = vld [vmem:[%s1 + $0xd0] sm:$0xf]
  %v73 = vld [vmem:[%s1 + $0xd4] sm:$0xf]
  %v82 = vunpack.c.l.b16 %v12
  %v83 = vunpack.c.h.b16 %v12
  %v84 = vunpack.c.l.b16 %v13
  %v85 = vunpack.c.h.b16 %v13
  %v86 = vunpack.c.l.b16 %v14
  %v87 = vunpack.c.h.b16 %v14
  %v88 = vunpack.c.l.b16 %v15
  %v89 = vunpack.c.h.b16 %v15
  %v90 = vunpack.c.l.b16 %v16
  %v91 = vunpack.c.h.b16 %v16
  %v92 = vunpack.c.l.b16 %v17
  %v93 = vunpack.c.h.b16 %v17
  %v94 = vunpack.c.l.b16 %v18
  %v95 = vunpack.c.h.b16 %v18
  %v96 = vunpack.c.l.b16 %v19
  %v97 = vunpack.c.h.b16 %v19
  %v98 = vpack.c.b16 %v86, %v82
  %v99 = vpack.c.b16 %v87, %v83
  %v100 = vpack.c.b16 %v88, %v84
  %v101 = vpack.c.b16 %v89, %v85
  %v102 = vpack.c.b16 %v94, %v90
  %v103 = vpack.c.b16 %v95, %v91
  %v104 = vpack.c.b16 %v96, %v92
  %v105 = vpack.c.b16 %v97, %v93
  %v166 = vunpack.c.l.b16 %v20
  %v167 = vunpack.c.l.b16 %v21
  %v168 = vunpack.c.l.b16 %v22
  %v169 = vunpack.c.l.b16 %v23
  %v170 = vunpack.c.l.b16 %v24
  %v171 = vunpack.c.l.b16 %v25
  %v172 = vunpack.c.l.b16 %v26
  %v173 = vunpack.c.l.b16 %v27
  %v174 = vunpack.c.l.b16 %v28
  %v175 = vunpack.c.l.b16 %v29
  %v176 = vunpack.c.l.b16 %v30
  %v177 = vunpack.c.l.b16 %v31
  %v178 = vunpack.c.l.b16 %v32
  %v179 = vunpack.c.l.b16 %v33
  %v180 = vunpack.c.l.b16 %v34
  %v181 = vunpack.c.l.b16 %v35
  %v182 = vunpack.c.l.b16 %v36
  %v183 = vunpack.c.l.b16 %v37
  %v184 = vunpack.c.l.b16 %v38
  %v185 = vunpack.c.l.b16 %v39
  %v186 = vunpack.c.l.b16 %v40
  %v187 = vunpack.c.l.b16 %v41
  %v188 = vunpack.c.l.b16 %v42
  %v189 = vunpack.c.l.b16 %v43
  %v190 = vunpack.c.l.b16 %v44
  %v191 = vunpack.c.l.b16 %v45
  %v192 = vunpack.c.l.b16 %v46
  %v193 = vunpack.c.l.b16 %v47
  %v194 = vunpack.c.l.b16 %v48
  %v195 = vunpack.c.l.b16 %v49
  %v196 = vunpack.c.l.b16 %v50
  %v197 = vunpack.c.l.b16 %v51
  %v198 = vunpack.c.l.b16 %v52
  %v199 = vunpack.c.l.b16 %v53
  %v200 = vunpack.c.l.b16 %v54
  %v201 = vunpack.c.l.b16 %v55
  %v202 = vunpack.c.l.b16 %v56
  %v203 = vunpack.c.l.b16 %v57
  %v204 = vunpack.c.l.b16 %v58
  %v205 = vunpack.c.l.b16 %v59
  %v206 = vunpack.c.l.b16 %v60
  %v207 = vunpack.c.l.b16 %v61
  %v208 = vunpack.c.l.b16 %v62
  %v209 = vunpack.c.l.b16 %v63
  %v210 = vunpack.c.l.b16 %v64
  %v211 = vunpack.c.l.b16 %v65
  %v212 = vunpack.c.l.b16 %v66
  %v213 = vunpack.c.l.b16 %v67
  %v214 = vunpack.c.l.b16 %v68
  %v215 = vunpack.c.l.b16 %v69
  %v216 = vunpack.c.l.b16 %v70
  %v217 = vunpack.c.l.b16 %v71
  %v218 = vunpack.c.l.b16 %v72
  %v219 = vunpack.c.l.b16 %v73
  %v220 = vpack.c.b16 %v167, %v166
  %v221 = vpack.c.b16 %v169, %v168
  %v222 = vpack.c.b16 %v171, %v170
  %v223 = vpack.c.b16 %v173, %v172
  %v224 = vpack.c.b16 %v175, %v174
  %v225 = vpack.c.b16 %v177, %v176
  %v226 = vpack.c.b16 %v179, %v178
  %v227 = vpack.c.b16 %v181, %v180
  %v228 = vpack.c.b16 %v183, %v182
  %v229 = vpack.c.b16 %v185, %v184
  %v230 = vpack.c.b16 %v187, %v186
  %v231 = vpack.c.b16 %v189, %v188
  %v232 = vpack.c.b16 %v191, %v190
  %v233 = vpack.c.b16 %v193, %v192
  %v234 = vpack.c.b16 %v195, %v194
  %v235 = vpack.c.b16 %v197, %v196
  %v236 = vpack.c.b16 %v199, %v198
  %v237 = vpack.c.b16 %v201, %v200
  %v238 = vpack.c.b16 %v203, %v202
  %v239 = vpack.c.b16 %v205, %v204
  %v240 = vpack.c.b16 %v207, %v206
  %v241 = vpack.c.b16 %v209, %v208
  %v242 = vpack.c.b16 %v211, %v210
  %v243 = vpack.c.b16 %v213, %v212
  %v244 = vpack.c.b16 %v215, %v214
  %v245 = vpack.c.b16 %v217, %v216
  %v246 = vpack.c.b16 %v219, %v218
  %vm274 = vcmask 392192
  %v276 = vsel %vm274, %v101, 0
  %v279 = vsel %vm274, %v105, 0
  %281 = vmatprep.subr.bf16.mxu0 0
  %282 = vmatpush1.bf16.msra.mxu0 %v220
  %283 = vmatprep.subr.bf16.mxu0 0
  %284 = vmatpush1.bf16.msra.mxu0 %v221
  %285 = vmatprep.subr.bf16.mxu0 0
  %286 = vmatpush1.bf16.msra.mxu0 %v222
  %287 = vmatprep.subr.bf16.mxu0 0
  %288 = vmatpush1.bf16.msra.mxu0 %v223
  %289 = vmatprep.subr.bf16.mxu0 0
  %290 = vmatpush1.bf16.msra.mxu0 %v224
  %291 = vmatprep.subr.bf16.mxu0 0
  %292 = vmatpush1.bf16.msra.mxu0 %v225
  %293 = vmatprep.subr.bf16.mxu0 0
  %294 = vmatpush1.bf16.msra.mxu0 %v226
  %295 = vmatprep.subr.bf16.mxu0 0
  %296 = vmatpush1.bf16.msra.mxu0 %v227
  %297 = vmatprep.subr.bf16.mxu0 0
  %298 = vmatpush1.bf16.msra.mxu0 %v228
  %299 = vmatprep.subr.bf16.mxu0 0
  %300 = vmatpush1.bf16.msra.mxu0 %v229
  %301 = vmatprep.subr.bf16.mxu0 0
  %302 = vmatpush1.bf16.msra.mxu0 %v230
  %303 = vmatprep.subr.bf16.mxu0 0
  %304 = vmatpush1.bf16.msra.mxu0 %v231
  %305 = vmatprep.subr.bf16.mxu0 0
  %306 = vmatpush1.bf16.msra.mxu0 %v232
  %307 = vmatprep.subr.bf16.mxu0 0
  %308 = vmatpush1.bf16.msra.mxu0 %v233
  %309 = vmatprep.subr.bf16.mxu0 0
  %310 = vmatpush1.bf16.msra.mxu0 %v234
  %311 = vmatprep.subr.bf16.mxu0 0
  %312 = vmatpush1.bf16.msra.mxu0 %v235
  %313 = vmatprep.mubr.bf16.mxu0 %v99
  %314 = vmatmul.mubr.bf16.gmra.mrb[0].mxu0 %v98
  %v315 = vpop.f32.mrb[0].mxu0
  %v316 = vadd.f32 0.0, %v315
  %v317 = vpop.f32.mrb[0].mxu0
  %v318 = vpop.f32.mrb[0].mxu0
  %v319 = vadd.f32 0.0, %v318
  %v320 = vpop.f32.mrb[0].mxu0
  %321 = vmatprep.mubr.bf16.mxu0 %v103
  %322 = vmatmul.mubr.bf16.gmra.mrb[0].mxu0 %v102
  %v323 = vpop.f32.mrb[0].mxu0
  %v324 = vadd.f32 0.0, %v323
  %v325 = vpop.f32.mrb[0].mxu0
  %v326 = vpop.f32.mrb[0].mxu0
  %v327 = vadd.f32 0.0, %v326
  %v328 = vpop.f32.mrb[0].mxu0
  %329 = vdwg.mxu0
  %330 = vmatprep.subr.bf16.mxu0 0
  %331 = vmatpush1.bf16.msra.mxu0 %v236
  %332 = vmatprep.subr.bf16.mxu0 0
  %333 = vmatpush1.bf16.msra.mxu0 %v237
  %334 = vmatprep.subr.bf16.mxu0 0
  %335 = vmatpush1.bf16.msra.mxu0 %v238
  %336 = vmatprep.subr.bf16.mxu0 0
  %337 = vmatpush1.bf16.msra.mxu0 %v239
  %338 = vmatprep.subr.bf16.mxu0 0
  %339 = vmatpush1.bf16.msra.mxu0 %v240
  %340 = vmatprep.subr.bf16.mxu0 0
  %341 = vmatpush1.bf16.msra.mxu0 %v241
  %342 = vmatprep.subr.bf16.mxu0 0
  %343 = vmatpush1.bf16.msra.mxu0 %v242
  %344 = vmatprep.subr.bf16.mxu0 0
  %345 = vmatpush1.bf16.msra.mxu0 %v243
  %346 = vmatprep.subr.bf16.mxu0 0
  %347 = vmatpush1.bf16.msra.mxu0 %v244
  %348 = vmatprep.subr.bf16.mxu0 0
  %349 = vmatpush1.bf16.msra.mxu0 %v245
  %350 = vmatprep.subr.bf16.mxu0 0
  %351 = vmatpush1.bf16.msra.mxu0 %v246
  %352 = vmatprep.subr.bf16.mxu0 0
  %353 = vmatpush1.bf16.msra.mxu0 0
  %354 = vmatprep.subr.bf16.mxu0 0
  %355 = vmatpush1.bf16.msra.mxu0 0
  %356 = vmatprep.subr.bf16.mxu0 0
  %357 = vmatpush1.bf16.msra.mxu0 0
  %358 = vmatprep.subr.bf16.mxu0 0
  %359 = vmatpush1.bf16.msra.mxu0 0
  %360 = vmatprep.subr.bf16.mxu0 0
  %361 = vmatpush1.bf16.msra.mxu0 0
  %362 = vmatprep.mubr.bf16.mxu0 %v276
  %363 = vmatmul.mubr.bf16.gmra.mrb[0].mxu0 %v100
  %v364 = vpop.f32.mrb[0].mxu0
  %v365 = vadd.f32 %v316, %v364
  %v366 = vpop.f32.mrb[0].mxu0
  %v367 = vpop.f32.mrb[0].mxu0
  %v368 = vadd.f32 %v319, %v367
  %v369 = vpop.f32.mrb[0].mxu0
  %370 = vmatprep.mubr.bf16.mxu0 %v279
  %371 = vmatmul.mubr.bf16.gmra.mrb[0].mxu0 %v104
  %v372 = vpop.f32.mrb[0].mxu0
  %v373 = vadd.f32 %v324, %v372
  %v374 = vpop.f32.mrb[0].mxu0
  %v375 = vpop.f32.mrb[0].mxu0
  %v376 = vadd.f32 %v327, %v375
  %v377 = vpop.f32.mrb[0].mxu0
  %378 = vdwg.mxu0
  %379 = vst [vmem:[%s2] sm:$0xff] %v365
  %380 = vst [vmem:[%s2 + $0x8] sm:$0xff] %v368
  %381 = vst [vmem:[%s2 + $0x10] sm:$0xff] %v373
  %382 = vst [vmem:[%s2 + $0x18] sm:$0xff] %v376
  // Predicated region
  $region10: #{pv_rcnn_forward.9} parent=0 // pred_check
    _
  $region11: #{pv_rcnn_forward.9} parent=0 // pred_check_branch
    %384 = sbr.rel (0) target = $region13
  $region12: #{pv_rcnn_forward.9} parent=0 // pred_region
    _
  $region13: #{pv_rcnn_forward.9} parent=0 // pred_fallthru
    _
  // Predicated region
  $region14: #{pv_rcnn_forward.9} parent=0 // pred_check
    _
  $region15: #{pv_rcnn_forward.9} parent=0 // pred_check_branch
    %386 = sbr.rel (0) target = $region17
  $region16: #{pv_rcnn_forward.9} parent=0 // pred_region
    _
  $region17: #{pv_rcnn_forward.9} parent=0 // pred_fallthru
    _

// kernel: pv_rcnn_forward.10
$region0: #{pv_rcnn_forward.10}
  #allocation0 [shape = 'u32[]', space=smem, size = 0x4, offset = 0x4, fixed_abs, tag = 'smem constant byte address 0x4 - core index']
  #allocation1 [shape = 'u32[144,128]{1,0:T(1,128)}', space=vmem, size = 0x12000, scoped, tag = 'internal scratch']
  %s0 = inlined_call_operand.vmem [shape: bf16[32,35], index: 0, kind: input, shape index: {}]
  %s1 = inlined_call_operand.vmem [shape: bf16[35,128], index: 1, kind: input, shape index: {}]
  %s2 = inlined_call_operand.vmem [shape: f32[32,128], index: 2, kind: output, shape index: {}]
  %s3 = sld [smem:[#allocation0]]
  $region18: #{pv_rcnn_forward.10} parent=0
    _
  %s5 = ssub.s32 1, %s3
  %s6 = scalar_select 0, %s5, %s3
  // Predicated region
  $region2: #{pv_rcnn_forward.10} parent=0 // pred_check
    _
  $region3: #{pv_rcnn_forward.10} parent=0 // pred_check_branch
    %8 = sbr.rel (0) target = $region5
  $region4: #{pv_rcnn_forward.10} parent=0 // pred_region
    _
  $region5: #{pv_rcnn_forward.10} parent=0 // pred_fallthru
    _
  // Predicated region
  $region6: #{pv_rcnn_forward.10} parent=0 // pred_check
    _
  $region7: #{pv_rcnn_forward.10} parent=0 // pred_check_branch
    %10 = sbr.rel (0) target = $region9
  $region8: #{pv_rcnn_forward.10} parent=0 // pred_region
    _
  $region9: #{pv_rcnn_forward.10} parent=0 // pred_fallthru
    _
  %v12 = vld [vmem:[%s0] sm:$0xf]
  %v13 = vld [vmem:[%s0 + $0x4] sm:$0xf]
  %v14 = vld [vmem:[%s0 + $0x8] sm:$0xf]
  %v15 = vld [vmem:[%s0 + $0xc] sm:$0xf]
  %v16 = vld [vmem:[%s1] sm:$0xf]
  %v17 = vld [vmem:[%s1 + $0x4] sm:$0xf]
  %v18 = vld [vmem:[%s1 + $0x8] sm:$0xf]
  %v19 = vld [vmem:[%s1 + $0xc] sm:$0xf]
  %v20 = vld [vmem:[%s1 + $0x10] sm:$0x3]
  %v25 = vunpack.c.l.b16 %v12
  %v26 = vunpack.c.l.b16 %v13
  %v27 = vunpack.c.l.b16 %v14
  %v28 = vunpack.c.l.b16 %v15
  %v29 = vpack.c.b16 %v26, %v25
  %v30 = vpack.c.b16 %v28, %v27
  %v36 = vunpack.c.l.b16 %v16
  %v37 = vunpack.c.l.b16 %v17
  %v38 = vunpack.c.l.b16 %v18
  %v39 = vunpack.c.l.b16 %v19
  %v40 = vunpack.c.l.b16 %v20
  %v41 = vpack.c.b16 %v37, %v36
  %v42 = vpack.c.b16 %v39, %v38
  %v43 = vpack.c.b16 %v40, %v40
  %vm46 = vcmask 285696
  %v48 = vsel %vm46, %v29, 0
  %v51 = vsel %vm46, %v30, 0
  %vm53 = vcmask 1040384
  %vm54 = vcmask 1041408
  %v55 = vsel %vm53, 4294967295, 65535
  %v56 = vsel %vm54, %v55, 0
  %v58 = vand.u32 %v43, %v56
  %60 = vmatprep.subr.bf16.mxu0 0
  %61 = vmatpush1.bf16.msra.mxu0 %v41
  %62 = vmatprep.subr.bf16.mxu0 0
  %63 = vmatpush1.bf16.msra.mxu0 %v42
  %64 = vmatprep.subr.bf16.mxu0 0
  %65 = vmatpush1.bf16.msra.mxu0 %v58
  %66 = vmatprep.subr.bf16.mxu0 0
  %67 = vmatpush1.bf16.msra.mxu0 0
  %68 = vmatprep.subr.bf16.mxu0 0
  %69 = vmatpush1.bf16.msra.mxu0 0
  %70 = vmatprep.subr.bf16.mxu0 0
  %71 = vmatpush1.bf16.msra.mxu0 0
  %72 = vmatprep.subr.bf16.mxu0 0
  %73 = vmatpush1.bf16.msra.mxu0 0
  %74 = vmatprep.subr.bf16.mxu0 0
  %75 = vmatpush1.bf16.msra.mxu0 0
  %76 = vmatprep.subr.bf16.mxu0 0
  %77 = vmatpush1.bf16.msra.mxu0 0
  %78 = vmatprep.subr.bf16.mxu0 0
  %79 = vmatpush1.bf16.msra.mxu0 0
  %80 = vmatprep.subr.bf16.mxu0 0
  %81 = vmatpush1.bf16.msra.mxu0 0
  %82 = vmatprep.subr.bf16.mxu0 0
  %83 = vmatpush1.bf16.msra.mxu0 0
  %84 = vmatprep.subr.bf16.mxu0 0
  %85 = vmatpush1.bf16.msra.mxu0 0
  %86 = vmatprep.subr.bf16.mxu0 0
  %87 = vmatpush1.bf16.msra.mxu0 0
  %88 = vmatprep.subr.bf16.mxu0 0
  %89 = vmatpush1.bf16.msra.mxu0 0
  %90 = vmatprep.subr.bf16.mxu0 0
  %91 = vmatpush1.bf16.msra.mxu0 0
  %92 = vmatprep.mubr.bf16.mxu0 0
  %93 = vmatmul.mubr.bf16.gmra.mrb[0].mxu0 %v48
  %v94 = vpop.f32.mrb[0].mxu0
  %v95 = vadd.f32 0.0, %v94
  %v96 = vpop.f32.mrb[0].mxu0
  %v97 = vpop.f32.mrb[0].mxu0
  %v98 = vadd.f32 0.0, %v97
  %v99 = vpop.f32.mrb[0].mxu0
  %100 = vmatprep.mubr.bf16.mxu0 0
  %101 = vmatmul.mubr.bf16.gmra.mrb[0].mxu0 %v51
  %v102 = vpop.f32.mrb[0].mxu0
  %v103 = vadd.f32 0.0, %v102
  %v104 = vpop.f32.mrb[0].mxu0
  %v105 = vpop.f32.mrb[0].mxu0
  %v106 = vadd.f32 0.0, %v105
  %v107 = vpop.f32.mrb[0].mxu0
  %108 = vdwg.mxu0
  %109 = vst [vmem:[%s2] sm:$0xff] %v95
  %110 = vst [vmem:[%s2 + $0x8] sm:$0xff] %v98
  %111 = vst [vmem:[%s2 + $0x10] sm:$0xff] %v103
  %112 = vst [vmem:[%s2 + $0x18] sm:$0xff] %v106
  // Predicated region
  $region10: #{pv_rcnn_forward.10} parent=0 // pred_check
    _
  $region11: #{pv_rcnn_forward.10} parent=0 // pred_check_branch
    %114 = sbr.rel (0) target = $region13
  $region12: #{pv_rcnn_forward.10} parent=0 // pred_region
    _
  $region13: #{pv_rcnn_forward.10} parent=0 // pred_fallthru
    _
  // Predicated region
  $region14: #{pv_rcnn_forward.10} parent=0 // pred_check
    _
  $region15: #{pv_rcnn_forward.10} parent=0 // pred_check_branch
    %116 = sbr.rel (0) target = $region17
  $region16: #{pv_rcnn_forward.10} parent=0 // pred_region
    _
  $region17: #{pv_rcnn_forward.10} parent=0 // pred_fallthru
    _

// kernel: pv_rcnn_forward.6
$region0: #{pv_rcnn_forward.6}
  #allocation0 [shape = 'u32[]', space=smem, size = 0x4, offset = 0x4, fixed_abs, tag = 'smem constant byte address 0x4 - core index']
  #allocation1 [shape = 'u32[144,128]{1,0:T(1,128)}', space=vmem, size = 0x12000, scoped, tag = 'internal scratch']
  %s0 = inlined_call_operand.vmem [shape: f32[8,256], index: 0, kind: input, shape index: {}]
  %s1 = inlined_call_operand.vmem [shape: f32[8,64], index: 1, kind: output, shape index: {}]
  %s2 = sld [smem:[#allocation0]]
  $region21: #{pv_rcnn_forward.6} parent=0
    _
  %s4 = ssub.s32 1, %s2
  %s5 = scalar_select 0, %s4, %s2
  // Predicated region
  $region2: #{pv_rcnn_forward.6} parent=0 // pred_check
    _
  $region3: #{pv_rcnn_forward.6} parent=0 // pred_check_branch
    %7 = sbr.rel (0) target = $region5
  $region4: #{pv_rcnn_forward.6} parent=0 // pred_region
    _
  $region5: #{pv_rcnn_forward.6} parent=0 // pred_fallthru
    _
  %v8 = vld [vmem:[%s0] sm:$0xff]
  %v9 = vld [vmem:[%s0 + $0x8] sm:$0xff]
  %v10 = vlaneseq
  %v11 = vand.u32 %v10, 127
  %v12 = vadd.s32 %v11, 128
  %vm13 = vcmp.eq.s32.totalorder %v11, 0
  %v14 = vsel %vm13, 1, 0
  %vm15 = vcmp.eq.s32.totalorder %v14, 1
  %17 = vset.pattern.permute.xlu0 0
  %18 = vperm.xlu0 %17, %v8
  %v19 = vpop.permute.xlu0 %18
  %v21 = vsel %vm15, %v19, 0.0
  loop: start=1, step=1, limit=64
  $region6: #{pv_rcnn_forward.6} parent=0 // loop_pre_header
    _
  $region7: #{pv_rcnn_forward.6} parent=0 // loop_header
    %s23 = sphi 1, %s27
    %p24 = scmp.ge.s32.totalorder %s23, 64
    %v28 = vphi 1e+30, %v53
    %v29 = vphi 1e+30, %v54
    %v30 = vphi %v8, %v92
    %v31 = vphi %v21, %v97
  $region8: #{pv_rcnn_forward.6} parent=0 // loop_header_branch
    %26 = sbr.rel (%p24) target = $region12
  $region9: #{pv_rcnn_forward.6} parent=0 // loop_body
    %33 = vset.pattern.permute.xlu0 0
    %34 = vperm.xlu0 %33, %v30
    %v35 = vpop.permute.xlu0 %34
    %v37 = vsub.f32 %v8, %v35
    %v38 = vsub.f32 %v9, %v35
    %v39 = vmul.f32 %v37, %v37
    %v40 = vmul.f32 %v38, %v38
    %v41 = vrot.slane %v39, 4
    %v42 = vadd.f32 %v39, %v41
    %v43 = vrot.slane %v42, 2
    %v44 = vadd.f32 %v42, %v43
    %v45 = vrot.slane %v44, 1
    %v46 = vadd.f32 %v44, %v45
    %v47 = vrot.slane %v40, 4
    %v48 = vadd.f32 %v40, %v47
    %v49 = vrot.slane %v48, 2
    %v50 = vadd.f32 %v48, %v49
    %v51 = vrot.slane %v50, 1
    %v52 = vadd.f32 %v50, %v51
    %v53 = vmin.f32 %v28, %v46
    %v54 = vmin.f32 %v29, %v52
    %v55 = vmax.f32 %v53, %v54
    %56 = vmax.xlane.f32.xlu0 %v55
    %v57 = vpop.xlane.xlu0 %56
    %s58 = vtos %v57
    %v59 = vstv %s58
    %vm60 = vcmp.ge.f32.partialorder %v53, %v59
    %vm61 = vcmp.ge.f32.partialorder %v54, %v59
    %v62 = vsel %vm60, %v11, 256
    %v63 = vsel %vm61, %v12, 256
    %vm64 = vcmp.lt.s32.totalorder %v62, %v63
    %v65 = vsel %vm64, %v62, %v63
    %v66 = vand.u32 %v65, 65535
    %v67 = vshra.s32 %v65, 16
    %v68 = vcvt.s32.f32 %v66
    %v69 = vcvt.s32.f32 %v67
    %70 = vmin.xlane.f32.xlu0 %v69
    %v71 = vpop.xlane.xlu0 %70
    %vm72 = vcmp.eq.f32.partialorder %v69, %v71
    %v73 = vsel %vm72, %v68, inf
    %74 = vmin.xlane.f32.xlu0 %v73
    %v75 = vpop.xlane.xlu0 %74
    %v76 = vcvt.f32.s32 %v75
    %v77 = vcvt.f32.s32 %v71
    %v78 = vshll.u32 %v77, 16
    %v79 = vadd.s32 %v78, %v76
    %s80 = vtos %v79
    %v81 = vstv %s80
    %vm82 = vcmp.eq.s32.totalorder %v11, %v81
    %vm83 = vcmp.eq.s32.totalorder %v12, %v81
    %v84 = vsel %vm82, 1, 0
    %v85 = vsel %vm83, 1, 0
    %vm86 = vcmp.eq.s32.totalorder %v84, 1
    %vm87 = vcmp.eq.s32.totalorder %v85, 1
    %v88 = vsel %vm86, %v8, 0.0
    %v89 = vsel %vm87, %v9, 0.0
    %v90 = vadd.f32 %v88, %v89
    %91 = vadd.xlane.f32.xlu0 %v90
    %v92 = vpop.xlane.xlu0 %91
    %v93 = vstv %s23
    %vm94 = vcmp.eq.s32.totalorder %v11, %v93
    %v95 = vsel %vm94, 1, 0
    %vm96 = vcmp.eq.s32.totalorder %v95, 1
    %v97 = vsel %vm96, %v92, %v31
  $region10: #{pv_rcnn_forward.6} parent=0 // loop_footer
    %s27 = sadd.s32 1, %s23
  $region11: #{pv_rcnn_forward.6} parent=0 // loop_footer_branch
    %22 = sbr.rel target = $region7
  $region12: #{pv_rcnn_forward.6} parent=0 // loop_exit
    _
  %vm98 = vcmask 523264
  %99 = vst.msk [vmem:[%s1] sm:$0xff] %vm98, %v31
  // Predicated region
  $region13: #{pv_rcnn_forward.6} parent=0 // pred_check
    _
  $region14: #{pv_rcnn_forward.6} parent=0 // pred_check_branch
    %101 = sbr.rel (0) target = $region16
  $region15: #{pv_rcnn_forward.6} parent=0 // pred_region
    _
  $region16: #{pv_rcnn_forward.6} parent=0 // pred_fallthru
    _
  // Predicated region
  $region17: #{pv_rcnn_forward.6} parent=0 // pred_check
    _
  $region18: #{pv_rcnn_forward.6} parent=0 // pred_check_branch
    %103 = sbr.rel (0) target = $region20
  $region19: #{pv_rcnn_forward.6} parent=0 // pred_region
    _
  $region20: #{pv_rcnn_forward.6} parent=0 // pred_fallthru
    _

// kernel: pv_rcnn_forward.11
$region0: #{pv_rcnn_forward.11}
  #allocation0 [shape = 'u32[]', space=smem, size = 0x4, offset = 0x4, fixed_abs, tag = 'smem constant byte address 0x4 - core index']
  #allocation1 [shape = 'u32[144,128]{1,0:T(1,128)}', space=vmem, size = 0x12000, scoped, tag = 'internal scratch']
  %s0 = inlined_call_operand.vmem [shape: f32[64,3], index: 0, kind: input, shape index: {}]
  %s1 = inlined_call_operand.vmem [shape: f32[3,32], index: 1, kind: input, shape index: {}]
  %s2 = inlined_call_operand.vmem [shape: f32[32,32], index: 2, kind: input, shape index: {}]
  %s3 = inlined_call_operand.vmem [shape: f32[3,32], index: 3, kind: input, shape index: {}]
  %s4 = inlined_call_operand.vmem [shape: bf16[32,32], index: 4, kind: input, shape index: {}]
  %s5 = inlined_call_operand.vmem [shape: f32[64,32], index: 5, kind: output, shape index: {}]
  %s6 = sld [smem:[#allocation0]]
  $region53: #{pv_rcnn_forward.11} parent=0
    _
  %s8 = ssub.s32 1, %s6
  %s9 = scalar_select 0, %s8, %s6
  loop: start=0, step=1, limit=4
  $region2: #{pv_rcnn_forward.11} parent=0 // loop_pre_header
    _
  $region3: #{pv_rcnn_forward.11} parent=0 // loop_header
    %s11 = sphi 0, %s15
    %p12 = scmp.ge.s32.totalorder %s11, 4
    %s21 = sphi 0, %s23
    %s24 = sphi 0, %s21
    %s25 = sphi 0, %s24
    %s41 = sphi 0, %s25
    %s45 = sphi 0, %s45
    %s47 = sphi 0, %s45
    %s48 = sphi 0, %s47
    %s62 = sphi 0, %s48
    %s66 = sphi 0, %s66
    %s68 = sphi 0, %s66
    %s69 = sphi 0, %s68
    %s83 = sphi 0, %s69
    %s87 = sphi 0, %s87
    %s89 = sphi 0, %s87
    %s90 = sphi 0, %s89
    %s104 = sphi 0, %s90
    %s108 = sphi 0, %s108
    %s110 = sphi 0, %s108
    %s111 = sphi 0, %s110
    %s125 = sphi 0, %s111
    %s131 = sphi 0, %s133
    %s134 = sphi 0, %s131
    %s135 = sphi 0, %s134
    %s151 = sphi 0, %s135
  $region4: #{pv_rcnn_forward.11} parent=0 // loop_header_branch
    %14 = sbr.rel (%p12) target = $region8
  $region5: #{pv_rcnn_forward.11} parent=0 // loop_body
    %s16 = ssub.s32 %s11, 1
    %s17 = ssub.s32 %s11, 2
    %s18 = sadd.s32 %s11, 1
    %s19 = ssub.s32 %s11, %s18
    %p20 = scmp.eq.s32.totalorder %s19, 0
    %s22 = sadd.s32 %s21, 1
    %s23 = scalar_select %p20, %s21, %s22
    %p26 = pneg %p20
    %p27 = scmp.eq.s32.totalorder %s11, 1
    %p28 = por %p26, %p27
    %p29 = scmp.ne.s32.totalorder %s21, %s24
    %p30 = scmp.eq.s32.totalorder %s11, 0
    %p31 = por %p29, %p30
    %p32 = scmp.ne.s32.totalorder %s21, %s24
    %p33 = scmp.eq.s32.totalorder %s16, 1
    %p34 = por %p32, %p33
    %p35 = scmp.ne.s32.totalorder %s24, %s25
    %p36 = scmp.eq.s32.totalorder %s16, 0
    %p37 = por %p35, %p36
    %p38 = scmp.ne.s32.totalorder %s24, %s25
    %p39 = scmp.eq.s32.totalorder %s17, 1
    %p40 = por %p38, %p39
    %p42 = scmp.ne.s32.totalorder %s25, %s41
    %p43 = scmp.eq.s32.totalorder %s17, 0
    %p44 = por %p42, %p43
    %s46 = sadd.s32 %s45, 1
    %p49 = scmp.eq.s32.totalorder %s11, 1
    %p50 = scmp.ne.s32.totalorder %s45, %s47
    %p51 = scmp.eq.s32.totalorder %s11, 0
    %p52 = por %p50, %p51
    %p53 = scmp.ne.s32.totalorder %s45, %s47
    %p54 = scmp.eq.s32.totalorder %s16, 1
    %p55 = por %p53, %p54
    %p56 = scmp.ne.s32.totalorder %s47, %s48
    %p57 = scmp.eq.s32.totalorder %s16, 0
    %p58 = por %p56, %p57
    %p59 = scmp.ne.s32.totalorder %s47, %s48
    %p60 = scmp.eq.s32.totalorder %s17, 1
    %p61 = por %p59, %p60
    %p63 = scmp.ne.s32.totalorder %s48, %s62
    %p64 = scmp.eq.s32.totalorder %s17, 0
    %p65 = por %p63, %p64
    %s67 = sadd.s32 %s66, 1
    %p70 = scmp.eq.s32.totalorder %s11, 1
    %p71 = scmp.ne.s32.totalorder %s66, %s68
    %p72 = scmp.eq.s32.totalorder %s11, 0
    %p73 = por %p71, %p72
    %p74 = scmp.ne.s32.totalorder %s66, %s68
    %p75 = scmp.eq.s32.totalorder %s16, 1
    %p76 = por %p74, %p75
    %p77 = scmp.ne.s32.totalorder %s68, %s69
    %p78 = scmp.eq.s32.totalorder %s16, 0
    %p79 = por %p77, %p78
    %p80 = scmp.ne.s32.totalorder %s68, %s69
    %p81 = scmp.eq.s32.totalorder %s17, 1
    %p82 = por %p80, %p81
    %p84 = scmp.ne.s32.totalorder %s69, %s83
    %p85 = scmp.eq.s32.totalorder %s17, 0
    %p86 = por %p84, %p85
    %s88 = sadd.s32 %s87, 1
    %p91 = scmp.eq.s32.totalorder %s11, 1
    %p92 = scmp.ne.s32.totalorder %s87, %s89
    %p93 = scmp.eq.s32.totalorder %s11, 0
    %p94 = por %p92, %p93
    %p95 = scmp.ne.s32.totalorder %s87, %s89
    %p96 = scmp.eq.s32.totalorder %s16, 1
    %p97 = por %p95, %p96
    %p98 = scmp.ne.s32.totalorder %s89, %s90
    %p99 = scmp.eq.s32.totalorder %s16, 0
    %p100 = por %p98, %p99
    %p101 = scmp.ne.s32.totalorder %s89, %s90
    %p102 = scmp.eq.s32.totalorder %s17, 1
    %p103 = por %p101, %p102
    %p105 = scmp.ne.s32.totalorder %s90, %s104
    %p106 = scmp.eq.s32.totalorder %s17, 0
    %p107 = por %p105, %p106
    %s109 = sadd.s32 %s108, 1
    %p112 = scmp.eq.s32.totalorder %s11, 1
    %p113 = scmp.ne.s32.totalorder %s108, %s110
    %p114 = scmp.eq.s32.totalorder %s11, 0
    %p115 = por %p113, %p114
    %p116 = scmp.ne.s32.totalorder %s108, %s110
    %p117 = scmp.eq.s32.totalorder %s16, 1
    %p118 = por %p116, %p117
    %p119 = scmp.ne.s32.totalorder %s110, %s111
    %p120 = scmp.eq.s32.totalorder %s16, 0
    %p121 = por %p119, %p120
    %p122 = scmp.ne.s32.totalorder %s110, %s111
    %p123 = scmp.eq.s32.totalorder %s17, 1
    %p124 = por %p122, %p123
    %p126 = scmp.ne.s32.totalorder %s111, %s125
    %p127 = scmp.eq.s32.totalorder %s17, 0
    %p128 = por %p126, %p127
    %s129 = ssub.s32 %s11, %s18
    %p130 = scmp.eq.s32.totalorder %s129, 0
    %s132 = sadd.s32 %s131, 1
    %s133 = scalar_select %p130, %s131, %s132
    %p136 = pneg %p130
    %p137 = scmp.eq.s32.totalorder %s11, 1
    %p138 = por %p136, %p137
    %p139 = scmp.ne.s32.totalorder %s131, %s134
    %p140 = scmp.eq.s32.totalorder %s11, 0
    %p141 = por %p139, %p140
    %p142 = scmp.ne.s32.totalorder %s131, %s134
    %p143 = scmp.eq.s32.totalorder %s16, 1
    %p144 = por %p142, %p143
    %p145 = scmp.ne.s32.totalorder %s134, %s135
    %p146 = scmp.eq.s32.totalorder %s16, 0
    %p147 = por %p145, %p146
    %p148 = scmp.ne.s32.totalorder %s134, %s135
    %p149 = scmp.eq.s32.totalorder %s17, 1
    %p150 = por %p148, %p149
    %p152 = scmp.ne.s32.totalorder %s135, %s151
    %p153 = scmp.eq.s32.totalorder %s17, 0
    %p154 = por %p152, %p153
    %p155 = scmp.le.s32.totalorder 1, %s11
    %p156 = scmp.lt.s32.totalorder %s11, 3
    %p157 = pnand %p155, %p156
    %p158 = pneg %p157
    // Predicated region
    $region9: #{pv_rcnn_forward.11} parent=5 // pred_check
      _
    $region10: #{pv_rcnn_forward.11} parent=5 // pred_check_branch
      %160 = sbr.rel (%p157) target = $region12
    $region11: #{pv_rcnn_forward.11} parent=5 // pred_region
      %s161 = ssub.s32 %s11, 1
      // Predicated region
      $region13: #{pv_rcnn_forward.11} parent=11 // pred_check
        %p162 = pneg %p58
      $region14: #{pv_rcnn_forward.11} parent=11 // pred_check_branch
        %164 = sbr.rel (%p162) target = $region16
      $region15: #{pv_rcnn_forward.11} parent=11 // pred_region
        _
      $region16: #{pv_rcnn_forward.11} parent=11 // pred_fallthru
        _
      // Predicated region
      $region17: #{pv_rcnn_forward.11} parent=11 // pred_check
        %p165 = pneg %p79
      $region18: #{pv_rcnn_forward.11} parent=11 // pred_check_branch
        %167 = sbr.rel (%p165) target = $region20
      $region19: #{pv_rcnn_forward.11} parent=11 // pred_region
        _
      $region20: #{pv_rcnn_forward.11} parent=11 // pred_fallthru
        _
      // Predicated region
      $region21: #{pv_rcnn_forward.11} parent=11 // pred_check
        %p168 = pneg %p100
      $region22: #{pv_rcnn_forward.11} parent=11 // pred_check_branch
        %170 = sbr.rel (%p168) target = $region24
      $region23: #{pv_rcnn_forward.11} parent=11 // pred_region
        _
      $region24: #{pv_rcnn_forward.11} parent=11 // pred_fallthru
        _
      // Predicated region
      $region25: #{pv_rcnn_forward.11} parent=11 // pred_check
        %p171 = pneg %p121
      $region26: #{pv_rcnn_forward.11} parent=11 // pred_check_branch
        %173 = sbr.rel (%p171) target = $region28
      $region27: #{pv_rcnn_forward.11} parent=11 // pred_region
        _
      $region28: #{pv_rcnn_forward.11} parent=11 // pred_fallthru
        _
    $region12: #{pv_rcnn_forward.11} parent=5 // pred_fallthru
      _
    %p174 = scmp.lt.s32.totalorder %s11, 2
    // Predicated region
    $region29: #{pv_rcnn_forward.11} parent=5 // pred_check
      %p175 = pneg %p174
    $region30: #{pv_rcnn_forward.11} parent=5 // pred_check_branch
      %177 = sbr.rel (%p175) target = $region32
    $region31: #{pv_rcnn_forward.11} parent=5 // pred_region
      // Predicated region
      $region33: #{pv_rcnn_forward.11} parent=31 // pred_check
        %p178 = pneg %p31
      $region34: #{pv_rcnn_forward.11} parent=31 // pred_check_branch
        %180 = sbr.rel (%p178) target = $region36
      $region35: #{pv_rcnn_forward.11} parent=31 // pred_region
        %s181 = smul.u32 4, %s11
        %p182 = scmp.lt.s32.totalorder %s181, 7
        %s183 = scalar_select %p182, %s181, 7
        %s184 = smul.addr %s183, 8
        %s185 = scalar_lea.vmem %s0, %s184
        %s186 = smul.u32 4, %s11
      $region36: #{pv_rcnn_forward.11} parent=31 // pred_fallthru
        _
    $region32: #{pv_rcnn_forward.11} parent=5 // pred_fallthru
      _
    %p187 = scmp.le.s32.totalorder 1, %s11
    %p188 = scmp.lt.s32.totalorder %s11, 3
    %p189 = pnand %p187, %p188
    %p190 = pneg %p189
    // Predicated region
    $region37: #{pv_rcnn_forward.11} parent=5 // pred_check
      _
    $region38: #{pv_rcnn_forward.11} parent=5 // pred_check_branch
      %192 = sbr.rel (%p189) target = $region40
    $region39: #{pv_rcnn_forward.11} parent=5 // pred_region
      %s193 = ssub.s32 %s11, 1
      %s194 = smul.u32 4, %s16
      %p195 = scmp.lt.s32.totalorder %s194, 7
      %s196 = scalar_select %p195, %s194, 7
      %s197 = smul.addr %s196, 8
      %s198 = scalar_lea.vmem %s0, %s197
      %p199 = pneg %p37
      %p200 = pneg %p34
      %p201 = pneg %p58
      %p202 = pneg %p55
      %p203 = pneg %p79
      %p204 = pneg %p76
      %p205 = pneg %p100
      %p206 = pneg %p97
      %p207 = pneg %p121
      %p208 = pneg %p118
      %p209 = pneg %p147
      %p210 = pneg %p144
      %s211 = smul.u32 4, %s16
      %p212 = scmp.lt.s32.totalorder %s211, 7
      %s213 = scalar_select %p212, %s211, 7
      %s214 = smul.addr %s213, 8
      %s215 = scalar_lea.vmem %s5, %s214
      %s216 = smul.u32 4, %s16
      %p217 = scmp.lt.s32.totalorder %s216, 7
      %s218 = scalar_select %p217, %s216, 7
      %s219 = smul.addr %s218, 8
      %s220 = scalar_lea.vmem %s0, %s219
      %s221 = smul.u32 4, %s16
      %s222 = smul.u32 4, %s16
      %p223 = scmp.lt.s32.totalorder %s222, 7
      %s224 = scalar_select %p223, %s222, 7
      %s225 = smul.addr %s224, 8
      %s226 = scalar_lea.vmem %s5, %s225
      %s227 = smul.u32 4, %s16
      %v229 = vld [vmem:[%s220] sm:$0xff]
      %v230 = vld [vmem:[%s220 + $0x8] sm:$0xff]
      %v231 = vld [vmem:[%s220 + $0x10] sm:$0xff]
      %v232 = vld [vmem:[%s220 + $0x18] sm:$0xff]
      %v233 = vld [vmem:[%s1] sm:$0x7]
      %vm234 = vcmask 23552
      %v236 = vsel %vm234, %v229, 0
      %v239 = vsel %vm234, %v230, 0
      %v242 = vsel %vm234, %v231, 0
      %v245 = vsel %vm234, %v232, 0
      %vm247 = vcmask 1042432
      %v249 = vsel %vm247, %v233, 0
      %251 = vmatprep.subr.mxu0 0.0
      %252 = vmatpush1.msra.mxu0 %v249
      %253 = vmatprep.subr.mxu0 0.0
      %254 = vmatpush1.msra.mxu0 0.0
      %255 = vmatprep.subr.mxu0 0.0
      %256 = vmatpush1.msra.mxu0 0.0
      %257 = vmatprep.subr.mxu0 0.0
      %258 = vmatpush1.msra.mxu0 0.0
      %259 = vmatprep.subr.mxu0 0.0
      %260 = vmatpush1.msra.mxu0 0.0
      %261 = vmatprep.subr.mxu0 0.0
      %262 = vmatpush1.msra.mxu0 0.0
      %263 = vmatprep.subr.mxu0 0.0
      %264 = vmatpush1.msra.mxu0 0.0
      %265 = vmatprep.subr.mxu0 0.0
      %266 = vmatpush1.msra.mxu0 0.0
      %267 = vmatprep.subr.mxu0 0.0
      %268 = vmatpush1.msra.mxu0 0.0
      %269 = vmatprep.subr.mxu0 0.0
      %270 = vmatpush1.msra.mxu0 0.0
      %271 = vmatprep.subr.mxu0 0.0
      %272 = vmatpush1.msra.mxu0 0.0
      %273 = vmatprep.subr.mxu0 0.0
      %274 = vmatpush1.msra.mxu0 0.0
      %275 = vmatprep.subr.mxu0 0.0
      %276 = vmatpush1.msra.mxu0 0.0
      %277 = vmatprep.subr.mxu0 0.0
      %278 = vmatpush1.msra.mxu0 0.0
      %279 = vmatprep.subr.mxu0 0.0
      %280 = vmatpush1.msra.mxu0 0.0
      %281 = vmatprep.subr.mxu0 0.0
      %282 = vmatpush1.msra.mxu0 0.0
      %283 = vmatprep.subr.mxu0 0.0
      %284 = vmatpush1.msra.mxu0 0.0
      %285 = vmatprep.subr.mxu0 0.0
      %286 = vmatpush1.msra.mxu0 0.0
      %287 = vmatprep.subr.mxu0 0.0
      %288 = vmatpush1.msra.mxu0 0.0
      %289 = vmatprep.subr.mxu0 0.0
      %290 = vmatpush1.msra.mxu0 0.0
      %291 = vmatprep.subr.mxu0 0.0
      %292 = vmatpush1.msra.mxu0 0.0
      %293 = vmatprep.subr.mxu0 0.0
      %294 = vmatpush1.msra.mxu0 0.0
      %295 = vmatprep.subr.mxu0 0.0
      %296 = vmatpush1.msra.mxu0 0.0
      %297 = vmatprep.subr.mxu0 0.0
      %298 = vmatpush1.msra.mxu0 0.0
      %299 = vmatprep.subr.mxu0 0.0
      %300 = vmatpush1.msra.mxu0 0.0
      %301 = vmatprep.subr.mxu0 0.0
      %302 = vmatpush1.msra.mxu0 0.0
      %303 = vmatprep.subr.mxu0 0.0
      %304 = vmatpush1.msra.mxu0 0.0
      %305 = vmatprep.subr.mxu0 0.0
      %306 = vmatpush1.msra.mxu0 0.0
      %307 = vmatprep.subr.mxu0 0.0
      %308 = vmatpush1.msra.mxu0 0.0
      %309 = vmatprep.subr.mxu0 0.0
      %310 = vmatpush1.msra.mxu0 0.0
      %311 = vmatprep.subr.mxu0 0.0
      %312 = vmatpush1.msra.mxu0 0.0
      %313 = vmatprep.subr.mxu0 0.0
      %314 = vmatpush1.msra.mxu0 0.0
      %315 = vmatprep.mubr.f32.mxu0 0.0
      %316 = vmatmul.mubr.f32.gmra.mrb[0].mxu0 %v236
      %v317 = vpop.f32.mrb[0].mxu0
      %v318 = vadd.f32 0.0, %v317
      %v319 = vpop.f32.mrb[0].mxu0
      %320 = vmatprep.mubr.f32.mxu0 0.0
      %321 = vmatmul.mubr.f32.gmra.mrb[0].mxu0 %v239
      %v322 = vpop.f32.mrb[0].mxu0
      %v323 = vadd.f32 0.0, %v322
      %v324 = vpop.f32.mrb[0].mxu0
      %325 = vmatprep.mubr.f32.mxu0 0.0
      %326 = vmatmul.mubr.f32.gmra.mrb[0].mxu0 %v242
      %v327 = vpop.f32.mrb[0].mxu0
      %v328 = vadd.f32 0.0, %v327
      %v329 = vpop.f32.mrb[0].mxu0
      %330 = vmatprep.mubr.f32.mxu0 0.0
      %331 = vmatmul.mubr.f32.gmra.mrb[0].mxu0 %v245
      %v332 = vpop.f32.mrb[0].mxu0
      %v333 = vadd.f32 0.0, %v332
      %v334 = vpop.f32.mrb[0].mxu0
      %335 = vdwg.mxu0
      %v336 = vmul.f32 %v229, %v229
      %v337 = vmul.f32 %v230, %v230
      %v338 = vmul.f32 %v231, %v231
      %v339 = vmul.f32 %v232, %v232
      %v340 = vsel %vm234, %v336, 0.0
      %341 = vadd.xlane.f32.xlu0 %v340
      %v342 = vpop.xlane.xlu0 %341
      %v343 = vsel %vm234, %v337, 0.0
      %344 = vadd.xlane.f32.xlu0 %v343
      %v345 = vpop.xlane.xlu0 %344
      %v346 = vsel %vm234, %v338, 0.0
      %347 = vadd.xlane.f32.xlu0 %v346
      %v348 = vpop.xlane.xlu0 %347
      %v349 = vsel %vm234, %v339, 0.0
      %350 = vadd.xlane.f32.xlu0 %v349
      %v351 = vpop.xlane.xlu0 %350
      %v352 = vmul.f32 %v233, %v233
      %vm353 = vcmask 256000
      %v354 = vsel %vm353, %v352, 0.0
      %v355 = vrot.slane %v354, 4
      %v356 = vadd.f32 %v354, %v355
      %v357 = vrot.slane %v356, 2
      %v358 = vadd.f32 %v356, %v357
      %v359 = vrot.slane %v358, 1
      %v360 = vadd.f32 %v358, %v359
      %v361 = vadd.f32 %v342, %v360
      %v362 = vadd.f32 %v345, %v360
      %v363 = vadd.f32 %v348, %v360
      %v364 = vadd.f32 %v351, %v360
      %v365 = vmul.f32 %v318, 2.0
      %v366 = vmul.f32 %v323, 2.0
      %v367 = vmul.f32 %v328, 2.0
      %v368 = vmul.f32 %v333, 2.0
      %v369 = vsub.f32 %v361, %v365
      %v370 = vsub.f32 %v362, %v366
      %v371 = vsub.f32 %v363, %v367
      %v372 = vsub.f32 %v364, %v368
      %v373 = vld [vmem:[%s3] sm:$0x7]
      %v375 = vsel %vm247, %v373, 0
      %377 = vmatprep.subr.mxu0 0.0
      %378 = vmatpush1.msra.mxu0 %v375
      %379 = vmatprep.subr.mxu0 0.0
      %380 = vmatpush1.msra.mxu0 0.0
      %381 = vmatprep.subr.mxu0 0.0
      %382 = vmatpush1.msra.mxu0 0.0
      %383 = vmatprep.subr.mxu0 0.0
      %384 = vmatpush1.msra.mxu0 0.0
      %385 = vmatprep.subr.mxu0 0.0
      %386 = vmatpush1.msra.mxu0 0.0
      %387 = vmatprep.subr.mxu0 0.0
      %388 = vmatpush1.msra.mxu0 0.0
      %389 = vmatprep.subr.mxu0 0.0
      %390 = vmatpush1.msra.mxu0 0.0
      %391 = vmatprep.subr.mxu0 0.0
      %392 = vmatpush1.msra.mxu0 0.0
      %393 = vmatprep.subr.mxu0 0.0
      %394 = vmatpush1.msra.mxu0 0.0
      %395 = vmatprep.subr.mxu0 0.0
      %396 = vmatpush1.msra.mxu0 0.0
      %397 = vmatprep.subr.mxu0 0.0
      %398 = vmatpush1.msra.mxu0 0.0
      %399 = vmatprep.subr.mxu0 0.0
      %400 = vmatpush1.msra.mxu0 0.0
      %401 = vmatprep.subr.mxu0 0.0
      %402 = vmatpush1.msra.mxu0 0.0
      %403 = vmatprep.subr.mxu0 0.0
      %404 = vmatpush1.msra.mxu0 0.0
      %405 = vmatprep.subr.mxu0 0.0
      %406 = vmatpush1.msra.mxu0 0.0
      %407 = vmatprep.subr.mxu0 0.0
      %408 = vmatpush1.msra.mxu0 0.0
      %409 = vmatprep.subr.mxu0 0.0
      %410 = vmatpush1.msra.mxu0 0.0
      %411 = vmatprep.subr.mxu0 0.0
      %412 = vmatpush1.msra.mxu0 0.0
      %413 = vmatprep.subr.mxu0 0.0
      %414 = vmatpush1.msra.mxu0 0.0
      %415 = vmatprep.subr.mxu0 0.0
      %416 = vmatpush1.msra.mxu0 0.0
      %417 = vmatprep.subr.mxu0 0.0
      %418 = vmatpush1.msra.mxu0 0.0
      %419 = vmatprep.subr.mxu0 0.0
      %420 = vmatpush1.msra.mxu0 0.0
      %421 = vmatprep.subr.mxu0 0.0
      %422 = vmatpush1.msra.mxu0 0.0
      %423 = vmatprep.subr.mxu0 0.0
      %424 = vmatpush1.msra.mxu0 0.0
      %425 = vmatprep.subr.mxu0 0.0
      %426 = vmatpush1.msra.mxu0 0.0
      %427 = vmatprep.subr.mxu0 0.0
      %428 = vmatpush1.msra.mxu0 0.0
      %429 = vmatprep.subr.mxu0 0.0
      %430 = vmatpush1.msra.mxu0 0.0
      %431 = vmatprep.subr.mxu0 0.0
      %432 = vmatpush1.msra.mxu0 0.0
      %433 = vmatprep.subr.mxu0 0.0
      %434 = vmatpush1.msra.mxu0 0.0
      %435 = vmatprep.subr.mxu0 0.0
      %436 = vmatpush1.msra.mxu0 0.0
      %437 = vmatprep.subr.mxu0 0.0
      %438 = vmatpush1.msra.mxu0 0.0
      %439 = vmatprep.subr.mxu0 0.0
      %440 = vmatpush1.msra.mxu0 0.0
      %441 = vmatprep.mubr.f32.mxu0 0.0
      %442 = vmatmul.mubr.f32.gmra.mrb[0].mxu0 %v236
      %v443 = vpop.f32.mrb[0].mxu0
      %v444 = vadd.f32 0.0, %v443
      %v445 = vpop.f32.mrb[0].mxu0
      %446 = vmatprep.mubr.f32.mxu0 0.0
      %447 = vmatmul.mubr.f32.gmra.mrb[0].mxu0 %v239
      %v448 = vpop.f32.mrb[0].mxu0
      %v449 = vadd.f32 0.0, %v448
      %v450 = vpop.f32.mrb[0].mxu0
      %451 = vmatprep.mubr.f32.mxu0 0.0
      %452 = vmatmul.mubr.f32.gmra.mrb[0].mxu0 %v242
      %v453 = vpop.f32.mrb[0].mxu0
      %v454 = vadd.f32 0.0, %v453
      %v455 = vpop.f32.mrb[0].mxu0
      %456 = vmatprep.mubr.f32.mxu0 0.0
      %457 = vmatmul.mubr.f32.gmra.mrb[0].mxu0 %v245
      %v458 = vpop.f32.mrb[0].mxu0
      %v459 = vadd.f32 0.0, %v458
      %v460 = vpop.f32.mrb[0].mxu0
      %461 = vdwg.mxu0
      %v462 = vld [vmem:[%s2] sm:$0xff]
      %v463 = vld [vmem:[%s2 + $0x8] sm:$0xff]
      %v464 = vld [vmem:[%s2 + $0x10] sm:$0xff]
      %v465 = vld [vmem:[%s2 + $0x18] sm:$0xff]
      %v470 = vcombine.high %v444, %v444
      %v472 = vunpack.c.l.s4 1966171168
      %v473 = vunpack.c.0.s8 %v472
      %v474 = vlaneseq
      %v475 = vshrl.u32 %v474, 7
      %v476 = vsub.s32 %v473, %v475
      %v477 = vrot.slane %v444, %v476
      %v479 = vunpack.c.l.s4 1966171168
      %v480 = vunpack.c.0.s8 %v479
      %v481 = vlaneseq
      %v482 = vshrl.u32 %v481, 7
      %v483 = vsub.s32 %v480, %v482
      %v484 = vrot.slane %v470, %v483
      %v485 = vcombine.high %v477, %v477
      %v486 = vcombine.high %v484, %v484
      %v488 = vunpack.c.l.s4 1966171168
      %v489 = vunpack.c.0.s8 %v488
      %v490 = vlaneseq
      %v491 = vshrl.u32 %v490, 7
      %v492 = vsub.s32 %v489, %v491
      %v493 = vrot.slane %v477, %v492
      %v495 = vunpack.c.l.s4 1966171168
      %v496 = vunpack.c.0.s8 %v495
      %v497 = vlaneseq
      %v498 = vshrl.u32 %v497, 7
      %v499 = vsub.s32 %v496, %v498
      %v500 = vrot.slane %v484, %v499
      %v502 = vunpack.c.l.s4 1966171168
      %v503 = vunpack.c.0.s8 %v502
      %v504 = vlaneseq
      %v505 = vshrl.u32 %v504, 7
      %v506 = vsub.s32 %v503, %v505
      %v507 = vrot.slane %v485, %v506
      %v509 = vunpack.c.l.s4 1966171168
      %v510 = vunpack.c.0.s8 %v509
      %v511 = vlaneseq
      %v512 = vshrl.u32 %v511, 7
      %v513 = vsub.s32 %v510, %v512
      %v514 = vrot.slane %v486, %v513
      %v515 = vcombine.high %v493, %v493
      %v516 = vcombine.high %v500, %v500
      %v517 = vcombine.high %v507, %v507
      %v518 = vcombine.high %v514, %v514
      %v519 = vcombine.high %v449, %v449
      %v521 = vunpack.c.l.s4 1966171168
      %v522 = vunpack.c.0.s8 %v521
      %v523 = vlaneseq
      %v524 = vshrl.u32 %v523, 7
      %v525 = vsub.s32 %v522, %v524
      %v526 = vrot.slane %v449, %v525
      %v528 = vunpack.c.l.s4 1966171168
      %v529 = vunpack.c.0.s8 %v528
      %v530 = vlaneseq
      %v531 = vshrl.u32 %v530, 7
      %v532 = vsub.s32 %v529, %v531
      %v533 = vrot.slane %v519, %v532
      %v534 = vcombine.high %v526, %v526
      %v535 = vcombine.high %v533, %v533
      %v537 = vunpack.c.l.s4 1966171168
      %v538 = vunpack.c.0.s8 %v537
      %v539 = vlaneseq
      %v540 = vshrl.u32 %v539, 7
      %v541 = vsub.s32 %v538, %v540
      %v542 = vrot.slane %v526, %v541
      %v544 = vunpack.c.l.s4 1966171168
      %v545 = vunpack.c.0.s8 %v544
      %v546 = vlaneseq
      %v547 = vshrl.u32 %v546, 7
      %v548 = vsub.s32 %v545, %v547
      %v549 = vrot.slane %v533, %v548
      %v551 = vunpack.c.l.s4 1966171168
      %v552 = vunpack.c.0.s8 %v551
      %v553 = vlaneseq
      %v554 = vshrl.u32 %v553, 7
      %v555 = vsub.s32 %v552, %v554
      %v556 = vrot.slane %v534, %v555
      %v558 = vunpack.c.l.s4 1966171168
      %v559 = vunpack.c.0.s8 %v558
      %v560 = vlaneseq
      %v561 = vshrl.u32 %v560, 7
      %v562 = vsub.s32 %v559, %v561
      %v563 = vrot.slane %v535, %v562
      %v564 = vcombine.high %v542, %v542
      %v565 = vcombine.high %v549, %v549
      %v566 = vcombine.high %v556, %v556
      %v567 = vcombine.high %v563, %v563
      %v568 = vcombine.high %v454, %v454
      %v570 = vunpack.c.l.s4 1966171168
      %v571 = vunpack.c.0.s8 %v570
      %v572 = vlaneseq
      %v573 = vshrl.u32 %v572, 7
      %v574 = vsub.s32 %v571, %v573
      %v575 = vrot.slane %v454, %v574
      %v577 = vunpack.c.l.s4 1966171168
      %v578 = vunpack.c.0.s8 %v577
      %v579 = vlaneseq
      %v580 = vshrl.u32 %v579, 7
      %v581 = vsub.s32 %v578, %v580
      %v582 = vrot.slane %v568, %v581
      %v583 = vcombine.high %v575, %v575
      %v584 = vcombine.high %v582, %v582
      %v586 = vunpack.c.l.s4 1966171168
      %v587 = vunpack.c.0.s8 %v586
      %v588 = vlaneseq
      %v589 = vshrl.u32 %v588, 7
      %v590 = vsub.s32 %v587, %v589
      %v591 = vrot.slane %v575, %v590
      %v593 = vunpack.c.l.s4 1966171168
      %v594 = vunpack.c.0.s8 %v593
      %v595 = vlaneseq
      %v596 = vshrl.u32 %v595, 7
      %v597 = vsub.s32 %v594, %v596
      %v598 = vrot.slane %v582, %v597
      %v600 = vunpack.c.l.s4 1966171168
      %v601 = vunpack.c.0.s8 %v600
      %v602 = vlaneseq
      %v603 = vshrl.u32 %v602, 7
      %v604 = vsub.s32 %v601, %v603
      %v605 = vrot.slane %v583, %v604
      %v607 = vunpack.c.l.s4 1966171168
      %v608 = vunpack.c.0.s8 %v607
      %v609 = vlaneseq
      %v610 = vshrl.u32 %v609, 7
      %v611 = vsub.s32 %v608, %v610
      %v612 = vrot.slane %v584, %v611
      %v613 = vcombine.high %v591, %v591
      %v614 = vcombine.high %v598, %v598
      %v615 = vcombine.high %v605, %v605
      %v616 = vcombine.high %v612, %v612
      %v617 = vcombine.high %v459, %v459
      %v619 = vunpack.c.l.s4 1966171168
      %v620 = vunpack.c.0.s8 %v619
      %v621 = vlaneseq
      %v622 = vshrl.u32 %v621, 7
      %v623 = vsub.s32 %v620, %v622
      %v624 = vrot.slane %v459, %v623
      %v626 = vunpack.c.l.s4 1966171168
      %v627 = vunpack.c.0.s8 %v626
      %v628 = vlaneseq
      %v629 = vshrl.u32 %v628, 7
      %v630 = vsub.s32 %v627, %v629
      %v631 = vrot.slane %v617, %v630
      %v632 = vcombine.high %v624, %v624
      %v633 = vcombine.high %v631, %v631
      %v635 = vunpack.c.l.s4 1966171168
      %v636 = vunpack.c.0.s8 %v635
      %v637 = vlaneseq
      %v638 = vshrl.u32 %v637, 7
      %v639 = vsub.s32 %v636, %v638
      %v640 = vrot.slane %v624, %v639
      %v642 = vunpack.c.l.s4 1966171168
      %v643 = vunpack.c.0.s8 %v642
      %v644 = vlaneseq
      %v645 = vshrl.u32 %v644, 7
      %v646 = vsub.s32 %v643, %v645
      %v647 = vrot.slane %v631, %v646
      %v649 = vunpack.c.l.s4 1966171168
      %v650 = vunpack.c.0.s8 %v649
      %v651 = vlaneseq
      %v652 = vshrl.u32 %v651, 7
      %v653 = vsub.s32 %v650, %v652
      %v654 = vrot.slane %v632, %v653
      %v656 = vunpack.c.l.s4 1966171168
      %v657 = vunpack.c.0.s8 %v656
      %v658 = vlaneseq
      %v659 = vshrl.u32 %v658, 7
      %v660 = vsub.s32 %v657, %v659
      %v661 = vrot.slane %v633, %v660
      %v662 = vcombine.high %v640, %v640
      %v663 = vcombine.high %v647, %v647
      %v664 = vcombine.high %v654, %v654
      %v665 = vcombine.high %v661, %v661
      %v666 = vlaneseq
      %v667 = vshrl.u32 %v666, 7
      %v668 = vsub.s32 0, %v667
      %v669 = vrot.slane %v493, %v668
      %v670 = vlaneseq
      %v671 = vshrl.u32 %v670, 7
      %v672 = vsub.s32 0, %v671
      %v673 = vrot.slane %v507, %v672
      %v674 = vlaneseq
      %v675 = vshrl.u32 %v674, 7
      %v676 = vsub.s32 0, %v675
      %v677 = vrot.slane %v515, %v676
      %v678 = vlaneseq
      %v679 = vshrl.u32 %v678, 7
      %v680 = vsub.s32 0, %v679
      %v681 = vrot.slane %v517, %v680
      %v682 = vlaneseq
      %v683 = vshrl.u32 %v682, 7
      %v684 = vsub.s32 0, %v683
      %v685 = vrot.slane %v500, %v684
      %v686 = vlaneseq
      %v687 = vshrl.u32 %v686, 7
      %v688 = vsub.s32 0, %v687
      %v689 = vrot.slane %v514, %v688
      %v690 = vlaneseq
      %v691 = vshrl.u32 %v690, 7
      %v692 = vsub.s32 0, %v691
      %v693 = vrot.slane %v516, %v692
      %v694 = vlaneseq
      %v695 = vshrl.u32 %v694, 7
      %v696 = vsub.s32 0, %v695
      %v697 = vrot.slane %v518, %v696
      %v698 = vlaneseq
      %v699 = vshrl.u32 %v698, 7
      %v700 = vsub.s32 0, %v699
      %v701 = vrot.slane %v542, %v700
      %v702 = vlaneseq
      %v703 = vshrl.u32 %v702, 7
      %v704 = vsub.s32 0, %v703
      %v705 = vrot.slane %v556, %v704
      %v706 = vlaneseq
      %v707 = vshrl.u32 %v706, 7
      %v708 = vsub.s32 0, %v707
      %v709 = vrot.slane %v564, %v708
      %v710 = vlaneseq
      %v711 = vshrl.u32 %v710, 7
      %v712 = vsub.s32 0, %v711
      %v713 = vrot.slane %v566, %v712
      %v714 = vlaneseq
      %v715 = vshrl.u32 %v714, 7
      %v716 = vsub.s32 0, %v715
      %v717 = vrot.slane %v549, %v716
      %v718 = vlaneseq
      %v719 = vshrl.u32 %v718, 7
      %v720 = vsub.s32 0, %v719
      %v721 = vrot.slane %v563, %v720
      %v722 = vlaneseq
      %v723 = vshrl.u32 %v722, 7
      %v724 = vsub.s32 0, %v723
      %v725 = vrot.slane %v565, %v724
      %v726 = vlaneseq
      %v727 = vshrl.u32 %v726, 7
      %v728 = vsub.s32 0, %v727
      %v729 = vrot.slane %v567, %v728
      %v730 = vlaneseq
      %v731 = vshrl.u32 %v730, 7
      %v732 = vsub.s32 0, %v731
      %v733 = vrot.slane %v591, %v732
      %v734 = vlaneseq
      %v735 = vshrl.u32 %v734, 7
      %v736 = vsub.s32 0, %v735
      %v737 = vrot.slane %v605, %v736
      %v738 = vlaneseq
      %v739 = vshrl.u32 %v738, 7
      %v740 = vsub.s32 0, %v739
      %v741 = vrot.slane %v613, %v740
      %v742 = vlaneseq
      %v743 = vshrl.u32 %v742, 7
      %v744 = vsub.s32 0, %v743
      %v745 = vrot.slane %v615, %v744
      %v746 = vlaneseq
      %v747 = vshrl.u32 %v746, 7
      %v748 = vsub.s32 0, %v747
      %v749 = vrot.slane %v598, %v748
      %v750 = vlaneseq
      %v751 = vshrl.u32 %v750, 7
      %v752 = vsub.s32 0, %v751
      %v753 = vrot.slane %v612, %v752
      %v754 = vlaneseq
      %v755 = vshrl.u32 %v754, 7
      %v756 = vsub.s32 0, %v755
      %v757 = vrot.slane %v614, %v756
      %v758 = vlaneseq
      %v759 = vshrl.u32 %v758, 7
      %v760 = vsub.s32 0, %v759
      %v761 = vrot.slane %v616, %v760
      %v762 = vlaneseq
      %v763 = vshrl.u32 %v762, 7
      %v764 = vsub.s32 0, %v763
      %v765 = vrot.slane %v640, %v764
      %v766 = vlaneseq
      %v767 = vshrl.u32 %v766, 7
      %v768 = vsub.s32 0, %v767
      %v769 = vrot.slane %v654, %v768
      %v770 = vlaneseq
      %v771 = vshrl.u32 %v770, 7
      %v772 = vsub.s32 0, %v771
      %v773 = vrot.slane %v662, %v772
      %v774 = vlaneseq
      %v775 = vshrl.u32 %v774, 7
      %v776 = vsub.s32 0, %v775
      %v777 = vrot.slane %v664, %v776
      %v778 = vlaneseq
      %v779 = vshrl.u32 %v778, 7
      %v780 = vsub.s32 0, %v779
      %v781 = vrot.slane %v647, %v780
      %v782 = vlaneseq
      %v783 = vshrl.u32 %v782, 7
      %v784 = vsub.s32 0, %v783
      %v785 = vrot.slane %v661, %v784
      %v786 = vlaneseq
      %v787 = vshrl.u32 %v786, 7
      %v788 = vsub.s32 0, %v787
      %v789 = vrot.slane %v663, %v788
      %v790 = vlaneseq
      %v791 = vshrl.u32 %v790, 7
      %v792 = vsub.s32 0, %v791
      %v793 = vrot.slane %v665, %v792
      %v826 = vsub.f32 %v462, %v669
      %v827 = vsub.f32 %v463, %v669
      %v828 = vsub.f32 %v464, %v669
      %v829 = vsub.f32 %v465, %v669
      %v830 = vsub.f32 %v462, %v673
      %v831 = vsub.f32 %v463, %v673
      %v832 = vsub.f32 %v464, %v673
      %v833 = vsub.f32 %v465, %v673
      %v834 = vsub.f32 %v462, %v677
      %v835 = vsub.f32 %v463, %v677
      %v836 = vsub.f32 %v464, %v677
      %v837 = vsub.f32 %v465, %v677
      %v838 = vsub.f32 %v462, %v681
      %v839 = vsub.f32 %v463, %v681
      %v840 = vsub.f32 %v464, %v681
      %v841 = vsub.f32 %v465, %v681
      %v842 = vsub.f32 %v462, %v685
      %v843 = vsub.f32 %v463, %v685
      %v844 = vsub.f32 %v464, %v685
      %v845 = vsub.f32 %v465, %v685
      %v846 = vsub.f32 %v462, %v689
      %v847 = vsub.f32 %v463, %v689
      %v848 = vsub.f32 %v464, %v689
      %v849 = vsub.f32 %v465, %v689
      %v850 = vsub.f32 %v462, %v693
      %v851 = vsub.f32 %v463, %v693
      %v852 = vsub.f32 %v464, %v693
      %v853 = vsub.f32 %v465, %v693
      %v854 = vsub.f32 %v462, %v697
      %v855 = vsub.f32 %v463, %v697
      %v856 = vsub.f32 %v464, %v697
      %v857 = vsub.f32 %v465, %v697
      %v858 = vsub.f32 %v462, %v701
      %v859 = vsub.f32 %v463, %v701
      %v860 = vsub.f32 %v464, %v701
      %v861 = vsub.f32 %v465, %v701
      %v862 = vsub.f32 %v462, %v705
      %v863 = vsub.f32 %v463, %v705
      %v864 = vsub.f32 %v464, %v705
      %v865 = vsub.f32 %v465, %v705
      %v866 = vsub.f32 %v462, %v709
      %v867 = vsub.f32 %v463, %v709
      %v868 = vsub.f32 %v464, %v709
      %v869 = vsub.f32 %v465, %v709
      %v870 = vsub.f32 %v462, %v713
      %v871 = vsub.f32 %v463, %v713
      %v872 = vsub.f32 %v464, %v713
      %v873 = vsub.f32 %v465, %v713
      %v874 = vsub.f32 %v462, %v717
      %v875 = vsub.f32 %v463, %v717
      %v876 = vsub.f32 %v464, %v717
      %v877 = vsub.f32 %v465, %v717
      %v878 = vsub.f32 %v462, %v721
      %v879 = vsub.f32 %v463, %v721
      %v880 = vsub.f32 %v464, %v721
      %v881 = vsub.f32 %v465, %v721
      %v882 = vsub.f32 %v462, %v725
      %v883 = vsub.f32 %v463, %v725
      %v884 = vsub.f32 %v464, %v725
      %v885 = vsub.f32 %v465, %v725
      %v886 = vsub.f32 %v462, %v729
      %v887 = vsub.f32 %v463, %v729
      %v888 = vsub.f32 %v464, %v729
      %v889 = vsub.f32 %v465, %v729
      %v890 = vsub.f32 %v462, %v733
      %v891 = vsub.f32 %v463, %v733
      %v892 = vsub.f32 %v464, %v733
      %v893 = vsub.f32 %v465, %v733
      %v894 = vsub.f32 %v462, %v737
      %v895 = vsub.f32 %v463, %v737
      %v896 = vsub.f32 %v464, %v737
      %v897 = vsub.f32 %v465, %v737
      %v898 = vsub.f32 %v462, %v741
      %v899 = vsub.f32 %v463, %v741
      %v900 = vsub.f32 %v464, %v741
      %v901 = vsub.f32 %v465, %v741
      %v902 = vsub.f32 %v462, %v745
      %v903 = vsub.f32 %v463, %v745
      %v904 = vsub.f32 %v464, %v745
      %v905 = vsub.f32 %v465, %v745
      %v906 = vsub.f32 %v462, %v749
      %v907 = vsub.f32 %v463, %v749
      %v908 = vsub.f32 %v464, %v749
      %v909 = vsub.f32 %v465, %v749
      %v910 = vsub.f32 %v462, %v753
      %v911 = vsub.f32 %v463, %v753
      %v912 = vsub.f32 %v464, %v753
      %v913 = vsub.f32 %v465, %v753
      %v914 = vsub.f32 %v462, %v757
      %v915 = vsub.f32 %v463, %v757
      %v916 = vsub.f32 %v464, %v757
      %v917 = vsub.f32 %v465, %v757
      %v918 = vsub.f32 %v462, %v761
      %v919 = vsub.f32 %v463, %v761
      %v920 = vsub.f32 %v464, %v761
      %v921 = vsub.f32 %v465, %v761
      %v922 = vsub.f32 %v462, %v765
      %v923 = vsub.f32 %v463, %v765
      %v924 = vsub.f32 %v464, %v765
      %v925 = vsub.f32 %v465, %v765
      %v926 = vsub.f32 %v462, %v769
      %v927 = vsub.f32 %v463, %v769
      %v928 = vsub.f32 %v464, %v769
      %v929 = vsub.f32 %v465, %v769
      %v930 = vsub.f32 %v462, %v773
      %v931 = vsub.f32 %v463, %v773
      %v932 = vsub.f32 %v464, %v773
      %v933 = vsub.f32 %v465, %v773
      %v934 = vsub.f32 %v462, %v777
      %v935 = vsub.f32 %v463, %v777
      %v936 = vsub.f32 %v464, %v777
      %v937 = vsub.f32 %v465, %v777
      %v938 = vsub.f32 %v462, %v781
      %v939 = vsub.f32 %v463, %v781
      %v940 = vsub.f32 %v464, %v781
      %v941 = vsub.f32 %v465, %v781
      %v942 = vsub.f32 %v462, %v785
      %v943 = vsub.f32 %v463, %v785
      %v944 = vsub.f32 %v464, %v785
      %v945 = vsub.f32 %v465, %v785
      %v946 = vsub.f32 %v462, %v789
      %v947 = vsub.f32 %v463, %v789
      %v948 = vsub.f32 %v464, %v789
      %v949 = vsub.f32 %v465, %v789
      %v950 = vsub.f32 %v462, %v793
      %v951 = vsub.f32 %v463, %v793
      %v952 = vsub.f32 %v464, %v793
      %v953 = vsub.f32 %v465, %v793
      %v954 = vmax.f32 %v826, 0.0
      %v955 = vmax.f32 %v827, 0.0
      %v956 = vmax.f32 %v828, 0.0
      %v957 = vmax.f32 %v829, 0.0
      %v958 = vmax.f32 %v830, 0.0
      %v959 = vmax.f32 %v831, 0.0
      %v960 = vmax.f32 %v832, 0.0
      %v961 = vmax.f32 %v833, 0.0
      %v962 = vmax.f32 %v834, 0.0
      %v963 = vmax.f32 %v835, 0.0
      %v964 = vmax.f32 %v836, 0.0
      %v965 = vmax.f32 %v837, 0.0
      %v966 = vmax.f32 %v838, 0.0
      %v967 = vmax.f32 %v839, 0.0
      %v968 = vmax.f32 %v840, 0.0
      %v969 = vmax.f32 %v841, 0.0
      %v970 = vmax.f32 %v842, 0.0
      %v971 = vmax.f32 %v843, 0.0
      %v972 = vmax.f32 %v844, 0.0
      %v973 = vmax.f32 %v845, 0.0
      %v974 = vmax.f32 %v846, 0.0
      %v975 = vmax.f32 %v847, 0.0
      %v976 = vmax.f32 %v848, 0.0
      %v977 = vmax.f32 %v849, 0.0
      %v978 = vmax.f32 %v850, 0.0
      %v979 = vmax.f32 %v851, 0.0
      %v980 = vmax.f32 %v852, 0.0
      %v981 = vmax.f32 %v853, 0.0
      %v982 = vmax.f32 %v854, 0.0
      %v983 = vmax.f32 %v855, 0.0
      %v984 = vmax.f32 %v856, 0.0
      %v985 = vmax.f32 %v857, 0.0
      %v986 = vmax.f32 %v858, 0.0
      %v987 = vmax.f32 %v859, 0.0
      %v988 = vmax.f32 %v860, 0.0
      %v989 = vmax.f32 %v861, 0.0
      %v990 = vmax.f32 %v862, 0.0
      %v991 = vmax.f32 %v863, 0.0
      %v992 = vmax.f32 %v864, 0.0
      %v993 = vmax.f32 %v865, 0.0
      %v994 = vmax.f32 %v866, 0.0
      %v995 = vmax.f32 %v867, 0.0
      %v996 = vmax.f32 %v868, 0.0
      %v997 = vmax.f32 %v869, 0.0
      %v998 = vmax.f32 %v870, 0.0
      %v999 = vmax.f32 %v871, 0.0
      %v1000 = vmax.f32 %v872, 0.0
      %v1001 = vmax.f32 %v873, 0.0
      %v1002 = vmax.f32 %v874, 0.0
      %v1003 = vmax.f32 %v875, 0.0
      %v1004 = vmax.f32 %v876, 0.0
      %v1005 = vmax.f32 %v877, 0.0
      %v1006 = vmax.f32 %v878, 0.0
      %v1007 = vmax.f32 %v879, 0.0
      %v1008 = vmax.f32 %v880, 0.0
      %v1009 = vmax.f32 %v881, 0.0
      %v1010 = vmax.f32 %v882, 0.0
      %v1011 = vmax.f32 %v883, 0.0
      %v1012 = vmax.f32 %v884, 0.0
      %v1013 = vmax.f32 %v885, 0.0
      %v1014 = vmax.f32 %v886, 0.0
      %v1015 = vmax.f32 %v887, 0.0
      %v1016 = vmax.f32 %v888, 0.0
      %v1017 = vmax.f32 %v889, 0.0
      %v1018 = vmax.f32 %v890, 0.0
      %v1019 = vmax.f32 %v891, 0.0
      %v1020 = vmax.f32 %v892, 0.0
      %v1021 = vmax.f32 %v893, 0.0
      %v1022 = vmax.f32 %v894, 0.0
      %v1023 = vmax.f32 %v895, 0.0
      %v1024 = vmax.f32 %v896, 0.0
      %v1025 = vmax.f32 %v897, 0.0
      %v1026 = vmax.f32 %v898, 0.0
      %v1027 = vmax.f32 %v899, 0.0
      %v1028 = vmax.f32 %v900, 0.0
      %v1029 = vmax.f32 %v901, 0.0
      %v1030 = vmax.f32 %v902, 0.0
      %v1031 = vmax.f32 %v903, 0.0
      %v1032 = vmax.f32 %v904, 0.0
      %v1033 = vmax.f32 %v905, 0.0
      %v1034 = vmax.f32 %v906, 0.0
      %v1035 = vmax.f32 %v907, 0.0
      %v1036 = vmax.f32 %v908, 0.0
      %v1037 = vmax.f32 %v909, 0.0
      %v1038 = vmax.f32 %v910, 0.0
      %v1039 = vmax.f32 %v911, 0.0
      %v1040 = vmax.f32 %v912, 0.0
      %v1041 = vmax.f32 %v913, 0.0
      %v1042 = vmax.f32 %v914, 0.0
      %v1043 = vmax.f32 %v915, 0.0
      %v1044 = vmax.f32 %v916, 0.0
      %v1045 = vmax.f32 %v917, 0.0
      %v1046 = vmax.f32 %v918, 0.0
      %v1047 = vmax.f32 %v919, 0.0
      %v1048 = vmax.f32 %v920, 0.0
      %v1049 = vmax.f32 %v921, 0.0
      %v1050 = vmax.f32 %v922, 0.0
      %v1051 = vmax.f32 %v923, 0.0
      %v1052 = vmax.f32 %v924, 0.0
      %v1053 = vmax.f32 %v925, 0.0
      %v1054 = vmax.f32 %v926, 0.0
      %v1055 = vmax.f32 %v927, 0.0
      %v1056 = vmax.f32 %v928, 0.0
      %v1057 = vmax.f32 %v929, 0.0
      %v1058 = vmax.f32 %v930, 0.0
      %v1059 = vmax.f32 %v931, 0.0
      %v1060 = vmax.f32 %v932, 0.0
      %v1061 = vmax.f32 %v933, 0.0
      %v1062 = vmax.f32 %v934, 0.0
      %v1063 = vmax.f32 %v935, 0.0
      %v1064 = vmax.f32 %v936, 0.0
      %v1065 = vmax.f32 %v937, 0.0
      %v1066 = vmax.f32 %v938, 0.0
      %v1067 = vmax.f32 %v939, 0.0
      %v1068 = vmax.f32 %v940, 0.0
      %v1069 = vmax.f32 %v941, 0.0
      %v1070 = vmax.f32 %v942, 0.0
      %v1071 = vmax.f32 %v943, 0.0
      %v1072 = vmax.f32 %v944, 0.0
      %v1073 = vmax.f32 %v945, 0.0
      %v1074 = vmax.f32 %v946, 0.0
      %v1075 = vmax.f32 %v947, 0.0
      %v1076 = vmax.f32 %v948, 0.0
      %v1077 = vmax.f32 %v949, 0.0
      %v1078 = vmax.f32 %v950, 0.0
      %v1079 = vmax.f32 %v951, 0.0
      %v1080 = vmax.f32 %v952, 0.0
      %v1081 = vmax.f32 %v953, 0.0
      %v1082 = vpack.c.bf16 %v955, %v954
      %v1083 = vpack.c.bf16 %v957, %v956
      %v1084 = vpack.c.bf16 %v959, %v958
      %v1085 = vpack.c.bf16 %v961, %v960
      %v1086 = vpack.c.bf16 %v963, %v962
      %v1087 = vpack.c.bf16 %v965, %v964
      %v1088 = vpack.c.bf16 %v967, %v966
      %v1089 = vpack.c.bf16 %v969, %v968
      %v1090 = vpack.c.bf16 %v971, %v970
      %v1091 = vpack.c.bf16 %v973, %v972
      %v1092 = vpack.c.bf16 %v975, %v974
      %v1093 = vpack.c.bf16 %v977, %v976
      %v1094 = vpack.c.bf16 %v979, %v978
      %v1095 = vpack.c.bf16 %v981, %v980
      %v1096 = vpack.c.bf16 %v983, %v982
      %v1097 = vpack.c.bf16 %v985, %v984
      %v1098 = vpack.c.bf16 %v987, %v986
      %v1099 = vpack.c.bf16 %v989, %v988
      %v1100 = vpack.c.bf16 %v991, %v990
      %v1101 = vpack.c.bf16 %v993, %v992
      %v1102 = vpack.c.bf16 %v995, %v994
      %v1103 = vpack.c.bf16 %v997, %v996
      %v1104 = vpack.c.bf16 %v999, %v998
      %v1105 = vpack.c.bf16 %v1001, %v1000
      %v1106 = vpack.c.bf16 %v1003, %v1002
      %v1107 = vpack.c.bf16 %v1005, %v1004
      %v1108 = vpack.c.bf16 %v1007, %v1006
      %v1109 = vpack.c.bf16 %v1009, %v1008
      %v1110 = vpack.c.bf16 %v1011, %v1010
      %v1111 = vpack.c.bf16 %v1013, %v1012
      %v1112 = vpack.c.bf16 %v1015, %v1014
      %v1113 = vpack.c.bf16 %v1017, %v1016
      %v1114 = vpack.c.bf16 %v1019, %v1018
      %v1115 = vpack.c.bf16 %v1021, %v1020
      %v1116 = vpack.c.bf16 %v1023, %v1022
      %v1117 = vpack.c.bf16 %v1025, %v1024
      %v1118 = vpack.c.bf16 %v1027, %v1026
      %v1119 = vpack.c.bf16 %v1029, %v1028
      %v1120 = vpack.c.bf16 %v1031, %v1030
      %v1121 = vpack.c.bf16 %v1033, %v1032
      %v1122 = vpack.c.bf16 %v1035, %v1034
      %v1123 = vpack.c.bf16 %v1037, %v1036
      %v1124 = vpack.c.bf16 %v1039, %v1038
      %v1125 = vpack.c.bf16 %v1041, %v1040
      %v1126 = vpack.c.bf16 %v1043, %v1042
      %v1127 = vpack.c.bf16 %v1045, %v1044
      %v1128 = vpack.c.bf16 %v1047, %v1046
      %v1129 = vpack.c.bf16 %v1049, %v1048
      %v1130 = vpack.c.bf16 %v1051, %v1050
      %v1131 = vpack.c.bf16 %v1053, %v1052
      %v1132 = vpack.c.bf16 %v1055, %v1054
      %v1133 = vpack.c.bf16 %v1057, %v1056
      %v1134 = vpack.c.bf16 %v1059, %v1058
      %v1135 = vpack.c.bf16 %v1061, %v1060
      %v1136 = vpack.c.bf16 %v1063, %v1062
      %v1137 = vpack.c.bf16 %v1065, %v1064
      %v1138 = vpack.c.bf16 %v1067, %v1066
      %v1139 = vpack.c.bf16 %v1069, %v1068
      %v1140 = vpack.c.bf16 %v1071, %v1070
      %v1141 = vpack.c.bf16 %v1073, %v1072
      %v1142 = vpack.c.bf16 %v1075, %v1074
      %v1143 = vpack.c.bf16 %v1077, %v1076
      %v1144 = vpack.c.bf16 %v1079, %v1078
      %v1145 = vpack.c.bf16 %v1081, %v1080
      %v1146 = vld [vmem:[%s4] sm:$0xf]
      %v1147 = vld [vmem:[%s4 + $0x4] sm:$0xf]
      %v1148 = vld [vmem:[%s4 + $0x8] sm:$0xf]
      %v1149 = vld [vmem:[%s4 + $0xc] sm:$0xf]
      %v1154 = vunpack.c.l.b16 %v1146
      %v1155 = vunpack.c.l.b16 %v1147
      %v1156 = vunpack.c.l.b16 %v1148
      %v1157 = vunpack.c.l.b16 %v1149
      %v1158 = vpack.c.b16 %v1155, %v1154
      %v1159 = vpack.c.b16 %v1157, %v1156
      %vm1162 = vcmask 261120
      %v1164 = vsel %vm1162, %v1082, 0
      %v1167 = vsel %vm1162, %v1083, 0
      %v1170 = vsel %vm1162, %v1084, 0
      %v1173 = vsel %vm1162, %v1085, 0
      %v1176 = vsel %vm1162, %v1086, 0
      %v1179 = vsel %vm1162, %v1087, 0
      %v1182 = vsel %vm1162, %v1088, 0
      %v1185 = vsel %vm1162, %v1089, 0
      %v1188 = vsel %vm1162, %v1090, 0
      %v1191 = vsel %vm1162, %v1091, 0
      %v1194 = vsel %vm1162, %v1092, 0
      %v1197 = vsel %vm1162, %v1093, 0
      %v1200 = vsel %vm1162, %v1094, 0
      %v1203 = vsel %vm1162, %v1095, 0
      %v1206 = vsel %vm1162, %v1096, 0
      %v1209 = vsel %vm1162, %v1097, 0
      %v1212 = vsel %vm1162, %v1098, 0
      %v1215 = vsel %vm1162, %v1099, 0
      %v1218 = vsel %vm1162, %v1100, 0
      %v1221 = vsel %vm1162, %v1101, 0
      %v1224 = vsel %vm1162, %v1102, 0
      %v1227 = vsel %vm1162, %v1103, 0
      %v1230 = vsel %vm1162, %v1104, 0
      %v1233 = vsel %vm1162, %v1105, 0
      %v1236 = vsel %vm1162, %v1106, 0
      %v1239 = vsel %vm1162, %v1107, 0
      %v1242 = vsel %vm1162, %v1108, 0
      %v1245 = vsel %vm1162, %v1109, 0
      %v1248 = vsel %vm1162, %v1110, 0
      %v1251 = vsel %vm1162, %v1111, 0
      %v1254 = vsel %vm1162, %v1112, 0
      %v1257 = vsel %vm1162, %v1113, 0
      %v1260 = vsel %vm1162, %v1114, 0
      %v1263 = vsel %vm1162, %v1115, 0
      %v1266 = vsel %vm1162, %v1116, 0
      %v1269 = vsel %vm1162, %v1117, 0
      %v1272 = vsel %vm1162, %v1118, 0
      %v1275 = vsel %vm1162, %v1119, 0
      %v1278 = vsel %vm1162, %v1120, 0
      %v1281 = vsel %vm1162, %v1121, 0
      %v1284 = vsel %vm1162, %v1122, 0
      %v1287 = vsel %vm1162, %v1123, 0
      %v1290 = vsel %vm1162, %v1124, 0
      %v1293 = vsel %vm1162, %v1125, 0
      %v1296 = vsel %vm1162, %v1126, 0
      %v1299 = vsel %vm1162, %v1127, 0
      %v1302 = vsel %vm1162, %v1128, 0
      %v1305 = vsel %vm1162, %v1129, 0
      %v1308 = vsel %vm1162, %v1130, 0
      %v1311 = vsel %vm1162, %v1131, 0
      %v1314 = vsel %vm1162, %v1132, 0
      %v1317 = vsel %vm1162, %v1133, 0
      %v1320 = vsel %vm1162, %v1134, 0
      %v1323 = vsel %vm1162, %v1135, 0
      %v1326 = vsel %vm1162, %v1136, 0
      %v1329 = vsel %vm1162, %v1137, 0
      %v1332 = vsel %vm1162, %v1138, 0
      %v1335 = vsel %vm1162, %v1139, 0
      %v1338 = vsel %vm1162, %v1140, 0
      %v1341 = vsel %vm1162, %v1141, 0
      %v1344 = vsel %vm1162, %v1142, 0
      %v1347 = vsel %vm1162, %v1143, 0
      %v1350 = vsel %vm1162, %v1144, 0
      %v1353 = vsel %vm1162, %v1145, 0
      %1355 = vmatprep.subr.bf16.mxu0 0
      %1356 = vmatpush1.bf16.msra.mxu0 %v1158
      %1357 = vmatprep.subr.bf16.mxu0 0
      %1358 = vmatpush1.bf16.msra.mxu0 %v1159
      %1359 = vmatprep.subr.bf16.mxu0 0
      %1360 = vmatpush1.bf16.msra.mxu0 0
      %1361 = vmatprep.subr.bf16.mxu0 0
      %1362 = vmatpush1.bf16.msra.mxu0 0
      %1363 = vmatprep.subr.bf16.mxu0 0
      %1364 = vmatpush1.bf16.msra.mxu0 0
      %1365 = vmatprep.subr.bf16.mxu0 0
      %1366 = vmatpush1.bf16.msra.mxu0 0
      %1367 = vmatprep.subr.bf16.mxu0 0
      %1368 = vmatpush1.bf16.msra.mxu0 0
      %1369 = vmatprep.subr.bf16.mxu0 0
      %1370 = vmatpush1.bf16.msra.mxu0 0
      %1371 = vmatprep.subr.bf16.mxu0 0
      %1372 = vmatpush1.bf16.msra.mxu0 0
      %1373 = vmatprep.subr.bf16.mxu0 0
      %1374 = vmatpush1.bf16.msra.mxu0 0
      %1375 = vmatprep.subr.bf16.mxu0 0
      %1376 = vmatpush1.bf16.msra.mxu0 0
      %1377 = vmatprep.subr.bf16.mxu0 0
      %1378 = vmatpush1.bf16.msra.mxu0 0
      %1379 = vmatprep.subr.bf16.mxu0 0
      %1380 = vmatpush1.bf16.msra.mxu0 0
      %1381 = vmatprep.subr.bf16.mxu0 0
      %1382 = vmatpush1.bf16.msra.mxu0 0
      %1383 = vmatprep.subr.bf16.mxu0 0
      %1384 = vmatpush1.bf16.msra.mxu0 0
      %1385 = vmatprep.subr.bf16.mxu0 0
      %1386 = vmatpush1.bf16.msra.mxu0 0
      %1387 = vmatprep.mubr.bf16.mxu0 0
      %1388 = vmatmul.mubr.bf16.gmra.mrb[0].mxu0 %v1164
      %v1389 = vpop.f32.mrb[0].mxu0
      %v1390 = vadd.f32 0.0, %v1389
      %v1391 = vpop.f32.mrb[0].mxu0
      %v1392 = vpop.f32.mrb[0].mxu0
      %v1393 = vadd.f32 0.0, %v1392
      %v1394 = vpop.f32.mrb[0].mxu0
      %1395 = vmatprep.mubr.bf16.mxu0 0
      %1396 = vmatmul.mubr.bf16.gmra.mrb[0].mxu0 %v1167
      %v1397 = vpop.f32.mrb[0].mxu0
      %v1398 = vadd.f32 0.0, %v1397
      %v1399 = vpop.f32.mrb[0].mxu0
      %v1400 = vpop.f32.mrb[0].mxu0
      %v1401 = vadd.f32 0.0, %v1400
      %v1402 = vpop.f32.mrb[0].mxu0
      %1403 = vmatprep.mubr.bf16.mxu0 0
      %1404 = vmatmul.mubr.bf16.gmra.mrb[0].mxu0 %v1170
      %v1405 = vpop.f32.mrb[0].mxu0
      %v1406 = vadd.f32 0.0, %v1405
      %v1407 = vpop.f32.mrb[0].mxu0
      %v1408 = vpop.f32.mrb[0].mxu0
      %v1409 = vadd.f32 0.0, %v1408
      %v1410 = vpop.f32.mrb[0].mxu0
      %1411 = vmatprep.mubr.bf16.mxu0 0
      %1412 = vmatmul.mubr.bf16.gmra.mrb[0].mxu0 %v1173
      %v1413 = vpop.f32.mrb[0].mxu0
      %v1414 = vadd.f32 0.0, %v1413
      %v1415 = vpop.f32.mrb[0].mxu0
      %v1416 = vpop.f32.mrb[0].mxu0
      %v1417 = vadd.f32 0.0, %v1416
      %v1418 = vpop.f32.mrb[0].mxu0
      %1419 = vmatprep.mubr.bf16.mxu0 0
      %1420 = vmatmul.mubr.bf16.gmra.mrb[0].mxu0 %v1176
      %v1421 = vpop.f32.mrb[0].mxu0
      %v1422 = vadd.f32 0.0, %v1421
      %v1423 = vpop.f32.mrb[0].mxu0
      %v1424 = vpop.f32.mrb[0].mxu0
      %v1425 = vadd.f32 0.0, %v1424
      %v1426 = vpop.f32.mrb[0].mxu0
      %1427 = vmatprep.mubr.bf16.mxu0 0
      %1428 = vmatmul.mubr.bf16.gmra.mrb[0].mxu0 %v1179
      %v1429 = vpop.f32.mrb[0].mxu0
      %v1430 = vadd.f32 0.0, %v1429
      %v1431 = vpop.f32.mrb[0].mxu0
      %v1432 = vpop.f32.mrb[0].mxu0
      %v1433 = vadd.f32 0.0, %v1432
      %v1434 = vpop.f32.mrb[0].mxu0
      %1435 = vmatprep.mubr.bf16.mxu0 0
      %1436 = vmatmul.mubr.bf16.gmra.mrb[0].mxu0 %v1182
      %v1437 = vpop.f32.mrb[0].mxu0
      %v1438 = vadd.f32 0.0, %v1437
      %v1439 = vpop.f32.mrb[0].mxu0
      %v1440 = vpop.f32.mrb[0].mxu0
      %v1441 = vadd.f32 0.0, %v1440
      %v1442 = vpop.f32.mrb[0].mxu0
      %1443 = vmatprep.mubr.bf16.mxu0 0
      %1444 = vmatmul.mubr.bf16.gmra.mrb[0].mxu0 %v1185
      %v1445 = vpop.f32.mrb[0].mxu0
      %v1446 = vadd.f32 0.0, %v1445
      %v1447 = vpop.f32.mrb[0].mxu0
      %v1448 = vpop.f32.mrb[0].mxu0
      %v1449 = vadd.f32 0.0, %v1448
      %v1450 = vpop.f32.mrb[0].mxu0
      %1451 = vmatprep.mubr.bf16.mxu0 0
      %1452 = vmatmul.mubr.bf16.gmra.mrb[0].mxu0 %v1188
      %v1453 = vpop.f32.mrb[0].mxu0
      %v1454 = vadd.f32 0.0, %v1453
      %v1455 = vpop.f32.mrb[0].mxu0
      %v1456 = vpop.f32.mrb[0].mxu0
      %v1457 = vadd.f32 0.0, %v1456
      %v1458 = vpop.f32.mrb[0].mxu0
      %1459 = vmatprep.mubr.bf16.mxu0 0
      %1460 = vmatmul.mubr.bf16.gmra.mrb[0].mxu0 %v1191
      %v1461 = vpop.f32.mrb[0].mxu0
      %v1462 = vadd.f32 0.0, %v1461
      %v1463 = vpop.f32.mrb[0].mxu0
      %v1464 = vpop.f32.mrb[0].mxu0
      %v1465 = vadd.f32 0.0, %v1464
      %v1466 = vpop.f32.mrb[0].mxu0
      %1467 = vmatprep.mubr.bf16.mxu0 0
      %1468 = vmatmul.mubr.bf16.gmra.mrb[0].mxu0 %v1194
      %v1469 = vpop.f32.mrb[0].mxu0
      %v1470 = vadd.f32 0.0, %v1469
      %v1471 = vpop.f32.mrb[0].mxu0
      %v1472 = vpop.f32.mrb[0].mxu0
      %v1473 = vadd.f32 0.0, %v1472
      %v1474 = vpop.f32.mrb[0].mxu0
      %1475 = vmatprep.mubr.bf16.mxu0 0
      %1476 = vmatmul.mubr.bf16.gmra.mrb[0].mxu0 %v1197
      %v1477 = vpop.f32.mrb[0].mxu0
      %v1478 = vadd.f32 0.0, %v1477
      %v1479 = vpop.f32.mrb[0].mxu0
      %v1480 = vpop.f32.mrb[0].mxu0
      %v1481 = vadd.f32 0.0, %v1480
      %v1482 = vpop.f32.mrb[0].mxu0
      %1483 = vmatprep.mubr.bf16.mxu0 0
      %1484 = vmatmul.mubr.bf16.gmra.mrb[0].mxu0 %v1200
      %v1485 = vpop.f32.mrb[0].mxu0
      %v1486 = vadd.f32 0.0, %v1485
      %v1487 = vpop.f32.mrb[0].mxu0
      %v1488 = vpop.f32.mrb[0].mxu0
      %v1489 = vadd.f32 0.0, %v1488
      %v1490 = vpop.f32.mrb[0].mxu0
      %1491 = vmatprep.mubr.bf16.mxu0 0
      %1492 = vmatmul.mubr.bf16.gmra.mrb[0].mxu0 %v1203
      %v1493 = vpop.f32.mrb[0].mxu0
      %v1494 = vadd.f32 0.0, %v1493
      %v1495 = vpop.f32.mrb[0].mxu0
      %v1496 = vpop.f32.mrb[0].mxu0
      %v1497 = vadd.f32 0.0, %v1496
      %v1498 = vpop.f32.mrb[0].mxu0
      %1499 = vmatprep.mubr.bf16.mxu0 0
      %1500 = vmatmul.mubr.bf16.gmra.mrb[0].mxu0 %v1206
      %v1501 = vpop.f32.mrb[0].mxu0
      %v1502 = vadd.f32 0.0, %v1501
      %v1503 = vpop.f32.mrb[0].mxu0
      %v1504 = vpop.f32.mrb[0].mxu0
      %v1505 = vadd.f32 0.0, %v1504
      %v1506 = vpop.f32.mrb[0].mxu0
      %1507 = vmatprep.mubr.bf16.mxu0 0
      %1508 = vmatmul.mubr.bf16.gmra.mrb[0].mxu0 %v1209
      %v1509 = vpop.f32.mrb[0].mxu0
      %v1510 = vadd.f32 0.0, %v1509
      %v1511 = vpop.f32.mrb[0].mxu0
      %v1512 = vpop.f32.mrb[0].mxu0
      %v1513 = vadd.f32 0.0, %v1512
      %v1514 = vpop.f32.mrb[0].mxu0
      %1515 = vmatprep.mubr.bf16.mxu0 0
      %1516 = vmatmul.mubr.bf16.gmra.mrb[0].mxu0 %v1212
      %v1517 = vpop.f32.mrb[0].mxu0
      %v1518 = vadd.f32 0.0, %v1517
      %v1519 = vpop.f32.mrb[0].mxu0
      %v1520 = vpop.f32.mrb[0].mxu0
      %v1521 = vadd.f32 0.0, %v1520
      %v1522 = vpop.f32.mrb[0].mxu0
      %1523 = vmatprep.mubr.bf16.mxu0 0
      %1524 = vmatmul.mubr.bf16.gmra.mrb[0].mxu0 %v1215
      %v1525 = vpop.f32.mrb[0].mxu0
      %v1526 = vadd.f32 0.0, %v1525
      %v1527 = vpop.f32.mrb[0].mxu0
      %v1528 = vpop.f32.mrb[0].mxu0
      %v1529 = vadd.f32 0.0, %v1528
      %v1530 = vpop.f32.mrb[0].mxu0
      %1531 = vmatprep.mubr.bf16.mxu0 0
      %1532 = vmatmul.mubr.bf16.gmra.mrb[0].mxu0 %v1218
      %v1533 = vpop.f32.mrb[0].mxu0
      %v1534 = vadd.f32 0.0, %v1533
      %v1535 = vpop.f32.mrb[0].mxu0
      %v1536 = vpop.f32.mrb[0].mxu0
      %v1537 = vadd.f32 0.0, %v1536
      %v1538 = vpop.f32.mrb[0].mxu0
      %1539 = vmatprep.mubr.bf16.mxu0 0
      %1540 = vmatmul.mubr.bf16.gmra.mrb[0].mxu0 %v1221
      %v1541 = vpop.f32.mrb[0].mxu0
      %v1542 = vadd.f32 0.0, %v1541
      %v1543 = vpop.f32.mrb[0].mxu0
      %v1544 = vpop.f32.mrb[0].mxu0
      %v1545 = vadd.f32 0.0, %v1544
      %v1546 = vpop.f32.mrb[0].mxu0
      %1547 = vmatprep.mubr.bf16.mxu0 0
      %1548 = vmatmul.mubr.bf16.gmra.mrb[0].mxu0 %v1224
      %v1549 = vpop.f32.mrb[0].mxu0
      %v1550 = vadd.f32 0.0, %v1549
      %v1551 = vpop.f32.mrb[0].mxu0
      %v1552 = vpop.f32.mrb[0].mxu0
      %v1553 = vadd.f32 0.0, %v1552
      %v1554 = vpop.f32.mrb[0].mxu0
      %1555 = vmatprep.mubr.bf16.mxu0 0
      %1556 = vmatmul.mubr.bf16.gmra.mrb[0].mxu0 %v1227
      %v1557 = vpop.f32.mrb[0].mxu0
      %v1558 = vadd.f32 0.0, %v1557
      %v1559 = vpop.f32.mrb[0].mxu0
      %v1560 = vpop.f32.mrb[0].mxu0
      %v1561 = vadd.f32 0.0, %v1560
      %v1562 = vpop.f32.mrb[0].mxu0
      %1563 = vmatprep.mubr.bf16.mxu0 0
      %1564 = vmatmul.mubr.bf16.gmra.mrb[0].mxu0 %v1230
      %v1565 = vpop.f32.mrb[0].mxu0
      %v1566 = vadd.f32 0.0, %v1565
      %v1567 = vpop.f32.mrb[0].mxu0
      %v1568 = vpop.f32.mrb[0].mxu0
      %v1569 = vadd.f32 0.0, %v1568
      %v1570 = vpop.f32.mrb[0].mxu0
      %1571 = vmatprep.mubr.bf16.mxu0 0
      %1572 = vmatmul.mubr.bf16.gmra.mrb[0].mxu0 %v1233
      %v1573 = vpop.f32.mrb[0].mxu0
      %v1574 = vadd.f32 0.0, %v1573
      %v1575 = vpop.f32.mrb[0].mxu0
      %v1576 = vpop.f32.mrb[0].mxu0
      %v1577 = vadd.f32 0.0, %v1576
      %v1578 = vpop.f32.mrb[0].mxu0
      %1579 = vmatprep.mubr.bf16.mxu0 0
      %1580 = vmatmul.mubr.bf16.gmra.mrb[0].mxu0 %v1236
      %v1581 = vpop.f32.mrb[0].mxu0
      %v1582 = vadd.f32 0.0, %v1581
      %v1583 = vpop.f32.mrb[0].mxu0
      %v1584 = vpop.f32.mrb[0].mxu0
      %v1585 = vadd.f32 0.0, %v1584
      %v1586 = vpop.f32.mrb[0].mxu0
      %1587 = vmatprep.mubr.bf16.mxu0 0
      %1588 = vmatmul.mubr.bf16.gmra.mrb[0].mxu0 %v1239
      %v1589 = vpop.f32.mrb[0].mxu0
      %v1590 = vadd.f32 0.0, %v1589
      %v1591 = vpop.f32.mrb[0].mxu0
      %v1592 = vpop.f32.mrb[0].mxu0
      %v1593 = vadd.f32 0.0, %v1592
      %v1594 = vpop.f32.mrb[0].mxu0
      %1595 = vmatprep.mubr.bf16.mxu0 0
      %1596 = vmatmul.mubr.bf16.gmra.mrb[0].mxu0 %v1242
      %v1597 = vpop.f32.mrb[0].mxu0
      %v1598 = vadd.f32 0.0, %v1597
      %v1599 = vpop.f32.mrb[0].mxu0
      %v1600 = vpop.f32.mrb[0].mxu0
      %v1601 = vadd.f32 0.0, %v1600
      %v1602 = vpop.f32.mrb[0].mxu0
      %1603 = vmatprep.mubr.bf16.mxu0 0
      %1604 = vmatmul.mubr.bf16.gmra.mrb[0].mxu0 %v1245
      %v1605 = vpop.f32.mrb[0].mxu0
      %v1606 = vadd.f32 0.0, %v1605
      %v1607 = vpop.f32.mrb[0].mxu0
      %v1608 = vpop.f32.mrb[0].mxu0
      %v1609 = vadd.f32 0.0, %v1608
      %v1610 = vpop.f32.mrb[0].mxu0
      %1611 = vmatprep.mubr.bf16.mxu0 0
      %1612 = vmatmul.mubr.bf16.gmra.mrb[0].mxu0 %v1248
      %v1613 = vpop.f32.mrb[0].mxu0
      %v1614 = vadd.f32 0.0, %v1613
      %v1615 = vpop.f32.mrb[0].mxu0
      %v1616 = vpop.f32.mrb[0].mxu0
      %v1617 = vadd.f32 0.0, %v1616
      %v1618 = vpop.f32.mrb[0].mxu0
      %1619 = vmatprep.mubr.bf16.mxu0 0
      %1620 = vmatmul.mubr.bf16.gmra.mrb[0].mxu0 %v1251
      %v1621 = vpop.f32.mrb[0].mxu0
      %v1622 = vadd.f32 0.0, %v1621
      %v1623 = vpop.f32.mrb[0].mxu0
      %v1624 = vpop.f32.mrb[0].mxu0
      %v1625 = vadd.f32 0.0, %v1624
      %v1626 = vpop.f32.mrb[0].mxu0
      %1627 = vmatprep.mubr.bf16.mxu0 0
      %1628 = vmatmul.mubr.bf16.gmra.mrb[0].mxu0 %v1254
      %v1629 = vpop.f32.mrb[0].mxu0
      %v1630 = vadd.f32 0.0, %v1629
      %v1631 = vpop.f32.mrb[0].mxu0
      %v1632 = vpop.f32.mrb[0].mxu0
      %v1633 = vadd.f32 0.0, %v1632
      %v1634 = vpop.f32.mrb[0].mxu0
      %1635 = vmatprep.mubr.bf16.mxu0 0
      %1636 = vmatmul.mubr.bf16.gmra.mrb[0].mxu0 %v1257
      %v1637 = vpop.f32.mrb[0].mxu0
      %v1638 = vadd.f32 0.0, %v1637
      %v1639 = vpop.f32.mrb[0].mxu0
      %v1640 = vpop.f32.mrb[0].mxu0
      %v1641 = vadd.f32 0.0, %v1640
      %v1642 = vpop.f32.mrb[0].mxu0
      %1643 = vmatprep.mubr.bf16.mxu0 0
      %1644 = vmatmul.mubr.bf16.gmra.mrb[0].mxu0 %v1260
      %v1645 = vpop.f32.mrb[0].mxu0
      %v1646 = vadd.f32 0.0, %v1645
      %v1647 = vpop.f32.mrb[0].mxu0
      %v1648 = vpop.f32.mrb[0].mxu0
      %v1649 = vadd.f32 0.0, %v1648
      %v1650 = vpop.f32.mrb[0].mxu0
      %1651 = vmatprep.mubr.bf16.mxu0 0
      %1652 = vmatmul.mubr.bf16.gmra.mrb[0].mxu0 %v1263
      %v1653 = vpop.f32.mrb[0].mxu0
      %v1654 = vadd.f32 0.0, %v1653
      %v1655 = vpop.f32.mrb[0].mxu0
      %v1656 = vpop.f32.mrb[0].mxu0
      %v1657 = vadd.f32 0.0, %v1656
      %v1658 = vpop.f32.mrb[0].mxu0
      %1659 = vmatprep.mubr.bf16.mxu0 0
      %1660 = vmatmul.mubr.bf16.gmra.mrb[0].mxu0 %v1266
      %v1661 = vpop.f32.mrb[0].mxu0
      %v1662 = vadd.f32 0.0, %v1661
      %v1663 = vpop.f32.mrb[0].mxu0
      %v1664 = vpop.f32.mrb[0].mxu0
      %v1665 = vadd.f32 0.0, %v1664
      %v1666 = vpop.f32.mrb[0].mxu0
      %1667 = vmatprep.mubr.bf16.mxu0 0
      %1668 = vmatmul.mubr.bf16.gmra.mrb[0].mxu0 %v1269
      %v1669 = vpop.f32.mrb[0].mxu0
      %v1670 = vadd.f32 0.0, %v1669
      %v1671 = vpop.f32.mrb[0].mxu0
      %v1672 = vpop.f32.mrb[0].mxu0
      %v1673 = vadd.f32 0.0, %v1672
      %v1674 = vpop.f32.mrb[0].mxu0
      %1675 = vmatprep.mubr.bf16.mxu0 0
      %1676 = vmatmul.mubr.bf16.gmra.mrb[0].mxu0 %v1272
      %v1677 = vpop.f32.mrb[0].mxu0
      %v1678 = vadd.f32 0.0, %v1677
      %v1679 = vpop.f32.mrb[0].mxu0
      %v1680 = vpop.f32.mrb[0].mxu0
      %v1681 = vadd.f32 0.0, %v1680
      %v1682 = vpop.f32.mrb[0].mxu0
      %1683 = vmatprep.mubr.bf16.mxu0 0
      %1684 = vmatmul.mubr.bf16.gmra.mrb[0].mxu0 %v1275
      %v1685 = vpop.f32.mrb[0].mxu0
      %v1686 = vadd.f32 0.0, %v1685
      %v1687 = vpop.f32.mrb[0].mxu0
      %v1688 = vpop.f32.mrb[0].mxu0
      %v1689 = vadd.f32 0.0, %v1688
      %v1690 = vpop.f32.mrb[0].mxu0
      %1691 = vmatprep.mubr.bf16.mxu0 0
      %1692 = vmatmul.mubr.bf16.gmra.mrb[0].mxu0 %v1278
      %v1693 = vpop.f32.mrb[0].mxu0
      %v1694 = vadd.f32 0.0, %v1693
      %v1695 = vpop.f32.mrb[0].mxu0
      %v1696 = vpop.f32.mrb[0].mxu0
      %v1697 = vadd.f32 0.0, %v1696
      %v1698 = vpop.f32.mrb[0].mxu0
      %1699 = vmatprep.mubr.bf16.mxu0 0
      %1700 = vmatmul.mubr.bf16.gmra.mrb[0].mxu0 %v1281
      %v1701 = vpop.f32.mrb[0].mxu0
      %v1702 = vadd.f32 0.0, %v1701
      %v1703 = vpop.f32.mrb[0].mxu0
      %v1704 = vpop.f32.mrb[0].mxu0
      %v1705 = vadd.f32 0.0, %v1704
      %v1706 = vpop.f32.mrb[0].mxu0
      %1707 = vmatprep.mubr.bf16.mxu0 0
      %1708 = vmatmul.mubr.bf16.gmra.mrb[0].mxu0 %v1284
      %v1709 = vpop.f32.mrb[0].mxu0
      %v1710 = vadd.f32 0.0, %v1709
      %v1711 = vpop.f32.mrb[0].mxu0
      %v1712 = vpop.f32.mrb[0].mxu0
      %v1713 = vadd.f32 0.0, %v1712
      %v1714 = vpop.f32.mrb[0].mxu0
      %1715 = vmatprep.mubr.bf16.mxu0 0
      %1716 = vmatmul.mubr.bf16.gmra.mrb[0].mxu0 %v1287
      %v1717 = vpop.f32.mrb[0].mxu0
      %v1718 = vadd.f32 0.0, %v1717
      %v1719 = vpop.f32.mrb[0].mxu0
      %v1720 = vpop.f32.mrb[0].mxu0
      %v1721 = vadd.f32 0.0, %v1720
      %v1722 = vpop.f32.mrb[0].mxu0
      %1723 = vmatprep.mubr.bf16.mxu0 0
      %1724 = vmatmul.mubr.bf16.gmra.mrb[0].mxu0 %v1290
      %v1725 = vpop.f32.mrb[0].mxu0
      %v1726 = vadd.f32 0.0, %v1725
      %v1727 = vpop.f32.mrb[0].mxu0
      %v1728 = vpop.f32.mrb[0].mxu0
      %v1729 = vadd.f32 0.0, %v1728
      %v1730 = vpop.f32.mrb[0].mxu0
      %1731 = vmatprep.mubr.bf16.mxu0 0
      %1732 = vmatmul.mubr.bf16.gmra.mrb[0].mxu0 %v1293
      %v1733 = vpop.f32.mrb[0].mxu0
      %v1734 = vadd.f32 0.0, %v1733
      %v1735 = vpop.f32.mrb[0].mxu0
      %v1736 = vpop.f32.mrb[0].mxu0
      %v1737 = vadd.f32 0.0, %v1736
      %v1738 = vpop.f32.mrb[0].mxu0
      %1739 = vmatprep.mubr.bf16.mxu0 0
      %1740 = vmatmul.mubr.bf16.gmra.mrb[0].mxu0 %v1296
      %v1741 = vpop.f32.mrb[0].mxu0
      %v1742 = vadd.f32 0.0, %v1741
      %v1743 = vpop.f32.mrb[0].mxu0
      %v1744 = vpop.f32.mrb[0].mxu0
      %v1745 = vadd.f32 0.0, %v1744
      %v1746 = vpop.f32.mrb[0].mxu0
      %1747 = vmatprep.mubr.bf16.mxu0 0
      %1748 = vmatmul.mubr.bf16.gmra.mrb[0].mxu0 %v1299
      %v1749 = vpop.f32.mrb[0].mxu0
      %v1750 = vadd.f32 0.0, %v1749
      %v1751 = vpop.f32.mrb[0].mxu0
      %v1752 = vpop.f32.mrb[0].mxu0
      %v1753 = vadd.f32 0.0, %v1752
      %v1754 = vpop.f32.mrb[0].mxu0
      %1755 = vmatprep.mubr.bf16.mxu0 0
      %1756 = vmatmul.mubr.bf16.gmra.mrb[0].mxu0 %v1302
      %v1757 = vpop.f32.mrb[0].mxu0
      %v1758 = vadd.f32 0.0, %v1757
      %v1759 = vpop.f32.mrb[0].mxu0
      %v1760 = vpop.f32.mrb[0].mxu0
      %v1761 = vadd.f32 0.0, %v1760
      %v1762 = vpop.f32.mrb[0].mxu0
      %1763 = vmatprep.mubr.bf16.mxu0 0
      %1764 = vmatmul.mubr.bf16.gmra.mrb[0].mxu0 %v1305
      %v1765 = vpop.f32.mrb[0].mxu0
      %v1766 = vadd.f32 0.0, %v1765
      %v1767 = vpop.f32.mrb[0].mxu0
      %v1768 = vpop.f32.mrb[0].mxu0
      %v1769 = vadd.f32 0.0, %v1768
      %v1770 = vpop.f32.mrb[0].mxu0
      %1771 = vmatprep.mubr.bf16.mxu0 0
      %1772 = vmatmul.mubr.bf16.gmra.mrb[0].mxu0 %v1308
      %v1773 = vpop.f32.mrb[0].mxu0
      %v1774 = vadd.f32 0.0, %v1773
      %v1775 = vpop.f32.mrb[0].mxu0
      %v1776 = vpop.f32.mrb[0].mxu0
      %v1777 = vadd.f32 0.0, %v1776
      %v1778 = vpop.f32.mrb[0].mxu0
      %1779 = vmatprep.mubr.bf16.mxu0 0
      %1780 = vmatmul.mubr.bf16.gmra.mrb[0].mxu0 %v1311
      %v1781 = vpop.f32.mrb[0].mxu0
      %v1782 = vadd.f32 0.0, %v1781
      %v1783 = vpop.f32.mrb[0].mxu0
      %v1784 = vpop.f32.mrb[0].mxu0
      %v1785 = vadd.f32 0.0, %v1784
      %v1786 = vpop.f32.mrb[0].mxu0
      %1787 = vmatprep.mubr.bf16.mxu0 0
      %1788 = vmatmul.mubr.bf16.gmra.mrb[0].mxu0 %v1314
      %v1789 = vpop.f32.mrb[0].mxu0
      %v1790 = vadd.f32 0.0, %v1789
      %v1791 = vpop.f32.mrb[0].mxu0
      %v1792 = vpop.f32.mrb[0].mxu0
      %v1793 = vadd.f32 0.0, %v1792
      %v1794 = vpop.f32.mrb[0].mxu0
      %1795 = vmatprep.mubr.bf16.mxu0 0
      %1796 = vmatmul.mubr.bf16.gmra.mrb[0].mxu0 %v1317
      %v1797 = vpop.f32.mrb[0].mxu0
      %v1798 = vadd.f32 0.0, %v1797
      %v1799 = vpop.f32.mrb[0].mxu0
      %v1800 = vpop.f32.mrb[0].mxu0
      %v1801 = vadd.f32 0.0, %v1800
      %v1802 = vpop.f32.mrb[0].mxu0
      %1803 = vmatprep.mubr.bf16.mxu0 0
      %1804 = vmatmul.mubr.bf16.gmra.mrb[0].mxu0 %v1320
      %v1805 = vpop.f32.mrb[0].mxu0
      %v1806 = vadd.f32 0.0, %v1805
      %v1807 = vpop.f32.mrb[0].mxu0
      %v1808 = vpop.f32.mrb[0].mxu0
      %v1809 = vadd.f32 0.0, %v1808
      %v1810 = vpop.f32.mrb[0].mxu0
      %1811 = vmatprep.mubr.bf16.mxu0 0
      %1812 = vmatmul.mubr.bf16.gmra.mrb[0].mxu0 %v1323
      %v1813 = vpop.f32.mrb[0].mxu0
      %v1814 = vadd.f32 0.0, %v1813
      %v1815 = vpop.f32.mrb[0].mxu0
      %v1816 = vpop.f32.mrb[0].mxu0
      %v1817 = vadd.f32 0.0, %v1816
      %v1818 = vpop.f32.mrb[0].mxu0
      %1819 = vmatprep.mubr.bf16.mxu0 0
      %1820 = vmatmul.mubr.bf16.gmra.mrb[0].mxu0 %v1326
      %v1821 = vpop.f32.mrb[0].mxu0
      %v1822 = vadd.f32 0.0, %v1821
      %v1823 = vpop.f32.mrb[0].mxu0
      %v1824 = vpop.f32.mrb[0].mxu0
      %v1825 = vadd.f32 0.0, %v1824
      %v1826 = vpop.f32.mrb[0].mxu0
      %1827 = vmatprep.mubr.bf16.mxu0 0
      %1828 = vmatmul.mubr.bf16.gmra.mrb[0].mxu0 %v1329
      %v1829 = vpop.f32.mrb[0].mxu0
      %v1830 = vadd.f32 0.0, %v1829
      %v1831 = vpop.f32.mrb[0].mxu0
      %v1832 = vpop.f32.mrb[0].mxu0
      %v1833 = vadd.f32 0.0, %v1832
      %v1834 = vpop.f32.mrb[0].mxu0
      %1835 = vmatprep.mubr.bf16.mxu0 0
      %1836 = vmatmul.mubr.bf16.gmra.mrb[0].mxu0 %v1332
      %v1837 = vpop.f32.mrb[0].mxu0
      %v1838 = vadd.f32 0.0, %v1837
      %v1839 = vpop.f32.mrb[0].mxu0
      %v1840 = vpop.f32.mrb[0].mxu0
      %v1841 = vadd.f32 0.0, %v1840
      %v1842 = vpop.f32.mrb[0].mxu0
      %1843 = vmatprep.mubr.bf16.mxu0 0
      %1844 = vmatmul.mubr.bf16.gmra.mrb[0].mxu0 %v1335
      %v1845 = vpop.f32.mrb[0].mxu0
      %v1846 = vadd.f32 0.0, %v1845
      %v1847 = vpop.f32.mrb[0].mxu0
      %v1848 = vpop.f32.mrb[0].mxu0
      %v1849 = vadd.f32 0.0, %v1848
      %v1850 = vpop.f32.mrb[0].mxu0
      %1851 = vmatprep.mubr.bf16.mxu0 0
      %1852 = vmatmul.mubr.bf16.gmra.mrb[0].mxu0 %v1338
      %v1853 = vpop.f32.mrb[0].mxu0
      %v1854 = vadd.f32 0.0, %v1853
      %v1855 = vpop.f32.mrb[0].mxu0
      %v1856 = vpop.f32.mrb[0].mxu0
      %v1857 = vadd.f32 0.0, %v1856
      %v1858 = vpop.f32.mrb[0].mxu0
      %1859 = vmatprep.mubr.bf16.mxu0 0
      %1860 = vmatmul.mubr.bf16.gmra.mrb[0].mxu0 %v1341
      %v1861 = vpop.f32.mrb[0].mxu0
      %v1862 = vadd.f32 0.0, %v1861
      %v1863 = vpop.f32.mrb[0].mxu0
      %v1864 = vpop.f32.mrb[0].mxu0
      %v1865 = vadd.f32 0.0, %v1864
      %v1866 = vpop.f32.mrb[0].mxu0
      %1867 = vmatprep.mubr.bf16.mxu0 0
      %1868 = vmatmul.mubr.bf16.gmra.mrb[0].mxu0 %v1344
      %v1869 = vpop.f32.mrb[0].mxu0
      %v1870 = vadd.f32 0.0, %v1869
      %v1871 = vpop.f32.mrb[0].mxu0
      %v1872 = vpop.f32.mrb[0].mxu0
      %v1873 = vadd.f32 0.0, %v1872
      %v1874 = vpop.f32.mrb[0].mxu0
      %1875 = vmatprep.mubr.bf16.mxu0 0
      %1876 = vmatmul.mubr.bf16.gmra.mrb[0].mxu0 %v1347
      %v1877 = vpop.f32.mrb[0].mxu0
      %v1878 = vadd.f32 0.0, %v1877
      %v1879 = vpop.f32.mrb[0].mxu0
      %v1880 = vpop.f32.mrb[0].mxu0
      %v1881 = vadd.f32 0.0, %v1880
      %v1882 = vpop.f32.mrb[0].mxu0
      %1883 = vmatprep.mubr.bf16.mxu0 0
      %1884 = vmatmul.mubr.bf16.gmra.mrb[0].mxu0 %v1350
      %v1885 = vpop.f32.mrb[0].mxu0
      %v1886 = vadd.f32 0.0, %v1885
      %v1887 = vpop.f32.mrb[0].mxu0
      %v1888 = vpop.f32.mrb[0].mxu0
      %v1889 = vadd.f32 0.0, %v1888
      %v1890 = vpop.f32.mrb[0].mxu0
      %1891 = vmatprep.mubr.bf16.mxu0 0
      %1892 = vmatmul.mubr.bf16.gmra.mrb[0].mxu0 %v1353
      %v1893 = vpop.f32.mrb[0].mxu0
      %v1894 = vadd.f32 0.0, %v1893
      %v1895 = vpop.f32.mrb[0].mxu0
      %v1896 = vpop.f32.mrb[0].mxu0
      %v1897 = vadd.f32 0.0, %v1896
      %v1898 = vpop.f32.mrb[0].mxu0
      %1899 = vdwg.mxu0
      %v1900 = vmax.f32 %v1390, 0.0
      %v1901 = vmax.f32 %v1393, 0.0
      %v1902 = vmax.f32 %v1398, 0.0
      %v1903 = vmax.f32 %v1401, 0.0
      %v1904 = vmax.f32 %v1406, 0.0
      %v1905 = vmax.f32 %v1409, 0.0
      %v1906 = vmax.f32 %v1414, 0.0
      %v1907 = vmax.f32 %v1417, 0.0
      %v1908 = vmax.f32 %v1422, 0.0
      %v1909 = vmax.f32 %v1425, 0.0
      %v1910 = vmax.f32 %v1430, 0.0
      %v1911 = vmax.f32 %v1433, 0.0
      %v1912 = vmax.f32 %v1438, 0.0
      %v1913 = vmax.f32 %v1441, 0.0
      %v1914 = vmax.f32 %v1446, 0.0
      %v1915 = vmax.f32 %v1449, 0.0
      %v1916 = vmax.f32 %v1454, 0.0
      %v1917 = vmax.f32 %v1457, 0.0
      %v1918 = vmax.f32 %v1462, 0.0
      %v1919 = vmax.f32 %v1465, 0.0
      %v1920 = vmax.f32 %v1470, 0.0
      %v1921 = vmax.f32 %v1473, 0.0
      %v1922 = vmax.f32 %v1478, 0.0
      %v1923 = vmax.f32 %v1481, 0.0
      %v1924 = vmax.f32 %v1486, 0.0
      %v1925 = vmax.f32 %v1489, 0.0
      %v1926 = vmax.f32 %v1494, 0.0
      %v1927 = vmax.f32 %v1497, 0.0
      %v1928 = vmax.f32 %v1502, 0.0
      %v1929 = vmax.f32 %v1505, 0.0
      %v1930 = vmax.f32 %v1510, 0.0
      %v1931 = vmax.f32 %v1513, 0.0
      %v1932 = vmax.f32 %v1518, 0.0
      %v1933 = vmax.f32 %v1521, 0.0
      %v1934 = vmax.f32 %v1526, 0.0
      %v1935 = vmax.f32 %v1529, 0.0
      %v1936 = vmax.f32 %v1534, 0.0
      %v1937 = vmax.f32 %v1537, 0.0
      %v1938 = vmax.f32 %v1542, 0.0
      %v1939 = vmax.f32 %v1545, 0.0
      %v1940 = vmax.f32 %v1550, 0.0
      %v1941 = vmax.f32 %v1553, 0.0
      %v1942 = vmax.f32 %v1558, 0.0
      %v1943 = vmax.f32 %v1561, 0.0
      %v1944 = vmax.f32 %v1566, 0.0
      %v1945 = vmax.f32 %v1569, 0.0
      %v1946 = vmax.f32 %v1574, 0.0
      %v1947 = vmax.f32 %v1577, 0.0
      %v1948 = vmax.f32 %v1582, 0.0
      %v1949 = vmax.f32 %v1585, 0.0
      %v1950 = vmax.f32 %v1590, 0.0
      %v1951 = vmax.f32 %v1593, 0.0
      %v1952 = vmax.f32 %v1598, 0.0
      %v1953 = vmax.f32 %v1601, 0.0
      %v1954 = vmax.f32 %v1606, 0.0
      %v1955 = vmax.f32 %v1609, 0.0
      %v1956 = vmax.f32 %v1614, 0.0
      %v1957 = vmax.f32 %v1617, 0.0
      %v1958 = vmax.f32 %v1622, 0.0
      %v1959 = vmax.f32 %v1625, 0.0
      %v1960 = vmax.f32 %v1630, 0.0
      %v1961 = vmax.f32 %v1633, 0.0
      %v1962 = vmax.f32 %v1638, 0.0
      %v1963 = vmax.f32 %v1641, 0.0
      %v1964 = vmax.f32 %v1646, 0.0
      %v1965 = vmax.f32 %v1649, 0.0
      %v1966 = vmax.f32 %v1654, 0.0
      %v1967 = vmax.f32 %v1657, 0.0
      %v1968 = vmax.f32 %v1662, 0.0
      %v1969 = vmax.f32 %v1665, 0.0
      %v1970 = vmax.f32 %v1670, 0.0
      %v1971 = vmax.f32 %v1673, 0.0
      %v1972 = vmax.f32 %v1678, 0.0
      %v1973 = vmax.f32 %v1681, 0.0
      %v1974 = vmax.f32 %v1686, 0.0
      %v1975 = vmax.f32 %v1689, 0.0
      %v1976 = vmax.f32 %v1694, 0.0
      %v1977 = vmax.f32 %v1697, 0.0
      %v1978 = vmax.f32 %v1702, 0.0
      %v1979 = vmax.f32 %v1705, 0.0
      %v1980 = vmax.f32 %v1710, 0.0
      %v1981 = vmax.f32 %v1713, 0.0
      %v1982 = vmax.f32 %v1718, 0.0
      %v1983 = vmax.f32 %v1721, 0.0
      %v1984 = vmax.f32 %v1726, 0.0
      %v1985 = vmax.f32 %v1729, 0.0
      %v1986 = vmax.f32 %v1734, 0.0
      %v1987 = vmax.f32 %v1737, 0.0
      %v1988 = vmax.f32 %v1742, 0.0
      %v1989 = vmax.f32 %v1745, 0.0
      %v1990 = vmax.f32 %v1750, 0.0
      %v1991 = vmax.f32 %v1753, 0.0
      %v1992 = vmax.f32 %v1758, 0.0
      %v1993 = vmax.f32 %v1761, 0.0
      %v1994 = vmax.f32 %v1766, 0.0
      %v1995 = vmax.f32 %v1769, 0.0
      %v1996 = vmax.f32 %v1774, 0.0
      %v1997 = vmax.f32 %v1777, 0.0
      %v1998 = vmax.f32 %v1782, 0.0
      %v1999 = vmax.f32 %v1785, 0.0
      %v2000 = vmax.f32 %v1790, 0.0
      %v2001 = vmax.f32 %v1793, 0.0
      %v2002 = vmax.f32 %v1798, 0.0
      %v2003 = vmax.f32 %v1801, 0.0
      %v2004 = vmax.f32 %v1806, 0.0
      %v2005 = vmax.f32 %v1809, 0.0
      %v2006 = vmax.f32 %v1814, 0.0
      %v2007 = vmax.f32 %v1817, 0.0
      %v2008 = vmax.f32 %v1822, 0.0
      %v2009 = vmax.f32 %v1825, 0.0
      %v2010 = vmax.f32 %v1830, 0.0
      %v2011 = vmax.f32 %v1833, 0.0
      %v2012 = vmax.f32 %v1838, 0.0
      %v2013 = vmax.f32 %v1841, 0.0
      %v2014 = vmax.f32 %v1846, 0.0
      %v2015 = vmax.f32 %v1849, 0.0
      %v2016 = vmax.f32 %v1854, 0.0
      %v2017 = vmax.f32 %v1857, 0.0
      %v2018 = vmax.f32 %v1862, 0.0
      %v2019 = vmax.f32 %v1865, 0.0
      %v2020 = vmax.f32 %v1870, 0.0
      %v2021 = vmax.f32 %v1873, 0.0
      %v2022 = vmax.f32 %v1878, 0.0
      %v2023 = vmax.f32 %v1881, 0.0
      %v2024 = vmax.f32 %v1886, 0.0
      %v2025 = vmax.f32 %v1889, 0.0
      %v2026 = vmax.f32 %v1894, 0.0
      %v2027 = vmax.f32 %v1897, 0.0
      %v2028 = vlaneseq
      %v2029 = vand.u32 %v2028, 127
      %vm2030 = vcmp.ge.s32.totalorder %v2029, 16
      %v2031 = vsel %vm2030, 2.56, 1.44
      %v2032 = vlaneseq
      %v2033 = vshrl.u32 %v2032, 7
      %v2034 = vsub.s32 0, %v2033
      %v2035 = vrot.slane %v369, %v2034
      %2037 = vbcast.lane.b32.xlu0 %v2035, 256
      %v2038 = vpop.permute.xlu0 %2037
      %s2040 = sor.u32 256, 8
      %2041 = vbcast.lane.b32.xlu0 %v2035, %s2040
      %v2042 = vpop.permute.xlu0 %2041
      %s2044 = sor.u32 256, 16
      %2045 = vbcast.lane.b32.xlu0 %v2035, %s2044
      %v2046 = vpop.permute.xlu0 %2045
      %s2048 = sor.u32 256, 24
      %2049 = vbcast.lane.b32.xlu0 %v2035, %s2048
      %v2050 = vpop.permute.xlu0 %2049
      %v2051 = vlaneseq
      %v2052 = vshrl.u32 %v2051, 7
      %v2053 = vsub.s32 1, %v2052
      %v2054 = vrot.slane %v369, %v2053
      %2056 = vbcast.lane.b32.xlu0 %v2054, 256
      %v2057 = vpop.permute.xlu0 %2056
      %s2059 = sor.u32 256, 8
      %2060 = vbcast.lane.b32.xlu0 %v2054, %s2059
      %v2061 = vpop.permute.xlu0 %2060
      %s2063 = sor.u32 256, 16
      %2064 = vbcast.lane.b32.xlu0 %v2054, %s2063
      %v2065 = vpop.permute.xlu0 %2064
      %s2067 = sor.u32 256, 24
      %2068 = vbcast.lane.b32.xlu0 %v2054, %s2067
      %v2069 = vpop.permute.xlu0 %2068
      %v2070 = vlaneseq
      %v2071 = vshrl.u32 %v2070, 7
      %v2072 = vsub.s32 2, %v2071
      %v2073 = vrot.slane %v369, %v2072
      %2075 = vbcast.lane.b32.xlu0 %v2073, 256
      %v2076 = vpop.permute.xlu0 %2075
      %s2078 = sor.u32 256, 8
      %2079 = vbcast.lane.b32.xlu0 %v2073, %s2078
      %v2080 = vpop.permute.xlu0 %2079
      %s2082 = sor.u32 256, 16
      %2083 = vbcast.lane.b32.xlu0 %v2073, %s2082
      %v2084 = vpop.permute.xlu0 %2083
      %s2086 = sor.u32 256, 24
      %2087 = vbcast.lane.b32.xlu0 %v2073, %s2086
      %v2088 = vpop.permute.xlu0 %2087
      %v2089 = vlaneseq
      %v2090 = vshrl.u32 %v2089, 7
      %v2091 = vsub.s32 3, %v2090
      %v2092 = vrot.slane %v369, %v2091
      %2094 = vbcast.lane.b32.xlu0 %v2092, 256
      %v2095 = vpop.permute.xlu0 %2094
      %s2097 = sor.u32 256, 8
      %2098 = vbcast.lane.b32.xlu0 %v2092, %s2097
      %v2099 = vpop.permute.xlu0 %2098
      %s2101 = sor.u32 256, 16
      %2102 = vbcast.lane.b32.xlu0 %v2092, %s2101
      %v2103 = vpop.permute.xlu0 %2102
      %s2105 = sor.u32 256, 24
      %2106 = vbcast.lane.b32.xlu0 %v2092, %s2105
      %v2107 = vpop.permute.xlu0 %2106
      %v2108 = vlaneseq
      %v2109 = vshrl.u32 %v2108, 7
      %v2110 = vsub.s32 4, %v2109
      %v2111 = vrot.slane %v369, %v2110
      %2113 = vbcast.lane.b32.xlu0 %v2111, 256
      %v2114 = vpop.permute.xlu0 %2113
      %s2116 = sor.u32 256, 8
      %2117 = vbcast.lane.b32.xlu0 %v2111, %s2116
      %v2118 = vpop.permute.xlu0 %2117
      %s2120 = sor.u32 256, 16
      %2121 = vbcast.lane.b32.xlu0 %v2111, %s2120
      %v2122 = vpop.permute.xlu0 %2121
      %s2124 = sor.u32 256, 24
      %2125 = vbcast.lane.b32.xlu0 %v2111, %s2124
      %v2126 = vpop.permute.xlu0 %2125
      %v2127 = vlaneseq
      %v2128 = vshrl.u32 %v2127, 7
      %v2129 = vsub.s32 5, %v2128
      %v2130 = vrot.slane %v369, %v2129
      %2132 = vbcast.lane.b32.xlu0 %v2130, 256
      %v2133 = vpop.permute.xlu0 %2132
      %s2135 = sor.u32 256, 8
      %2136 = vbcast.lane.b32.xlu0 %v2130, %s2135
      %v2137 = vpop.permute.xlu0 %2136
      %s2139 = sor.u32 256, 16
      %2140 = vbcast.lane.b32.xlu0 %v2130, %s2139
      %v2141 = vpop.permute.xlu0 %2140
      %s2143 = sor.u32 256, 24
      %2144 = vbcast.lane.b32.xlu0 %v2130, %s2143
      %v2145 = vpop.permute.xlu0 %2144
      %v2146 = vlaneseq
      %v2147 = vshrl.u32 %v2146, 7
      %v2148 = vsub.s32 6, %v2147
      %v2149 = vrot.slane %v369, %v2148
      %2151 = vbcast.lane.b32.xlu0 %v2149, 256
      %v2152 = vpop.permute.xlu0 %2151
      %s2154 = sor.u32 256, 8
      %2155 = vbcast.lane.b32.xlu0 %v2149, %s2154
      %v2156 = vpop.permute.xlu0 %2155
      %s2158 = sor.u32 256, 16
      %2159 = vbcast.lane.b32.xlu0 %v2149, %s2158
      %v2160 = vpop.permute.xlu0 %2159
      %s2162 = sor.u32 256, 24
      %2163 = vbcast.lane.b32.xlu0 %v2149, %s2162
      %v2164 = vpop.permute.xlu0 %2163
      %v2165 = vlaneseq
      %v2166 = vshrl.u32 %v2165, 7
      %v2167 = vsub.s32 7, %v2166
      %v2168 = vrot.slane %v369, %v2167
      %2170 = vbcast.lane.b32.xlu0 %v2168, 256
      %v2171 = vpop.permute.xlu0 %2170
      %s2173 = sor.u32 256, 8
      %2174 = vbcast.lane.b32.xlu0 %v2168, %s2173
      %v2175 = vpop.permute.xlu0 %2174
      %s2177 = sor.u32 256, 16
      %2178 = vbcast.lane.b32.xlu0 %v2168, %s2177
      %v2179 = vpop.permute.xlu0 %2178
      %s2181 = sor.u32 256, 24
      %2182 = vbcast.lane.b32.xlu0 %v2168, %s2181
      %v2183 = vpop.permute.xlu0 %2182
      %v2184 = vlaneseq
      %v2185 = vshrl.u32 %v2184, 7
      %v2186 = vsub.s32 0, %v2185
      %v2187 = vrot.slane %v370, %v2186
      %2189 = vbcast.lane.b32.xlu0 %v2187, 256
      %v2190 = vpop.permute.xlu0 %2189
      %s2192 = sor.u32 256, 8
      %2193 = vbcast.lane.b32.xlu0 %v2187, %s2192
      %v2194 = vpop.permute.xlu0 %2193
      %s2196 = sor.u32 256, 16
      %2197 = vbcast.lane.b32.xlu0 %v2187, %s2196
      %v2198 = vpop.permute.xlu0 %2197
      %s2200 = sor.u32 256, 24
      %2201 = vbcast.lane.b32.xlu0 %v2187, %s2200
      %v2202 = vpop.permute.xlu0 %2201
      %v2203 = vlaneseq
      %v2204 = vshrl.u32 %v2203, 7
      %v2205 = vsub.s32 1, %v2204
      %v2206 = vrot.slane %v370, %v2205
      %2208 = vbcast.lane.b32.xlu0 %v2206, 256
      %v2209 = vpop.permute.xlu0 %2208
      %s2211 = sor.u32 256, 8
      %2212 = vbcast.lane.b32.xlu0 %v2206, %s2211
      %v2213 = vpop.permute.xlu0 %2212
      %s2215 = sor.u32 256, 16
      %2216 = vbcast.lane.b32.xlu0 %v2206, %s2215
      %v2217 = vpop.permute.xlu0 %2216
      %s2219 = sor.u32 256, 24
      %2220 = vbcast.lane.b32.xlu0 %v2206, %s2219
      %v2221 = vpop.permute.xlu0 %2220
      %v2222 = vlaneseq
      %v2223 = vshrl.u32 %v2222, 7
      %v2224 = vsub.s32 2, %v2223
      %v2225 = vrot.slane %v370, %v2224
      %2227 = vbcast.lane.b32.xlu0 %v2225, 256
      %v2228 = vpop.permute.xlu0 %2227
      %s2230 = sor.u32 256, 8
      %2231 = vbcast.lane.b32.xlu0 %v2225, %s2230
      %v2232 = vpop.permute.xlu0 %2231
      %s2234 = sor.u32 256, 16
      %2235 = vbcast.lane.b32.xlu0 %v2225, %s2234
      %v2236 = vpop.permute.xlu0 %2235
      %s2238 = sor.u32 256, 24
      %2239 = vbcast.lane.b32.xlu0 %v2225, %s2238
      %v2240 = vpop.permute.xlu0 %2239
      %v2241 = vlaneseq
      %v2242 = vshrl.u32 %v2241, 7
      %v2243 = vsub.s32 3, %v2242
      %v2244 = vrot.slane %v370, %v2243
      %2246 = vbcast.lane.b32.xlu0 %v2244, 256
      %v2247 = vpop.permute.xlu0 %2246
      %s2249 = sor.u32 256, 8
      %2250 = vbcast.lane.b32.xlu0 %v2244, %s2249
      %v2251 = vpop.permute.xlu0 %2250
      %s2253 = sor.u32 256, 16
      %2254 = vbcast.lane.b32.xlu0 %v2244, %s2253
      %v2255 = vpop.permute.xlu0 %2254
      %s2257 = sor.u32 256, 24
      %2258 = vbcast.lane.b32.xlu0 %v2244, %s2257
      %v2259 = vpop.permute.xlu0 %2258
      %v2260 = vlaneseq
      %v2261 = vshrl.u32 %v2260, 7
      %v2262 = vsub.s32 4, %v2261
      %v2263 = vrot.slane %v370, %v2262
      %2265 = vbcast.lane.b32.xlu0 %v2263, 256
      %v2266 = vpop.permute.xlu0 %2265
      %s2268 = sor.u32 256, 8
      %2269 = vbcast.lane.b32.xlu0 %v2263, %s2268
      %v2270 = vpop.permute.xlu0 %2269
      %s2272 = sor.u32 256, 16
      %2273 = vbcast.lane.b32.xlu0 %v2263, %s2272
      %v2274 = vpop.permute.xlu0 %2273
      %s2276 = sor.u32 256, 24
      %2277 = vbcast.lane.b32.xlu0 %v2263, %s2276
      %v2278 = vpop.permute.xlu0 %2277
      %v2279 = vlaneseq
      %v2280 = vshrl.u32 %v2279, 7
      %v2281 = vsub.s32 5, %v2280
      %v2282 = vrot.slane %v370, %v2281
      %2284 = vbcast.lane.b32.xlu0 %v2282, 256
      %v2285 = vpop.permute.xlu0 %2284
      %s2287 = sor.u32 256, 8
      %2288 = vbcast.lane.b32.xlu0 %v2282, %s2287
      %v2289 = vpop.permute.xlu0 %2288
      %s2291 = sor.u32 256, 16
      %2292 = vbcast.lane.b32.xlu0 %v2282, %s2291
      %v2293 = vpop.permute.xlu0 %2292
      %s2295 = sor.u32 256, 24
      %2296 = vbcast.lane.b32.xlu0 %v2282, %s2295
      %v2297 = vpop.permute.xlu0 %2296
      %v2298 = vlaneseq
      %v2299 = vshrl.u32 %v2298, 7
      %v2300 = vsub.s32 6, %v2299
      %v2301 = vrot.slane %v370, %v2300
      %2303 = vbcast.lane.b32.xlu0 %v2301, 256
      %v2304 = vpop.permute.xlu0 %2303
      %s2306 = sor.u32 256, 8
      %2307 = vbcast.lane.b32.xlu0 %v2301, %s2306
      %v2308 = vpop.permute.xlu0 %2307
      %s2310 = sor.u32 256, 16
      %2311 = vbcast.lane.b32.xlu0 %v2301, %s2310
      %v2312 = vpop.permute.xlu0 %2311
      %s2314 = sor.u32 256, 24
      %2315 = vbcast.lane.b32.xlu0 %v2301, %s2314
      %v2316 = vpop.permute.xlu0 %2315
      %v2317 = vlaneseq
      %v2318 = vshrl.u32 %v2317, 7
      %v2319 = vsub.s32 7, %v2318
      %v2320 = vrot.slane %v370, %v2319
      %2322 = vbcast.lane.b32.xlu0 %v2320, 256
      %v2323 = vpop.permute.xlu0 %2322
      %s2325 = sor.u32 256, 8
      %2326 = vbcast.lane.b32.xlu0 %v2320, %s2325
      %v2327 = vpop.permute.xlu0 %2326
      %s2329 = sor.u32 256, 16
      %2330 = vbcast.lane.b32.xlu0 %v2320, %s2329
      %v2331 = vpop.permute.xlu0 %2330
      %s2333 = sor.u32 256, 24
      %2334 = vbcast.lane.b32.xlu0 %v2320, %s2333
      %v2335 = vpop.permute.xlu0 %2334
      %v2336 = vlaneseq
      %v2337 = vshrl.u32 %v2336, 7
      %v2338 = vsub.s32 0, %v2337
      %v2339 = vrot.slane %v371, %v2338
      %2341 = vbcast.lane.b32.xlu0 %v2339, 256
      %v2342 = vpop.permute.xlu0 %2341
      %s2344 = sor.u32 256, 8
      %2345 = vbcast.lane.b32.xlu0 %v2339, %s2344
      %v2346 = vpop.permute.xlu0 %2345
      %s2348 = sor.u32 256, 16
      %2349 = vbcast.lane.b32.xlu0 %v2339, %s2348
      %v2350 = vpop.permute.xlu0 %2349
      %s2352 = sor.u32 256, 24
      %2353 = vbcast.lane.b32.xlu0 %v2339, %s2352
      %v2354 = vpop.permute.xlu0 %2353
      %v2355 = vlaneseq
      %v2356 = vshrl.u32 %v2355, 7
      %v2357 = vsub.s32 1, %v2356
      %v2358 = vrot.slane %v371, %v2357
      %2360 = vbcast.lane.b32.xlu0 %v2358, 256
      %v2361 = vpop.permute.xlu0 %2360
      %s2363 = sor.u32 256, 8
      %2364 = vbcast.lane.b32.xlu0 %v2358, %s2363
      %v2365 = vpop.permute.xlu0 %2364
      %s2367 = sor.u32 256, 16
      %2368 = vbcast.lane.b32.xlu0 %v2358, %s2367
      %v2369 = vpop.permute.xlu0 %2368
      %s2371 = sor.u32 256, 24
      %2372 = vbcast.lane.b32.xlu0 %v2358, %s2371
      %v2373 = vpop.permute.xlu0 %2372
      %v2374 = vlaneseq
      %v2375 = vshrl.u32 %v2374, 7
      %v2376 = vsub.s32 2, %v2375
      %v2377 = vrot.slane %v371, %v2376
      %2379 = vbcast.lane.b32.xlu0 %v2377, 256
      %v2380 = vpop.permute.xlu0 %2379
      %s2382 = sor.u32 256, 8
      %2383 = vbcast.lane.b32.xlu0 %v2377, %s2382
      %v2384 = vpop.permute.xlu0 %2383
      %s2386 = sor.u32 256, 16
      %2387 = vbcast.lane.b32.xlu0 %v2377, %s2386
      %v2388 = vpop.permute.xlu0 %2387
      %s2390 = sor.u32 256, 24
      %2391 = vbcast.lane.b32.xlu0 %v2377, %s2390
      %v2392 = vpop.permute.xlu0 %2391
      %v2393 = vlaneseq
      %v2394 = vshrl.u32 %v2393, 7
      %v2395 = vsub.s32 3, %v2394
      %v2396 = vrot.slane %v371, %v2395
      %2398 = vbcast.lane.b32.xlu0 %v2396, 256
      %v2399 = vpop.permute.xlu0 %2398
      %s2401 = sor.u32 256, 8
      %2402 = vbcast.lane.b32.xlu0 %v2396, %s2401
      %v2403 = vpop.permute.xlu0 %2402
      %s2405 = sor.u32 256, 16
      %2406 = vbcast.lane.b32.xlu0 %v2396, %s2405
      %v2407 = vpop.permute.xlu0 %2406
      %s2409 = sor.u32 256, 24
      %2410 = vbcast.lane.b32.xlu0 %v2396, %s2409
      %v2411 = vpop.permute.xlu0 %2410
      %v2412 = vlaneseq
      %v2413 = vshrl.u32 %v2412, 7
      %v2414 = vsub.s32 4, %v2413
      %v2415 = vrot.slane %v371, %v2414
      %2417 = vbcast.lane.b32.xlu0 %v2415, 256
      %v2418 = vpop.permute.xlu0 %2417
      %s2420 = sor.u32 256, 8
      %2421 = vbcast.lane.b32.xlu0 %v2415, %s2420
      %v2422 = vpop.permute.xlu0 %2421
      %s2424 = sor.u32 256, 16
      %2425 = vbcast.lane.b32.xlu0 %v2415, %s2424
      %v2426 = vpop.permute.xlu0 %2425
      %s2428 = sor.u32 256, 24
      %2429 = vbcast.lane.b32.xlu0 %v2415, %s2428
      %v2430 = vpop.permute.xlu0 %2429
      %v2431 = vlaneseq
      %v2432 = vshrl.u32 %v2431, 7
      %v2433 = vsub.s32 5, %v2432
      %v2434 = vrot.slane %v371, %v2433
      %2436 = vbcast.lane.b32.xlu0 %v2434, 256
      %v2437 = vpop.permute.xlu0 %2436
      %s2439 = sor.u32 256, 8
      %2440 = vbcast.lane.b32.xlu0 %v2434, %s2439
      %v2441 = vpop.permute.xlu0 %2440
      %s2443 = sor.u32 256, 16
      %2444 = vbcast.lane.b32.xlu0 %v2434, %s2443
      %v2445 = vpop.permute.xlu0 %2444
      %s2447 = sor.u32 256, 24
      %2448 = vbcast.lane.b32.xlu0 %v2434, %s2447
      %v2449 = vpop.permute.xlu0 %2448
      %v2450 = vlaneseq
      %v2451 = vshrl.u32 %v2450, 7
      %v2452 = vsub.s32 6, %v2451
      %v2453 = vrot.slane %v371, %v2452
      %2455 = vbcast.lane.b32.xlu0 %v2453, 256
      %v2456 = vpop.permute.xlu0 %2455
      %s2458 = sor.u32 256, 8
      %2459 = vbcast.lane.b32.xlu0 %v2453, %s2458
      %v2460 = vpop.permute.xlu0 %2459
      %s2462 = sor.u32 256, 16
      %2463 = vbcast.lane.b32.xlu0 %v2453, %s2462
      %v2464 = vpop.permute.xlu0 %2463
      %s2466 = sor.u32 256, 24
      %2467 = vbcast.lane.b32.xlu0 %v2453, %s2466
      %v2468 = vpop.permute.xlu0 %2467
      %v2469 = vlaneseq
      %v2470 = vshrl.u32 %v2469, 7
      %v2471 = vsub.s32 7, %v2470
      %v2472 = vrot.slane %v371, %v2471
      %2474 = vbcast.lane.b32.xlu0 %v2472, 256
      %v2475 = vpop.permute.xlu0 %2474
      %s2477 = sor.u32 256, 8
      %2478 = vbcast.lane.b32.xlu0 %v2472, %s2477
      %v2479 = vpop.permute.xlu0 %2478
      %s2481 = sor.u32 256, 16
      %2482 = vbcast.lane.b32.xlu0 %v2472, %s2481
      %v2483 = vpop.permute.xlu0 %2482
      %s2485 = sor.u32 256, 24
      %2486 = vbcast.lane.b32.xlu0 %v2472, %s2485
      %v2487 = vpop.permute.xlu0 %2486
      %v2488 = vlaneseq
      %v2489 = vshrl.u32 %v2488, 7
      %v2490 = vsub.s32 0, %v2489
      %v2491 = vrot.slane %v372, %v2490
      %2493 = vbcast.lane.b32.xlu0 %v2491, 256
      %v2494 = vpop.permute.xlu0 %2493
      %s2496 = sor.u32 256, 8
      %2497 = vbcast.lane.b32.xlu0 %v2491, %s2496
      %v2498 = vpop.permute.xlu0 %2497
      %s2500 = sor.u32 256, 16
      %2501 = vbcast.lane.b32.xlu0 %v2491, %s2500
      %v2502 = vpop.permute.xlu0 %2501
      %s2504 = sor.u32 256, 24
      %2505 = vbcast.lane.b32.xlu0 %v2491, %s2504
      %v2506 = vpop.permute.xlu0 %2505
      %v2507 = vlaneseq
      %v2508 = vshrl.u32 %v2507, 7
      %v2509 = vsub.s32 1, %v2508
      %v2510 = vrot.slane %v372, %v2509
      %2512 = vbcast.lane.b32.xlu0 %v2510, 256
      %v2513 = vpop.permute.xlu0 %2512
      %s2515 = sor.u32 256, 8
      %2516 = vbcast.lane.b32.xlu0 %v2510, %s2515
      %v2517 = vpop.permute.xlu0 %2516
      %s2519 = sor.u32 256, 16
      %2520 = vbcast.lane.b32.xlu0 %v2510, %s2519
      %v2521 = vpop.permute.xlu0 %2520
      %s2523 = sor.u32 256, 24
      %2524 = vbcast.lane.b32.xlu0 %v2510, %s2523
      %v2525 = vpop.permute.xlu0 %2524
      %v2526 = vlaneseq
      %v2527 = vshrl.u32 %v2526, 7
      %v2528 = vsub.s32 2, %v2527
      %v2529 = vrot.slane %v372, %v2528
      %2531 = vbcast.lane.b32.xlu0 %v2529, 256
      %v2532 = vpop.permute.xlu0 %2531
      %s2534 = sor.u32 256, 8
      %2535 = vbcast.lane.b32.xlu0 %v2529, %s2534
      %v2536 = vpop.permute.xlu0 %2535
      %s2538 = sor.u32 256, 16
      %2539 = vbcast.lane.b32.xlu0 %v2529, %s2538
      %v2540 = vpop.permute.xlu0 %2539
      %s2542 = sor.u32 256, 24
      %2543 = vbcast.lane.b32.xlu0 %v2529, %s2542
      %v2544 = vpop.permute.xlu0 %2543
      %v2545 = vlaneseq
      %v2546 = vshrl.u32 %v2545, 7
      %v2547 = vsub.s32 3, %v2546
      %v2548 = vrot.slane %v372, %v2547
      %2550 = vbcast.lane.b32.xlu0 %v2548, 256
      %v2551 = vpop.permute.xlu0 %2550
      %s2553 = sor.u32 256, 8
      %2554 = vbcast.lane.b32.xlu0 %v2548, %s2553
      %v2555 = vpop.permute.xlu0 %2554
      %s2557 = sor.u32 256, 16
      %2558 = vbcast.lane.b32.xlu0 %v2548, %s2557
      %v2559 = vpop.permute.xlu0 %2558
      %s2561 = sor.u32 256, 24
      %2562 = vbcast.lane.b32.xlu0 %v2548, %s2561
      %v2563 = vpop.permute.xlu0 %2562
      %v2564 = vlaneseq
      %v2565 = vshrl.u32 %v2564, 7
      %v2566 = vsub.s32 4, %v2565
      %v2567 = vrot.slane %v372, %v2566
      %2569 = vbcast.lane.b32.xlu0 %v2567, 256
      %v2570 = vpop.permute.xlu0 %2569
      %s2572 = sor.u32 256, 8
      %2573 = vbcast.lane.b32.xlu0 %v2567, %s2572
      %v2574 = vpop.permute.xlu0 %2573
      %s2576 = sor.u32 256, 16
      %2577 = vbcast.lane.b32.xlu0 %v2567, %s2576
      %v2578 = vpop.permute.xlu0 %2577
      %s2580 = sor.u32 256, 24
      %2581 = vbcast.lane.b32.xlu0 %v2567, %s2580
      %v2582 = vpop.permute.xlu0 %2581
      %v2583 = vlaneseq
      %v2584 = vshrl.u32 %v2583, 7
      %v2585 = vsub.s32 5, %v2584
      %v2586 = vrot.slane %v372, %v2585
      %2588 = vbcast.lane.b32.xlu0 %v2586, 256
      %v2589 = vpop.permute.xlu0 %2588
      %s2591 = sor.u32 256, 8
      %2592 = vbcast.lane.b32.xlu0 %v2586, %s2591
      %v2593 = vpop.permute.xlu0 %2592
      %s2595 = sor.u32 256, 16
      %2596 = vbcast.lane.b32.xlu0 %v2586, %s2595
      %v2597 = vpop.permute.xlu0 %2596
      %s2599 = sor.u32 256, 24
      %2600 = vbcast.lane.b32.xlu0 %v2586, %s2599
      %v2601 = vpop.permute.xlu0 %2600
      %v2602 = vlaneseq
      %v2603 = vshrl.u32 %v2602, 7
      %v2604 = vsub.s32 6, %v2603
      %v2605 = vrot.slane %v372, %v2604
      %2607 = vbcast.lane.b32.xlu0 %v2605, 256
      %v2608 = vpop.permute.xlu0 %2607
      %s2610 = sor.u32 256, 8
      %2611 = vbcast.lane.b32.xlu0 %v2605, %s2610
      %v2612 = vpop.permute.xlu0 %2611
      %s2614 = sor.u32 256, 16
      %2615 = vbcast.lane.b32.xlu0 %v2605, %s2614
      %v2616 = vpop.permute.xlu0 %2615
      %s2618 = sor.u32 256, 24
      %2619 = vbcast.lane.b32.xlu0 %v2605, %s2618
      %v2620 = vpop.permute.xlu0 %2619
      %v2621 = vlaneseq
      %v2622 = vshrl.u32 %v2621, 7
      %v2623 = vsub.s32 7, %v2622
      %v2624 = vrot.slane %v372, %v2623
      %2626 = vbcast.lane.b32.xlu0 %v2624, 256
      %v2627 = vpop.permute.xlu0 %2626
      %s2629 = sor.u32 256, 8
      %2630 = vbcast.lane.b32.xlu0 %v2624, %s2629
      %v2631 = vpop.permute.xlu0 %2630
      %s2633 = sor.u32 256, 16
      %2634 = vbcast.lane.b32.xlu0 %v2624, %s2633
      %v2635 = vpop.permute.xlu0 %2634
      %s2637 = sor.u32 256, 24
      %2638 = vbcast.lane.b32.xlu0 %v2624, %s2637
      %v2639 = vpop.permute.xlu0 %2638
      %vm2640 = vcmp.le.f32.partialorder %v2038, %v2031
      %vm2641 = vcmp.le.f32.partialorder %v2042, %v2031
      %vm2642 = vcmp.le.f32.partialorder %v2046, %v2031
      %vm2643 = vcmp.le.f32.partialorder %v2050, %v2031
      %vm2644 = vcmp.le.f32.partialorder %v2057, %v2031
      %vm2645 = vcmp.le.f32.partialorder %v2061, %v2031
      %vm2646 = vcmp.le.f32.partialorder %v2065, %v2031
      %vm2647 = vcmp.le.f32.partialorder %v2069, %v2031
      %vm2648 = vcmp.le.f32.partialorder %v2076, %v2031
      %vm2649 = vcmp.le.f32.partialorder %v2080, %v2031
      %vm2650 = vcmp.le.f32.partialorder %v2084, %v2031
      %vm2651 = vcmp.le.f32.partialorder %v2088, %v2031
      %vm2652 = vcmp.le.f32.partialorder %v2095, %v2031
      %vm2653 = vcmp.le.f32.partialorder %v2099, %v2031
      %vm2654 = vcmp.le.f32.partialorder %v2103, %v2031
      %vm2655 = vcmp.le.f32.partialorder %v2107, %v2031
      %vm2656 = vcmp.le.f32.partialorder %v2114, %v2031
      %vm2657 = vcmp.le.f32.partialorder %v2118, %v2031
      %vm2658 = vcmp.le.f32.partialorder %v2122, %v2031
      %vm2659 = vcmp.le.f32.partialorder %v2126, %v2031
      %vm2660 = vcmp.le.f32.partialorder %v2133, %v2031
      %vm2661 = vcmp.le.f32.partialorder %v2137, %v2031
      %vm2662 = vcmp.le.f32.partialorder %v2141, %v2031
      %vm2663 = vcmp.le.f32.partialorder %v2145, %v2031
      %vm2664 = vcmp.le.f32.partialorder %v2152, %v2031
      %vm2665 = vcmp.le.f32.partialorder %v2156, %v2031
      %vm2666 = vcmp.le.f32.partialorder %v2160, %v2031
      %vm2667 = vcmp.le.f32.partialorder %v2164, %v2031
      %vm2668 = vcmp.le.f32.partialorder %v2171, %v2031
      %vm2669 = vcmp.le.f32.partialorder %v2175, %v2031
      %vm2670 = vcmp.le.f32.partialorder %v2179, %v2031
      %vm2671 = vcmp.le.f32.partialorder %v2183, %v2031
      %vm2672 = vcmp.le.f32.partialorder %v2190, %v2031
      %vm2673 = vcmp.le.f32.partialorder %v2194, %v2031
      %vm2674 = vcmp.le.f32.partialorder %v2198, %v2031
      %vm2675 = vcmp.le.f32.partialorder %v2202, %v2031
      %vm2676 = vcmp.le.f32.partialorder %v2209, %v2031
      %vm2677 = vcmp.le.f32.partialorder %v2213, %v2031
      %vm2678 = vcmp.le.f32.partialorder %v2217, %v2031
      %vm2679 = vcmp.le.f32.partialorder %v2221, %v2031
      %vm2680 = vcmp.le.f32.partialorder %v2228, %v2031
      %vm2681 = vcmp.le.f32.partialorder %v2232, %v2031
      %vm2682 = vcmp.le.f32.partialorder %v2236, %v2031
      %vm2683 = vcmp.le.f32.partialorder %v2240, %v2031
      %vm2684 = vcmp.le.f32.partialorder %v2247, %v2031
      %vm2685 = vcmp.le.f32.partialorder %v2251, %v2031
      %vm2686 = vcmp.le.f32.partialorder %v2255, %v2031
      %vm2687 = vcmp.le.f32.partialorder %v2259, %v2031
      %vm2688 = vcmp.le.f32.partialorder %v2266, %v2031
      %vm2689 = vcmp.le.f32.partialorder %v2270, %v2031
      %vm2690 = vcmp.le.f32.partialorder %v2274, %v2031
      %vm2691 = vcmp.le.f32.partialorder %v2278, %v2031
      %vm2692 = vcmp.le.f32.partialorder %v2285, %v2031
      %vm2693 = vcmp.le.f32.partialorder %v2289, %v2031
      %vm2694 = vcmp.le.f32.partialorder %v2293, %v2031
      %vm2695 = vcmp.le.f32.partialorder %v2297, %v2031
      %vm2696 = vcmp.le.f32.partialorder %v2304, %v2031
      %vm2697 = vcmp.le.f32.partialorder %v2308, %v2031
      %vm2698 = vcmp.le.f32.partialorder %v2312, %v2031
      %vm2699 = vcmp.le.f32.partialorder %v2316, %v2031
      %vm2700 = vcmp.le.f32.partialorder %v2323, %v2031
      %vm2701 = vcmp.le.f32.partialorder %v2327, %v2031
      %vm2702 = vcmp.le.f32.partialorder %v2331, %v2031
      %vm2703 = vcmp.le.f32.partialorder %v2335, %v2031
      %vm2704 = vcmp.le.f32.partialorder %v2342, %v2031
      %vm2705 = vcmp.le.f32.partialorder %v2346, %v2031
      %vm2706 = vcmp.le.f32.partialorder %v2350, %v2031
      %vm2707 = vcmp.le.f32.partialorder %v2354, %v2031
      %vm2708 = vcmp.le.f32.partialorder %v2361, %v2031
      %vm2709 = vcmp.le.f32.partialorder %v2365, %v2031
      %vm2710 = vcmp.le.f32.partialorder %v2369, %v2031
      %vm2711 = vcmp.le.f32.partialorder %v2373, %v2031
      %vm2712 = vcmp.le.f32.partialorder %v2380, %v2031
      %vm2713 = vcmp.le.f32.partialorder %v2384, %v2031
      %vm2714 = vcmp.le.f32.partialorder %v2388, %v2031
      %vm2715 = vcmp.le.f32.partialorder %v2392, %v2031
      %vm2716 = vcmp.le.f32.partialorder %v2399, %v2031
      %vm2717 = vcmp.le.f32.partialorder %v2403, %v2031
      %vm2718 = vcmp.le.f32.partialorder %v2407, %v2031
      %vm2719 = vcmp.le.f32.partialorder %v2411, %v2031
      %vm2720 = vcmp.le.f32.partialorder %v2418, %v2031
      %vm2721 = vcmp.le.f32.partialorder %v2422, %v2031
      %vm2722 = vcmp.le.f32.partialorder %v2426, %v2031
      %vm2723 = vcmp.le.f32.partialorder %v2430, %v2031
      %vm2724 = vcmp.le.f32.partialorder %v2437, %v2031
      %vm2725 = vcmp.le.f32.partialorder %v2441, %v2031
      %vm2726 = vcmp.le.f32.partialorder %v2445, %v2031
      %vm2727 = vcmp.le.f32.partialorder %v2449, %v2031
      %vm2728 = vcmp.le.f32.partialorder %v2456, %v2031
      %vm2729 = vcmp.le.f32.partialorder %v2460, %v2031
      %vm2730 = vcmp.le.f32.partialorder %v2464, %v2031
      %vm2731 = vcmp.le.f32.partialorder %v2468, %v2031
      %vm2732 = vcmp.le.f32.partialorder %v2475, %v2031
      %vm2733 = vcmp.le.f32.partialorder %v2479, %v2031
      %vm2734 = vcmp.le.f32.partialorder %v2483, %v2031
      %vm2735 = vcmp.le.f32.partialorder %v2487, %v2031
      %vm2736 = vcmp.le.f32.partialorder %v2494, %v2031
      %vm2737 = vcmp.le.f32.partialorder %v2498, %v2031
      %vm2738 = vcmp.le.f32.partialorder %v2502, %v2031
      %vm2739 = vcmp.le.f32.partialorder %v2506, %v2031
      %vm2740 = vcmp.le.f32.partialorder %v2513, %v2031
      %vm2741 = vcmp.le.f32.partialorder %v2517, %v2031
      %vm2742 = vcmp.le.f32.partialorder %v2521, %v2031
      %vm2743 = vcmp.le.f32.partialorder %v2525, %v2031
      %vm2744 = vcmp.le.f32.partialorder %v2532, %v2031
      %vm2745 = vcmp.le.f32.partialorder %v2536, %v2031
      %vm2746 = vcmp.le.f32.partialorder %v2540, %v2031
      %vm2747 = vcmp.le.f32.partialorder %v2544, %v2031
      %vm2748 = vcmp.le.f32.partialorder %v2551, %v2031
      %vm2749 = vcmp.le.f32.partialorder %v2555, %v2031
      %vm2750 = vcmp.le.f32.partialorder %v2559, %v2031
      %vm2751 = vcmp.le.f32.partialorder %v2563, %v2031
      %vm2752 = vcmp.le.f32.partialorder %v2570, %v2031
      %vm2753 = vcmp.le.f32.partialorder %v2574, %v2031
      %vm2754 = vcmp.le.f32.partialorder %v2578, %v2031
      %vm2755 = vcmp.le.f32.partialorder %v2582, %v2031
      %vm2756 = vcmp.le.f32.partialorder %v2589, %v2031
      %vm2757 = vcmp.le.f32.partialorder %v2593, %v2031
      %vm2758 = vcmp.le.f32.partialorder %v2597, %v2031
      %vm2759 = vcmp.le.f32.partialorder %v2601, %v2031
      %vm2760 = vcmp.le.f32.partialorder %v2608, %v2031
      %vm2761 = vcmp.le.f32.partialorder %v2612, %v2031
      %vm2762 = vcmp.le.f32.partialorder %v2616, %v2031
      %vm2763 = vcmp.le.f32.partialorder %v2620, %v2031
      %vm2764 = vcmp.le.f32.partialorder %v2627, %v2031
      %vm2765 = vcmp.le.f32.partialorder %v2631, %v2031
      %vm2766 = vcmp.le.f32.partialorder %v2635, %v2031
      %vm2767 = vcmp.le.f32.partialorder %v2639, %v2031
      %v2768 = vsel %vm2640, %v1900, -1e+30
      %v2769 = vsel %vm2641, %v1901, -1e+30
      %v2770 = vsel %vm2642, %v1902, -1e+30
      %v2771 = vsel %vm2643, %v1903, -1e+30
      %v2772 = vsel %vm2644, %v1904, -1e+30
      %v2773 = vsel %vm2645, %v1905, -1e+30
      %v2774 = vsel %vm2646, %v1906, -1e+30
      %v2775 = vsel %vm2647, %v1907, -1e+30
      %v2776 = vsel %vm2648, %v1908, -1e+30
      %v2777 = vsel %vm2649, %v1909, -1e+30
      %v2778 = vsel %vm2650, %v1910, -1e+30
      %v2779 = vsel %vm2651, %v1911, -1e+30
      %v2780 = vsel %vm2652, %v1912, -1e+30
      %v2781 = vsel %vm2653, %v1913, -1e+30
      %v2782 = vsel %vm2654, %v1914, -1e+30
      %v2783 = vsel %vm2655, %v1915, -1e+30
      %v2784 = vsel %vm2656, %v1916, -1e+30
      %v2785 = vsel %vm2657, %v1917, -1e+30
      %v2786 = vsel %vm2658, %v1918, -1e+30
      %v2787 = vsel %vm2659, %v1919, -1e+30
      %v2788 = vsel %vm2660, %v1920, -1e+30
      %v2789 = vsel %vm2661, %v1921, -1e+30
      %v2790 = vsel %vm2662, %v1922, -1e+30
      %v2791 = vsel %vm2663, %v1923, -1e+30
      %v2792 = vsel %vm2664, %v1924, -1e+30
      %v2793 = vsel %vm2665, %v1925, -1e+30
      %v2794 = vsel %vm2666, %v1926, -1e+30
      %v2795 = vsel %vm2667, %v1927, -1e+30
      %v2796 = vsel %vm2668, %v1928, -1e+30
      %v2797 = vsel %vm2669, %v1929, -1e+30
      %v2798 = vsel %vm2670, %v1930, -1e+30
      %v2799 = vsel %vm2671, %v1931, -1e+30
      %v2800 = vsel %vm2672, %v1932, -1e+30
      %v2801 = vsel %vm2673, %v1933, -1e+30
      %v2802 = vsel %vm2674, %v1934, -1e+30
      %v2803 = vsel %vm2675, %v1935, -1e+30
      %v2804 = vsel %vm2676, %v1936, -1e+30
      %v2805 = vsel %vm2677, %v1937, -1e+30
      %v2806 = vsel %vm2678, %v1938, -1e+30
      %v2807 = vsel %vm2679, %v1939, -1e+30
      %v2808 = vsel %vm2680, %v1940, -1e+30
      %v2809 = vsel %vm2681, %v1941, -1e+30
      %v2810 = vsel %vm2682, %v1942, -1e+30
      %v2811 = vsel %vm2683, %v1943, -1e+30
      %v2812 = vsel %vm2684, %v1944, -1e+30
      %v2813 = vsel %vm2685, %v1945, -1e+30
      %v2814 = vsel %vm2686, %v1946, -1e+30
      %v2815 = vsel %vm2687, %v1947, -1e+30
      %v2816 = vsel %vm2688, %v1948, -1e+30
      %v2817 = vsel %vm2689, %v1949, -1e+30
      %v2818 = vsel %vm2690, %v1950, -1e+30
      %v2819 = vsel %vm2691, %v1951, -1e+30
      %v2820 = vsel %vm2692, %v1952, -1e+30
      %v2821 = vsel %vm2693, %v1953, -1e+30
      %v2822 = vsel %vm2694, %v1954, -1e+30
      %v2823 = vsel %vm2695, %v1955, -1e+30
      %v2824 = vsel %vm2696, %v1956, -1e+30
      %v2825 = vsel %vm2697, %v1957, -1e+30
      %v2826 = vsel %vm2698, %v1958, -1e+30
      %v2827 = vsel %vm2699, %v1959, -1e+30
      %v2828 = vsel %vm2700, %v1960, -1e+30
      %v2829 = vsel %vm2701, %v1961, -1e+30
      %v2830 = vsel %vm2702, %v1962, -1e+30
      %v2831 = vsel %vm2703, %v1963, -1e+30
      %v2832 = vsel %vm2704, %v1964, -1e+30
      %v2833 = vsel %vm2705, %v1965, -1e+30
      %v2834 = vsel %vm2706, %v1966, -1e+30
      %v2835 = vsel %vm2707, %v1967, -1e+30
      %v2836 = vsel %vm2708, %v1968, -1e+30
      %v2837 = vsel %vm2709, %v1969, -1e+30
      %v2838 = vsel %vm2710, %v1970, -1e+30
      %v2839 = vsel %vm2711, %v1971, -1e+30
      %v2840 = vsel %vm2712, %v1972, -1e+30
      %v2841 = vsel %vm2713, %v1973, -1e+30
      %v2842 = vsel %vm2714, %v1974, -1e+30
      %v2843 = vsel %vm2715, %v1975, -1e+30
      %v2844 = vsel %vm2716, %v1976, -1e+30
      %v2845 = vsel %vm2717, %v1977, -1e+30
      %v2846 = vsel %vm2718, %v1978, -1e+30
      %v2847 = vsel %vm2719, %v1979, -1e+30
      %v2848 = vsel %vm2720, %v1980, -1e+30
      %v2849 = vsel %vm2721, %v1981, -1e+30
      %v2850 = vsel %vm2722, %v1982, -1e+30
      %v2851 = vsel %vm2723, %v1983, -1e+30
      %v2852 = vsel %vm2724, %v1984, -1e+30
      %v2853 = vsel %vm2725, %v1985, -1e+30
      %v2854 = vsel %vm2726, %v1986, -1e+30
      %v2855 = vsel %vm2727, %v1987, -1e+30
      %v2856 = vsel %vm2728, %v1988, -1e+30
      %v2857 = vsel %vm2729, %v1989, -1e+30
      %v2858 = vsel %vm2730, %v1990, -1e+30
      %v2859 = vsel %vm2731, %v1991, -1e+30
      %v2860 = vsel %vm2732, %v1992, -1e+30
      %v2861 = vsel %vm2733, %v1993, -1e+30
      %v2862 = vsel %vm2734, %v1994, -1e+30
      %v2863 = vsel %vm2735, %v1995, -1e+30
      %v2864 = vsel %vm2736, %v1996, -1e+30
      %v2865 = vsel %vm2737, %v1997, -1e+30
      %v2866 = vsel %vm2738, %v1998, -1e+30
      %v2867 = vsel %vm2739, %v1999, -1e+30
      %v2868 = vsel %vm2740, %v2000, -1e+30
      %v2869 = vsel %vm2741, %v2001, -1e+30
      %v2870 = vsel %vm2742, %v2002, -1e+30
      %v2871 = vsel %vm2743, %v2003, -1e+30
      %v2872 = vsel %vm2744, %v2004, -1e+30
      %v2873 = vsel %vm2745, %v2005, -1e+30
      %v2874 = vsel %vm2746, %v2006, -1e+30
      %v2875 = vsel %vm2747, %v2007, -1e+30
      %v2876 = vsel %vm2748, %v2008, -1e+30
      %v2877 = vsel %vm2749, %v2009, -1e+30
      %v2878 = vsel %vm2750, %v2010, -1e+30
      %v2879 = vsel %vm2751, %v2011, -1e+30
      %v2880 = vsel %vm2752, %v2012, -1e+30
      %v2881 = vsel %vm2753, %v2013, -1e+30
      %v2882 = vsel %vm2754, %v2014, -1e+30
      %v2883 = vsel %vm2755, %v2015, -1e+30
      %v2884 = vsel %vm2756, %v2016, -1e+30
      %v2885 = vsel %vm2757, %v2017, -1e+30
      %v2886 = vsel %vm2758, %v2018, -1e+30
      %v2887 = vsel %vm2759, %v2019, -1e+30
      %v2888 = vsel %vm2760, %v2020, -1e+30
      %v2889 = vsel %vm2761, %v2021, -1e+30
      %v2890 = vsel %vm2762, %v2022, -1e+30
      %v2891 = vsel %vm2763, %v2023, -1e+30
      %v2892 = vsel %vm2764, %v2024, -1e+30
      %v2893 = vsel %vm2765, %v2025, -1e+30
      %v2894 = vsel %vm2766, %v2026, -1e+30
      %v2895 = vsel %vm2767, %v2027, -1e+30
      %v2896 = vsel %vm1162, %v2768, -inf
      %v2897 = vsel %vm1162, %v2769, -inf
      %v2898 = vmax.f32 %v2896, %v2897
      %v2899 = vsel %vm1162, %v2770, -inf
      %v2900 = vmax.f32 %v2898, %v2899
      %v2901 = vsel %vm1162, %v2771, -inf
      %v2902 = vmax.f32 %v2900, %v2901
      %v2903 = vrot.slane %v2902, 4
      %v2904 = vmax.f32 %v2902, %v2903
      %v2905 = vrot.slane %v2904, 2
      %v2906 = vmax.f32 %v2904, %v2905
      %v2907 = vrot.slane %v2906, 1
      %v2908 = vmax.f32 %v2906, %v2907
      %v2909 = vsel %vm1162, %v2772, -inf
      %v2910 = vsel %vm1162, %v2773, -inf
      %v2911 = vmax.f32 %v2909, %v2910
      %v2912 = vsel %vm1162, %v2774, -inf
      %v2913 = vmax.f32 %v2911, %v2912
      %v2914 = vsel %vm1162, %v2775, -inf
      %v2915 = vmax.f32 %v2913, %v2914
      %v2916 = vrot.slane %v2915, 4
      %v2917 = vmax.f32 %v2915, %v2916
      %v2918 = vrot.slane %v2917, 2
      %v2919 = vmax.f32 %v2917, %v2918
      %v2920 = vrot.slane %v2919, 1
      %v2921 = vmax.f32 %v2919, %v2920
      %v2922 = vsel %vm1162, %v2776, -inf
      %v2923 = vsel %vm1162, %v2777, -inf
      %v2924 = vmax.f32 %v2922, %v2923
      %v2925 = vsel %vm1162, %v2778, -inf
      %v2926 = vmax.f32 %v2924, %v2925
      %v2927 = vsel %vm1162, %v2779, -inf
      %v2928 = vmax.f32 %v2926, %v2927
      %v2929 = vrot.slane %v2928, 4
      %v2930 = vmax.f32 %v2928, %v2929
      %v2931 = vrot.slane %v2930, 2
      %v2932 = vmax.f32 %v2930, %v2931
      %v2933 = vrot.slane %v2932, 1
      %v2934 = vmax.f32 %v2932, %v2933
      %v2935 = vsel %vm1162, %v2780, -inf
      %v2936 = vsel %vm1162, %v2781, -inf
      %v2937 = vmax.f32 %v2935, %v2936
      %v2938 = vsel %vm1162, %v2782, -inf
      %v2939 = vmax.f32 %v2937, %v2938
      %v2940 = vsel %vm1162, %v2783, -inf
      %v2941 = vmax.f32 %v2939, %v2940
      %v2942 = vrot.slane %v2941, 4
      %v2943 = vmax.f32 %v2941, %v2942
      %v2944 = vrot.slane %v2943, 2
      %v2945 = vmax.f32 %v2943, %v2944
      %v2946 = vrot.slane %v2945, 1
      %v2947 = vmax.f32 %v2945, %v2946
      %v2948 = vsel %vm1162, %v2784, -inf
      %v2949 = vsel %vm1162, %v2785, -inf
      %v2950 = vmax.f32 %v2948, %v2949
      %v2951 = vsel %vm1162, %v2786, -inf
      %v2952 = vmax.f32 %v2950, %v2951
      %v2953 = vsel %vm1162, %v2787, -inf
      %v2954 = vmax.f32 %v2952, %v2953
      %v2955 = vrot.slane %v2954, 4
      %v2956 = vmax.f32 %v2954, %v2955
      %v2957 = vrot.slane %v2956, 2
      %v2958 = vmax.f32 %v2956, %v2957
      %v2959 = vrot.slane %v2958, 1
      %v2960 = vmax.f32 %v2958, %v2959
      %v2961 = vsel %vm1162, %v2788, -inf
      %v2962 = vsel %vm1162, %v2789, -inf
      %v2963 = vmax.f32 %v2961, %v2962
      %v2964 = vsel %vm1162, %v2790, -inf
      %v2965 = vmax.f32 %v2963, %v2964
      %v2966 = vsel %vm1162, %v2791, -inf
      %v2967 = vmax.f32 %v2965, %v2966
      %v2968 = vrot.slane %v2967, 4
      %v2969 = vmax.f32 %v2967, %v2968
      %v2970 = vrot.slane %v2969, 2
      %v2971 = vmax.f32 %v2969, %v2970
      %v2972 = vrot.slane %v2971, 1
      %v2973 = vmax.f32 %v2971, %v2972
      %v2974 = vsel %vm1162, %v2792, -inf
      %v2975 = vsel %vm1162, %v2793, -inf
      %v2976 = vmax.f32 %v2974, %v2975
      %v2977 = vsel %vm1162, %v2794, -inf
      %v2978 = vmax.f32 %v2976, %v2977
      %v2979 = vsel %vm1162, %v2795, -inf
      %v2980 = vmax.f32 %v2978, %v2979
      %v2981 = vrot.slane %v2980, 4
      %v2982 = vmax.f32 %v2980, %v2981
      %v2983 = vrot.slane %v2982, 2
      %v2984 = vmax.f32 %v2982, %v2983
      %v2985 = vrot.slane %v2984, 1
      %v2986 = vmax.f32 %v2984, %v2985
      %v2987 = vsel %vm1162, %v2796, -inf
      %v2988 = vsel %vm1162, %v2797, -inf
      %v2989 = vmax.f32 %v2987, %v2988
      %v2990 = vsel %vm1162, %v2798, -inf
      %v2991 = vmax.f32 %v2989, %v2990
      %v2992 = vsel %vm1162, %v2799, -inf
      %v2993 = vmax.f32 %v2991, %v2992
      %v2994 = vrot.slane %v2993, 4
      %v2995 = vmax.f32 %v2993, %v2994
      %v2996 = vrot.slane %v2995, 2
      %v2997 = vmax.f32 %v2995, %v2996
      %v2998 = vrot.slane %v2997, 1
      %v2999 = vmax.f32 %v2997, %v2998
      %v3000 = vsel %vm1162, %v2800, -inf
      %v3001 = vsel %vm1162, %v2801, -inf
      %v3002 = vmax.f32 %v3000, %v3001
      %v3003 = vsel %vm1162, %v2802, -inf
      %v3004 = vmax.f32 %v3002, %v3003
      %v3005 = vsel %vm1162, %v2803, -inf
      %v3006 = vmax.f32 %v3004, %v3005
      %v3007 = vrot.slane %v3006, 4
      %v3008 = vmax.f32 %v3006, %v3007
      %v3009 = vrot.slane %v3008, 2
      %v3010 = vmax.f32 %v3008, %v3009
      %v3011 = vrot.slane %v3010, 1
      %v3012 = vmax.f32 %v3010, %v3011
      %v3013 = vsel %vm1162, %v2804, -inf
      %v3014 = vsel %vm1162, %v2805, -inf
      %v3015 = vmax.f32 %v3013, %v3014
      %v3016 = vsel %vm1162, %v2806, -inf
      %v3017 = vmax.f32 %v3015, %v3016
      %v3018 = vsel %vm1162, %v2807, -inf
      %v3019 = vmax.f32 %v3017, %v3018
      %v3020 = vrot.slane %v3019, 4
      %v3021 = vmax.f32 %v3019, %v3020
      %v3022 = vrot.slane %v3021, 2
      %v3023 = vmax.f32 %v3021, %v3022
      %v3024 = vrot.slane %v3023, 1
      %v3025 = vmax.f32 %v3023, %v3024
      %v3026 = vsel %vm1162, %v2808, -inf
      %v3027 = vsel %vm1162, %v2809, -inf
      %v3028 = vmax.f32 %v3026, %v3027
      %v3029 = vsel %vm1162, %v2810, -inf
      %v3030 = vmax.f32 %v3028, %v3029
      %v3031 = vsel %vm1162, %v2811, -inf
      %v3032 = vmax.f32 %v3030, %v3031
      %v3033 = vrot.slane %v3032, 4
      %v3034 = vmax.f32 %v3032, %v3033
      %v3035 = vrot.slane %v3034, 2
      %v3036 = vmax.f32 %v3034, %v3035
      %v3037 = vrot.slane %v3036, 1
      %v3038 = vmax.f32 %v3036, %v3037
      %v3039 = vsel %vm1162, %v2812, -inf
      %v3040 = vsel %vm1162, %v2813, -inf
      %v3041 = vmax.f32 %v3039, %v3040
      %v3042 = vsel %vm1162, %v2814, -inf
      %v3043 = vmax.f32 %v3041, %v3042
      %v3044 = vsel %vm1162, %v2815, -inf
      %v3045 = vmax.f32 %v3043, %v3044
      %v3046 = vrot.slane %v3045, 4
      %v3047 = vmax.f32 %v3045, %v3046
      %v3048 = vrot.slane %v3047, 2
      %v3049 = vmax.f32 %v3047, %v3048
      %v3050 = vrot.slane %v3049, 1
      %v3051 = vmax.f32 %v3049, %v3050
      %v3052 = vsel %vm1162, %v2816, -inf
      %v3053 = vsel %vm1162, %v2817, -inf
      %v3054 = vmax.f32 %v3052, %v3053
      %v3055 = vsel %vm1162, %v2818, -inf
      %v3056 = vmax.f32 %v3054, %v3055
      %v3057 = vsel %vm1162, %v2819, -inf
      %v3058 = vmax.f32 %v3056, %v3057
      %v3059 = vrot.slane %v3058, 4
      %v3060 = vmax.f32 %v3058, %v3059
      %v3061 = vrot.slane %v3060, 2
      %v3062 = vmax.f32 %v3060, %v3061
      %v3063 = vrot.slane %v3062, 1
      %v3064 = vmax.f32 %v3062, %v3063
      %v3065 = vsel %vm1162, %v2820, -inf
      %v3066 = vsel %vm1162, %v2821, -inf
      %v3067 = vmax.f32 %v3065, %v3066
      %v3068 = vsel %vm1162, %v2822, -inf
      %v3069 = vmax.f32 %v3067, %v3068
      %v3070 = vsel %vm1162, %v2823, -inf
      %v3071 = vmax.f32 %v3069, %v3070
      %v3072 = vrot.slane %v3071, 4
      %v3073 = vmax.f32 %v3071, %v3072
      %v3074 = vrot.slane %v3073, 2
      %v3075 = vmax.f32 %v3073, %v3074
      %v3076 = vrot.slane %v3075, 1
      %v3077 = vmax.f32 %v3075, %v3076
      %v3078 = vsel %vm1162, %v2824, -inf
      %v3079 = vsel %vm1162, %v2825, -inf
      %v3080 = vmax.f32 %v3078, %v3079
      %v3081 = vsel %vm1162, %v2826, -inf
      %v3082 = vmax.f32 %v3080, %v3081
      %v3083 = vsel %vm1162, %v2827, -inf
      %v3084 = vmax.f32 %v3082, %v3083
      %v3085 = vrot.slane %v3084, 4
      %v3086 = vmax.f32 %v3084, %v3085
      %v3087 = vrot.slane %v3086, 2
      %v3088 = vmax.f32 %v3086, %v3087
      %v3089 = vrot.slane %v3088, 1
      %v3090 = vmax.f32 %v3088, %v3089
      %v3091 = vsel %vm1162, %v2828, -inf
      %v3092 = vsel %vm1162, %v2829, -inf
      %v3093 = vmax.f32 %v3091, %v3092
      %v3094 = vsel %vm1162, %v2830, -inf
      %v3095 = vmax.f32 %v3093, %v3094
      %v3096 = vsel %vm1162, %v2831, -inf
      %v3097 = vmax.f32 %v3095, %v3096
      %v3098 = vrot.slane %v3097, 4
      %v3099 = vmax.f32 %v3097, %v3098
      %v3100 = vrot.slane %v3099, 2
      %v3101 = vmax.f32 %v3099, %v3100
      %v3102 = vrot.slane %v3101, 1
      %v3103 = vmax.f32 %v3101, %v3102
      %v3104 = vsel %vm1162, %v2832, -inf
      %v3105 = vsel %vm1162, %v2833, -inf
      %v3106 = vmax.f32 %v3104, %v3105
      %v3107 = vsel %vm1162, %v2834, -inf
      %v3108 = vmax.f32 %v3106, %v3107
      %v3109 = vsel %vm1162, %v2835, -inf
      %v3110 = vmax.f32 %v3108, %v3109
      %v3111 = vrot.slane %v3110, 4
      %v3112 = vmax.f32 %v3110, %v3111
      %v3113 = vrot.slane %v3112, 2
      %v3114 = vmax.f32 %v3112, %v3113
      %v3115 = vrot.slane %v3114, 1
      %v3116 = vmax.f32 %v3114, %v3115
      %v3117 = vsel %vm1162, %v2836, -inf
      %v3118 = vsel %vm1162, %v2837, -inf
      %v3119 = vmax.f32 %v3117, %v3118
      %v3120 = vsel %vm1162, %v2838, -inf
      %v3121 = vmax.f32 %v3119, %v3120
      %v3122 = vsel %vm1162, %v2839, -inf
      %v3123 = vmax.f32 %v3121, %v3122
      %v3124 = vrot.slane %v3123, 4
      %v3125 = vmax.f32 %v3123, %v3124
      %v3126 = vrot.slane %v3125, 2
      %v3127 = vmax.f32 %v3125, %v3126
      %v3128 = vrot.slane %v3127, 1
      %v3129 = vmax.f32 %v3127, %v3128
      %v3130 = vsel %vm1162, %v2840, -inf
      %v3131 = vsel %vm1162, %v2841, -inf
      %v3132 = vmax.f32 %v3130, %v3131
      %v3133 = vsel %vm1162, %v2842, -inf
      %v3134 = vmax.f32 %v3132, %v3133
      %v3135 = vsel %vm1162, %v2843, -inf
      %v3136 = vmax.f32 %v3134, %v3135
      %v3137 = vrot.slane %v3136, 4
      %v3138 = vmax.f32 %v3136, %v3137
      %v3139 = vrot.slane %v3138, 2
      %v3140 = vmax.f32 %v3138, %v3139
      %v3141 = vrot.slane %v3140, 1
      %v3142 = vmax.f32 %v3140, %v3141
      %v3143 = vsel %vm1162, %v2844, -inf
      %v3144 = vsel %vm1162, %v2845, -inf
      %v3145 = vmax.f32 %v3143, %v3144
      %v3146 = vsel %vm1162, %v2846, -inf
      %v3147 = vmax.f32 %v3145, %v3146
      %v3148 = vsel %vm1162, %v2847, -inf
      %v3149 = vmax.f32 %v3147, %v3148
      %v3150 = vrot.slane %v3149, 4
      %v3151 = vmax.f32 %v3149, %v3150
      %v3152 = vrot.slane %v3151, 2
      %v3153 = vmax.f32 %v3151, %v3152
      %v3154 = vrot.slane %v3153, 1
      %v3155 = vmax.f32 %v3153, %v3154
      %v3156 = vsel %vm1162, %v2848, -inf
      %v3157 = vsel %vm1162, %v2849, -inf
      %v3158 = vmax.f32 %v3156, %v3157
      %v3159 = vsel %vm1162, %v2850, -inf
      %v3160 = vmax.f32 %v3158, %v3159
      %v3161 = vsel %vm1162, %v2851, -inf
      %v3162 = vmax.f32 %v3160, %v3161
      %v3163 = vrot.slane %v3162, 4
      %v3164 = vmax.f32 %v3162, %v3163
      %v3165 = vrot.slane %v3164, 2
      %v3166 = vmax.f32 %v3164, %v3165
      %v3167 = vrot.slane %v3166, 1
      %v3168 = vmax.f32 %v3166, %v3167
      %v3169 = vsel %vm1162, %v2852, -inf
      %v3170 = vsel %vm1162, %v2853, -inf
      %v3171 = vmax.f32 %v3169, %v3170
      %v3172 = vsel %vm1162, %v2854, -inf
      %v3173 = vmax.f32 %v3171, %v3172
      %v3174 = vsel %vm1162, %v2855, -inf
      %v3175 = vmax.f32 %v3173, %v3174
      %v3176 = vrot.slane %v3175, 4
      %v3177 = vmax.f32 %v3175, %v3176
      %v3178 = vrot.slane %v3177, 2
      %v3179 = vmax.f32 %v3177, %v3178
      %v3180 = vrot.slane %v3179, 1
      %v3181 = vmax.f32 %v3179, %v3180
      %v3182 = vsel %vm1162, %v2856, -inf
      %v3183 = vsel %vm1162, %v2857, -inf
      %v3184 = vmax.f32 %v3182, %v3183
      %v3185 = vsel %vm1162, %v2858, -inf
      %v3186 = vmax.f32 %v3184, %v3185
      %v3187 = vsel %vm1162, %v2859, -inf
      %v3188 = vmax.f32 %v3186, %v3187
      %v3189 = vrot.slane %v3188, 4
      %v3190 = vmax.f32 %v3188, %v3189
      %v3191 = vrot.slane %v3190, 2
      %v3192 = vmax.f32 %v3190, %v3191
      %v3193 = vrot.slane %v3192, 1
      %v3194 = vmax.f32 %v3192, %v3193
      %v3195 = vsel %vm1162, %v2860, -inf
      %v3196 = vsel %vm1162, %v2861, -inf
      %v3197 = vmax.f32 %v3195, %v3196
      %v3198 = vsel %vm1162, %v2862, -inf
      %v3199 = vmax.f32 %v3197, %v3198
      %v3200 = vsel %vm1162, %v2863, -inf
      %v3201 = vmax.f32 %v3199, %v3200
      %v3202 = vrot.slane %v3201, 4
      %v3203 = vmax.f32 %v3201, %v3202
      %v3204 = vrot.slane %v3203, 2
      %v3205 = vmax.f32 %v3203, %v3204
      %v3206 = vrot.slane %v3205, 1
      %v3207 = vmax.f32 %v3205, %v3206
      %v3208 = vsel %vm1162, %v2864, -inf
      %v3209 = vsel %vm1162, %v2865, -inf
      %v3210 = vmax.f32 %v3208, %v3209
      %v3211 = vsel %vm1162, %v2866, -inf
      %v3212 = vmax.f32 %v3210, %v3211
      %v3213 = vsel %vm1162, %v2867, -inf
      %v3214 = vmax.f32 %v3212, %v3213
      %v3215 = vrot.slane %v3214, 4
      %v3216 = vmax.f32 %v3214, %v3215
      %v3217 = vrot.slane %v3216, 2
      %v3218 = vmax.f32 %v3216, %v3217
      %v3219 = vrot.slane %v3218, 1
      %v3220 = vmax.f32 %v3218, %v3219
      %v3221 = vsel %vm1162, %v2868, -inf
      %v3222 = vsel %vm1162, %v2869, -inf
      %v3223 = vmax.f32 %v3221, %v3222
      %v3224 = vsel %vm1162, %v2870, -inf
      %v3225 = vmax.f32 %v3223, %v3224
      %v3226 = vsel %vm1162, %v2871, -inf
      %v3227 = vmax.f32 %v3225, %v3226
      %v3228 = vrot.slane %v3227, 4
      %v3229 = vmax.f32 %v3227, %v3228
      %v3230 = vrot.slane %v3229, 2
      %v3231 = vmax.f32 %v3229, %v3230
      %v3232 = vrot.slane %v3231, 1
      %v3233 = vmax.f32 %v3231, %v3232
      %v3234 = vsel %vm1162, %v2872, -inf
      %v3235 = vsel %vm1162, %v2873, -inf
      %v3236 = vmax.f32 %v3234, %v3235
      %v3237 = vsel %vm1162, %v2874, -inf
      %v3238 = vmax.f32 %v3236, %v3237
      %v3239 = vsel %vm1162, %v2875, -inf
      %v3240 = vmax.f32 %v3238, %v3239
      %v3241 = vrot.slane %v3240, 4
      %v3242 = vmax.f32 %v3240, %v3241
      %v3243 = vrot.slane %v3242, 2
      %v3244 = vmax.f32 %v3242, %v3243
      %v3245 = vrot.slane %v3244, 1
      %v3246 = vmax.f32 %v3244, %v3245
      %v3247 = vsel %vm1162, %v2876, -inf
      %v3248 = vsel %vm1162, %v2877, -inf
      %v3249 = vmax.f32 %v3247, %v3248
      %v3250 = vsel %vm1162, %v2878, -inf
      %v3251 = vmax.f32 %v3249, %v3250
      %v3252 = vsel %vm1162, %v2879, -inf
      %v3253 = vmax.f32 %v3251, %v3252
      %v3254 = vrot.slane %v3253, 4
      %v3255 = vmax.f32 %v3253, %v3254
      %v3256 = vrot.slane %v3255, 2
      %v3257 = vmax.f32 %v3255, %v3256
      %v3258 = vrot.slane %v3257, 1
      %v3259 = vmax.f32 %v3257, %v3258
      %v3260 = vsel %vm1162, %v2880, -inf
      %v3261 = vsel %vm1162, %v2881, -inf
      %v3262 = vmax.f32 %v3260, %v3261
      %v3263 = vsel %vm1162, %v2882, -inf
      %v3264 = vmax.f32 %v3262, %v3263
      %v3265 = vsel %vm1162, %v2883, -inf
      %v3266 = vmax.f32 %v3264, %v3265
      %v3267 = vrot.slane %v3266, 4
      %v3268 = vmax.f32 %v3266, %v3267
      %v3269 = vrot.slane %v3268, 2
      %v3270 = vmax.f32 %v3268, %v3269
      %v3271 = vrot.slane %v3270, 1
      %v3272 = vmax.f32 %v3270, %v3271
      %v3273 = vsel %vm1162, %v2884, -inf
      %v3274 = vsel %vm1162, %v2885, -inf
      %v3275 = vmax.f32 %v3273, %v3274
      %v3276 = vsel %vm1162, %v2886, -inf
      %v3277 = vmax.f32 %v3275, %v3276
      %v3278 = vsel %vm1162, %v2887, -inf
      %v3279 = vmax.f32 %v3277, %v3278
      %v3280 = vrot.slane %v3279, 4
      %v3281 = vmax.f32 %v3279, %v3280
      %v3282 = vrot.slane %v3281, 2
      %v3283 = vmax.f32 %v3281, %v3282
      %v3284 = vrot.slane %v3283, 1
      %v3285 = vmax.f32 %v3283, %v3284
      %v3286 = vsel %vm1162, %v2888, -inf
      %v3287 = vsel %vm1162, %v2889, -inf
      %v3288 = vmax.f32 %v3286, %v3287
      %v3289 = vsel %vm1162, %v2890, -inf
      %v3290 = vmax.f32 %v3288, %v3289
      %v3291 = vsel %vm1162, %v2891, -inf
      %v3292 = vmax.f32 %v3290, %v3291
      %v3293 = vrot.slane %v3292, 4
      %v3294 = vmax.f32 %v3292, %v3293
      %v3295 = vrot.slane %v3294, 2
      %v3296 = vmax.f32 %v3294, %v3295
      %v3297 = vrot.slane %v3296, 1
      %v3298 = vmax.f32 %v3296, %v3297
      %v3299 = vsel %vm1162, %v2892, -inf
      %v3300 = vsel %vm1162, %v2893, -inf
      %v3301 = vmax.f32 %v3299, %v3300
      %v3302 = vsel %vm1162, %v2894, -inf
      %v3303 = vmax.f32 %v3301, %v3302
      %v3304 = vsel %vm1162, %v2895, -inf
      %v3305 = vmax.f32 %v3303, %v3304
      %v3306 = vrot.slane %v3305, 4
      %v3307 = vmax.f32 %v3305, %v3306
      %v3308 = vrot.slane %v3307, 2
      %v3309 = vmax.f32 %v3307, %v3308
      %v3310 = vrot.slane %v3309, 1
      %v3311 = vmax.f32 %v3309, %v3310
      %v3312 = vsel %vm2640, 1.0, 0.0
      %v3313 = vsel %vm2641, 1.0, 0.0
      %v3314 = vsel %vm2642, 1.0, 0.0
      %v3315 = vsel %vm2643, 1.0, 0.0
      %v3316 = vsel %vm2644, 1.0, 0.0
      %v3317 = vsel %vm2645, 1.0, 0.0
      %v3318 = vsel %vm2646, 1.0, 0.0
      %v3319 = vsel %vm2647, 1.0, 0.0
      %v3320 = vsel %vm2648, 1.0, 0.0
      %v3321 = vsel %vm2649, 1.0, 0.0
      %v3322 = vsel %vm2650, 1.0, 0.0
      %v3323 = vsel %vm2651, 1.0, 0.0
      %v3324 = vsel %vm2652, 1.0, 0.0
      %v3325 = vsel %vm2653, 1.0, 0.0
      %v3326 = vsel %vm2654, 1.0, 0.0
      %v3327 = vsel %vm2655, 1.0, 0.0
      %v3328 = vsel %vm2656, 1.0, 0.0
      %v3329 = vsel %vm2657, 1.0, 0.0
      %v3330 = vsel %vm2658, 1.0, 0.0
      %v3331 = vsel %vm2659, 1.0, 0.0
      %v3332 = vsel %vm2660, 1.0, 0.0
      %v3333 = vsel %vm2661, 1.0, 0.0
      %v3334 = vsel %vm2662, 1.0, 0.0
      %v3335 = vsel %vm2663, 1.0, 0.0
      %v3336 = vsel %vm2664, 1.0, 0.0
      %v3337 = vsel %vm2665, 1.0, 0.0
      %v3338 = vsel %vm2666, 1.0, 0.0
      %v3339 = vsel %vm2667, 1.0, 0.0
      %v3340 = vsel %vm2668, 1.0, 0.0
      %v3341 = vsel %vm2669, 1.0, 0.0
      %v3342 = vsel %vm2670, 1.0, 0.0
      %v3343 = vsel %vm2671, 1.0, 0.0
      %v3344 = vsel %vm2672, 1.0, 0.0
      %v3345 = vsel %vm2673, 1.0, 0.0
      %v3346 = vsel %vm2674, 1.0, 0.0
      %v3347 = vsel %vm2675, 1.0, 0.0
      %v3348 = vsel %vm2676, 1.0, 0.0
      %v3349 = vsel %vm2677, 1.0, 0.0
      %v3350 = vsel %vm2678, 1.0, 0.0
      %v3351 = vsel %vm2679, 1.0, 0.0
      %v3352 = vsel %vm2680, 1.0, 0.0
      %v3353 = vsel %vm2681, 1.0, 0.0
      %v3354 = vsel %vm2682, 1.0, 0.0
      %v3355 = vsel %vm2683, 1.0, 0.0
      %v3356 = vsel %vm2684, 1.0, 0.0
      %v3357 = vsel %vm2685, 1.0, 0.0
      %v3358 = vsel %vm2686, 1.0, 0.0
      %v3359 = vsel %vm2687, 1.0, 0.0
      %v3360 = vsel %vm2688, 1.0, 0.0
      %v3361 = vsel %vm2689, 1.0, 0.0
      %v3362 = vsel %vm2690, 1.0, 0.0
      %v3363 = vsel %vm2691, 1.0, 0.0
      %v3364 = vsel %vm2692, 1.0, 0.0
      %v3365 = vsel %vm2693, 1.0, 0.0
      %v3366 = vsel %vm2694, 1.0, 0.0
      %v3367 = vsel %vm2695, 1.0, 0.0
      %v3368 = vsel %vm2696, 1.0, 0.0
      %v3369 = vsel %vm2697, 1.0, 0.0
      %v3370 = vsel %vm2698, 1.0, 0.0
      %v3371 = vsel %vm2699, 1.0, 0.0
      %v3372 = vsel %vm2700, 1.0, 0.0
      %v3373 = vsel %vm2701, 1.0, 0.0
      %v3374 = vsel %vm2702, 1.0, 0.0
      %v3375 = vsel %vm2703, 1.0, 0.0
      %v3376 = vsel %vm2704, 1.0, 0.0
      %v3377 = vsel %vm2705, 1.0, 0.0
      %v3378 = vsel %vm2706, 1.0, 0.0
      %v3379 = vsel %vm2707, 1.0, 0.0
      %v3380 = vsel %vm2708, 1.0, 0.0
      %v3381 = vsel %vm2709, 1.0, 0.0
      %v3382 = vsel %vm2710, 1.0, 0.0
      %v3383 = vsel %vm2711, 1.0, 0.0
      %v3384 = vsel %vm2712, 1.0, 0.0
      %v3385 = vsel %vm2713, 1.0, 0.0
      %v3386 = vsel %vm2714, 1.0, 0.0
      %v3387 = vsel %vm2715, 1.0, 0.0
      %v3388 = vsel %vm2716, 1.0, 0.0
      %v3389 = vsel %vm2717, 1.0, 0.0
      %v3390 = vsel %vm2718, 1.0, 0.0
      %v3391 = vsel %vm2719, 1.0, 0.0
      %v3392 = vsel %vm2720, 1.0, 0.0
      %v3393 = vsel %vm2721, 1.0, 0.0
      %v3394 = vsel %vm2722, 1.0, 0.0
      %v3395 = vsel %vm2723, 1.0, 0.0
      %v3396 = vsel %vm2724, 1.0, 0.0
      %v3397 = vsel %vm2725, 1.0, 0.0
      %v3398 = vsel %vm2726, 1.0, 0.0
      %v3399 = vsel %vm2727, 1.0, 0.0
      %v3400 = vsel %vm2728, 1.0, 0.0
      %v3401 = vsel %vm2729, 1.0, 0.0
      %v3402 = vsel %vm2730, 1.0, 0.0
      %v3403 = vsel %vm2731, 1.0, 0.0
      %v3404 = vsel %vm2732, 1.0, 0.0
      %v3405 = vsel %vm2733, 1.0, 0.0
      %v3406 = vsel %vm2734, 1.0, 0.0
      %v3407 = vsel %vm2735, 1.0, 0.0
      %v3408 = vsel %vm2736, 1.0, 0.0
      %v3409 = vsel %vm2737, 1.0, 0.0
      %v3410 = vsel %vm2738, 1.0, 0.0
      %v3411 = vsel %vm2739, 1.0, 0.0
      %v3412 = vsel %vm2740, 1.0, 0.0
      %v3413 = vsel %vm2741, 1.0, 0.0
      %v3414 = vsel %vm2742, 1.0, 0.0
      %v3415 = vsel %vm2743, 1.0, 0.0
      %v3416 = vsel %vm2744, 1.0, 0.0
      %v3417 = vsel %vm2745, 1.0, 0.0
      %v3418 = vsel %vm2746, 1.0, 0.0
      %v3419 = vsel %vm2747, 1.0, 0.0
      %v3420 = vsel %vm2748, 1.0, 0.0
      %v3421 = vsel %vm2749, 1.0, 0.0
      %v3422 = vsel %vm2750, 1.0, 0.0
      %v3423 = vsel %vm2751, 1.0, 0.0
      %v3424 = vsel %vm2752, 1.0, 0.0
      %v3425 = vsel %vm2753, 1.0, 0.0
      %v3426 = vsel %vm2754, 1.0, 0.0
      %v3427 = vsel %vm2755, 1.0, 0.0
      %v3428 = vsel %vm2756, 1.0, 0.0
      %v3429 = vsel %vm2757, 1.0, 0.0
      %v3430 = vsel %vm2758, 1.0, 0.0
      %v3431 = vsel %vm2759, 1.0, 0.0
      %v3432 = vsel %vm2760, 1.0, 0.0
      %v3433 = vsel %vm2761, 1.0, 0.0
      %v3434 = vsel %vm2762, 1.0, 0.0
      %v3435 = vsel %vm2763, 1.0, 0.0
      %v3436 = vsel %vm2764, 1.0, 0.0
      %v3437 = vsel %vm2765, 1.0, 0.0
      %v3438 = vsel %vm2766, 1.0, 0.0
      %v3439 = vsel %vm2767, 1.0, 0.0
      %v3440 = vsel %vm1162, %v3312, -inf
      %v3441 = vsel %vm1162, %v3313, -inf
      %v3442 = vmax.f32 %v3440, %v3441
      %v3443 = vsel %vm1162, %v3314, -inf
      %v3444 = vmax.f32 %v3442, %v3443
      %v3445 = vsel %vm1162, %v3315, -inf
      %v3446 = vmax.f32 %v3444, %v3445
      %v3447 = vrot.slane %v3446, 4
      %v3448 = vmax.f32 %v3446, %v3447
      %v3449 = vrot.slane %v3448, 2
      %v3450 = vmax.f32 %v3448, %v3449
      %v3451 = vrot.slane %v3450, 1
      %v3452 = vmax.f32 %v3450, %v3451
      %v3453 = vsel %vm1162, %v3316, -inf
      %v3454 = vsel %vm1162, %v3317, -inf
      %v3455 = vmax.f32 %v3453, %v3454
      %v3456 = vsel %vm1162, %v3318, -inf
      %v3457 = vmax.f32 %v3455, %v3456
      %v3458 = vsel %vm1162, %v3319, -inf
      %v3459 = vmax.f32 %v3457, %v3458
      %v3460 = vrot.slane %v3459, 4
      %v3461 = vmax.f32 %v3459, %v3460
      %v3462 = vrot.slane %v3461, 2
      %v3463 = vmax.f32 %v3461, %v3462
      %v3464 = vrot.slane %v3463, 1
      %v3465 = vmax.f32 %v3463, %v3464
      %v3466 = vsel %vm1162, %v3320, -inf
      %v3467 = vsel %vm1162, %v3321, -inf
      %v3468 = vmax.f32 %v3466, %v3467
      %v3469 = vsel %vm1162, %v3322, -inf
      %v3470 = vmax.f32 %v3468, %v3469
      %v3471 = vsel %vm1162, %v3323, -inf
      %v3472 = vmax.f32 %v3470, %v3471
      %v3473 = vrot.slane %v3472, 4
      %v3474 = vmax.f32 %v3472, %v3473
      %v3475 = vrot.slane %v3474, 2
      %v3476 = vmax.f32 %v3474, %v3475
      %v3477 = vrot.slane %v3476, 1
      %v3478 = vmax.f32 %v3476, %v3477
      %v3479 = vsel %vm1162, %v3324, -inf
      %v3480 = vsel %vm1162, %v3325, -inf
      %v3481 = vmax.f32 %v3479, %v3480
      %v3482 = vsel %vm1162, %v3326, -inf
      %v3483 = vmax.f32 %v3481, %v3482
      %v3484 = vsel %vm1162, %v3327, -inf
      %v3485 = vmax.f32 %v3483, %v3484
      %v3486 = vrot.slane %v3485, 4
      %v3487 = vmax.f32 %v3485, %v3486
      %v3488 = vrot.slane %v3487, 2
      %v3489 = vmax.f32 %v3487, %v3488
      %v3490 = vrot.slane %v3489, 1
      %v3491 = vmax.f32 %v3489, %v3490
      %v3492 = vsel %vm1162, %v3328, -inf
      %v3493 = vsel %vm1162, %v3329, -inf
      %v3494 = vmax.f32 %v3492, %v3493
      %v3495 = vsel %vm1162, %v3330, -inf
      %v3496 = vmax.f32 %v3494, %v3495
      %v3497 = vsel %vm1162, %v3331, -inf
      %v3498 = vmax.f32 %v3496, %v3497
      %v3499 = vrot.slane %v3498, 4
      %v3500 = vmax.f32 %v3498, %v3499
      %v3501 = vrot.slane %v3500, 2
      %v3502 = vmax.f32 %v3500, %v3501
      %v3503 = vrot.slane %v3502, 1
      %v3504 = vmax.f32 %v3502, %v3503
      %v3505 = vsel %vm1162, %v3332, -inf
      %v3506 = vsel %vm1162, %v3333, -inf
      %v3507 = vmax.f32 %v3505, %v3506
      %v3508 = vsel %vm1162, %v3334, -inf
      %v3509 = vmax.f32 %v3507, %v3508
      %v3510 = vsel %vm1162, %v3335, -inf
      %v3511 = vmax.f32 %v3509, %v3510
      %v3512 = vrot.slane %v3511, 4
      %v3513 = vmax.f32 %v3511, %v3512
      %v3514 = vrot.slane %v3513, 2
      %v3515 = vmax.f32 %v3513, %v3514
      %v3516 = vrot.slane %v3515, 1
      %v3517 = vmax.f32 %v3515, %v3516
      %v3518 = vsel %vm1162, %v3336, -inf
      %v3519 = vsel %vm1162, %v3337, -inf
      %v3520 = vmax.f32 %v3518, %v3519
      %v3521 = vsel %vm1162, %v3338, -inf
      %v3522 = vmax.f32 %v3520, %v3521
      %v3523 = vsel %vm1162, %v3339, -inf
      %v3524 = vmax.f32 %v3522, %v3523
      %v3525 = vrot.slane %v3524, 4
      %v3526 = vmax.f32 %v3524, %v3525
      %v3527 = vrot.slane %v3526, 2
      %v3528 = vmax.f32 %v3526, %v3527
      %v3529 = vrot.slane %v3528, 1
      %v3530 = vmax.f32 %v3528, %v3529
      %v3531 = vsel %vm1162, %v3340, -inf
      %v3532 = vsel %vm1162, %v3341, -inf
      %v3533 = vmax.f32 %v3531, %v3532
      %v3534 = vsel %vm1162, %v3342, -inf
      %v3535 = vmax.f32 %v3533, %v3534
      %v3536 = vsel %vm1162, %v3343, -inf
      %v3537 = vmax.f32 %v3535, %v3536
      %v3538 = vrot.slane %v3537, 4
      %v3539 = vmax.f32 %v3537, %v3538
      %v3540 = vrot.slane %v3539, 2
      %v3541 = vmax.f32 %v3539, %v3540
      %v3542 = vrot.slane %v3541, 1
      %v3543 = vmax.f32 %v3541, %v3542
      %v3544 = vsel %vm1162, %v3344, -inf
      %v3545 = vsel %vm1162, %v3345, -inf
      %v3546 = vmax.f32 %v3544, %v3545
      %v3547 = vsel %vm1162, %v3346, -inf
      %v3548 = vmax.f32 %v3546, %v3547
      %v3549 = vsel %vm1162, %v3347, -inf
      %v3550 = vmax.f32 %v3548, %v3549
      %v3551 = vrot.slane %v3550, 4
      %v3552 = vmax.f32 %v3550, %v3551
      %v3553 = vrot.slane %v3552, 2
      %v3554 = vmax.f32 %v3552, %v3553
      %v3555 = vrot.slane %v3554, 1
      %v3556 = vmax.f32 %v3554, %v3555
      %v3557 = vsel %vm1162, %v3348, -inf
      %v3558 = vsel %vm1162, %v3349, -inf
      %v3559 = vmax.f32 %v3557, %v3558
      %v3560 = vsel %vm1162, %v3350, -inf
      %v3561 = vmax.f32 %v3559, %v3560
      %v3562 = vsel %vm1162, %v3351, -inf
      %v3563 = vmax.f32 %v3561, %v3562
      %v3564 = vrot.slane %v3563, 4
      %v3565 = vmax.f32 %v3563, %v3564
      %v3566 = vrot.slane %v3565, 2
      %v3567 = vmax.f32 %v3565, %v3566
      %v3568 = vrot.slane %v3567, 1
      %v3569 = vmax.f32 %v3567, %v3568
      %v3570 = vsel %vm1162, %v3352, -inf
      %v3571 = vsel %vm1162, %v3353, -inf
      %v3572 = vmax.f32 %v3570, %v3571
      %v3573 = vsel %vm1162, %v3354, -inf
      %v3574 = vmax.f32 %v3572, %v3573
      %v3575 = vsel %vm1162, %v3355, -inf
      %v3576 = vmax.f32 %v3574, %v3575
      %v3577 = vrot.slane %v3576, 4
      %v3578 = vmax.f32 %v3576, %v3577
      %v3579 = vrot.slane %v3578, 2
      %v3580 = vmax.f32 %v3578, %v3579
      %v3581 = vrot.slane %v3580, 1
      %v3582 = vmax.f32 %v3580, %v3581
      %v3583 = vsel %vm1162, %v3356, -inf
      %v3584 = vsel %vm1162, %v3357, -inf
      %v3585 = vmax.f32 %v3583, %v3584
      %v3586 = vsel %vm1162, %v3358, -inf
      %v3587 = vmax.f32 %v3585, %v3586
      %v3588 = vsel %vm1162, %v3359, -inf
      %v3589 = vmax.f32 %v3587, %v3588
      %v3590 = vrot.slane %v3589, 4
      %v3591 = vmax.f32 %v3589, %v3590
      %v3592 = vrot.slane %v3591, 2
      %v3593 = vmax.f32 %v3591, %v3592
      %v3594 = vrot.slane %v3593, 1
      %v3595 = vmax.f32 %v3593, %v3594
      %v3596 = vsel %vm1162, %v3360, -inf
      %v3597 = vsel %vm1162, %v3361, -inf
      %v3598 = vmax.f32 %v3596, %v3597
      %v3599 = vsel %vm1162, %v3362, -inf
      %v3600 = vmax.f32 %v3598, %v3599
      %v3601 = vsel %vm1162, %v3363, -inf
      %v3602 = vmax.f32 %v3600, %v3601
      %v3603 = vrot.slane %v3602, 4
      %v3604 = vmax.f32 %v3602, %v3603
      %v3605 = vrot.slane %v3604, 2
      %v3606 = vmax.f32 %v3604, %v3605
      %v3607 = vrot.slane %v3606, 1
      %v3608 = vmax.f32 %v3606, %v3607
      %v3609 = vsel %vm1162, %v3364, -inf
      %v3610 = vsel %vm1162, %v3365, -inf
      %v3611 = vmax.f32 %v3609, %v3610
      %v3612 = vsel %vm1162, %v3366, -inf
      %v3613 = vmax.f32 %v3611, %v3612
      %v3614 = vsel %vm1162, %v3367, -inf
      %v3615 = vmax.f32 %v3613, %v3614
      %v3616 = vrot.slane %v3615, 4
      %v3617 = vmax.f32 %v3615, %v3616
      %v3618 = vrot.slane %v3617, 2
      %v3619 = vmax.f32 %v3617, %v3618
      %v3620 = vrot.slane %v3619, 1
      %v3621 = vmax.f32 %v3619, %v3620
      %v3622 = vsel %vm1162, %v3368, -inf
      %v3623 = vsel %vm1162, %v3369, -inf
      %v3624 = vmax.f32 %v3622, %v3623
      %v3625 = vsel %vm1162, %v3370, -inf
      %v3626 = vmax.f32 %v3624, %v3625
      %v3627 = vsel %vm1162, %v3371, -inf
      %v3628 = vmax.f32 %v3626, %v3627
      %v3629 = vrot.slane %v3628, 4
      %v3630 = vmax.f32 %v3628, %v3629
      %v3631 = vrot.slane %v3630, 2
      %v3632 = vmax.f32 %v3630, %v3631
      %v3633 = vrot.slane %v3632, 1
      %v3634 = vmax.f32 %v3632, %v3633
      %v3635 = vsel %vm1162, %v3372, -inf
      %v3636 = vsel %vm1162, %v3373, -inf
      %v3637 = vmax.f32 %v3635, %v3636
      %v3638 = vsel %vm1162, %v3374, -inf
      %v3639 = vmax.f32 %v3637, %v3638
      %v3640 = vsel %vm1162, %v3375, -inf
      %v3641 = vmax.f32 %v3639, %v3640
      %v3642 = vrot.slane %v3641, 4
      %v3643 = vmax.f32 %v3641, %v3642
      %v3644 = vrot.slane %v3643, 2
      %v3645 = vmax.f32 %v3643, %v3644
      %v3646 = vrot.slane %v3645, 1
      %v3647 = vmax.f32 %v3645, %v3646
      %v3648 = vsel %vm1162, %v3376, -inf
      %v3649 = vsel %vm1162, %v3377, -inf
      %v3650 = vmax.f32 %v3648, %v3649
      %v3651 = vsel %vm1162, %v3378, -inf
      %v3652 = vmax.f32 %v3650, %v3651
      %v3653 = vsel %vm1162, %v3379, -inf
      %v3654 = vmax.f32 %v3652, %v3653
      %v3655 = vrot.slane %v3654, 4
      %v3656 = vmax.f32 %v3654, %v3655
      %v3657 = vrot.slane %v3656, 2
      %v3658 = vmax.f32 %v3656, %v3657
      %v3659 = vrot.slane %v3658, 1
      %v3660 = vmax.f32 %v3658, %v3659
      %v3661 = vsel %vm1162, %v3380, -inf
      %v3662 = vsel %vm1162, %v3381, -inf
      %v3663 = vmax.f32 %v3661, %v3662
      %v3664 = vsel %vm1162, %v3382, -inf
      %v3665 = vmax.f32 %v3663, %v3664
      %v3666 = vsel %vm1162, %v3383, -inf
      %v3667 = vmax.f32 %v3665, %v3666
      %v3668 = vrot.slane %v3667, 4
      %v3669 = vmax.f32 %v3667, %v3668
      %v3670 = vrot.slane %v3669, 2
      %v3671 = vmax.f32 %v3669, %v3670
      %v3672 = vrot.slane %v3671, 1
      %v3673 = vmax.f32 %v3671, %v3672
      %v3674 = vsel %vm1162, %v3384, -inf
      %v3675 = vsel %vm1162, %v3385, -inf
      %v3676 = vmax.f32 %v3674, %v3675
      %v3677 = vsel %vm1162, %v3386, -inf
      %v3678 = vmax.f32 %v3676, %v3677
      %v3679 = vsel %vm1162, %v3387, -inf
      %v3680 = vmax.f32 %v3678, %v3679
      %v3681 = vrot.slane %v3680, 4
      %v3682 = vmax.f32 %v3680, %v3681
      %v3683 = vrot.slane %v3682, 2
      %v3684 = vmax.f32 %v3682, %v3683
      %v3685 = vrot.slane %v3684, 1
      %v3686 = vmax.f32 %v3684, %v3685
      %v3687 = vsel %vm1162, %v3388, -inf
      %v3688 = vsel %vm1162, %v3389, -inf
      %v3689 = vmax.f32 %v3687, %v3688
      %v3690 = vsel %vm1162, %v3390, -inf
      %v3691 = vmax.f32 %v3689, %v3690
      %v3692 = vsel %vm1162, %v3391, -inf
      %v3693 = vmax.f32 %v3691, %v3692
      %v3694 = vrot.slane %v3693, 4
      %v3695 = vmax.f32 %v3693, %v3694
      %v3696 = vrot.slane %v3695, 2
      %v3697 = vmax.f32 %v3695, %v3696
      %v3698 = vrot.slane %v3697, 1
      %v3699 = vmax.f32 %v3697, %v3698
      %v3700 = vsel %vm1162, %v3392, -inf
      %v3701 = vsel %vm1162, %v3393, -inf
      %v3702 = vmax.f32 %v3700, %v3701
      %v3703 = vsel %vm1162, %v3394, -inf
      %v3704 = vmax.f32 %v3702, %v3703
      %v3705 = vsel %vm1162, %v3395, -inf
      %v3706 = vmax.f32 %v3704, %v3705
      %v3707 = vrot.slane %v3706, 4
      %v3708 = vmax.f32 %v3706, %v3707
      %v3709 = vrot.slane %v3708, 2
      %v3710 = vmax.f32 %v3708, %v3709
      %v3711 = vrot.slane %v3710, 1
      %v3712 = vmax.f32 %v3710, %v3711
      %v3713 = vsel %vm1162, %v3396, -inf
      %v3714 = vsel %vm1162, %v3397, -inf
      %v3715 = vmax.f32 %v3713, %v3714
      %v3716 = vsel %vm1162, %v3398, -inf
      %v3717 = vmax.f32 %v3715, %v3716
      %v3718 = vsel %vm1162, %v3399, -inf
      %v3719 = vmax.f32 %v3717, %v3718
      %v3720 = vrot.slane %v3719, 4
      %v3721 = vmax.f32 %v3719, %v3720
      %v3722 = vrot.slane %v3721, 2
      %v3723 = vmax.f32 %v3721, %v3722
      %v3724 = vrot.slane %v3723, 1
      %v3725 = vmax.f32 %v3723, %v3724
      %v3726 = vsel %vm1162, %v3400, -inf
      %v3727 = vsel %vm1162, %v3401, -inf
      %v3728 = vmax.f32 %v3726, %v3727
      %v3729 = vsel %vm1162, %v3402, -inf
      %v3730 = vmax.f32 %v3728, %v3729
      %v3731 = vsel %vm1162, %v3403, -inf
      %v3732 = vmax.f32 %v3730, %v3731
      %v3733 = vrot.slane %v3732, 4
      %v3734 = vmax.f32 %v3732, %v3733
      %v3735 = vrot.slane %v3734, 2
      %v3736 = vmax.f32 %v3734, %v3735
      %v3737 = vrot.slane %v3736, 1
      %v3738 = vmax.f32 %v3736, %v3737
      %v3739 = vsel %vm1162, %v3404, -inf
      %v3740 = vsel %vm1162, %v3405, -inf
      %v3741 = vmax.f32 %v3739, %v3740
      %v3742 = vsel %vm1162, %v3406, -inf
      %v3743 = vmax.f32 %v3741, %v3742
      %v3744 = vsel %vm1162, %v3407, -inf
      %v3745 = vmax.f32 %v3743, %v3744
      %v3746 = vrot.slane %v3745, 4
      %v3747 = vmax.f32 %v3745, %v3746
      %v3748 = vrot.slane %v3747, 2
      %v3749 = vmax.f32 %v3747, %v3748
      %v3750 = vrot.slane %v3749, 1
      %v3751 = vmax.f32 %v3749, %v3750
      %v3752 = vsel %vm1162, %v3408, -inf
      %v3753 = vsel %vm1162, %v3409, -inf
      %v3754 = vmax.f32 %v3752, %v3753
      %v3755 = vsel %vm1162, %v3410, -inf
      %v3756 = vmax.f32 %v3754, %v3755
      %v3757 = vsel %vm1162, %v3411, -inf
      %v3758 = vmax.f32 %v3756, %v3757
      %v3759 = vrot.slane %v3758, 4
      %v3760 = vmax.f32 %v3758, %v3759
      %v3761 = vrot.slane %v3760, 2
      %v3762 = vmax.f32 %v3760, %v3761
      %v3763 = vrot.slane %v3762, 1
      %v3764 = vmax.f32 %v3762, %v3763
      %v3765 = vsel %vm1162, %v3412, -inf
      %v3766 = vsel %vm1162, %v3413, -inf
      %v3767 = vmax.f32 %v3765, %v3766
      %v3768 = vsel %vm1162, %v3414, -inf
      %v3769 = vmax.f32 %v3767, %v3768
      %v3770 = vsel %vm1162, %v3415, -inf
      %v3771 = vmax.f32 %v3769, %v3770
      %v3772 = vrot.slane %v3771, 4
      %v3773 = vmax.f32 %v3771, %v3772
      %v3774 = vrot.slane %v3773, 2
      %v3775 = vmax.f32 %v3773, %v3774
      %v3776 = vrot.slane %v3775, 1
      %v3777 = vmax.f32 %v3775, %v3776
      %v3778 = vsel %vm1162, %v3416, -inf
      %v3779 = vsel %vm1162, %v3417, -inf
      %v3780 = vmax.f32 %v3778, %v3779
      %v3781 = vsel %vm1162, %v3418, -inf
      %v3782 = vmax.f32 %v3780, %v3781
      %v3783 = vsel %vm1162, %v3419, -inf
      %v3784 = vmax.f32 %v3782, %v3783
      %v3785 = vrot.slane %v3784, 4
      %v3786 = vmax.f32 %v3784, %v3785
      %v3787 = vrot.slane %v3786, 2
      %v3788 = vmax.f32 %v3786, %v3787
      %v3789 = vrot.slane %v3788, 1
      %v3790 = vmax.f32 %v3788, %v3789
      %v3791 = vsel %vm1162, %v3420, -inf
      %v3792 = vsel %vm1162, %v3421, -inf
      %v3793 = vmax.f32 %v3791, %v3792
      %v3794 = vsel %vm1162, %v3422, -inf
      %v3795 = vmax.f32 %v3793, %v3794
      %v3796 = vsel %vm1162, %v3423, -inf
      %v3797 = vmax.f32 %v3795, %v3796
      %v3798 = vrot.slane %v3797, 4
      %v3799 = vmax.f32 %v3797, %v3798
      %v3800 = vrot.slane %v3799, 2
      %v3801 = vmax.f32 %v3799, %v3800
      %v3802 = vrot.slane %v3801, 1
      %v3803 = vmax.f32 %v3801, %v3802
      %v3804 = vsel %vm1162, %v3424, -inf
      %v3805 = vsel %vm1162, %v3425, -inf
      %v3806 = vmax.f32 %v3804, %v3805
      %v3807 = vsel %vm1162, %v3426, -inf
      %v3808 = vmax.f32 %v3806, %v3807
      %v3809 = vsel %vm1162, %v3427, -inf
      %v3810 = vmax.f32 %v3808, %v3809
      %v3811 = vrot.slane %v3810, 4
      %v3812 = vmax.f32 %v3810, %v3811
      %v3813 = vrot.slane %v3812, 2
      %v3814 = vmax.f32 %v3812, %v3813
      %v3815 = vrot.slane %v3814, 1
      %v3816 = vmax.f32 %v3814, %v3815
      %v3817 = vsel %vm1162, %v3428, -inf
      %v3818 = vsel %vm1162, %v3429, -inf
      %v3819 = vmax.f32 %v3817, %v3818
      %v3820 = vsel %vm1162, %v3430, -inf
      %v3821 = vmax.f32 %v3819, %v3820
      %v3822 = vsel %vm1162, %v3431, -inf
      %v3823 = vmax.f32 %v3821, %v3822
      %v3824 = vrot.slane %v3823, 4
      %v3825 = vmax.f32 %v3823, %v3824
      %v3826 = vrot.slane %v3825, 2
      %v3827 = vmax.f32 %v3825, %v3826
      %v3828 = vrot.slane %v3827, 1
      %v3829 = vmax.f32 %v3827, %v3828
      %v3830 = vsel %vm1162, %v3432, -inf
      %v3831 = vsel %vm1162, %v3433, -inf
      %v3832 = vmax.f32 %v3830, %v3831
      %v3833 = vsel %vm1162, %v3434, -inf
      %v3834 = vmax.f32 %v3832, %v3833
      %v3835 = vsel %vm1162, %v3435, -inf
      %v3836 = vmax.f32 %v3834, %v3835
      %v3837 = vrot.slane %v3836, 4
      %v3838 = vmax.f32 %v3836, %v3837
      %v3839 = vrot.slane %v3838, 2
      %v3840 = vmax.f32 %v3838, %v3839
      %v3841 = vrot.slane %v3840, 1
      %v3842 = vmax.f32 %v3840, %v3841
      %v3843 = vsel %vm1162, %v3436, -inf
      %v3844 = vsel %vm1162, %v3437, -inf
      %v3845 = vmax.f32 %v3843, %v3844
      %v3846 = vsel %vm1162, %v3438, -inf
      %v3847 = vmax.f32 %v3845, %v3846
      %v3848 = vsel %vm1162, %v3439, -inf
      %v3849 = vmax.f32 %v3847, %v3848
      %v3850 = vrot.slane %v3849, 4
      %v3851 = vmax.f32 %v3849, %v3850
      %v3852 = vrot.slane %v3851, 2
      %v3853 = vmax.f32 %v3851, %v3852
      %v3854 = vrot.slane %v3853, 1
      %v3855 = vmax.f32 %v3853, %v3854
      %vm3856 = vcmp.gt.f32.partialorder %v3452, 0.0
      %vm3857 = vcmp.gt.f32.partialorder %v3465, 0.0
      %vm3858 = vcmp.gt.f32.partialorder %v3478, 0.0
      %vm3859 = vcmp.gt.f32.partialorder %v3491, 0.0
      %vm3860 = vcmp.gt.f32.partialorder %v3504, 0.0
      %vm3861 = vcmp.gt.f32.partialorder %v3517, 0.0
      %vm3862 = vcmp.gt.f32.partialorder %v3530, 0.0
      %vm3863 = vcmp.gt.f32.partialorder %v3543, 0.0
      %vm3864 = vcmp.gt.f32.partialorder %v3556, 0.0
      %vm3865 = vcmp.gt.f32.partialorder %v3569, 0.0
      %vm3866 = vcmp.gt.f32.partialorder %v3582, 0.0
      %vm3867 = vcmp.gt.f32.partialorder %v3595, 0.0
      %vm3868 = vcmp.gt.f32.partialorder %v3608, 0.0
      %vm3869 = vcmp.gt.f32.partialorder %v3621, 0.0
      %vm3870 = vcmp.gt.f32.partialorder %v3634, 0.0
      %vm3871 = vcmp.gt.f32.partialorder %v3647, 0.0
      %vm3872 = vcmp.gt.f32.partialorder %v3660, 0.0
      %vm3873 = vcmp.gt.f32.partialorder %v3673, 0.0
      %vm3874 = vcmp.gt.f32.partialorder %v3686, 0.0
      %vm3875 = vcmp.gt.f32.partialorder %v3699, 0.0
      %vm3876 = vcmp.gt.f32.partialorder %v3712, 0.0
      %vm3877 = vcmp.gt.f32.partialorder %v3725, 0.0
      %vm3878 = vcmp.gt.f32.partialorder %v3738, 0.0
      %vm3879 = vcmp.gt.f32.partialorder %v3751, 0.0
      %vm3880 = vcmp.gt.f32.partialorder %v3764, 0.0
      %vm3881 = vcmp.gt.f32.partialorder %v3777, 0.0
      %vm3882 = vcmp.gt.f32.partialorder %v3790, 0.0
      %vm3883 = vcmp.gt.f32.partialorder %v3803, 0.0
      %vm3884 = vcmp.gt.f32.partialorder %v3816, 0.0
      %vm3885 = vcmp.gt.f32.partialorder %v3829, 0.0
      %vm3886 = vcmp.gt.f32.partialorder %v3842, 0.0
      %vm3887 = vcmp.gt.f32.partialorder %v3855, 0.0
      %v3888 = vsel %vm3856, %v2908, %v1900
      %v3889 = vsel %vm3857, %v2921, %v1904
      %v3890 = vsel %vm3858, %v2934, %v1908
      %v3891 = vsel %vm3859, %v2947, %v1912
      %v3892 = vsel %vm3860, %v2960, %v1916
      %v3893 = vsel %vm3861, %v2973, %v1920
      %v3894 = vsel %vm3862, %v2986, %v1924
      %v3895 = vsel %vm3863, %v2999, %v1928
      %v3896 = vsel %vm3864, %v3012, %v1932
      %v3897 = vsel %vm3865, %v3025, %v1936
      %v3898 = vsel %vm3866, %v3038, %v1940
      %v3899 = vsel %vm3867, %v3051, %v1944
      %v3900 = vsel %vm3868, %v3064, %v1948
      %v3901 = vsel %vm3869, %v3077, %v1952
      %v3902 = vsel %vm3870, %v3090, %v1956
      %v3903 = vsel %vm3871, %v3103, %v1960
      %v3904 = vsel %vm3872, %v3116, %v1964
      %v3905 = vsel %vm3873, %v3129, %v1968
      %v3906 = vsel %vm3874, %v3142, %v1972
      %v3907 = vsel %vm3875, %v3155, %v1976
      %v3908 = vsel %vm3876, %v3168, %v1980
      %v3909 = vsel %vm3877, %v3181, %v1984
      %v3910 = vsel %vm3878, %v3194, %v1988
      %v3911 = vsel %vm3879, %v3207, %v1992
      %v3912 = vsel %vm3880, %v3220, %v1996
      %v3913 = vsel %vm3881, %v3233, %v2000
      %v3914 = vsel %vm3882, %v3246, %v2004
      %v3915 = vsel %vm3883, %v3259, %v2008
      %v3916 = vsel %vm3884, %v3272, %v2012
      %v3917 = vsel %vm3885, %v3285, %v2016
      %v3918 = vsel %vm3886, %v3298, %v2020
      %v3919 = vsel %vm3887, %v3311, %v2024
      %v3952 = vrot.slane %v3889, 7
      %vm3953 = vcmask 1041409
      %v3954 = vsel %vm3953, %v3952, %v3888
      %v3955 = vrot.slane %v3890, 6
      %vm3956 = vcmask 1042434
      %v3957 = vsel %vm3956, %v3955, %v3954
      %v3958 = vrot.slane %v3891, 5
      %vm3959 = vcmask 1043459
      %v3960 = vsel %vm3959, %v3958, %v3957
      %v3961 = vrot.slane %v3892, 4
      %vm3962 = vcmask 1044484
      %v3963 = vsel %vm3962, %v3961, %v3960
      %v3964 = vrot.slane %v3893, 3
      %vm3965 = vcmask 1045509
      %v3966 = vsel %vm3965, %v3964, %v3963
      %v3967 = vrot.slane %v3894, 2
      %vm3968 = vcmask 1046534
      %v3969 = vsel %vm3968, %v3967, %v3966
      %v3970 = vrot.slane %v3895, 1
      %vm3971 = vcmask 1047559
      %v3972 = vsel %vm3971, %v3970, %v3969
      %v3973 = vrot.slane %v3897, 7
      %v3974 = vsel %vm3953, %v3973, %v3896
      %v3975 = vrot.slane %v3898, 6
      %v3976 = vsel %vm3956, %v3975, %v3974
      %v3977 = vrot.slane %v3899, 5
      %v3978 = vsel %vm3959, %v3977, %v3976
      %v3979 = vrot.slane %v3900, 4
      %v3980 = vsel %vm3962, %v3979, %v3978
      %v3981 = vrot.slane %v3901, 3
      %v3982 = vsel %vm3965, %v3981, %v3980
      %v3983 = vrot.slane %v3902, 2
      %v3984 = vsel %vm3968, %v3983, %v3982
      %v3985 = vrot.slane %v3903, 1
      %v3986 = vsel %vm3971, %v3985, %v3984
      %v3987 = vrot.slane %v3905, 7
      %v3988 = vsel %vm3953, %v3987, %v3904
      %v3989 = vrot.slane %v3906, 6
      %v3990 = vsel %vm3956, %v3989, %v3988
      %v3991 = vrot.slane %v3907, 5
      %v3992 = vsel %vm3959, %v3991, %v3990
      %v3993 = vrot.slane %v3908, 4
      %v3994 = vsel %vm3962, %v3993, %v3992
      %v3995 = vrot.slane %v3909, 3
      %v3996 = vsel %vm3965, %v3995, %v3994
      %v3997 = vrot.slane %v3910, 2
      %v3998 = vsel %vm3968, %v3997, %v3996
      %v3999 = vrot.slane %v3911, 1
      %v4000 = vsel %vm3971, %v3999, %v3998
      %v4001 = vrot.slane %v3913, 7
      %v4002 = vsel %vm3953, %v4001, %v3912
      %v4003 = vrot.slane %v3914, 6
      %v4004 = vsel %vm3956, %v4003, %v4002
      %v4005 = vrot.slane %v3915, 5
      %v4006 = vsel %vm3959, %v4005, %v4004
      %v4007 = vrot.slane %v3916, 4
      %v4008 = vsel %vm3962, %v4007, %v4006
      %v4009 = vrot.slane %v3917, 3
      %v4010 = vsel %vm3965, %v4009, %v4008
      %v4011 = vrot.slane %v3918, 2
      %v4012 = vsel %vm3968, %v4011, %v4010
      %v4013 = vrot.slane %v3919, 1
      %v4014 = vsel %vm3971, %v4013, %v4012
      %4019 = vst.msk [vmem:[%s226] sm:$0xff] %vm1162, %v3972
      %4020 = vst.msk [vmem:[%s226 + $0x8] sm:$0xff] %vm1162, %v3986
      %4021 = vst.msk [vmem:[%s226 + $0x10] sm:$0xff] %vm1162, %v4000
      %4022 = vst.msk [vmem:[%s226 + $0x18] sm:$0xff] %vm1162, %v4014
      %s4023 = smul.u32 4, %s16
      %p4024 = scmp.lt.s32.totalorder %s4023, 7
      %s4025 = scalar_select %p4024, %s4023, 7
      %s4026 = smul.addr %s4025, 8
      %s4027 = scalar_lea.vmem %s5, %s4026
      // Predicated region
      $region41: #{pv_rcnn_forward.11} parent=39 // pred_check
        %p4028 = pneg %p144
      $region42: #{pv_rcnn_forward.11} parent=39 // pred_check_branch
        %4030 = sbr.rel (%p4028) target = $region44
      $region43: #{pv_rcnn_forward.11} parent=39 // pred_region
        %s4031 = smul.u32 4, %s16
      $region44: #{pv_rcnn_forward.11} parent=39 // pred_fallthru
        _
    $region40: #{pv_rcnn_forward.11} parent=5 // pred_fallthru
      _
    %p4032 = scmp.le.s32.totalorder 2, %s11
    // Predicated region
    $region45: #{pv_rcnn_forward.11} parent=5 // pred_check
      %p4033 = pneg %p4032
    $region46: #{pv_rcnn_forward.11} parent=5 // pred_check_branch
      %4035 = sbr.rel (%p4033) target = $region48
    $region47: #{pv_rcnn_forward.11} parent=5 // pred_region
      %s4036 = ssub.s32 %s11, 2
      // Predicated region
      $region49: #{pv_rcnn_forward.11} parent=47 // pred_check
        %p4037 = pneg %p150
      $region50: #{pv_rcnn_forward.11} parent=47 // pred_check_branch
        %4039 = sbr.rel (%p4037) target = $region52
      $region51: #{pv_rcnn_forward.11} parent=47 // pred_region
        %s4040 = smul.u32 4, %s17
        %p4041 = scmp.lt.s32.totalorder %s4040, 7
        %s4042 = scalar_select %p4041, %s4040, 7
        %s4043 = smul.addr %s4042, 8
        %s4044 = scalar_lea.vmem %s5, %s4043
      $region52: #{pv_rcnn_forward.11} parent=47 // pred_fallthru
        _
    $region48: #{pv_rcnn_forward.11} parent=5 // pred_fallthru
      _
  $region6: #{pv_rcnn_forward.11} parent=0 // loop_footer
    %s15 = sadd.s32 1, %s11
  $region7: #{pv_rcnn_forward.11} parent=0 // loop_footer_branch
    %10 = sbr.rel target = $region3
  $region8: #{pv_rcnn_forward.11} parent=0 // loop_exit
    _

</llo_original>
